<compile_context>
chip_gen: v7x
topology: tpu7x:2x2x1
jax: 0.10.0
libtpu: 0.0.40
codegen_flags: <defaults>
</compile_context>

<pallas_src>
import functools

import jax
import jax.numpy as jnp
from jax import lax
from jax.experimental import pallas as pl
from jax.experimental.pallas import tpu as pltpu

NEG_SLOPE = 0.2
EPS = 1e-5


def _leaky(x):
    return jnp.where(x > 0, x, NEG_SLOPE * x)


def _round_up(x, m):
    return (x + m - 1) // m * m


# ----------------------------- fused kernel ----------------------------------
def _fused_kernel(x_ref, mnl_ref, mnf_ref, w1_ref, b1_ref, g_ref, bt_ref,
                  w2_ref, b2_ref, wi_ref, bi_ref, out_ref, acc_ref, halo_ref,
                  *, hw, wdim, c_half, pad):
    cp = out_ref.shape[-1]
    f32 = jnp.float32

    # zero the halo regions of the shifted-view scratch once; they stay zero.
    halo_ref[pl.ds(0, pad), :] = jnp.zeros((pad, cp), f32)
    halo_ref[pl.ds(pad + hw, pad), :] = jnp.zeros((pad, cp), f32)

    # per-row (flattened spatial) column masks, precomputed on the host:
    #   dw = -1 taps must not read across a row boundary from column W-1,
    #   dw = +1 taps must not read across a row boundary from column 0.
    m_for_dw = {-1: mnl_ref[...], 0: None, 1: mnf_ref[...]}   # (HW, 1) f32

    def conv3x3(src, w_ref):
        """SAME 3x3 conv of src (HW, Cp) with w_ref (9, Cp, Cp) via 9 shifted dots."""
        acc_ref[...] = jnp.zeros((hw, cp), f32)
        for dw in (-1, 0, 1):
            m = m_for_dw[dw]
            v = src if m is None else src * m
            halo_ref[pl.ds(pad, hw), :] = v            # center of the halo buffer
            for dh in (-1, 0, 1):
                t = (dh + 1) * 3 + (dw + 1)            # tap index, (kh, kw) row-major
                shifted = halo_ref[pl.ds(pad + dh * wdim + dw, hw), :]
                acc_ref[...] = acc_ref[...] + jnp.dot(
                    shifted.astype(jnp.bfloat16), w_ref[t],
                    preferred_element_type=f32)
        return acc_ref[...]

    x = x_ref[...]                                      # (HW, Cp) f32

    # ---- conv_1 -> LeakyReLU -------------------------------------------------
    y = _leaky(conv3x3(x, w1_ref) + b1_ref[...])

    # ---- half instance norm: per-channel stats over HW, single pass ----------
    inv_hw = 1.0 / hw
    mean = jnp.sum(y, axis=0, keepdims=True) * inv_hw            # (1, Cp)
    ex2 = jnp.sum(y * y, axis=0, keepdims=True) * inv_hw
    var = jnp.maximum(ex2 - mean * mean, 0.0)
    normed = (y - mean) * lax.rsqrt(var + EPS) * g_ref[...] + bt_ref[...]
    lane = lax.broadcasted_iota(jnp.int32, (1, cp), 1)
    resi = jnp.where(lane < c_half, normed, y)                   # first half normalized

    # ---- conv_2 -> LeakyReLU --------------------------------------------------
    y2 = _leaky(conv3x3(resi, w2_ref) + b2_ref[...])

    # ---- 1x1 identity conv + residual add -------------------------------------
    ident = jnp.dot(x.astype(jnp.bfloat16), wi_ref[...],
                    preferred_element_type=f32) + bi_ref[...]
    out_ref[...] = (ident + y2).astype(out_ref.dtype)


# ------------------------------- JAX wrapper ----------------------------------
def hin_res_block(x, params):
    """x: (N, H, W, Cin) float32 -> (N, H, W, Cout) float32."""
    n, h, w, cin = x.shape
    cout = params["b1"].shape[-1]
    c_half = cout // 2
    hw = h * w
    cp = _round_up(max(cin, cout), 128)     # lane-dense channel width
    pad = _round_up(w + 1, 8)               # halo rows, sublane-aligned stores

    def pad_c(a):
        return jnp.pad(a, [(0, 0)] * (a.ndim - 1) + [(0, cp - a.shape[-1])])

    # channel-padded flattened activations (cast to bf16 at the MXU in-kernel)
    xp = pad_c(x).reshape(n, hw, cp)

    # 3x3 weights: HWIO -> tap-stacked (9, Cp, Cp) bf16
    def prep_w3(w_hwio):
        ci, co = w_hwio.shape[2], w_hwio.shape[3]
        wp = jnp.pad(w_hwio, ((0, 0), (0, 0), (0, cp - ci), (0, cp - co)))
        return wp.reshape(9, cp, cp).astype(jnp.bfloat16)

    w1s = prep_w3(params["w1_hwio"])
    w2s = prep_w3(params["w2_hwio"])
    wis = jnp.pad(params["wi_hwio"][0, 0],
                  ((0, cp - cin), (0, cp - cout))).astype(jnp.bfloat16)
    b1p, b2p, bip = pad_c(params["b1"]), pad_c(params["b2"]), pad_c(params["bi"])
    gp, btp = pad_c(params["gamma"]), pad_c(params["beta"])

    # column masks for the dw = -1 / +1 conv taps (constant-folded under jit)
    wcol = jnp.arange(hw, dtype=jnp.int32) % w
    m_not_last = (wcol != (w - 1)).astype(jnp.float32).reshape(hw, 1)
    m_not_first = (wcol != 0).astype(jnp.float32).reshape(hw, 1)

    kernel = functools.partial(_fused_kernel, hw=hw, wdim=w,
                               c_half=c_half, pad=pad)

    def const(shape):
        return pl.BlockSpec(shape, lambda i, _s=len(shape): (0,) * _s)

    out = pl.pallas_call(
        kernel,
        out_shape=jax.ShapeDtypeStruct((n, hw, cp), jnp.float32),
        grid=(n,),
        in_specs=[
            pl.BlockSpec((pl.Squeezed(), hw, cp), lambda i: (i, 0, 0)),  # x
            const((hw, 1)),        # mask: not last column  (dw = -1)
            const((hw, 1)),        # mask: not first column (dw = +1)
            const((9, cp, cp)),    # w1 (bf16)
            const((1, cp)),        # b1
            const((1, cp)),        # gamma
            const((1, cp)),        # beta
            const((9, cp, cp)),    # w2 (bf16)
            const((1, cp)),        # b2
            const((cp, cp)),       # wi (bf16)
            const((1, cp)),        # bi
        ],
        out_specs=pl.BlockSpec((pl.Squeezed(), hw, cp), lambda i: (i, 0, 0)),
        scratch_shapes=[
            pltpu.VMEM((hw, cp), jnp.float32),             # conv accumulator
            pltpu.VMEM((hw + 2 * pad, cp), jnp.float32),   # zero-haloed shifts
        ],
        compiler_params=pltpu.CompilerParams(
            dimension_semantics=("parallel",)),            # batch -> megacore
    )(xp, m_not_last, m_not_first, w1s, b1p, gp, btp, w2s, b2p, wis, bip)

    return out.reshape(n, h, w, cp)[..., :cout]


# --------------------------- params / reference -------------------------------
def init_params(key, cin, cout):
    ks = jax.random.split(key, 6)
    s1 = 1.0 / float(jnp.sqrt(9 * cin))
    s2 = 1.0 / float(jnp.sqrt(9 * cout))
    si = 1.0 / float(jnp.sqrt(cin))
    w1 = jax.random.uniform(ks[0], (3, 3, cin, cout), jnp.float32, -s1, s1)
    b1 = jax.random.uniform(ks[1], (1, cout), jnp.float32, -s1, s1)
    w2 = jax.random.uniform(ks[2], (3, 3, cout, cout), jnp.float32, -s2, s2)
    b2 = jax.random.uniform(ks[3], (1, cout), jnp.float32, -s2, s2)
    wi = jax.random.uniform(ks[4], (1, 1, cin, cout), jnp.float32, -si, si)
    bi = jax.random.uniform(ks[5], (1, cout), jnp.float32, -si, si)
    gamma = jnp.ones((1, cout // 2), jnp.float32)   # nn.InstanceNorm2d affine init
    beta = jnp.zeros((1, cout // 2), jnp.float32)
    return {"w1_hwio": w1, "b1": b1, "w2_hwio": w2, "b2": b2,
            "wi_hwio": wi, "bi": bi, "gamma": gamma, "beta": beta}


def ref_forward(x, p):
    dn = ("NHWC", "HWIO", "NHWC")

    def conv(a, w):
        return lax.conv_general_dilated(a, w, (1, 1), "SAME", dimension_numbers=dn)

    r = _leaky(conv(x, p["w1_hwio"]) + p["b1"].reshape(1, 1, 1, -1))
    ch = p["gamma"].shape[-1]
    r1, r2 = r[..., :ch], r[..., ch:]
    mean = r1.mean(axis=(1, 2), keepdims=True)
    var = ((r1 - mean) ** 2).mean(axis=(1, 2), keepdims=True)
    r1 = (r1 - mean) / jnp.sqrt(var + EPS)
    r1 = r1 * p["gamma"].reshape(1, 1, 1, -1) + p["beta"].reshape(1, 1, 1, -1)
    r = jnp.concatenate([r1, r2], axis=-1)
    r = _leaky(conv(r, p["w2_hwio"]) + p["b2"].reshape(1, 1, 1, -1))
    ident = conv(x, p["wi_hwio"]) + p["bi"].reshape(1, 1, 1, -1)
    return ident + r


if __name__ == "__main__":
    key = jax.random.PRNGKey(0)
    kx, kp = jax.random.split(key)
    N, H, W, CIN, COUT = 2, 16, 16, 8, 8          # PyTorch NCHW x: [2, 8, 16, 16]
    x = jax.random.normal(kx, (N, H, W, CIN), jnp.float32)
    params = init_params(kp, CIN, COUT)

    out = jax.block_until_ready(jax.jit(hin_res_block)(x, params))

    ref = ref_forward(x, params)
    assert out.shape == (N, H, W, COUT)
    max_err = float(jnp.max(jnp.abs(out - ref)))
    # bf16 MXU operands with f32 accumulation vs an all-f32 XLA reference.
    assert max_err < 5e-2, max_err
    print("KERNEL_OK")
</pallas_src>

<mosaic_0001>
module attributes {stable_mosaic.version = 11 : i64} {
  func.func @_fused_kernel(%arg0: i32, %arg1: memref<1x256x128xf32, #tpu.memory_space<vmem>>, %arg2: memref<256x1xf32, #tpu.memory_space<vmem>>, %arg3: memref<256x1xf32, #tpu.memory_space<vmem>>, %arg4: memref<9x128x128xbf16, #tpu.memory_space<vmem>>, %arg5: memref<1x128xf32, #tpu.memory_space<vmem>>, %arg6: memref<1x128xf32, #tpu.memory_space<vmem>>, %arg7: memref<1x128xf32, #tpu.memory_space<vmem>>, %arg8: memref<9x128x128xbf16, #tpu.memory_space<vmem>>, %arg9: memref<1x128xf32, #tpu.memory_space<vmem>>, %arg10: memref<128x128xbf16, #tpu.memory_space<vmem>>, %arg11: memref<1x128xf32, #tpu.memory_space<vmem>>, %arg12: memref<1x256x128xf32, #tpu.memory_space<vmem>>, %arg13: memref<256x128xf32, #tpu.memory_space<vmem>>, %arg14: memref<304x128xf32, #tpu.memory_space<vmem>>) attributes {dimension_semantics = [#tpu.dimension_semantics<parallel>], iteration_bounds = array<i64: 2>, scalar_prefetch = 0 : i64, scratch_operands = 2 : i64, tpu.core_type = #tpu.core_type<tc>, window_params = [{transform_indices = @transform_0, window_bounds = array<i64: 1, 256, 128>}, {pipeline_mode = #tpu.pipeline_mode<synchronous>, transform_indices = @transform_1, window_bounds = array<i64: 256, 1>}, {pipeline_mode = #tpu.pipeline_mode<synchronous>, transform_indices = @transform_2, window_bounds = array<i64: 256, 1>}, {pipeline_mode = #tpu.pipeline_mode<synchronous>, transform_indices = @transform_3, window_bounds = array<i64: 9, 128, 128>}, {pipeline_mode = #tpu.pipeline_mode<synchronous>, transform_indices = @transform_4, window_bounds = array<i64: 1, 128>}, {pipeline_mode = #tpu.pipeline_mode<synchronous>, transform_indices = @transform_5, window_bounds = array<i64: 1, 128>}, {pipeline_mode = #tpu.pipeline_mode<synchronous>, transform_indices = @transform_6, window_bounds = array<i64: 1, 128>}, {pipeline_mode = #tpu.pipeline_mode<synchronous>, transform_indices = @transform_7, window_bounds = array<i64: 9, 128, 128>}, {pipeline_mode = #tpu.pipeline_mode<synchronous>, transform_indices = @transform_8, window_bounds = array<i64: 1, 128>}, {pipeline_mode = #tpu.pipeline_mode<synchronous>, transform_indices = @transform_9, window_bounds = array<i64: 128, 128>}, {pipeline_mode = #tpu.pipeline_mode<synchronous>, transform_indices = @transform_10, window_bounds = array<i64: 1, 128>}, {transform_indices = @transform_11, window_bounds = array<i64: 1, 256, 128>}]} {
    %cst = arith.constant 0.000000e+00 : f32
    %0 = vector.broadcast %cst : f32 to vector<24x128xf32>
    %c0 = arith.constant 0 : index
    %c0_0 = arith.constant 0 : index
    %1 = vector.load %arg14[%c0, %c0_0] : memref<304x128xf32, #tpu.memory_space<vmem>>, vector<24x128xf32>
    tpu.vector_store %arg14[%c0, %c0_0], %0 {strides = array<i32>} : memref<304x128xf32, #tpu.memory_space<vmem>>, vector<24x128xf32>,
    %cst_1 = arith.constant 0.000000e+00 : f32
    %2 = vector.broadcast %cst_1 : f32 to vector<24x128xf32>
    %c280 = arith.constant 280 : index
    %c0_2 = arith.constant 0 : index
    %3 = vector.load %arg14[%c280, %c0_2] : memref<304x128xf32, #tpu.memory_space<vmem>>, vector<24x128xf32>
    tpu.vector_store %arg14[%c280, %c0_2], %2 {strides = array<i32>} : memref<304x128xf32, #tpu.memory_space<vmem>>, vector<24x128xf32>,
    %c0_3 = arith.constant 0 : index
    %c0_4 = arith.constant 0 : index
    %4 = vector.load %arg2[%c0_3, %c0_4] : memref<256x1xf32, #tpu.memory_space<vmem>>, vector<256x1xf32>
    %c0_5 = arith.constant 0 : index
    %c0_6 = arith.constant 0 : index
    %5 = vector.load %arg3[%c0_5, %c0_6] : memref<256x1xf32, #tpu.memory_space<vmem>>, vector<256x1xf32>
    %c0_7 = arith.constant 0 : index
    %c0_8 = arith.constant 0 : index
    %c0_9 = arith.constant 0 : index
    %6 = vector.load %arg1[%c0_7, %c0_8, %c0_9] : memref<1x256x128xf32, #tpu.memory_space<vmem>>, vector<1x256x128xf32>
    %7 = vector.shape_cast %6 : vector<1x256x128xf32> to vector<256x128xf32>
    %cst_10 = arith.constant 0.000000e+00 : f32
    %8 = vector.broadcast %cst_10 : f32 to vector<256x128xf32>
    %c0_11 = arith.constant 0 : index
    %c0_12 = arith.constant 0 : index
    %9 = vector.load %arg13[%c0_11, %c0_12] : memref<256x128xf32, #tpu.memory_space<vmem>>, vector<256x128xf32>
    tpu.vector_store %arg13[%c0_11, %c0_12], %8 {strides = array<i32>} : memref<256x128xf32, #tpu.memory_space<vmem>>, vector<256x128xf32>,
    %10 = vector.broadcast %4 : vector<256x1xf32> to vector<256x128xf32>
    %11 = arith.mulf %7, %10 : vector<256x128xf32>
    %c24 = arith.constant 24 : index
    %c0_13 = arith.constant 0 : index
    %12 = vector.load %arg14[%c24, %c0_13] : memref<304x128xf32, #tpu.memory_space<vmem>>, vector<256x128xf32>
    tpu.vector_store %arg14[%c24, %c0_13], %11 {strides = array<i32>} : memref<304x128xf32, #tpu.memory_space<vmem>>, vector<256x128xf32>,
    %c7 = arith.constant 7 : index
    %c0_14 = arith.constant 0 : index
    %13 = vector.load %arg14[%c7, %c0_14] : memref<304x128xf32, #tpu.memory_space<vmem>>, vector<256x128xf32>
    %c0_15 = arith.constant 0 : index
    %c0_16 = arith.constant 0 : index
    %14 = vector.load %arg13[%c0_15, %c0_16] : memref<256x128xf32, #tpu.memory_space<vmem>>, vector<256x128xf32>
    %15 = arith.truncf %13 : vector<256x128xf32> to vector<256x128xbf16>
    %c0_17 = arith.constant 0 : index
    %c0_18 = arith.constant 0 : index
    %c0_19 = arith.constant 0 : index
    %16 = vector.load %arg4[%c0_17, %c0_18, %c0_19] : memref<9x128x128xbf16, #tpu.memory_space<vmem>>, vector<1x128x128xbf16>
    %17 = vector.shape_cast %16 : vector<1x128x128xbf16> to vector<128x128xbf16>
    %cst_20 = arith.constant dense<0.000000e+00> : vector<256x128xf32>
    %18 = tpu.matmul %15, %17, %cst_20 {dimension_numbers = #tpu.dot_dimension_numbers<[1], [0], [0], [1], [0, 0, 1, 1], [], []>} : vector<256x128xbf16>, vector<128x128xbf16>, vector<256x128xf32> -> vector<256x128xf32>
    %19 = arith.addf %14, %18 : vector<256x128xf32>
    %c0_21 = arith.constant 0 : index
    %c0_22 = arith.constant 0 : index
    %20 = vector.load %arg13[%c0_21, %c0_22] : memref<256x128xf32, #tpu.memory_space<vmem>>, vector<256x128xf32>
    tpu.vector_store %arg13[%c0_21, %c0_22], %19 {strides = array<i32>} : memref<256x128xf32, #tpu.memory_space<vmem>>, vector<256x128xf32>,
    %c23 = arith.constant 23 : index
    %c0_23 = arith.constant 0 : index
    %21 = vector.load %arg14[%c23, %c0_23] : memref<304x128xf32, #tpu.memory_space<vmem>>, vector<256x128xf32>
    %c0_24 = arith.constant 0 : index
    %c0_25 = arith.constant 0 : index
    %22 = vector.load %arg13[%c0_24, %c0_25] : memref<256x128xf32, #tpu.memory_space<vmem>>, vector<256x128xf32>
    %23 = arith.truncf %21 : vector<256x128xf32> to vector<256x128xbf16>
    %c3 = arith.constant 3 : index
    %c0_26 = arith.constant 0 : index
    %c0_27 = arith.constant 0 : index
    %24 = vector.load %arg4[%c3, %c0_26, %c0_27] : memref<9x128x128xbf16, #tpu.memory_space<vmem>>, vector<1x128x128xbf16>
    %25 = vector.shape_cast %24 : vector<1x128x128xbf16> to vector<128x128xbf16>
    %cst_28 = arith.constant dense<0.000000e+00> : vector<256x128xf32>
    %26 = tpu.matmul %23, %25, %cst_28 {dimension_numbers = #tpu.dot_dimension_numbers<[1], [0], [0], [1], [0, 0, 1, 1], [], []>} : vector<256x128xbf16>, vector<128x128xbf16>, vector<256x128xf32> -> vector<256x128xf32>
    %27 = arith.addf %22, %26 : vector<256x128xf32>
    %c0_29 = arith.constant 0 : index
    %c0_30 = arith.constant 0 : index
    %28 = vector.load %arg13[%c0_29, %c0_30] : memref<256x128xf32, #tpu.memory_space<vmem>>, vector<256x128xf32>
    tpu.vector_store %arg13[%c0_29, %c0_30], %27 {strides = array<i32>} : memref<256x128xf32, #tpu.memory_space<vmem>>, vector<256x128xf32>,
    %c39 = arith.constant 39 : index
    %c0_31 = arith.constant 0 : index
    %29 = vector.load %arg14[%c39, %c0_31] : memref<304x128xf32, #tpu.memory_space<vmem>>, vector<256x128xf32>
    %c0_32 = arith.constant 0 : index
    %c0_33 = arith.constant 0 : index
    %30 = vector.load %arg13[%c0_32, %c0_33] : memref<256x128xf32, #tpu.memory_space<vmem>>, vector<256x128xf32>
    %31 = arith.truncf %29 : vector<256x128xf32> to vector<256x128xbf16>
    %c6 = arith.constant 6 : index
    %c0_34 = arith.constant 0 : index
    %c0_35 = arith.constant 0 : index
    %32 = vector.load %arg4[%c6, %c0_34, %c0_35] : memref<9x128x128xbf16, #tpu.memory_space<vmem>>, vector<1x128x128xbf16>
    %33 = vector.shape_cast %32 : vector<1x128x128xbf16> to vector<128x128xbf16>
    %cst_36 = arith.constant dense<0.000000e+00> : vector<256x128xf32>
    %34 = tpu.matmul %31, %33, %cst_36 {dimension_numbers = #tpu.dot_dimension_numbers<[1], [0], [0], [1], [0, 0, 1, 1], [], []>} : vector<256x128xbf16>, vector<128x128xbf16>, vector<256x128xf32> -> vector<256x128xf32>
    %35 = arith.addf %30, %34 : vector<256x128xf32>
    %c0_37 = arith.constant 0 : index
    %c0_38 = arith.constant 0 : index
    %36 = vector.load %arg13[%c0_37, %c0_38] : memref<256x128xf32, #tpu.memory_space<vmem>>, vector<256x128xf32>
    tpu.vector_store %arg13[%c0_37, %c0_38], %35 {strides = array<i32>} : memref<256x128xf32, #tpu.memory_space<vmem>>, vector<256x128xf32>,
    %c24_39 = arith.constant 24 : index
    %c0_40 = arith.constant 0 : index
    %37 = vector.load %arg14[%c24_39, %c0_40] : memref<304x128xf32, #tpu.memory_space<vmem>>, vector<256x128xf32>
    tpu.vector_store %arg14[%c24_39, %c0_40], %7 {strides = array<i32>} : memref<304x128xf32, #tpu.memory_space<vmem>>, vector<256x128xf32>,
    %c8 = arith.constant 8 : index
    %c0_41 = arith.constant 0 : index
    %38 = vector.load %arg14[%c8, %c0_41] : memref<304x128xf32, #tpu.memory_space<vmem>>, vector<256x128xf32>
    %c0_42 = arith.constant 0 : index
    %c0_43 = arith.constant 0 : index
    %39 = vector.load %arg13[%c0_42, %c0_43] : memref<256x128xf32, #tpu.memory_space<vmem>>, vector<256x128xf32>
    %40 = arith.truncf %38 : vector<256x128xf32> to vector<256x128xbf16>
    %c1 = arith.constant 1 : index
    %c0_44 = arith.constant 0 : index
    %c0_45 = arith.constant 0 : index
    %41 = vector.load %arg4[%c1, %c0_44, %c0_45] : memref<9x128x128xbf16, #tpu.memory_space<vmem>>, vector<1x128x128xbf16>
    %42 = vector.shape_cast %41 : vector<1x128x128xbf16> to vector<128x128xbf16>
    %cst_46 = arith.constant dense<0.000000e+00> : vector<256x128xf32>
    %43 = tpu.matmul %40, %42, %cst_46 {dimension_numbers = #tpu.dot_dimension_numbers<[1], [0], [0], [1], [0, 0, 1, 1], [], []>} : vector<256x128xbf16>, vector<128x128xbf16>, vector<256x128xf32> -> vector<256x128xf32>
    %44 = arith.addf %39, %43 : vector<256x128xf32>
    %c0_47 = arith.constant 0 : index
    %c0_48 = arith.constant 0 : index
    %45 = vector.load %arg13[%c0_47, %c0_48] : memref<256x128xf32, #tpu.memory_space<vmem>>, vector<256x128xf32>
    tpu.vector_store %arg13[%c0_47, %c0_48], %44 {strides = array<i32>} : memref<256x128xf32, #tpu.memory_space<vmem>>, vector<256x128xf32>,
    %c24_49 = arith.constant 24 : index
    %c0_50 = arith.constant 0 : index
    %46 = vector.load %arg14[%c24_49, %c0_50] : memref<304x128xf32, #tpu.memory_space<vmem>>, vector<256x128xf32>
    %c0_51 = arith.constant 0 : index
    %c0_52 = arith.constant 0 : index
    %47 = vector.load %arg13[%c0_51, %c0_52] : memref<256x128xf32, #tpu.memory_space<vmem>>, vector<256x128xf32>
    %48 = arith.truncf %46 : vector<256x128xf32> to vector<256x128xbf16>
    %c4 = arith.constant 4 : index
    %c0_53 = arith.constant 0 : index
    %c0_54 = arith.constant 0 : index
    %49 = vector.load %arg4[%c4, %c0_53, %c0_54] : memref<9x128x128xbf16, #tpu.memory_space<vmem>>, vector<1x128x128xbf16>
    %50 = vector.shape_cast %49 : vector<1x128x128xbf16> to vector<128x128xbf16>
    %cst_55 = arith.constant dense<0.000000e+00> : vector<256x128xf32>
    %51 = tpu.matmul %48, %50, %cst_55 {dimension_numbers = #tpu.dot_dimension_numbers<[1], [0], [0], [1], [0, 0, 1, 1], [], []>} : vector<256x128xbf16>, vector<128x128xbf16>, vector<256x128xf32> -> vector<256x128xf32>
    %52 = arith.addf %47, %51 : vector<256x128xf32>
    %c0_56 = arith.constant 0 : index
    %c0_57 = arith.constant 0 : index
    %53 = vector.load %arg13[%c0_56, %c0_57] : memref<256x128xf32, #tpu.memory_space<vmem>>, vector<256x128xf32>
    tpu.vector_store %arg13[%c0_56, %c0_57], %52 {strides = array<i32>} : memref<256x128xf32, #tpu.memory_space<vmem>>, vector<256x128xf32>,
    %c40 = arith.constant 40 : index
    %c0_58 = arith.constant 0 : index
    %54 = vector.load %arg14[%c40, %c0_58] : memref<304x128xf32, #tpu.memory_space<vmem>>, vector<256x128xf32>
    %c0_59 = arith.constant 0 : index
    %c0_60 = arith.constant 0 : index
    %55 = vector.load %arg13[%c0_59, %c0_60] : memref<256x128xf32, #tpu.memory_space<vmem>>, vector<256x128xf32>
    %56 = arith.truncf %54 : vector<256x128xf32> to vector<256x128xbf16>
    %c7_61 = arith.constant 7 : index
    %c0_62 = arith.constant 0 : index
    %c0_63 = arith.constant 0 : index
    %57 = vector.load %arg4[%c7_61, %c0_62, %c0_63] : memref<9x128x128xbf16, #tpu.memory_space<vmem>>, vector<1x128x128xbf16>
    %58 = vector.shape_cast %57 : vector<1x128x128xbf16> to vector<128x128xbf16>
    %cst_64 = arith.constant dense<0.000000e+00> : vector<256x128xf32>
    %59 = tpu.matmul %56, %58, %cst_64 {dimension_numbers = #tpu.dot_dimension_numbers<[1], [0], [0], [1], [0, 0, 1, 1], [], []>} : vector<256x128xbf16>, vector<128x128xbf16>, vector<256x128xf32> -> vector<256x128xf32>
    %60 = arith.addf %55, %59 : vector<256x128xf32>
    %c0_65 = arith.constant 0 : index
    %c0_66 = arith.constant 0 : index
    %61 = vector.load %arg13[%c0_65, %c0_66] : memref<256x128xf32, #tpu.memory_space<vmem>>, vector<256x128xf32>
    tpu.vector_store %arg13[%c0_65, %c0_66], %60 {strides = array<i32>} : memref<256x128xf32, #tpu.memory_space<vmem>>, vector<256x128xf32>,
    %62 = vector.broadcast %5 : vector<256x1xf32> to vector<256x128xf32>
    %63 = arith.mulf %7, %62 : vector<256x128xf32>
    %c24_67 = arith.constant 24 : index
    %c0_68 = arith.constant 0 : index
    %64 = vector.load %arg14[%c24_67, %c0_68] : memref<304x128xf32, #tpu.memory_space<vmem>>, vector<256x128xf32>
    tpu.vector_store %arg14[%c24_67, %c0_68], %63 {strides = array<i32>} : memref<304x128xf32, #tpu.memory_space<vmem>>, vector<256x128xf32>,
    %c9 = arith.constant 9 : index
    %c0_69 = arith.constant 0 : index
    %65 = vector.load %arg14[%c9, %c0_69] : memref<304x128xf32, #tpu.memory_space<vmem>>, vector<256x128xf32>
    %c0_70 = arith.constant 0 : index
    %c0_71 = arith.constant 0 : index
    %66 = vector.load %arg13[%c0_70, %c0_71] : memref<256x128xf32, #tpu.memory_space<vmem>>, vector<256x128xf32>
    %67 = arith.truncf %65 : vector<256x128xf32> to vector<256x128xbf16>
    %c2 = arith.constant 2 : index
    %c0_72 = arith.constant 0 : index
    %c0_73 = arith.constant 0 : index
    %68 = vector.load %arg4[%c2, %c0_72, %c0_73] : memref<9x128x128xbf16, #tpu.memory_space<vmem>>, vector<1x128x128xbf16>
    %69 = vector.shape_cast %68 : vector<1x128x128xbf16> to vector<128x128xbf16>
    %cst_74 = arith.constant dense<0.000000e+00> : vector<256x128xf32>
    %70 = tpu.matmul %67, %69, %cst_74 {dimension_numbers = #tpu.dot_dimension_numbers<[1], [0], [0], [1], [0, 0, 1, 1], [], []>} : vector<256x128xbf16>, vector<128x128xbf16>, vector<256x128xf32> -> vector<256x128xf32>
    %71 = arith.addf %66, %70 : vector<256x128xf32>
    %c0_75 = arith.constant 0 : index
    %c0_76 = arith.constant 0 : index
    %72 = vector.load %arg13[%c0_75, %c0_76] : memref<256x128xf32, #tpu.memory_space<vmem>>, vector<256x128xf32>
    tpu.vector_store %arg13[%c0_75, %c0_76], %71 {strides = array<i32>} : memref<256x128xf32, #tpu.memory_space<vmem>>, vector<256x128xf32>,
    %c25 = arith.constant 25 : index
    %c0_77 = arith.constant 0 : index
    %73 = vector.load %arg14[%c25, %c0_77] : memref<304x128xf32, #tpu.memory_space<vmem>>, vector<256x128xf32>
    %c0_78 = arith.constant 0 : index
    %c0_79 = arith.constant 0 : index
    %74 = vector.load %arg13[%c0_78, %c0_79] : memref<256x128xf32, #tpu.memory_space<vmem>>, vector<256x128xf32>
    %75 = arith.truncf %73 : vector<256x128xf32> to vector<256x128xbf16>
    %c5 = arith.constant 5 : index
    %c0_80 = arith.constant 0 : index
    %c0_81 = arith.constant 0 : index
    %76 = vector.load %arg4[%c5, %c0_80, %c0_81] : memref<9x128x128xbf16, #tpu.memory_space<vmem>>, vector<1x128x128xbf16>
    %77 = vector.shape_cast %76 : vector<1x128x128xbf16> to vector<128x128xbf16>
    %cst_82 = arith.constant dense<0.000000e+00> : vector<256x128xf32>
    %78 = tpu.matmul %75, %77, %cst_82 {dimension_numbers = #tpu.dot_dimension_numbers<[1], [0], [0], [1], [0, 0, 1, 1], [], []>} : vector<256x128xbf16>, vector<128x128xbf16>, vector<256x128xf32> -> vector<256x128xf32>
    %79 = arith.addf %74, %78 : vector<256x128xf32>
    %c0_83 = arith.constant 0 : index
    %c0_84 = arith.constant 0 : index
    %80 = vector.load %arg13[%c0_83, %c0_84] : memref<256x128xf32, #tpu.memory_space<vmem>>, vector<256x128xf32>
    tpu.vector_store %arg13[%c0_83, %c0_84], %79 {strides = array<i32>} : memref<256x128xf32, #tpu.memory_space<vmem>>, vector<256x128xf32>,
    %c41 = arith.constant 41 : index
    %c0_85 = arith.constant 0 : index
    %81 = vector.load %arg14[%c41, %c0_85] : memref<304x128xf32, #tpu.memory_space<vmem>>, vector<256x128xf32>
    %c0_86 = arith.constant 0 : index
    %c0_87 = arith.constant 0 : index
    %82 = vector.load %arg13[%c0_86, %c0_87] : memref<256x128xf32, #tpu.memory_space<vmem>>, vector<256x128xf32>
    %83 = arith.truncf %81 : vector<256x128xf32> to vector<256x128xbf16>
    %c8_88 = arith.constant 8 : index
    %c0_89 = arith.constant 0 : index
    %c0_90 = arith.constant 0 : index
    %84 = vector.load %arg4[%c8_88, %c0_89, %c0_90] : memref<9x128x128xbf16, #tpu.memory_space<vmem>>, vector<1x128x128xbf16>
    %85 = vector.shape_cast %84 : vector<1x128x128xbf16> to vector<128x128xbf16>
    %cst_91 = arith.constant dense<0.000000e+00> : vector<256x128xf32>
    %86 = tpu.matmul %83, %85, %cst_91 {dimension_numbers = #tpu.dot_dimension_numbers<[1], [0], [0], [1], [0, 0, 1, 1], [], []>} : vector<256x128xbf16>, vector<128x128xbf16>, vector<256x128xf32> -> vector<256x128xf32>
    %87 = arith.addf %82, %86 : vector<256x128xf32>
    %c0_92 = arith.constant 0 : index
    %c0_93 = arith.constant 0 : index
    %88 = vector.load %arg13[%c0_92, %c0_93] : memref<256x128xf32, #tpu.memory_space<vmem>>, vector<256x128xf32>
    tpu.vector_store %arg13[%c0_92, %c0_93], %87 {strides = array<i32>} : memref<256x128xf32, #tpu.memory_space<vmem>>, vector<256x128xf32>,
    %c0_94 = arith.constant 0 : index
    %c0_95 = arith.constant 0 : index
    %89 = vector.load %arg13[%c0_94, %c0_95] : memref<256x128xf32, #tpu.memory_space<vmem>>, vector<256x128xf32>
    %c0_96 = arith.constant 0 : index
    %c0_97 = arith.constant 0 : index
    %90 = vector.load %arg5[%c0_96, %c0_97] : memref<1x128xf32, #tpu.memory_space<vmem>>, vector<1x128xf32>
    %91 = vector.broadcast %90 : vector<1x128xf32> to vector<256x128xf32>
    %92 = arith.addf %89, %91 : vector<256x128xf32>
    %cst_98 = arith.constant 0.000000e+00 : f32
    %93 = vector.broadcast %cst_98 : f32 to vector<256x128xf32>
    %94 = arith.cmpf ogt, %92, %93 : vector<256x128xf32>
    %cst_99 = arith.constant 2.000000e-01 : f32
    %95 = vector.broadcast %cst_99 : f32 to vector<256x128xf32>
    %96 = arith.mulf %95, %92 : vector<256x128xf32>
    %97 = arith.select %94, %92, %96 : vector<256x128xi1>, vector<256x128xf32>
    %cst_100 = arith.constant dense<0.000000e+00> : vector<128xf32>
    %98 = vector.multi_reduction <add>, %97, %cst_100 [0] : vector<256x128xf32> to vector<128xf32>
    %99 = vector.shape_cast %98 : vector<128xf32> to vector<1x128xf32>
    %cst_101 = arith.constant 3.906250e-03 : f32
    %100 = vector.broadcast %cst_101 : f32 to vector<1x128xf32>
    %101 = arith.mulf %99, %100 : vector<1x128xf32>
    %102 = arith.mulf %97, %97 : vector<256x128xf32>
    %cst_102 = arith.constant dense<0.000000e+00> : vector<128xf32>
    %103 = vector.multi_reduction <add>, %102, %cst_102 [0] : vector<256x128xf32> to vector<128xf32>
    %104 = vector.shape_cast %103 : vector<128xf32> to vector<1x128xf32>
    %cst_103 = arith.constant 3.906250e-03 : f32
    %105 = vector.broadcast %cst_103 : f32 to vector<1x128xf32>
    %106 = arith.mulf %104, %105 : vector<1x128xf32>
    %107 = arith.mulf %101, %101 : vector<1x128xf32>
    %108 = arith.subf %106, %107 : vector<1x128xf32>
    %cst_104 = arith.constant 0.000000e+00 : f32
    %109 = vector.broadcast %cst_104 : f32 to vector<1x128xf32>
    %110 = arith.maximumf %108, %109 : vector<1x128xf32>
    %111 = vector.broadcast %101 : vector<1x128xf32> to vector<256x128xf32>
    %112 = arith.subf %97, %111 : vector<256x128xf32>
    %cst_105 = arith.constant 9.99999974E-6 : f32
    %113 = vector.broadcast %cst_105 : f32 to vector<1x128xf32>
    %114 = arith.addf %110, %113 : vector<1x128xf32>
    %115 = math.rsqrt %114 : vector<1x128xf32>
    %116 = vector.broadcast %115 : vector<1x128xf32> to vector<256x128xf32>
    %117 = arith.mulf %112, %116 : vector<256x128xf32>
    %c0_106 = arith.constant 0 : index
    %c0_107 = arith.constant 0 : index
    %118 = vector.load %arg6[%c0_106, %c0_107] : memref<1x128xf32, #tpu.memory_space<vmem>>, vector<1x128xf32>
    %119 = vector.broadcast %118 : vector<1x128xf32> to vector<256x128xf32>
    %120 = arith.mulf %117, %119 : vector<256x128xf32>
    %c0_108 = arith.constant 0 : index
    %c0_109 = arith.constant 0 : index
    %121 = vector.load %arg7[%c0_108, %c0_109] : memref<1x128xf32, #tpu.memory_space<vmem>>, vector<1x128xf32>
    %122 = vector.broadcast %121 : vector<1x128xf32> to vector<256x128xf32>
    %123 = arith.addf %120, %122 : vector<256x128xf32>
    %124 = tpu.iota {dimensions = array<i32: 1>} : vector<1x128xi32>
    %c4_i32 = arith.constant 4 : i32
    %125 = vector.broadcast %c4_i32 : i32 to vector<1x128xi32>
    %126 = arith.cmpi slt, %124, %125 : vector<1x128xi32>
    %127 = vector.shape_cast %126 : vector<1x128xi1> to vector<1x128xi1>
    %128 = vector.broadcast %127 : vector<1x128xi1> to vector<256x128xi1>
    %129 = arith.select %128, %123, %97 : vector<256x128xi1>, vector<256x128xf32>
    %cst_110 = arith.constant 0.000000e+00 : f32
    %130 = vector.broadcast %cst_110 : f32 to vector<256x128xf32>
    %c0_111 = arith.constant 0 : index
    %c0_112 = arith.constant 0 : index
    %131 = vector.load %arg13[%c0_111, %c0_112] : memref<256x128xf32, #tpu.memory_space<vmem>>, vector<256x128xf32>
    tpu.vector_store %arg13[%c0_111, %c0_112], %130 {strides = array<i32>} : memref<256x128xf32, #tpu.memory_space<vmem>>, vector<256x128xf32>,
    %132 = vector.broadcast %4 : vector<256x1xf32> to vector<256x128xf32>
    %133 = arith.mulf %129, %132 : vector<256x128xf32>
    %c24_113 = arith.constant 24 : index
    %c0_114 = arith.constant 0 : index
    %134 = vector.load %arg14[%c24_113, %c0_114] : memref<304x128xf32, #tpu.memory_space<vmem>>, vector<256x128xf32>
    tpu.vector_store %arg14[%c24_113, %c0_114], %133 {strides = array<i32>} : memref<304x128xf32, #tpu.memory_space<vmem>>, vector<256x128xf32>,
    %c7_115 = arith.constant 7 : index
    %c0_116 = arith.constant 0 : index
    %135 = vector.load %arg14[%c7_115, %c0_116] : memref<304x128xf32, #tpu.memory_space<vmem>>, vector<256x128xf32>
    %c0_117 = arith.constant 0 : index
    %c0_118 = arith.constant 0 : index
    %136 = vector.load %arg13[%c0_117, %c0_118] : memref<256x128xf32, #tpu.memory_space<vmem>>, vector<256x128xf32>
    %137 = arith.truncf %135 : vector<256x128xf32> to vector<256x128xbf16>
    %c0_119 = arith.constant 0 : index
    %c0_120 = arith.constant 0 : index
    %c0_121 = arith.constant 0 : index
    %138 = vector.load %arg8[%c0_119, %c0_120, %c0_121] : memref<9x128x128xbf16, #tpu.memory_space<vmem>>, vector<1x128x128xbf16>
    %139 = vector.shape_cast %138 : vector<1x128x128xbf16> to vector<128x128xbf16>
    %cst_122 = arith.constant dense<0.000000e+00> : vector<256x128xf32>
    %140 = tpu.matmul %137, %139, %cst_122 {dimension_numbers = #tpu.dot_dimension_numbers<[1], [0], [0], [1], [0, 0, 1, 1], [], []>} : vector<256x128xbf16>, vector<128x128xbf16>, vector<256x128xf32> -> vector<256x128xf32>
    %141 = arith.addf %136, %140 : vector<256x128xf32>
    %c0_123 = arith.constant 0 : index
    %c0_124 = arith.constant 0 : index
    %142 = vector.load %arg13[%c0_123, %c0_124] : memref<256x128xf32, #tpu.memory_space<vmem>>, vector<256x128xf32>
    tpu.vector_store %arg13[%c0_123, %c0_124], %141 {strides = array<i32>} : memref<256x128xf32, #tpu.memory_space<vmem>>, vector<256x128xf32>,
    %c23_125 = arith.constant 23 : index
    %c0_126 = arith.constant 0 : index
    %143 = vector.load %arg14[%c23_125, %c0_126] : memref<304x128xf32, #tpu.memory_space<vmem>>, vector<256x128xf32>
    %c0_127 = arith.constant 0 : index
    %c0_128 = arith.constant 0 : index
    %144 = vector.load %arg13[%c0_127, %c0_128] : memref<256x128xf32, #tpu.memory_space<vmem>>, vector<256x128xf32>
    %145 = arith.truncf %143 : vector<256x128xf32> to vector<256x128xbf16>
    %c3_129 = arith.constant 3 : index
    %c0_130 = arith.constant 0 : index
    %c0_131 = arith.constant 0 : index
    %146 = vector.load %arg8[%c3_129, %c0_130, %c0_131] : memref<9x128x128xbf16, #tpu.memory_space<vmem>>, vector<1x128x128xbf16>
    %147 = vector.shape_cast %146 : vector<1x128x128xbf16> to vector<128x128xbf16>
    %cst_132 = arith.constant dense<0.000000e+00> : vector<256x128xf32>
    %148 = tpu.matmul %145, %147, %cst_132 {dimension_numbers = #tpu.dot_dimension_numbers<[1], [0], [0], [1], [0, 0, 1, 1], [], []>} : vector<256x128xbf16>, vector<128x128xbf16>, vector<256x128xf32> -> vector<256x128xf32>
    %149 = arith.addf %144, %148 : vector<256x128xf32>
    %c0_133 = arith.constant 0 : index
    %c0_134 = arith.constant 0 : index
    %150 = vector.load %arg13[%c0_133, %c0_134] : memref<256x128xf32, #tpu.memory_space<vmem>>, vector<256x128xf32>
    tpu.vector_store %arg13[%c0_133, %c0_134], %149 {strides = array<i32>} : memref<256x128xf32, #tpu.memory_space<vmem>>, vector<256x128xf32>,
    %c39_135 = arith.constant 39 : index
    %c0_136 = arith.constant 0 : index
    %151 = vector.load %arg14[%c39_135, %c0_136] : memref<304x128xf32, #tpu.memory_space<vmem>>, vector<256x128xf32>
    %c0_137 = arith.constant 0 : index
    %c0_138 = arith.constant 0 : index
    %152 = vector.load %arg13[%c0_137, %c0_138] : memref<256x128xf32, #tpu.memory_space<vmem>>, vector<256x128xf32>
    %153 = arith.truncf %151 : vector<256x128xf32> to vector<256x128xbf16>
    %c6_139 = arith.constant 6 : index
    %c0_140 = arith.constant 0 : index
    %c0_141 = arith.constant 0 : index
    %154 = vector.load %arg8[%c6_139, %c0_140, %c0_141] : memref<9x128x128xbf16, #tpu.memory_space<vmem>>, vector<1x128x128xbf16>
    %155 = vector.shape_cast %154 : vector<1x128x128xbf16> to vector<128x128xbf16>
    %cst_142 = arith.constant dense<0.000000e+00> : vector<256x128xf32>
    %156 = tpu.matmul %153, %155, %cst_142 {dimension_numbers = #tpu.dot_dimension_numbers<[1], [0], [0], [1], [0, 0, 1, 1], [], []>} : vector<256x128xbf16>, vector<128x128xbf16>, vector<256x128xf32> -> vector<256x128xf32>
    %157 = arith.addf %152, %156 : vector<256x128xf32>
    %c0_143 = arith.constant 0 : index
    %c0_144 = arith.constant 0 : index
    %158 = vector.load %arg13[%c0_143, %c0_144] : memref<256x128xf32, #tpu.memory_space<vmem>>, vector<256x128xf32>
    tpu.vector_store %arg13[%c0_143, %c0_144], %157 {strides = array<i32>} : memref<256x128xf32, #tpu.memory_space<vmem>>, vector<256x128xf32>,
    %c24_145 = arith.constant 24 : index
    %c0_146 = arith.constant 0 : index
    %159 = vector.load %arg14[%c24_145, %c0_146] : memref<304x128xf32, #tpu.memory_space<vmem>>, vector<256x128xf32>
    tpu.vector_store %arg14[%c24_145, %c0_146], %129 {strides = array<i32>} : memref<304x128xf32, #tpu.memory_space<vmem>>, vector<256x128xf32>,
    %c8_147 = arith.constant 8 : index
    %c0_148 = arith.constant 0 : index
    %160 = vector.load %arg14[%c8_147, %c0_148] : memref<304x128xf32, #tpu.memory_space<vmem>>, vector<256x128xf32>
    %c0_149 = arith.constant 0 : index
    %c0_150 = arith.constant 0 : index
    %161 = vector.load %arg13[%c0_149, %c0_150] : memref<256x128xf32, #tpu.memory_space<vmem>>, vector<256x128xf32>
    %162 = arith.truncf %160 : vector<256x128xf32> to vector<256x128xbf16>
    %c1_151 = arith.constant 1 : index
    %c0_152 = arith.constant 0 : index
    %c0_153 = arith.constant 0 : index
    %163 = vector.load %arg8[%c1_151, %c0_152, %c0_153] : memref<9x128x128xbf16, #tpu.memory_space<vmem>>, vector<1x128x128xbf16>
    %164 = vector.shape_cast %163 : vector<1x128x128xbf16> to vector<128x128xbf16>
    %cst_154 = arith.constant dense<0.000000e+00> : vector<256x128xf32>
    %165 = tpu.matmul %162, %164, %cst_154 {dimension_numbers = #tpu.dot_dimension_numbers<[1], [0], [0], [1], [0, 0, 1, 1], [], []>} : vector<256x128xbf16>, vector<128x128xbf16>, vector<256x128xf32> -> vector<256x128xf32>
    %166 = arith.addf %161, %165 : vector<256x128xf32>
    %c0_155 = arith.constant 0 : index
    %c0_156 = arith.constant 0 : index
    %167 = vector.load %arg13[%c0_155, %c0_156] : memref<256x128xf32, #tpu.memory_space<vmem>>, vector<256x128xf32>
    tpu.vector_store %arg13[%c0_155, %c0_156], %166 {strides = array<i32>} : memref<256x128xf32, #tpu.memory_space<vmem>>, vector<256x128xf32>,
    %c24_157 = arith.constant 24 : index
    %c0_158 = arith.constant 0 : index
    %168 = vector.load %arg14[%c24_157, %c0_158] : memref<304x128xf32, #tpu.memory_space<vmem>>, vector<256x128xf32>
    %c0_159 = arith.constant 0 : index
    %c0_160 = arith.constant 0 : index
    %169 = vector.load %arg13[%c0_159, %c0_160] : memref<256x128xf32, #tpu.memory_space<vmem>>, vector<256x128xf32>
    %170 = arith.truncf %168 : vector<256x128xf32> to vector<256x128xbf16>
    %c4_161 = arith.constant 4 : index
    %c0_162 = arith.constant 0 : index
    %c0_163 = arith.constant 0 : index
    %171 = vector.load %arg8[%c4_161, %c0_162, %c0_163] : memref<9x128x128xbf16, #tpu.memory_space<vmem>>, vector<1x128x128xbf16>
    %172 = vector.shape_cast %171 : vector<1x128x128xbf16> to vector<128x128xbf16>
    %cst_164 = arith.constant dense<0.000000e+00> : vector<256x128xf32>
    %173 = tpu.matmul %170, %172, %cst_164 {dimension_numbers = #tpu.dot_dimension_numbers<[1], [0], [0], [1], [0, 0, 1, 1], [], []>} : vector<256x128xbf16>, vector<128x128xbf16>, vector<256x128xf32> -> vector<256x128xf32>
    %174 = arith.addf %169, %173 : vector<256x128xf32>
    %c0_165 = arith.constant 0 : index
    %c0_166 = arith.constant 0 : index
    %175 = vector.load %arg13[%c0_165, %c0_166] : memref<256x128xf32, #tpu.memory_space<vmem>>, vector<256x128xf32>
    tpu.vector_store %arg13[%c0_165, %c0_166], %174 {strides = array<i32>} : memref<256x128xf32, #tpu.memory_space<vmem>>, vector<256x128xf32>,
    %c40_167 = arith.constant 40 : index
    %c0_168 = arith.constant 0 : index
    %176 = vector.load %arg14[%c40_167, %c0_168] : memref<304x128xf32, #tpu.memory_space<vmem>>, vector<256x128xf32>
    %c0_169 = arith.constant 0 : index
    %c0_170 = arith.constant 0 : index
    %177 = vector.load %arg13[%c0_169, %c0_170] : memref<256x128xf32, #tpu.memory_space<vmem>>, vector<256x128xf32>
    %178 = arith.truncf %176 : vector<256x128xf32> to vector<256x128xbf16>
    %c7_171 = arith.constant 7 : index
    %c0_172 = arith.constant 0 : index
    %c0_173 = arith.constant 0 : index
    %179 = vector.load %arg8[%c7_171, %c0_172, %c0_173] : memref<9x128x128xbf16, #tpu.memory_space<vmem>>, vector<1x128x128xbf16>
    %180 = vector.shape_cast %179 : vector<1x128x128xbf16> to vector<128x128xbf16>
    %cst_174 = arith.constant dense<0.000000e+00> : vector<256x128xf32>
    %181 = tpu.matmul %178, %180, %cst_174 {dimension_numbers = #tpu.dot_dimension_numbers<[1], [0], [0], [1], [0, 0, 1, 1], [], []>} : vector<256x128xbf16>, vector<128x128xbf16>, vector<256x128xf32> -> vector<256x128xf32>
    %182 = arith.addf %177, %181 : vector<256x128xf32>
    %c0_175 = arith.constant 0 : index
    %c0_176 = arith.constant 0 : index
    %183 = vector.load %arg13[%c0_175, %c0_176] : memref<256x128xf32, #tpu.memory_space<vmem>>, vector<256x128xf32>
    tpu.vector_store %arg13[%c0_175, %c0_176], %182 {strides = array<i32>} : memref<256x128xf32, #tpu.memory_space<vmem>>, vector<256x128xf32>,
    %184 = vector.broadcast %5 : vector<256x1xf32> to vector<256x128xf32>
    %185 = arith.mulf %129, %184 : vector<256x128xf32>
    %c24_177 = arith.constant 24 : index
    %c0_178 = arith.constant 0 : index
    %186 = vector.load %arg14[%c24_177, %c0_178] : memref<304x128xf32, #tpu.memory_space<vmem>>, vector<256x128xf32>
    tpu.vector_store %arg14[%c24_177, %c0_178], %185 {strides = array<i32>} : memref<304x128xf32, #tpu.memory_space<vmem>>, vector<256x128xf32>,
    %c9_179 = arith.constant 9 : index
    %c0_180 = arith.constant 0 : index
    %187 = vector.load %arg14[%c9_179, %c0_180] : memref<304x128xf32, #tpu.memory_space<vmem>>, vector<256x128xf32>
    %c0_181 = arith.constant 0 : index
    %c0_182 = arith.constant 0 : index
    %188 = vector.load %arg13[%c0_181, %c0_182] : memref<256x128xf32, #tpu.memory_space<vmem>>, vector<256x128xf32>
    %189 = arith.truncf %187 : vector<256x128xf32> to vector<256x128xbf16>
    %c2_183 = arith.constant 2 : index
    %c0_184 = arith.constant 0 : index
    %c0_185 = arith.constant 0 : index
    %190 = vector.load %arg8[%c2_183, %c0_184, %c0_185] : memref<9x128x128xbf16, #tpu.memory_space<vmem>>, vector<1x128x128xbf16>
    %191 = vector.shape_cast %190 : vector<1x128x128xbf16> to vector<128x128xbf16>
    %cst_186 = arith.constant dense<0.000000e+00> : vector<256x128xf32>
    %192 = tpu.matmul %189, %191, %cst_186 {dimension_numbers = #tpu.dot_dimension_numbers<[1], [0], [0], [1], [0, 0, 1, 1], [], []>} : vector<256x128xbf16>, vector<128x128xbf16>, vector<256x128xf32> -> vector<256x128xf32>
    %193 = arith.addf %188, %192 : vector<256x128xf32>
    %c0_187 = arith.constant 0 : index
    %c0_188 = arith.constant 0 : index
    %194 = vector.load %arg13[%c0_187, %c0_188] : memref<256x128xf32, #tpu.memory_space<vmem>>, vector<256x128xf32>
    tpu.vector_store %arg13[%c0_187, %c0_188], %193 {strides = array<i32>} : memref<256x128xf32, #tpu.memory_space<vmem>>, vector<256x128xf32>,
    %c25_189 = arith.constant 25 : index
    %c0_190 = arith.constant 0 : index
    %195 = vector.load %arg14[%c25_189, %c0_190] : memref<304x128xf32, #tpu.memory_space<vmem>>, vector<256x128xf32>
    %c0_191 = arith.constant 0 : index
    %c0_192 = arith.constant 0 : index
    %196 = vector.load %arg13[%c0_191, %c0_192] : memref<256x128xf32, #tpu.memory_space<vmem>>, vector<256x128xf32>
    %197 = arith.truncf %195 : vector<256x128xf32> to vector<256x128xbf16>
    %c5_193 = arith.constant 5 : index
    %c0_194 = arith.constant 0 : index
    %c0_195 = arith.constant 0 : index
    %198 = vector.load %arg8[%c5_193, %c0_194, %c0_195] : memref<9x128x128xbf16, #tpu.memory_space<vmem>>, vector<1x128x128xbf16>
    %199 = vector.shape_cast %198 : vector<1x128x128xbf16> to vector<128x128xbf16>
    %cst_196 = arith.constant dense<0.000000e+00> : vector<256x128xf32>
    %200 = tpu.matmul %197, %199, %cst_196 {dimension_numbers = #tpu.dot_dimension_numbers<[1], [0], [0], [1], [0, 0, 1, 1], [], []>} : vector<256x128xbf16>, vector<128x128xbf16>, vector<256x128xf32> -> vector<256x128xf32>
    %201 = arith.addf %196, %200 : vector<256x128xf32>
    %c0_197 = arith.constant 0 : index
    %c0_198 = arith.constant 0 : index
    %202 = vector.load %arg13[%c0_197, %c0_198] : memref<256x128xf32, #tpu.memory_space<vmem>>, vector<256x128xf32>
    tpu.vector_store %arg13[%c0_197, %c0_198], %201 {strides = array<i32>} : memref<256x128xf32, #tpu.memory_space<vmem>>, vector<256x128xf32>,
    %c41_199 = arith.constant 41 : index
    %c0_200 = arith.constant 0 : index
    %203 = vector.load %arg14[%c41_199, %c0_200] : memref<304x128xf32, #tpu.memory_space<vmem>>, vector<256x128xf32>
    %c0_201 = arith.constant 0 : index
    %c0_202 = arith.constant 0 : index
    %204 = vector.load %arg13[%c0_201, %c0_202] : memref<256x128xf32, #tpu.memory_space<vmem>>, vector<256x128xf32>
    %205 = arith.truncf %203 : vector<256x128xf32> to vector<256x128xbf16>
    %c8_203 = arith.constant 8 : index
    %c0_204 = arith.constant 0 : index
    %c0_205 = arith.constant 0 : index
    %206 = vector.load %arg8[%c8_203, %c0_204, %c0_205] : memref<9x128x128xbf16, #tpu.memory_space<vmem>>, vector<1x128x128xbf16>
    %207 = vector.shape_cast %206 : vector<1x128x128xbf16> to vector<128x128xbf16>
    %cst_206 = arith.constant dense<0.000000e+00> : vector<256x128xf32>
    %208 = tpu.matmul %205, %207, %cst_206 {dimension_numbers = #tpu.dot_dimension_numbers<[1], [0], [0], [1], [0, 0, 1, 1], [], []>} : vector<256x128xbf16>, vector<128x128xbf16>, vector<256x128xf32> -> vector<256x128xf32>
    %209 = arith.addf %204, %208 : vector<256x128xf32>
    %c0_207 = arith.constant 0 : index
    %c0_208 = arith.constant 0 : index
    %210 = vector.load %arg13[%c0_207, %c0_208] : memref<256x128xf32, #tpu.memory_space<vmem>>, vector<256x128xf32>
    tpu.vector_store %arg13[%c0_207, %c0_208], %209 {strides = array<i32>} : memref<256x128xf32, #tpu.memory_space<vmem>>, vector<256x128xf32>,
    %c0_209 = arith.constant 0 : index
    %c0_210 = arith.constant 0 : index
    %211 = vector.load %arg13[%c0_209, %c0_210] : memref<256x128xf32, #tpu.memory_space<vmem>>, vector<256x128xf32>
    %c0_211 = arith.constant 0 : index
    %c0_212 = arith.constant 0 : index
    %212 = vector.load %arg9[%c0_211, %c0_212] : memref<1x128xf32, #tpu.memory_space<vmem>>, vector<1x128xf32>
    %213 = vector.broadcast %212 : vector<1x128xf32> to vector<256x128xf32>
    %214 = arith.addf %211, %213 : vector<256x128xf32>
    %cst_213 = arith.constant 0.000000e+00 : f32
    %215 = vector.broadcast %cst_213 : f32 to vector<256x128xf32>
    %216 = arith.cmpf ogt, %214, %215 : vector<256x128xf32>
    %cst_214 = arith.constant 2.000000e-01 : f32
    %217 = vector.broadcast %cst_214 : f32 to vector<256x128xf32>
    %218 = arith.mulf %217, %214 : vector<256x128xf32>
    %219 = arith.select %216, %214, %218 : vector<256x128xi1>, vector<256x128xf32>
    %220 = arith.truncf %7 : vector<256x128xf32> to vector<256x128xbf16>
    %c0_215 = arith.constant 0 : index
    %c0_216 = arith.constant 0 : index
    %221 = vector.load %arg10[%c0_215, %c0_216] : memref<128x128xbf16, #tpu.memory_space<vmem>>, vector<128x128xbf16>
    %cst_217 = arith.constant dense<0.000000e+00> : vector<256x128xf32>
    %222 = tpu.matmul %220, %221, %cst_217 {dimension_numbers = #tpu.dot_dimension_numbers<[1], [0], [0], [1], [0, 0, 1, 1], [], []>} : vector<256x128xbf16>, vector<128x128xbf16>, vector<256x128xf32> -> vector<256x128xf32>
    %c0_218 = arith.constant 0 : index
    %c0_219 = arith.constant 0 : index
    %223 = vector.load %arg11[%c0_218, %c0_219] : memref<1x128xf32, #tpu.memory_space<vmem>>, vector<1x128xf32>
    %224 = vector.broadcast %223 : vector<1x128xf32> to vector<256x128xf32>
    %225 = arith.addf %222, %224 : vector<256x128xf32>
    %226 = arith.addf %225, %219 : vector<256x128xf32>
    %c0_220 = arith.constant 0 : index
    %c0_221 = arith.constant 0 : index
    %c0_222 = arith.constant 0 : index
    %227 = vector.load %arg12[%c0_220, %c0_221, %c0_222] : memref<1x256x128xf32, #tpu.memory_space<vmem>>, vector<1x256x128xf32>
    %228 = vector.shape_cast %227 : vector<1x256x128xf32> to vector<256x128xf32>
    %229 = vector.shape_cast %226 : vector<256x128xf32> to vector<1x256x128xf32>
    tpu.vector_store %arg12[%c0_220, %c0_221, %c0_222], %229 {strides = array<i32>} : memref<1x256x128xf32, #tpu.memory_space<vmem>>, vector<1x256x128xf32>,
    return
  }
  func.func @transform_0(%arg0: i32) -> (i32, i32, i32) {
    %c0_i32 = arith.constant 0 : i32
    %c0_i32_0 = arith.constant 0 : i32
    %c0_i32_1 = arith.constant 0 : i32
    return %arg0, %c0_i32, %c0_i32_0 : i32, i32, i32
  }
  func.func @transform_1(%arg0: i32) -> (i32, i32) {
    %c0_i32 = arith.constant 0 : i32
    %c0_i32_0 = arith.constant 0 : i32
    %c0_i32_1 = arith.constant 0 : i32
    return %c0_i32, %c0_i32_0 : i32, i32
  }
  func.func @transform_2(%arg0: i32) -> (i32, i32) {
    %c0_i32 = arith.constant 0 : i32
    %c0_i32_0 = arith.constant 0 : i32
    %c0_i32_1 = arith.constant 0 : i32
    return %c0_i32, %c0_i32_0 : i32, i32
  }
  func.func @transform_3(%arg0: i32) -> (i32, i32, i32) {
    %c0_i32 = arith.constant 0 : i32
    %c0_i32_0 = arith.constant 0 : i32
    %c0_i32_1 = arith.constant 0 : i32
    %c0_i32_2 = arith.constant 0 : i32
    return %c0_i32, %c0_i32_0, %c0_i32_1 : i32, i32, i32
  }
  func.func @transform_4(%arg0: i32) -> (i32, i32) {
    %c0_i32 = arith.constant 0 : i32
    %c0_i32_0 = arith.constant 0 : i32
    %c0_i32_1 = arith.constant 0 : i32
    return %c0_i32, %c0_i32_0 : i32, i32
  }
  func.func @transform_5(%arg0: i32) -> (i32, i32) {
    %c0_i32 = arith.constant 0 : i32
    %c0_i32_0 = arith.constant 0 : i32
    %c0_i32_1 = arith.constant 0 : i32
    return %c0_i32, %c0_i32_0 : i32, i32
  }
  func.func @transform_6(%arg0: i32) -> (i32, i32) {
    %c0_i32 = arith.constant 0 : i32
    %c0_i32_0 = arith.constant 0 : i32
    %c0_i32_1 = arith.constant 0 : i32
    return %c0_i32, %c0_i32_0 : i32, i32
  }
  func.func @transform_7(%arg0: i32) -> (i32, i32, i32) {
    %c0_i32 = arith.constant 0 : i32
    %c0_i32_0 = arith.constant 0 : i32
    %c0_i32_1 = arith.constant 0 : i32
    %c0_i32_2 = arith.constant 0 : i32
    return %c0_i32, %c0_i32_0, %c0_i32_1 : i32, i32, i32
  }
  func.func @transform_8(%arg0: i32) -> (i32, i32) {
    %c0_i32 = arith.constant 0 : i32
    %c0_i32_0 = arith.constant 0 : i32
    %c0_i32_1 = arith.constant 0 : i32
    return %c0_i32, %c0_i32_0 : i32, i32
  }
  func.func @transform_9(%arg0: i32) -> (i32, i32) {
    %c0_i32 = arith.constant 0 : i32
    %c0_i32_0 = arith.constant 0 : i32
    %c0_i32_1 = arith.constant 0 : i32
    return %c0_i32, %c0_i32_0 : i32, i32
  }
  func.func @transform_10(%arg0: i32) -> (i32, i32) {
    %c0_i32 = arith.constant 0 : i32
    %c0_i32_0 = arith.constant 0 : i32
    %c0_i32_1 = arith.constant 0 : i32
    return %c0_i32, %c0_i32_0 : i32, i32
  }
  func.func @transform_11(%arg0: i32) -> (i32, i32, i32) {
    %c0_i32 = arith.constant 0 : i32
    %c0_i32_0 = arith.constant 0 : i32
    %c0_i32_1 = arith.constant 0 : i32
    return %arg0, %c0_i32, %c0_i32_0 : i32, i32, i32
  }
}

</mosaic_0001>

<llo_original>
// kernel: hin_res_block.1
$region0: #{hin_res_block.1}
  #allocation0 [shape = 'u32[]', space=smem, size = 0x4, offset = 0x4, fixed_abs, tag = 'smem constant byte address 0x4 - core index']
  #allocation1 [shape = 'u32[144,128]{1,0:T(1,128)}', space=vmem, size = 0x12000, scoped, tag = 'internal scratch']
  #allocation2 [shape = 'f32[256,128]{1,0:T(8,128)}', space=vmem, size = 0x20000, scoped, tag = 'scratch operand']
  #allocation3 [shape = 'f32[304,128]{1,0:T(8,128)}', space=vmem, size = 0x26000, scoped, tag = 'scratch operand']
  %s0 = inlined_call_operand.vmem [shape: f32[2,256,128], index: 0, kind: input, shape index: {}]
  %s1 = inlined_call_operand.vmem [shape: f32[256,1], index: 1, kind: input, shape index: {}]
  %s2 = inlined_call_operand.vmem [shape: f32[256,1], index: 2, kind: input, shape index: {}]
  %s3 = inlined_call_operand.vmem [shape: bf16[9,128,128], index: 3, kind: input, shape index: {}]
  %s4 = inlined_call_operand.vmem [shape: f32[1,128], index: 4, kind: input, shape index: {}]
  %s5 = inlined_call_operand.vmem [shape: f32[1,128], index: 5, kind: input, shape index: {}]
  %s6 = inlined_call_operand.vmem [shape: f32[1,128], index: 6, kind: input, shape index: {}]
  %s7 = inlined_call_operand.vmem [shape: bf16[9,128,128], index: 7, kind: input, shape index: {}]
  %s8 = inlined_call_operand.vmem [shape: f32[1,128], index: 8, kind: input, shape index: {}]
  %s9 = inlined_call_operand.vmem [shape: bf16[128,128], index: 9, kind: input, shape index: {}]
  %s10 = inlined_call_operand.vmem [shape: f32[1,128], index: 10, kind: input, shape index: {}]
  %s11 = inlined_call_operand.vmem [shape: f32[2,256,128], index: 11, kind: output, shape index: {}]
  %s12 = sld [smem:[#allocation0]]
  $region77: #{hin_res_block.1} parent=0
    _
  %s14 = ssub.s32 1, %s12
  %s15 = scalar_select 0, %s14, %s12
  loop: start=0, step=1, limit=4
  $region2: #{hin_res_block.1} parent=0 // loop_pre_header
    _
  $region3: #{hin_res_block.1} parent=0 // loop_header
    %s17 = sphi 0, %s21
    %p18 = scmp.ge.s32.totalorder %s17, 4
    %s27 = sphi 0, %s29
    %s30 = sphi 0, %s27
    %s31 = sphi 0, %s30
    %s47 = sphi 0, %s31
    %s51 = sphi 0, %s51
    %s53 = sphi 0, %s51
    %s54 = sphi 0, %s53
    %s68 = sphi 0, %s54
    %s72 = sphi 0, %s72
    %s74 = sphi 0, %s72
    %s75 = sphi 0, %s74
    %s89 = sphi 0, %s75
    %s93 = sphi 0, %s93
    %s95 = sphi 0, %s93
    %s96 = sphi 0, %s95
    %s110 = sphi 0, %s96
    %s114 = sphi 0, %s114
    %s116 = sphi 0, %s114
    %s117 = sphi 0, %s116
    %s131 = sphi 0, %s117
    %s135 = sphi 0, %s135
    %s137 = sphi 0, %s135
    %s138 = sphi 0, %s137
    %s152 = sphi 0, %s138
    %s156 = sphi 0, %s156
    %s158 = sphi 0, %s156
    %s159 = sphi 0, %s158
    %s173 = sphi 0, %s159
    %s177 = sphi 0, %s177
    %s179 = sphi 0, %s177
    %s180 = sphi 0, %s179
    %s194 = sphi 0, %s180
    %s198 = sphi 0, %s198
    %s200 = sphi 0, %s198
    %s201 = sphi 0, %s200
    %s215 = sphi 0, %s201
    %s219 = sphi 0, %s219
    %s221 = sphi 0, %s219
    %s222 = sphi 0, %s221
    %s236 = sphi 0, %s222
    %s240 = sphi 0, %s240
    %s242 = sphi 0, %s240
    %s243 = sphi 0, %s242
    %s257 = sphi 0, %s243
    %s263 = sphi 0, %s265
    %s266 = sphi 0, %s263
    %s267 = sphi 0, %s266
    %s283 = sphi 0, %s267
  $region4: #{hin_res_block.1} parent=0 // loop_header_branch
    %20 = sbr.rel (%p18) target = $region8
  $region5: #{hin_res_block.1} parent=0 // loop_body
    %s22 = ssub.s32 %s17, 1
    %s23 = ssub.s32 %s17, 2
    %s24 = sadd.s32 %s17, 1
    %s25 = ssub.s32 %s17, %s24
    %p26 = scmp.eq.s32.totalorder %s25, 0
    %s28 = sadd.s32 %s27, 1
    %s29 = scalar_select %p26, %s27, %s28
    %p32 = pneg %p26
    %p33 = scmp.eq.s32.totalorder %s17, 1
    %p34 = por %p32, %p33
    %p35 = scmp.ne.s32.totalorder %s27, %s30
    %p36 = scmp.eq.s32.totalorder %s17, 0
    %p37 = por %p35, %p36
    %p38 = scmp.ne.s32.totalorder %s27, %s30
    %p39 = scmp.eq.s32.totalorder %s22, 1
    %p40 = por %p38, %p39
    %p41 = scmp.ne.s32.totalorder %s30, %s31
    %p42 = scmp.eq.s32.totalorder %s22, 0
    %p43 = por %p41, %p42
    %p44 = scmp.ne.s32.totalorder %s30, %s31
    %p45 = scmp.eq.s32.totalorder %s23, 1
    %p46 = por %p44, %p45
    %p48 = scmp.ne.s32.totalorder %s31, %s47
    %p49 = scmp.eq.s32.totalorder %s23, 0
    %p50 = por %p48, %p49
    %s52 = sadd.s32 %s51, 1
    %p55 = scmp.eq.s32.totalorder %s17, 1
    %p56 = scmp.ne.s32.totalorder %s51, %s53
    %p57 = scmp.eq.s32.totalorder %s17, 0
    %p58 = por %p56, %p57
    %p59 = scmp.ne.s32.totalorder %s51, %s53
    %p60 = scmp.eq.s32.totalorder %s22, 1
    %p61 = por %p59, %p60
    %p62 = scmp.ne.s32.totalorder %s53, %s54
    %p63 = scmp.eq.s32.totalorder %s22, 0
    %p64 = por %p62, %p63
    %p65 = scmp.ne.s32.totalorder %s53, %s54
    %p66 = scmp.eq.s32.totalorder %s23, 1
    %p67 = por %p65, %p66
    %p69 = scmp.ne.s32.totalorder %s54, %s68
    %p70 = scmp.eq.s32.totalorder %s23, 0
    %p71 = por %p69, %p70
    %s73 = sadd.s32 %s72, 1
    %p76 = scmp.eq.s32.totalorder %s17, 1
    %p77 = scmp.ne.s32.totalorder %s72, %s74
    %p78 = scmp.eq.s32.totalorder %s17, 0
    %p79 = por %p77, %p78
    %p80 = scmp.ne.s32.totalorder %s72, %s74
    %p81 = scmp.eq.s32.totalorder %s22, 1
    %p82 = por %p80, %p81
    %p83 = scmp.ne.s32.totalorder %s74, %s75
    %p84 = scmp.eq.s32.totalorder %s22, 0
    %p85 = por %p83, %p84
    %p86 = scmp.ne.s32.totalorder %s74, %s75
    %p87 = scmp.eq.s32.totalorder %s23, 1
    %p88 = por %p86, %p87
    %p90 = scmp.ne.s32.totalorder %s75, %s89
    %p91 = scmp.eq.s32.totalorder %s23, 0
    %p92 = por %p90, %p91
    %s94 = sadd.s32 %s93, 1
    %p97 = scmp.eq.s32.totalorder %s17, 1
    %p98 = scmp.ne.s32.totalorder %s93, %s95
    %p99 = scmp.eq.s32.totalorder %s17, 0
    %p100 = por %p98, %p99
    %p101 = scmp.ne.s32.totalorder %s93, %s95
    %p102 = scmp.eq.s32.totalorder %s22, 1
    %p103 = por %p101, %p102
    %p104 = scmp.ne.s32.totalorder %s95, %s96
    %p105 = scmp.eq.s32.totalorder %s22, 0
    %p106 = por %p104, %p105
    %p107 = scmp.ne.s32.totalorder %s95, %s96
    %p108 = scmp.eq.s32.totalorder %s23, 1
    %p109 = por %p107, %p108
    %p111 = scmp.ne.s32.totalorder %s96, %s110
    %p112 = scmp.eq.s32.totalorder %s23, 0
    %p113 = por %p111, %p112
    %s115 = sadd.s32 %s114, 1
    %p118 = scmp.eq.s32.totalorder %s17, 1
    %p119 = scmp.ne.s32.totalorder %s114, %s116
    %p120 = scmp.eq.s32.totalorder %s17, 0
    %p121 = por %p119, %p120
    %p122 = scmp.ne.s32.totalorder %s114, %s116
    %p123 = scmp.eq.s32.totalorder %s22, 1
    %p124 = por %p122, %p123
    %p125 = scmp.ne.s32.totalorder %s116, %s117
    %p126 = scmp.eq.s32.totalorder %s22, 0
    %p127 = por %p125, %p126
    %p128 = scmp.ne.s32.totalorder %s116, %s117
    %p129 = scmp.eq.s32.totalorder %s23, 1
    %p130 = por %p128, %p129
    %p132 = scmp.ne.s32.totalorder %s117, %s131
    %p133 = scmp.eq.s32.totalorder %s23, 0
    %p134 = por %p132, %p133
    %s136 = sadd.s32 %s135, 1
    %p139 = scmp.eq.s32.totalorder %s17, 1
    %p140 = scmp.ne.s32.totalorder %s135, %s137
    %p141 = scmp.eq.s32.totalorder %s17, 0
    %p142 = por %p140, %p141
    %p143 = scmp.ne.s32.totalorder %s135, %s137
    %p144 = scmp.eq.s32.totalorder %s22, 1
    %p145 = por %p143, %p144
    %p146 = scmp.ne.s32.totalorder %s137, %s138
    %p147 = scmp.eq.s32.totalorder %s22, 0
    %p148 = por %p146, %p147
    %p149 = scmp.ne.s32.totalorder %s137, %s138
    %p150 = scmp.eq.s32.totalorder %s23, 1
    %p151 = por %p149, %p150
    %p153 = scmp.ne.s32.totalorder %s138, %s152
    %p154 = scmp.eq.s32.totalorder %s23, 0
    %p155 = por %p153, %p154
    %s157 = sadd.s32 %s156, 1
    %p160 = scmp.eq.s32.totalorder %s17, 1
    %p161 = scmp.ne.s32.totalorder %s156, %s158
    %p162 = scmp.eq.s32.totalorder %s17, 0
    %p163 = por %p161, %p162
    %p164 = scmp.ne.s32.totalorder %s156, %s158
    %p165 = scmp.eq.s32.totalorder %s22, 1
    %p166 = por %p164, %p165
    %p167 = scmp.ne.s32.totalorder %s158, %s159
    %p168 = scmp.eq.s32.totalorder %s22, 0
    %p169 = por %p167, %p168
    %p170 = scmp.ne.s32.totalorder %s158, %s159
    %p171 = scmp.eq.s32.totalorder %s23, 1
    %p172 = por %p170, %p171
    %p174 = scmp.ne.s32.totalorder %s159, %s173
    %p175 = scmp.eq.s32.totalorder %s23, 0
    %p176 = por %p174, %p175
    %s178 = sadd.s32 %s177, 1
    %p181 = scmp.eq.s32.totalorder %s17, 1
    %p182 = scmp.ne.s32.totalorder %s177, %s179
    %p183 = scmp.eq.s32.totalorder %s17, 0
    %p184 = por %p182, %p183
    %p185 = scmp.ne.s32.totalorder %s177, %s179
    %p186 = scmp.eq.s32.totalorder %s22, 1
    %p187 = por %p185, %p186
    %p188 = scmp.ne.s32.totalorder %s179, %s180
    %p189 = scmp.eq.s32.totalorder %s22, 0
    %p190 = por %p188, %p189
    %p191 = scmp.ne.s32.totalorder %s179, %s180
    %p192 = scmp.eq.s32.totalorder %s23, 1
    %p193 = por %p191, %p192
    %p195 = scmp.ne.s32.totalorder %s180, %s194
    %p196 = scmp.eq.s32.totalorder %s23, 0
    %p197 = por %p195, %p196
    %s199 = sadd.s32 %s198, 1
    %p202 = scmp.eq.s32.totalorder %s17, 1
    %p203 = scmp.ne.s32.totalorder %s198, %s200
    %p204 = scmp.eq.s32.totalorder %s17, 0
    %p205 = por %p203, %p204
    %p206 = scmp.ne.s32.totalorder %s198, %s200
    %p207 = scmp.eq.s32.totalorder %s22, 1
    %p208 = por %p206, %p207
    %p209 = scmp.ne.s32.totalorder %s200, %s201
    %p210 = scmp.eq.s32.totalorder %s22, 0
    %p211 = por %p209, %p210
    %p212 = scmp.ne.s32.totalorder %s200, %s201
    %p213 = scmp.eq.s32.totalorder %s23, 1
    %p214 = por %p212, %p213
    %p216 = scmp.ne.s32.totalorder %s201, %s215
    %p217 = scmp.eq.s32.totalorder %s23, 0
    %p218 = por %p216, %p217
    %s220 = sadd.s32 %s219, 1
    %p223 = scmp.eq.s32.totalorder %s17, 1
    %p224 = scmp.ne.s32.totalorder %s219, %s221
    %p225 = scmp.eq.s32.totalorder %s17, 0
    %p226 = por %p224, %p225
    %p227 = scmp.ne.s32.totalorder %s219, %s221
    %p228 = scmp.eq.s32.totalorder %s22, 1
    %p229 = por %p227, %p228
    %p230 = scmp.ne.s32.totalorder %s221, %s222
    %p231 = scmp.eq.s32.totalorder %s22, 0
    %p232 = por %p230, %p231
    %p233 = scmp.ne.s32.totalorder %s221, %s222
    %p234 = scmp.eq.s32.totalorder %s23, 1
    %p235 = por %p233, %p234
    %p237 = scmp.ne.s32.totalorder %s222, %s236
    %p238 = scmp.eq.s32.totalorder %s23, 0
    %p239 = por %p237, %p238
    %s241 = sadd.s32 %s240, 1
    %p244 = scmp.eq.s32.totalorder %s17, 1
    %p245 = scmp.ne.s32.totalorder %s240, %s242
    %p246 = scmp.eq.s32.totalorder %s17, 0
    %p247 = por %p245, %p246
    %p248 = scmp.ne.s32.totalorder %s240, %s242
    %p249 = scmp.eq.s32.totalorder %s22, 1
    %p250 = por %p248, %p249
    %p251 = scmp.ne.s32.totalorder %s242, %s243
    %p252 = scmp.eq.s32.totalorder %s22, 0
    %p253 = por %p251, %p252
    %p254 = scmp.ne.s32.totalorder %s242, %s243
    %p255 = scmp.eq.s32.totalorder %s23, 1
    %p256 = por %p254, %p255
    %p258 = scmp.ne.s32.totalorder %s243, %s257
    %p259 = scmp.eq.s32.totalorder %s23, 0
    %p260 = por %p258, %p259
    %s261 = ssub.s32 %s17, %s24
    %p262 = scmp.eq.s32.totalorder %s261, 0
    %s264 = sadd.s32 %s263, 1
    %s265 = scalar_select %p262, %s263, %s264
    %p268 = pneg %p262
    %p269 = scmp.eq.s32.totalorder %s17, 1
    %p270 = por %p268, %p269
    %p271 = scmp.ne.s32.totalorder %s263, %s266
    %p272 = scmp.eq.s32.totalorder %s17, 0
    %p273 = por %p271, %p272
    %p274 = scmp.ne.s32.totalorder %s263, %s266
    %p275 = scmp.eq.s32.totalorder %s22, 1
    %p276 = por %p274, %p275
    %p277 = scmp.ne.s32.totalorder %s266, %s267
    %p278 = scmp.eq.s32.totalorder %s22, 0
    %p279 = por %p277, %p278
    %p280 = scmp.ne.s32.totalorder %s266, %s267
    %p281 = scmp.eq.s32.totalorder %s23, 1
    %p282 = por %p280, %p281
    %p284 = scmp.ne.s32.totalorder %s267, %s283
    %p285 = scmp.eq.s32.totalorder %s23, 0
    %p286 = por %p284, %p285
    %p287 = scmp.le.s32.totalorder 1, %s17
    %p288 = scmp.lt.s32.totalorder %s17, 3
    %p289 = pnand %p287, %p288
    %p290 = pneg %p289
    // Predicated region
    $region9: #{hin_res_block.1} parent=5 // pred_check
      _
    $region10: #{hin_res_block.1} parent=5 // pred_check_branch
      %292 = sbr.rel (%p289) target = $region12
    $region11: #{hin_res_block.1} parent=5 // pred_region
      %s293 = ssub.s32 %s17, 1
      // Predicated region
      $region13: #{hin_res_block.1} parent=11 // pred_check
        %p294 = pneg %p64
      $region14: #{hin_res_block.1} parent=11 // pred_check_branch
        %296 = sbr.rel (%p294) target = $region16
      $region15: #{hin_res_block.1} parent=11 // pred_region
        _
      $region16: #{hin_res_block.1} parent=11 // pred_fallthru
        _
      // Predicated region
      $region17: #{hin_res_block.1} parent=11 // pred_check
        %p297 = pneg %p85
      $region18: #{hin_res_block.1} parent=11 // pred_check_branch
        %299 = sbr.rel (%p297) target = $region20
      $region19: #{hin_res_block.1} parent=11 // pred_region
        _
      $region20: #{hin_res_block.1} parent=11 // pred_fallthru
        _
      // Predicated region
      $region21: #{hin_res_block.1} parent=11 // pred_check
        %p300 = pneg %p106
      $region22: #{hin_res_block.1} parent=11 // pred_check_branch
        %302 = sbr.rel (%p300) target = $region24
      $region23: #{hin_res_block.1} parent=11 // pred_region
        _
      $region24: #{hin_res_block.1} parent=11 // pred_fallthru
        _
      // Predicated region
      $region25: #{hin_res_block.1} parent=11 // pred_check
        %p303 = pneg %p127
      $region26: #{hin_res_block.1} parent=11 // pred_check_branch
        %305 = sbr.rel (%p303) target = $region28
      $region27: #{hin_res_block.1} parent=11 // pred_region
        _
      $region28: #{hin_res_block.1} parent=11 // pred_fallthru
        _
      // Predicated region
      $region29: #{hin_res_block.1} parent=11 // pred_check
        %p306 = pneg %p148
      $region30: #{hin_res_block.1} parent=11 // pred_check_branch
        %308 = sbr.rel (%p306) target = $region32
      $region31: #{hin_res_block.1} parent=11 // pred_region
        _
      $region32: #{hin_res_block.1} parent=11 // pred_fallthru
        _
      // Predicated region
      $region33: #{hin_res_block.1} parent=11 // pred_check
        %p309 = pneg %p169
      $region34: #{hin_res_block.1} parent=11 // pred_check_branch
        %311 = sbr.rel (%p309) target = $region36
      $region35: #{hin_res_block.1} parent=11 // pred_region
        _
      $region36: #{hin_res_block.1} parent=11 // pred_fallthru
        _
      // Predicated region
      $region37: #{hin_res_block.1} parent=11 // pred_check
        %p312 = pneg %p190
      $region38: #{hin_res_block.1} parent=11 // pred_check_branch
        %314 = sbr.rel (%p312) target = $region40
      $region39: #{hin_res_block.1} parent=11 // pred_region
        _
      $region40: #{hin_res_block.1} parent=11 // pred_fallthru
        _
      // Predicated region
      $region41: #{hin_res_block.1} parent=11 // pred_check
        %p315 = pneg %p211
      $region42: #{hin_res_block.1} parent=11 // pred_check_branch
        %317 = sbr.rel (%p315) target = $region44
      $region43: #{hin_res_block.1} parent=11 // pred_region
        _
      $region44: #{hin_res_block.1} parent=11 // pred_fallthru
        _
      // Predicated region
      $region45: #{hin_res_block.1} parent=11 // pred_check
        %p318 = pneg %p232
      $region46: #{hin_res_block.1} parent=11 // pred_check_branch
        %320 = sbr.rel (%p318) target = $region48
      $region47: #{hin_res_block.1} parent=11 // pred_region
        _
      $region48: #{hin_res_block.1} parent=11 // pred_fallthru
        _
      // Predicated region
      $region49: #{hin_res_block.1} parent=11 // pred_check
        %p321 = pneg %p253
      $region50: #{hin_res_block.1} parent=11 // pred_check_branch
        %323 = sbr.rel (%p321) target = $region52
      $region51: #{hin_res_block.1} parent=11 // pred_region
        _
      $region52: #{hin_res_block.1} parent=11 // pred_fallthru
        _
    $region12: #{hin_res_block.1} parent=5 // pred_fallthru
      _
    %p324 = scmp.lt.s32.totalorder %s17, 2
    // Predicated region
    $region53: #{hin_res_block.1} parent=5 // pred_check
      %p325 = pneg %p324
    $region54: #{hin_res_block.1} parent=5 // pred_check_branch
      %327 = sbr.rel (%p325) target = $region56
    $region55: #{hin_res_block.1} parent=5 // pred_region
      // Predicated region
      $region57: #{hin_res_block.1} parent=55 // pred_check
        %p328 = pneg %p37
      $region58: #{hin_res_block.1} parent=55 // pred_check_branch
        %330 = sbr.rel (%p328) target = $region60
      $region59: #{hin_res_block.1} parent=55 // pred_region
        %p331 = scmp.lt.s32.totalorder %s17, 1
        %s332 = scalar_select %p331, %s17, 1
        %s333 = smul.addr %s332, 32
        %s334 = smul.addr %s333, 8
        %s335 = scalar_lea.vmem %s0, %s334
      $region60: #{hin_res_block.1} parent=55 // pred_fallthru
        _
    $region56: #{hin_res_block.1} parent=5 // pred_fallthru
      _
    %p336 = scmp.le.s32.totalorder 1, %s17
    %p337 = scmp.lt.s32.totalorder %s17, 3
    %p338 = pnand %p336, %p337
    %p339 = pneg %p338
    // Predicated region
    $region61: #{hin_res_block.1} parent=5 // pred_check
      _
    $region62: #{hin_res_block.1} parent=5 // pred_check_branch
      %341 = sbr.rel (%p338) target = $region64
    $region63: #{hin_res_block.1} parent=5 // pred_region
      %s342 = ssub.s32 %s17, 1
      %p343 = scmp.lt.s32.totalorder %s22, 1
      %s344 = scalar_select %p343, %s22, 1
      %s345 = smul.addr %s344, 32
      %s346 = smul.addr %s345, 8
      %s347 = scalar_lea.vmem %s0, %s346
      %p348 = pneg %p43
      %p349 = pneg %p40
      %p350 = pneg %p64
      %p351 = pneg %p61
      %p352 = pneg %p85
      %p353 = pneg %p82
      %p354 = pneg %p106
      %p355 = pneg %p103
      %p356 = pneg %p127
      %p357 = pneg %p124
      %p358 = pneg %p148
      %p359 = pneg %p145
      %p360 = pneg %p169
      %p361 = pneg %p166
      %p362 = pneg %p190
      %p363 = pneg %p187
      %p364 = pneg %p211
      %p365 = pneg %p208
      %p366 = pneg %p232
      %p367 = pneg %p229
      %p368 = pneg %p253
      %p369 = pneg %p250
      %p370 = pneg %p279
      %p371 = pneg %p276
      %p372 = scmp.lt.s32.totalorder %s22, 1
      %s373 = scalar_select %p372, %s22, 1
      %s374 = smul.addr %s373, 32
      %s375 = smul.addr %s374, 8
      %s376 = scalar_lea.vmem %s11, %s375
      %p377 = scmp.lt.s32.totalorder %s22, 1
      %s378 = scalar_select %p377, %s22, 1
      %s379 = smul.addr %s378, 32
      %s380 = smul.addr %s379, 8
      %s381 = scalar_lea.vmem %s0, %s380
      %p382 = scmp.lt.s32.totalorder %s22, 1
      %s383 = scalar_select %p382, %s22, 1
      %s384 = smul.addr %s383, 32
      %s385 = smul.addr %s384, 8
      %s386 = scalar_lea.vmem %s11, %s385
      %388 = vst [vmem:[#allocation3] sm:$0xff] 0.0
      %389 = vst [vmem:[#allocation3 + $0x8] sm:$0xff] 0.0
      %390 = vst [vmem:[#allocation3 + $0x10] sm:$0xff] 0.0
      %391 = vst [vmem:[#allocation3 + $0x118] sm:$0xff] 0.0
      %392 = vst [vmem:[#allocation3 + $0x120] sm:$0xff] 0.0
      %393 = vst [vmem:[#allocation3 + $0x128] sm:$0xff] 0.0
      %v394 = vld [vmem:[%s1] sm:$0xff]
      %v395 = vld [vmem:[%s1 + $0x8] sm:$0xff]
      %v396 = vld [vmem:[%s1 + $0x10] sm:$0xff]
      %v397 = vld [vmem:[%s1 + $0x18] sm:$0xff]
      %v398 = vld [vmem:[%s1 + $0x20] sm:$0xff]
      %v399 = vld [vmem:[%s1 + $0x28] sm:$0xff]
      %v400 = vld [vmem:[%s1 + $0x30] sm:$0xff]
      %v401 = vld [vmem:[%s1 + $0x38] sm:$0xff]
      %v402 = vld [vmem:[%s1 + $0x40] sm:$0xff]
      %v403 = vld [vmem:[%s1 + $0x48] sm:$0xff]
      %v404 = vld [vmem:[%s1 + $0x50] sm:$0xff]
      %v405 = vld [vmem:[%s1 + $0x58] sm:$0xff]
      %v406 = vld [vmem:[%s1 + $0x60] sm:$0xff]
      %v407 = vld [vmem:[%s1 + $0x68] sm:$0xff]
      %v408 = vld [vmem:[%s1 + $0x70] sm:$0xff]
      %v409 = vld [vmem:[%s1 + $0x78] sm:$0xff]
      %v410 = vld [vmem:[%s1 + $0x80] sm:$0xff]
      %v411 = vld [vmem:[%s1 + $0x88] sm:$0xff]
      %v412 = vld [vmem:[%s1 + $0x90] sm:$0xff]
      %v413 = vld [vmem:[%s1 + $0x98] sm:$0xff]
      %v414 = vld [vmem:[%s1 + $0xa0] sm:$0xff]
      %v415 = vld [vmem:[%s1 + $0xa8] sm:$0xff]
      %v416 = vld [vmem:[%s1 + $0xb0] sm:$0xff]
      %v417 = vld [vmem:[%s1 + $0xb8] sm:$0xff]
      %v418 = vld [vmem:[%s1 + $0xc0] sm:$0xff]
      %v419 = vld [vmem:[%s1 + $0xc8] sm:$0xff]
      %v420 = vld [vmem:[%s1 + $0xd0] sm:$0xff]
      %v421 = vld [vmem:[%s1 + $0xd8] sm:$0xff]
      %v422 = vld [vmem:[%s1 + $0xe0] sm:$0xff]
      %v423 = vld [vmem:[%s1 + $0xe8] sm:$0xff]
      %v424 = vld [vmem:[%s1 + $0xf0] sm:$0xff]
      %v425 = vld [vmem:[%s1 + $0xf8] sm:$0xff]
      %v426 = vld [vmem:[%s2] sm:$0xff]
      %v427 = vld [vmem:[%s2 + $0x8] sm:$0xff]
      %v428 = vld [vmem:[%s2 + $0x10] sm:$0xff]
      %v429 = vld [vmem:[%s2 + $0x18] sm:$0xff]
      %v430 = vld [vmem:[%s2 + $0x20] sm:$0xff]
      %v431 = vld [vmem:[%s2 + $0x28] sm:$0xff]
      %v432 = vld [vmem:[%s2 + $0x30] sm:$0xff]
      %v433 = vld [vmem:[%s2 + $0x38] sm:$0xff]
      %v434 = vld [vmem:[%s2 + $0x40] sm:$0xff]
      %v435 = vld [vmem:[%s2 + $0x48] sm:$0xff]
      %v436 = vld [vmem:[%s2 + $0x50] sm:$0xff]
      %v437 = vld [vmem:[%s2 + $0x58] sm:$0xff]
      %v438 = vld [vmem:[%s2 + $0x60] sm:$0xff]
      %v439 = vld [vmem:[%s2 + $0x68] sm:$0xff]
      %v440 = vld [vmem:[%s2 + $0x70] sm:$0xff]
      %v441 = vld [vmem:[%s2 + $0x78] sm:$0xff]
      %v442 = vld [vmem:[%s2 + $0x80] sm:$0xff]
      %v443 = vld [vmem:[%s2 + $0x88] sm:$0xff]
      %v444 = vld [vmem:[%s2 + $0x90] sm:$0xff]
      %v445 = vld [vmem:[%s2 + $0x98] sm:$0xff]
      %v446 = vld [vmem:[%s2 + $0xa0] sm:$0xff]
      %v447 = vld [vmem:[%s2 + $0xa8] sm:$0xff]
      %v448 = vld [vmem:[%s2 + $0xb0] sm:$0xff]
      %v449 = vld [vmem:[%s2 + $0xb8] sm:$0xff]
      %v450 = vld [vmem:[%s2 + $0xc0] sm:$0xff]
      %v451 = vld [vmem:[%s2 + $0xc8] sm:$0xff]
      %v452 = vld [vmem:[%s2 + $0xd0] sm:$0xff]
      %v453 = vld [vmem:[%s2 + $0xd8] sm:$0xff]
      %v454 = vld [vmem:[%s2 + $0xe0] sm:$0xff]
      %v455 = vld [vmem:[%s2 + $0xe8] sm:$0xff]
      %v456 = vld [vmem:[%s2 + $0xf0] sm:$0xff]
      %v457 = vld [vmem:[%s2 + $0xf8] sm:$0xff]
      %v458 = vld [vmem:[%s381] sm:$0xff]
      %v459 = vld [vmem:[%s381 + $0x8] sm:$0xff]
      %v460 = vld [vmem:[%s381 + $0x10] sm:$0xff]
      %v461 = vld [vmem:[%s381 + $0x18] sm:$0xff]
      %v462 = vld [vmem:[%s381 + $0x20] sm:$0xff]
      %v463 = vld [vmem:[%s381 + $0x28] sm:$0xff]
      %v464 = vld [vmem:[%s381 + $0x30] sm:$0xff]
      %v465 = vld [vmem:[%s381 + $0x38] sm:$0xff]
      %v466 = vld [vmem:[%s381 + $0x40] sm:$0xff]
      %v467 = vld [vmem:[%s381 + $0x48] sm:$0xff]
      %v468 = vld [vmem:[%s381 + $0x50] sm:$0xff]
      %v469 = vld [vmem:[%s381 + $0x58] sm:$0xff]
      %v470 = vld [vmem:[%s381 + $0x60] sm:$0xff]
      %v471 = vld [vmem:[%s381 + $0x68] sm:$0xff]
      %v472 = vld [vmem:[%s381 + $0x70] sm:$0xff]
      %v473 = vld [vmem:[%s381 + $0x78] sm:$0xff]
      %v474 = vld [vmem:[%s381 + $0x80] sm:$0xff]
      %v475 = vld [vmem:[%s381 + $0x88] sm:$0xff]
      %v476 = vld [vmem:[%s381 + $0x90] sm:$0xff]
      %v477 = vld [vmem:[%s381 + $0x98] sm:$0xff]
      %v478 = vld [vmem:[%s381 + $0xa0] sm:$0xff]
      %v479 = vld [vmem:[%s381 + $0xa8] sm:$0xff]
      %v480 = vld [vmem:[%s381 + $0xb0] sm:$0xff]
      %v481 = vld [vmem:[%s381 + $0xb8] sm:$0xff]
      %v482 = vld [vmem:[%s381 + $0xc0] sm:$0xff]
      %v483 = vld [vmem:[%s381 + $0xc8] sm:$0xff]
      %v484 = vld [vmem:[%s381 + $0xd0] sm:$0xff]
      %v485 = vld [vmem:[%s381 + $0xd8] sm:$0xff]
      %v486 = vld [vmem:[%s381 + $0xe0] sm:$0xff]
      %v487 = vld [vmem:[%s381 + $0xe8] sm:$0xff]
      %v488 = vld [vmem:[%s381 + $0xf0] sm:$0xff]
      %v489 = vld [vmem:[%s381 + $0xf8] sm:$0xff]
      %490 = vst [vmem:[#allocation2] sm:$0xff] 0.0
      %491 = vst [vmem:[#allocation2 + $0x8] sm:$0xff] 0.0
      %492 = vst [vmem:[#allocation2 + $0x10] sm:$0xff] 0.0
      %493 = vst [vmem:[#allocation2 + $0x18] sm:$0xff] 0.0
      %494 = vst [vmem:[#allocation2 + $0x20] sm:$0xff] 0.0
      %495 = vst [vmem:[#allocation2 + $0x28] sm:$0xff] 0.0
      %496 = vst [vmem:[#allocation2 + $0x30] sm:$0xff] 0.0
      %497 = vst [vmem:[#allocation2 + $0x38] sm:$0xff] 0.0
      %498 = vst [vmem:[#allocation2 + $0x40] sm:$0xff] 0.0
      %499 = vst [vmem:[#allocation2 + $0x48] sm:$0xff] 0.0
      %500 = vst [vmem:[#allocation2 + $0x50] sm:$0xff] 0.0
      %501 = vst [vmem:[#allocation2 + $0x58] sm:$0xff] 0.0
      %502 = vst [vmem:[#allocation2 + $0x60] sm:$0xff] 0.0
      %503 = vst [vmem:[#allocation2 + $0x68] sm:$0xff] 0.0
      %504 = vst [vmem:[#allocation2 + $0x70] sm:$0xff] 0.0
      %505 = vst [vmem:[#allocation2 + $0x78] sm:$0xff] 0.0
      %506 = vst [vmem:[#allocation2 + $0x80] sm:$0xff] 0.0
      %507 = vst [vmem:[#allocation2 + $0x88] sm:$0xff] 0.0
      %508 = vst [vmem:[#allocation2 + $0x90] sm:$0xff] 0.0
      %509 = vst [vmem:[#allocation2 + $0x98] sm:$0xff] 0.0
      %510 = vst [vmem:[#allocation2 + $0xa0] sm:$0xff] 0.0
      %511 = vst [vmem:[#allocation2 + $0xa8] sm:$0xff] 0.0
      %512 = vst [vmem:[#allocation2 + $0xb0] sm:$0xff] 0.0
      %513 = vst [vmem:[#allocation2 + $0xb8] sm:$0xff] 0.0
      %514 = vst [vmem:[#allocation2 + $0xc0] sm:$0xff] 0.0
      %515 = vst [vmem:[#allocation2 + $0xc8] sm:$0xff] 0.0
      %516 = vst [vmem:[#allocation2 + $0xd0] sm:$0xff] 0.0
      %517 = vst [vmem:[#allocation2 + $0xd8] sm:$0xff] 0.0
      %518 = vst [vmem:[#allocation2 + $0xe0] sm:$0xff] 0.0
      %519 = vst [vmem:[#allocation2 + $0xe8] sm:$0xff] 0.0
      %520 = vst [vmem:[#allocation2 + $0xf0] sm:$0xff] 0.0
      %521 = vst [vmem:[#allocation2 + $0xf8] sm:$0xff] 0.0
      %523 = vset.pattern.permute.xlu0 0
      %524 = vperm.xlu0 %523, %v394
      %v525 = vpop.permute.xlu0 %524
      %528 = vset.pattern.permute.xlu0 0
      %529 = vperm.xlu0 %528, %v395
      %v530 = vpop.permute.xlu0 %529
      %533 = vset.pattern.permute.xlu0 0
      %534 = vperm.xlu0 %533, %v396
      %v535 = vpop.permute.xlu0 %534
      %538 = vset.pattern.permute.xlu0 0
      %539 = vperm.xlu0 %538, %v397
      %v540 = vpop.permute.xlu0 %539
      %543 = vset.pattern.permute.xlu0 0
      %544 = vperm.xlu0 %543, %v398
      %v545 = vpop.permute.xlu0 %544
      %548 = vset.pattern.permute.xlu0 0
      %549 = vperm.xlu0 %548, %v399
      %v550 = vpop.permute.xlu0 %549
      %553 = vset.pattern.permute.xlu0 0
      %554 = vperm.xlu0 %553, %v400
      %v555 = vpop.permute.xlu0 %554
      %558 = vset.pattern.permute.xlu0 0
      %559 = vperm.xlu0 %558, %v401
      %v560 = vpop.permute.xlu0 %559
      %563 = vset.pattern.permute.xlu0 0
      %564 = vperm.xlu0 %563, %v402
      %v565 = vpop.permute.xlu0 %564
      %568 = vset.pattern.permute.xlu0 0
      %569 = vperm.xlu0 %568, %v403
      %v570 = vpop.permute.xlu0 %569
      %573 = vset.pattern.permute.xlu0 0
      %574 = vperm.xlu0 %573, %v404
      %v575 = vpop.permute.xlu0 %574
      %578 = vset.pattern.permute.xlu0 0
      %579 = vperm.xlu0 %578, %v405
      %v580 = vpop.permute.xlu0 %579
      %583 = vset.pattern.permute.xlu0 0
      %584 = vperm.xlu0 %583, %v406
      %v585 = vpop.permute.xlu0 %584
      %588 = vset.pattern.permute.xlu0 0
      %589 = vperm.xlu0 %588, %v407
      %v590 = vpop.permute.xlu0 %589
      %593 = vset.pattern.permute.xlu0 0
      %594 = vperm.xlu0 %593, %v408
      %v595 = vpop.permute.xlu0 %594
      %598 = vset.pattern.permute.xlu0 0
      %599 = vperm.xlu0 %598, %v409
      %v600 = vpop.permute.xlu0 %599
      %603 = vset.pattern.permute.xlu0 0
      %604 = vperm.xlu0 %603, %v410
      %v605 = vpop.permute.xlu0 %604
      %608 = vset.pattern.permute.xlu0 0
      %609 = vperm.xlu0 %608, %v411
      %v610 = vpop.permute.xlu0 %609
      %613 = vset.pattern.permute.xlu0 0
      %614 = vperm.xlu0 %613, %v412
      %v615 = vpop.permute.xlu0 %614
      %618 = vset.pattern.permute.xlu0 0
      %619 = vperm.xlu0 %618, %v413
      %v620 = vpop.permute.xlu0 %619
      %623 = vset.pattern.permute.xlu0 0
      %624 = vperm.xlu0 %623, %v414
      %v625 = vpop.permute.xlu0 %624
      %628 = vset.pattern.permute.xlu0 0
      %629 = vperm.xlu0 %628, %v415
      %v630 = vpop.permute.xlu0 %629
      %633 = vset.pattern.permute.xlu0 0
      %634 = vperm.xlu0 %633, %v416
      %v635 = vpop.permute.xlu0 %634
      %638 = vset.pattern.permute.xlu0 0
      %639 = vperm.xlu0 %638, %v417
      %v640 = vpop.permute.xlu0 %639
      %643 = vset.pattern.permute.xlu0 0
      %644 = vperm.xlu0 %643, %v418
      %v645 = vpop.permute.xlu0 %644
      %648 = vset.pattern.permute.xlu0 0
      %649 = vperm.xlu0 %648, %v419
      %v650 = vpop.permute.xlu0 %649
      %653 = vset.pattern.permute.xlu0 0
      %654 = vperm.xlu0 %653, %v420
      %v655 = vpop.permute.xlu0 %654
      %658 = vset.pattern.permute.xlu0 0
      %659 = vperm.xlu0 %658, %v421
      %v660 = vpop.permute.xlu0 %659
      %663 = vset.pattern.permute.xlu0 0
      %664 = vperm.xlu0 %663, %v422
      %v665 = vpop.permute.xlu0 %664
      %668 = vset.pattern.permute.xlu0 0
      %669 = vperm.xlu0 %668, %v423
      %v670 = vpop.permute.xlu0 %669
      %673 = vset.pattern.permute.xlu0 0
      %674 = vperm.xlu0 %673, %v424
      %v675 = vpop.permute.xlu0 %674
      %678 = vset.pattern.permute.xlu0 0
      %679 = vperm.xlu0 %678, %v425
      %v680 = vpop.permute.xlu0 %679
      %v682 = vmul.f32 %v458, %v525
      %v683 = vmul.f32 %v459, %v530
      %v684 = vmul.f32 %v460, %v535
      %v685 = vmul.f32 %v461, %v540
      %v686 = vmul.f32 %v462, %v545
      %v687 = vmul.f32 %v463, %v550
      %v688 = vmul.f32 %v464, %v555
      %v689 = vmul.f32 %v465, %v560
      %v690 = vmul.f32 %v466, %v565
      %v691 = vmul.f32 %v467, %v570
      %v692 = vmul.f32 %v468, %v575
      %v693 = vmul.f32 %v469, %v580
      %v694 = vmul.f32 %v470, %v585
      %v695 = vmul.f32 %v471, %v590
      %v696 = vmul.f32 %v472, %v595
      %v697 = vmul.f32 %v473, %v600
      %v698 = vmul.f32 %v474, %v605
      %v699 = vmul.f32 %v475, %v610
      %v700 = vmul.f32 %v476, %v615
      %v701 = vmul.f32 %v477, %v620
      %v702 = vmul.f32 %v478, %v625
      %v703 = vmul.f32 %v479, %v630
      %v704 = vmul.f32 %v480, %v635
      %v705 = vmul.f32 %v481, %v640
      %v706 = vmul.f32 %v482, %v645
      %v707 = vmul.f32 %v483, %v650
      %v708 = vmul.f32 %v484, %v655
      %v709 = vmul.f32 %v485, %v660
      %v710 = vmul.f32 %v486, %v665
      %v711 = vmul.f32 %v487, %v670
      %v712 = vmul.f32 %v488, %v675
      %v713 = vmul.f32 %v489, %v680
      %714 = vst [vmem:[#allocation3 + $0x18] sm:$0xff] %v682
      %715 = vst [vmem:[#allocation3 + $0x20] sm:$0xff] %v683
      %716 = vst [vmem:[#allocation3 + $0x28] sm:$0xff] %v684
      %717 = vst [vmem:[#allocation3 + $0x30] sm:$0xff] %v685
      %718 = vst [vmem:[#allocation3 + $0x38] sm:$0xff] %v686
      %719 = vst [vmem:[#allocation3 + $0x40] sm:$0xff] %v687
      %720 = vst [vmem:[#allocation3 + $0x48] sm:$0xff] %v688
      %721 = vst [vmem:[#allocation3 + $0x50] sm:$0xff] %v689
      %722 = vst [vmem:[#allocation3 + $0x58] sm:$0xff] %v690
      %723 = vst [vmem:[#allocation3 + $0x60] sm:$0xff] %v691
      %724 = vst [vmem:[#allocation3 + $0x68] sm:$0xff] %v692
      %725 = vst [vmem:[#allocation3 + $0x70] sm:$0xff] %v693
      %726 = vst [vmem:[#allocation3 + $0x78] sm:$0xff] %v694
      %727 = vst [vmem:[#allocation3 + $0x80] sm:$0xff] %v695
      %728 = vst [vmem:[#allocation3 + $0x88] sm:$0xff] %v696
      %729 = vst [vmem:[#allocation3 + $0x90] sm:$0xff] %v697
      %730 = vst [vmem:[#allocation3 + $0x98] sm:$0xff] %v698
      %731 = vst [vmem:[#allocation3 + $0xa0] sm:$0xff] %v699
      %732 = vst [vmem:[#allocation3 + $0xa8] sm:$0xff] %v700
      %733 = vst [vmem:[#allocation3 + $0xb0] sm:$0xff] %v701
      %734 = vst [vmem:[#allocation3 + $0xb8] sm:$0xff] %v702
      %735 = vst [vmem:[#allocation3 + $0xc0] sm:$0xff] %v703
      %736 = vst [vmem:[#allocation3 + $0xc8] sm:$0xff] %v704
      %737 = vst [vmem:[#allocation3 + $0xd0] sm:$0xff] %v705
      %738 = vst [vmem:[#allocation3 + $0xd8] sm:$0xff] %v706
      %739 = vst [vmem:[#allocation3 + $0xe0] sm:$0xff] %v707
      %740 = vst [vmem:[#allocation3 + $0xe8] sm:$0xff] %v708
      %741 = vst [vmem:[#allocation3 + $0xf0] sm:$0xff] %v709
      %742 = vst [vmem:[#allocation3 + $0xf8] sm:$0xff] %v710
      %743 = vst [vmem:[#allocation3 + $0x100] sm:$0xff] %v711
      %744 = vst [vmem:[#allocation3 + $0x108] sm:$0xff] %v712
      %745 = vst [vmem:[#allocation3 + $0x110] sm:$0xff] %v713
      %v746 = vld [vmem:[#allocation3 + $0x7] sm:$0xff]
      %v747 = vld [vmem:[#allocation3 + $0xf] sm:$0xff]
      %v748 = vld [vmem:[#allocation3 + $0x17] sm:$0xff]
      %v749 = vld [vmem:[#allocation3 + $0x1f] sm:$0xff]
      %v750 = vld [vmem:[#allocation3 + $0x27] sm:$0xff]
      %v751 = vld [vmem:[#allocation3 + $0x2f] sm:$0xff]
      %v752 = vld [vmem:[#allocation3 + $0x37] sm:$0xff]
      %v753 = vld [vmem:[#allocation3 + $0x3f] sm:$0xff]
      %v754 = vld [vmem:[#allocation3 + $0x47] sm:$0xff]
      %v755 = vld [vmem:[#allocation3 + $0x4f] sm:$0xff]
      %v756 = vld [vmem:[#allocation3 + $0x57] sm:$0xff]
      %v757 = vld [vmem:[#allocation3 + $0x5f] sm:$0xff]
      %v758 = vld [vmem:[#allocation3 + $0x67] sm:$0xff]
      %v759 = vld [vmem:[#allocation3 + $0x6f] sm:$0xff]
      %v760 = vld [vmem:[#allocation3 + $0x77] sm:$0xff]
      %v761 = vld [vmem:[#allocation3 + $0x7f] sm:$0xff]
      %v762 = vld [vmem:[#allocation3 + $0x87] sm:$0xff]
      %v763 = vld [vmem:[#allocation3 + $0x8f] sm:$0xff]
      %v764 = vld [vmem:[#allocation3 + $0x97] sm:$0xff]
      %v765 = vld [vmem:[#allocation3 + $0x9f] sm:$0xff]
      %v766 = vld [vmem:[#allocation3 + $0xa7] sm:$0xff]
      %v767 = vld [vmem:[#allocation3 + $0xaf] sm:$0xff]
      %v768 = vld [vmem:[#allocation3 + $0xb7] sm:$0xff]
      %v769 = vld [vmem:[#allocation3 + $0xbf] sm:$0xff]
      %v770 = vld [vmem:[#allocation3 + $0xc7] sm:$0xff]
      %v771 = vld [vmem:[#allocation3 + $0xcf] sm:$0xff]
      %v772 = vld [vmem:[#allocation3 + $0xd7] sm:$0xff]
      %v773 = vld [vmem:[#allocation3 + $0xdf] sm:$0xff]
      %v774 = vld [vmem:[#allocation3 + $0xe7] sm:$0xff]
      %v775 = vld [vmem:[#allocation3 + $0xef] sm:$0xff]
      %v776 = vld [vmem:[#allocation3 + $0xf7] sm:$0xff]
      %v777 = vld [vmem:[#allocation3 + $0xff] sm:$0xff]
      %v778 = vld [vmem:[#allocation2] sm:$0xff]
      %v779 = vld [vmem:[#allocation2 + $0x8] sm:$0xff]
      %v780 = vld [vmem:[#allocation2 + $0x10] sm:$0xff]
      %v781 = vld [vmem:[#allocation2 + $0x18] sm:$0xff]
      %v782 = vld [vmem:[#allocation2 + $0x20] sm:$0xff]
      %v783 = vld [vmem:[#allocation2 + $0x28] sm:$0xff]
      %v784 = vld [vmem:[#allocation2 + $0x30] sm:$0xff]
      %v785 = vld [vmem:[#allocation2 + $0x38] sm:$0xff]
      %v786 = vld [vmem:[#allocation2 + $0x40] sm:$0xff]
      %v787 = vld [vmem:[#allocation2 + $0x48] sm:$0xff]
      %v788 = vld [vmem:[#allocation2 + $0x50] sm:$0xff]
      %v789 = vld [vmem:[#allocation2 + $0x58] sm:$0xff]
      %v790 = vld [vmem:[#allocation2 + $0x60] sm:$0xff]
      %v791 = vld [vmem:[#allocation2 + $0x68] sm:$0xff]
      %v792 = vld [vmem:[#allocation2 + $0x70] sm:$0xff]
      %v793 = vld [vmem:[#allocation2 + $0x78] sm:$0xff]
      %v794 = vld [vmem:[#allocation2 + $0x80] sm:$0xff]
      %v795 = vld [vmem:[#allocation2 + $0x88] sm:$0xff]
      %v796 = vld [vmem:[#allocation2 + $0x90] sm:$0xff]
      %v797 = vld [vmem:[#allocation2 + $0x98] sm:$0xff]
      %v798 = vld [vmem:[#allocation2 + $0xa0] sm:$0xff]
      %v799 = vld [vmem:[#allocation2 + $0xa8] sm:$0xff]
      %v800 = vld [vmem:[#allocation2 + $0xb0] sm:$0xff]
      %v801 = vld [vmem:[#allocation2 + $0xb8] sm:$0xff]
      %v802 = vld [vmem:[#allocation2 + $0xc0] sm:$0xff]
      %v803 = vld [vmem:[#allocation2 + $0xc8] sm:$0xff]
      %v804 = vld [vmem:[#allocation2 + $0xd0] sm:$0xff]
      %v805 = vld [vmem:[#allocation2 + $0xd8] sm:$0xff]
      %v806 = vld [vmem:[#allocation2 + $0xe0] sm:$0xff]
      %v807 = vld [vmem:[#allocation2 + $0xe8] sm:$0xff]
      %v808 = vld [vmem:[#allocation2 + $0xf0] sm:$0xff]
      %v809 = vld [vmem:[#allocation2 + $0xf8] sm:$0xff]
      %v810 = vpack.c.bf16 %v747, %v746
      %v811 = vpack.c.bf16 %v749, %v748
      %v812 = vpack.c.bf16 %v751, %v750
      %v813 = vpack.c.bf16 %v753, %v752
      %v814 = vpack.c.bf16 %v755, %v754
      %v815 = vpack.c.bf16 %v757, %v756
      %v816 = vpack.c.bf16 %v759, %v758
      %v817 = vpack.c.bf16 %v761, %v760
      %v818 = vpack.c.bf16 %v763, %v762
      %v819 = vpack.c.bf16 %v765, %v764
      %v820 = vpack.c.bf16 %v767, %v766
      %v821 = vpack.c.bf16 %v769, %v768
      %v822 = vpack.c.bf16 %v771, %v770
      %v823 = vpack.c.bf16 %v773, %v772
      %v824 = vpack.c.bf16 %v775, %v774
      %v825 = vpack.c.bf16 %v777, %v776
      %v826 = vld [vmem:[%s3] sm:$0xf]
      %v827 = vld [vmem:[%s3 + $0x4] sm:$0xf]
      %v828 = vld [vmem:[%s3 + $0x8] sm:$0xf]
      %v829 = vld [vmem:[%s3 + $0xc] sm:$0xf]
      %v830 = vld [vmem:[%s3 + $0x10] sm:$0xf]
      %v831 = vld [vmem:[%s3 + $0x14] sm:$0xf]
      %v832 = vld [vmem:[%s3 + $0x18] sm:$0xf]
      %v833 = vld [vmem:[%s3 + $0x1c] sm:$0xf]
      %v834 = vld [vmem:[%s3 + $0x20] sm:$0xf]
      %v835 = vld [vmem:[%s3 + $0x24] sm:$0xf]
      %v836 = vld [vmem:[%s3 + $0x28] sm:$0xf]
      %v837 = vld [vmem:[%s3 + $0x2c] sm:$0xf]
      %v838 = vld [vmem:[%s3 + $0x30] sm:$0xf]
      %v839 = vld [vmem:[%s3 + $0x34] sm:$0xf]
      %v840 = vld [vmem:[%s3 + $0x38] sm:$0xf]
      %v841 = vld [vmem:[%s3 + $0x3c] sm:$0xf]
      %v858 = vunpack.c.l.b16 %v826
      %v859 = vunpack.c.l.b16 %v827
      %v860 = vunpack.c.l.b16 %v828
      %v861 = vunpack.c.l.b16 %v829
      %v862 = vunpack.c.l.b16 %v830
      %v863 = vunpack.c.l.b16 %v831
      %v864 = vunpack.c.l.b16 %v832
      %v865 = vunpack.c.l.b16 %v833
      %v866 = vunpack.c.l.b16 %v834
      %v867 = vunpack.c.l.b16 %v835
      %v868 = vunpack.c.l.b16 %v836
      %v869 = vunpack.c.l.b16 %v837
      %v870 = vunpack.c.l.b16 %v838
      %v871 = vunpack.c.l.b16 %v839
      %v872 = vunpack.c.l.b16 %v840
      %v873 = vunpack.c.l.b16 %v841
      %v874 = vpack.c.b16 %v859, %v858
      %v875 = vpack.c.b16 %v861, %v860
      %v876 = vpack.c.b16 %v863, %v862
      %v877 = vpack.c.b16 %v865, %v864
      %v878 = vpack.c.b16 %v867, %v866
      %v879 = vpack.c.b16 %v869, %v868
      %v880 = vpack.c.b16 %v871, %v870
      %v881 = vpack.c.b16 %v873, %v872
      %890 = vmatprep.subr.bf16.mxu0 0
      %891 = vmatpush1.bf16.msra.mxu0 %v874
      %892 = vmatprep.subr.bf16.mxu0 0
      %893 = vmatpush1.bf16.msra.mxu0 %v875
      %894 = vmatprep.subr.bf16.mxu0 0
      %895 = vmatpush1.bf16.msra.mxu0 %v876
      %896 = vmatprep.subr.bf16.mxu0 0
      %897 = vmatpush1.bf16.msra.mxu0 %v877
      %898 = vmatprep.subr.bf16.mxu0 0
      %899 = vmatpush1.bf16.msra.mxu0 %v878
      %900 = vmatprep.subr.bf16.mxu0 0
      %901 = vmatpush1.bf16.msra.mxu0 %v879
      %902 = vmatprep.subr.bf16.mxu0 0
      %903 = vmatpush1.bf16.msra.mxu0 %v880
      %904 = vmatprep.subr.bf16.mxu0 0
      %905 = vmatpush1.bf16.msra.mxu0 %v881
      %906 = vmatprep.subr.bf16.mxu0 0
      %907 = vmatpush1.bf16.msra.mxu0 0
      %908 = vmatprep.subr.bf16.mxu0 0
      %909 = vmatpush1.bf16.msra.mxu0 0
      %910 = vmatprep.subr.bf16.mxu0 0
      %911 = vmatpush1.bf16.msra.mxu0 0
      %912 = vmatprep.subr.bf16.mxu0 0
      %913 = vmatpush1.bf16.msra.mxu0 0
      %914 = vmatprep.subr.bf16.mxu0 0
      %915 = vmatpush1.bf16.msra.mxu0 0
      %916 = vmatprep.subr.bf16.mxu0 0
      %917 = vmatpush1.bf16.msra.mxu0 0
      %918 = vmatprep.subr.bf16.mxu0 0
      %919 = vmatpush1.bf16.msra.mxu0 0
      %920 = vmatprep.subr.bf16.mxu0 0
      %921 = vmatpush1.bf16.msra.mxu0 0
      %922 = vmatprep.mubr.bf16.mxu0 0
      %923 = vmatmul.mubr.bf16.gmra.mrb[0].mxu0 %v810
      %v924 = vpop.f32.mrb[0].mxu0
      %v925 = vadd.f32 0.0, %v924
      %v926 = vpop.f32.mrb[0].mxu0
      %v927 = vpop.f32.mrb[0].mxu0
      %v928 = vadd.f32 0.0, %v927
      %v929 = vpop.f32.mrb[0].mxu0
      %930 = vmatprep.mubr.bf16.mxu0 0
      %931 = vmatmul.mubr.bf16.gmra.mrb[0].mxu0 %v811
      %v932 = vpop.f32.mrb[0].mxu0
      %v933 = vadd.f32 0.0, %v932
      %v934 = vpop.f32.mrb[0].mxu0
      %v935 = vpop.f32.mrb[0].mxu0
      %v936 = vadd.f32 0.0, %v935
      %v937 = vpop.f32.mrb[0].mxu0
      %938 = vmatprep.mubr.bf16.mxu0 0
      %939 = vmatmul.mubr.bf16.gmra.mrb[0].mxu0 %v812
      %v940 = vpop.f32.mrb[0].mxu0
      %v941 = vadd.f32 0.0, %v940
      %v942 = vpop.f32.mrb[0].mxu0
      %v943 = vpop.f32.mrb[0].mxu0
      %v944 = vadd.f32 0.0, %v943
      %v945 = vpop.f32.mrb[0].mxu0
      %946 = vmatprep.mubr.bf16.mxu0 0
      %947 = vmatmul.mubr.bf16.gmra.mrb[0].mxu0 %v813
      %v948 = vpop.f32.mrb[0].mxu0
      %v949 = vadd.f32 0.0, %v948
      %v950 = vpop.f32.mrb[0].mxu0
      %v951 = vpop.f32.mrb[0].mxu0
      %v952 = vadd.f32 0.0, %v951
      %v953 = vpop.f32.mrb[0].mxu0
      %954 = vmatprep.mubr.bf16.mxu0 0
      %955 = vmatmul.mubr.bf16.gmra.mrb[0].mxu0 %v814
      %v956 = vpop.f32.mrb[0].mxu0
      %v957 = vadd.f32 0.0, %v956
      %v958 = vpop.f32.mrb[0].mxu0
      %v959 = vpop.f32.mrb[0].mxu0
      %v960 = vadd.f32 0.0, %v959
      %v961 = vpop.f32.mrb[0].mxu0
      %962 = vmatprep.mubr.bf16.mxu0 0
      %963 = vmatmul.mubr.bf16.gmra.mrb[0].mxu0 %v815
      %v964 = vpop.f32.mrb[0].mxu0
      %v965 = vadd.f32 0.0, %v964
      %v966 = vpop.f32.mrb[0].mxu0
      %v967 = vpop.f32.mrb[0].mxu0
      %v968 = vadd.f32 0.0, %v967
      %v969 = vpop.f32.mrb[0].mxu0
      %970 = vmatprep.mubr.bf16.mxu0 0
      %971 = vmatmul.mubr.bf16.gmra.mrb[0].mxu0 %v816
      %v972 = vpop.f32.mrb[0].mxu0
      %v973 = vadd.f32 0.0, %v972
      %v974 = vpop.f32.mrb[0].mxu0
      %v975 = vpop.f32.mrb[0].mxu0
      %v976 = vadd.f32 0.0, %v975
      %v977 = vpop.f32.mrb[0].mxu0
      %978 = vmatprep.mubr.bf16.mxu0 0
      %979 = vmatmul.mubr.bf16.gmra.mrb[0].mxu0 %v817
      %v980 = vpop.f32.mrb[0].mxu0
      %v981 = vadd.f32 0.0, %v980
      %v982 = vpop.f32.mrb[0].mxu0
      %v983 = vpop.f32.mrb[0].mxu0
      %v984 = vadd.f32 0.0, %v983
      %v985 = vpop.f32.mrb[0].mxu0
      %986 = vmatprep.mubr.bf16.mxu0 0
      %987 = vmatmul.mubr.bf16.gmra.mrb[0].mxu0 %v818
      %v988 = vpop.f32.mrb[0].mxu0
      %v989 = vadd.f32 0.0, %v988
      %v990 = vpop.f32.mrb[0].mxu0
      %v991 = vpop.f32.mrb[0].mxu0
      %v992 = vadd.f32 0.0, %v991
      %v993 = vpop.f32.mrb[0].mxu0
      %994 = vmatprep.mubr.bf16.mxu0 0
      %995 = vmatmul.mubr.bf16.gmra.mrb[0].mxu0 %v819
      %v996 = vpop.f32.mrb[0].mxu0
      %v997 = vadd.f32 0.0, %v996
      %v998 = vpop.f32.mrb[0].mxu0
      %v999 = vpop.f32.mrb[0].mxu0
      %v1000 = vadd.f32 0.0, %v999
      %v1001 = vpop.f32.mrb[0].mxu0
      %1002 = vmatprep.mubr.bf16.mxu0 0
      %1003 = vmatmul.mubr.bf16.gmra.mrb[0].mxu0 %v820
      %v1004 = vpop.f32.mrb[0].mxu0
      %v1005 = vadd.f32 0.0, %v1004
      %v1006 = vpop.f32.mrb[0].mxu0
      %v1007 = vpop.f32.mrb[0].mxu0
      %v1008 = vadd.f32 0.0, %v1007
      %v1009 = vpop.f32.mrb[0].mxu0
      %1010 = vmatprep.mubr.bf16.mxu0 0
      %1011 = vmatmul.mubr.bf16.gmra.mrb[0].mxu0 %v821
      %v1012 = vpop.f32.mrb[0].mxu0
      %v1013 = vadd.f32 0.0, %v1012
      %v1014 = vpop.f32.mrb[0].mxu0
      %v1015 = vpop.f32.mrb[0].mxu0
      %v1016 = vadd.f32 0.0, %v1015
      %v1017 = vpop.f32.mrb[0].mxu0
      %1018 = vmatprep.mubr.bf16.mxu0 0
      %1019 = vmatmul.mubr.bf16.gmra.mrb[0].mxu0 %v822
      %v1020 = vpop.f32.mrb[0].mxu0
      %v1021 = vadd.f32 0.0, %v1020
      %v1022 = vpop.f32.mrb[0].mxu0
      %v1023 = vpop.f32.mrb[0].mxu0
      %v1024 = vadd.f32 0.0, %v1023
      %v1025 = vpop.f32.mrb[0].mxu0
      %1026 = vmatprep.mubr.bf16.mxu0 0
      %1027 = vmatmul.mubr.bf16.gmra.mrb[0].mxu0 %v823
      %v1028 = vpop.f32.mrb[0].mxu0
      %v1029 = vadd.f32 0.0, %v1028
      %v1030 = vpop.f32.mrb[0].mxu0
      %v1031 = vpop.f32.mrb[0].mxu0
      %v1032 = vadd.f32 0.0, %v1031
      %v1033 = vpop.f32.mrb[0].mxu0
      %1034 = vmatprep.mubr.bf16.mxu0 0
      %1035 = vmatmul.mubr.bf16.gmra.mrb[0].mxu0 %v824
      %v1036 = vpop.f32.mrb[0].mxu0
      %v1037 = vadd.f32 0.0, %v1036
      %v1038 = vpop.f32.mrb[0].mxu0
      %v1039 = vpop.f32.mrb[0].mxu0
      %v1040 = vadd.f32 0.0, %v1039
      %v1041 = vpop.f32.mrb[0].mxu0
      %1042 = vmatprep.mubr.bf16.mxu0 0
      %1043 = vmatmul.mubr.bf16.gmra.mrb[0].mxu0 %v825
      %v1044 = vpop.f32.mrb[0].mxu0
      %v1045 = vadd.f32 0.0, %v1044
      %v1046 = vpop.f32.mrb[0].mxu0
      %v1047 = vpop.f32.mrb[0].mxu0
      %v1048 = vadd.f32 0.0, %v1047
      %v1049 = vpop.f32.mrb[0].mxu0
      %1050 = vdwg.mxu0
      %v1051 = vadd.f32 %v778, %v925
      %v1052 = vadd.f32 %v779, %v928
      %v1053 = vadd.f32 %v780, %v933
      %v1054 = vadd.f32 %v781, %v936
      %v1055 = vadd.f32 %v782, %v941
      %v1056 = vadd.f32 %v783, %v944
      %v1057 = vadd.f32 %v784, %v949
      %v1058 = vadd.f32 %v785, %v952
      %v1059 = vadd.f32 %v786, %v957
      %v1060 = vadd.f32 %v787, %v960
      %v1061 = vadd.f32 %v788, %v965
      %v1062 = vadd.f32 %v789, %v968
      %v1063 = vadd.f32 %v790, %v973
      %v1064 = vadd.f32 %v791, %v976
      %v1065 = vadd.f32 %v792, %v981
      %v1066 = vadd.f32 %v793, %v984
      %v1067 = vadd.f32 %v794, %v989
      %v1068 = vadd.f32 %v795, %v992
      %v1069 = vadd.f32 %v796, %v997
      %v1070 = vadd.f32 %v797, %v1000
      %v1071 = vadd.f32 %v798, %v1005
      %v1072 = vadd.f32 %v799, %v1008
      %v1073 = vadd.f32 %v800, %v1013
      %v1074 = vadd.f32 %v801, %v1016
      %v1075 = vadd.f32 %v802, %v1021
      %v1076 = vadd.f32 %v803, %v1024
      %v1077 = vadd.f32 %v804, %v1029
      %v1078 = vadd.f32 %v805, %v1032
      %v1079 = vadd.f32 %v806, %v1037
      %v1080 = vadd.f32 %v807, %v1040
      %v1081 = vadd.f32 %v808, %v1045
      %v1082 = vadd.f32 %v809, %v1048
      %1083 = vst [vmem:[#allocation2] sm:$0xff] %v1051
      %1084 = vst [vmem:[#allocation2 + $0x8] sm:$0xff] %v1052
      %1085 = vst [vmem:[#allocation2 + $0x10] sm:$0xff] %v1053
      %1086 = vst [vmem:[#allocation2 + $0x18] sm:$0xff] %v1054
      %1087 = vst [vmem:[#allocation2 + $0x20] sm:$0xff] %v1055
      %1088 = vst [vmem:[#allocation2 + $0x28] sm:$0xff] %v1056
      %1089 = vst [vmem:[#allocation2 + $0x30] sm:$0xff] %v1057
      %1090 = vst [vmem:[#allocation2 + $0x38] sm:$0xff] %v1058
      %1091 = vst [vmem:[#allocation2 + $0x40] sm:$0xff] %v1059
      %1092 = vst [vmem:[#allocation2 + $0x48] sm:$0xff] %v1060
      %1093 = vst [vmem:[#allocation2 + $0x50] sm:$0xff] %v1061
      %1094 = vst [vmem:[#allocation2 + $0x58] sm:$0xff] %v1062
      %1095 = vst [vmem:[#allocation2 + $0x60] sm:$0xff] %v1063
      %1096 = vst [vmem:[#allocation2 + $0x68] sm:$0xff] %v1064
      %1097 = vst [vmem:[#allocation2 + $0x70] sm:$0xff] %v1065
      %1098 = vst [vmem:[#allocation2 + $0x78] sm:$0xff] %v1066
      %1099 = vst [vmem:[#allocation2 + $0x80] sm:$0xff] %v1067
      %1100 = vst [vmem:[#allocation2 + $0x88] sm:$0xff] %v1068
      %1101 = vst [vmem:[#allocation2 + $0x90] sm:$0xff] %v1069
      %1102 = vst [vmem:[#allocation2 + $0x98] sm:$0xff] %v1070
      %1103 = vst [vmem:[#allocation2 + $0xa0] sm:$0xff] %v1071
      %1104 = vst [vmem:[#allocation2 + $0xa8] sm:$0xff] %v1072
      %1105 = vst [vmem:[#allocation2 + $0xb0] sm:$0xff] %v1073
      %1106 = vst [vmem:[#allocation2 + $0xb8] sm:$0xff] %v1074
      %1107 = vst [vmem:[#allocation2 + $0xc0] sm:$0xff] %v1075
      %1108 = vst [vmem:[#allocation2 + $0xc8] sm:$0xff] %v1076
      %1109 = vst [vmem:[#allocation2 + $0xd0] sm:$0xff] %v1077
      %1110 = vst [vmem:[#allocation2 + $0xd8] sm:$0xff] %v1078
      %1111 = vst [vmem:[#allocation2 + $0xe0] sm:$0xff] %v1079
      %1112 = vst [vmem:[#allocation2 + $0xe8] sm:$0xff] %v1080
      %1113 = vst [vmem:[#allocation2 + $0xf0] sm:$0xff] %v1081
      %1114 = vst [vmem:[#allocation2 + $0xf8] sm:$0xff] %v1082
      %v1115 = vld [vmem:[#allocation3 + $0x17] sm:$0xff]
      %v1116 = vld [vmem:[#allocation3 + $0x1f] sm:$0xff]
      %v1117 = vld [vmem:[#allocation3 + $0x27] sm:$0xff]
      %v1118 = vld [vmem:[#allocation3 + $0x2f] sm:$0xff]
      %v1119 = vld [vmem:[#allocation3 + $0x37] sm:$0xff]
      %v1120 = vld [vmem:[#allocation3 + $0x3f] sm:$0xff]
      %v1121 = vld [vmem:[#allocation3 + $0x47] sm:$0xff]
      %v1122 = vld [vmem:[#allocation3 + $0x4f] sm:$0xff]
      %v1123 = vld [vmem:[#allocation3 + $0x57] sm:$0xff]
      %v1124 = vld [vmem:[#allocation3 + $0x5f] sm:$0xff]
      %v1125 = vld [vmem:[#allocation3 + $0x67] sm:$0xff]
      %v1126 = vld [vmem:[#allocation3 + $0x6f] sm:$0xff]
      %v1127 = vld [vmem:[#allocation3 + $0x77] sm:$0xff]
      %v1128 = vld [vmem:[#allocation3 + $0x7f] sm:$0xff]
      %v1129 = vld [vmem:[#allocation3 + $0x87] sm:$0xff]
      %v1130 = vld [vmem:[#allocation3 + $0x8f] sm:$0xff]
      %v1131 = vld [vmem:[#allocation3 + $0x97] sm:$0xff]
      %v1132 = vld [vmem:[#allocation3 + $0x9f] sm:$0xff]
      %v1133 = vld [vmem:[#allocation3 + $0xa7] sm:$0xff]
      %v1134 = vld [vmem:[#allocation3 + $0xaf] sm:$0xff]
      %v1135 = vld [vmem:[#allocation3 + $0xb7] sm:$0xff]
      %v1136 = vld [vmem:[#allocation3 + $0xbf] sm:$0xff]
      %v1137 = vld [vmem:[#allocation3 + $0xc7] sm:$0xff]
      %v1138 = vld [vmem:[#allocation3 + $0xcf] sm:$0xff]
      %v1139 = vld [vmem:[#allocation3 + $0xd7] sm:$0xff]
      %v1140 = vld [vmem:[#allocation3 + $0xdf] sm:$0xff]
      %v1141 = vld [vmem:[#allocation3 + $0xe7] sm:$0xff]
      %v1142 = vld [vmem:[#allocation3 + $0xef] sm:$0xff]
      %v1143 = vld [vmem:[#allocation3 + $0xf7] sm:$0xff]
      %v1144 = vld [vmem:[#allocation3 + $0xff] sm:$0xff]
      %v1145 = vld [vmem:[#allocation3 + $0x107] sm:$0xff]
      %v1146 = vld [vmem:[#allocation3 + $0x10f] sm:$0xff]
      %v1147 = vld [vmem:[#allocation2] sm:$0xff]
      %v1148 = vld [vmem:[#allocation2 + $0x8] sm:$0xff]
      %v1149 = vld [vmem:[#allocation2 + $0x10] sm:$0xff]
      %v1150 = vld [vmem:[#allocation2 + $0x18] sm:$0xff]
      %v1151 = vld [vmem:[#allocation2 + $0x20] sm:$0xff]
      %v1152 = vld [vmem:[#allocation2 + $0x28] sm:$0xff]
      %v1153 = vld [vmem:[#allocation2 + $0x30] sm:$0xff]
      %v1154 = vld [vmem:[#allocation2 + $0x38] sm:$0xff]
      %v1155 = vld [vmem:[#allocation2 + $0x40] sm:$0xff]
      %v1156 = vld [vmem:[#allocation2 + $0x48] sm:$0xff]
      %v1157 = vld [vmem:[#allocation2 + $0x50] sm:$0xff]
      %v1158 = vld [vmem:[#allocation2 + $0x58] sm:$0xff]
      %v1159 = vld [vmem:[#allocation2 + $0x60] sm:$0xff]
      %v1160 = vld [vmem:[#allocation2 + $0x68] sm:$0xff]
      %v1161 = vld [vmem:[#allocation2 + $0x70] sm:$0xff]
      %v1162 = vld [vmem:[#allocation2 + $0x78] sm:$0xff]
      %v1163 = vld [vmem:[#allocation2 + $0x80] sm:$0xff]
      %v1164 = vld [vmem:[#allocation2 + $0x88] sm:$0xff]
      %v1165 = vld [vmem:[#allocation2 + $0x90] sm:$0xff]
      %v1166 = vld [vmem:[#allocation2 + $0x98] sm:$0xff]
      %v1167 = vld [vmem:[#allocation2 + $0xa0] sm:$0xff]
      %v1168 = vld [vmem:[#allocation2 + $0xa8] sm:$0xff]
      %v1169 = vld [vmem:[#allocation2 + $0xb0] sm:$0xff]
      %v1170 = vld [vmem:[#allocation2 + $0xb8] sm:$0xff]
      %v1171 = vld [vmem:[#allocation2 + $0xc0] sm:$0xff]
      %v1172 = vld [vmem:[#allocation2 + $0xc8] sm:$0xff]
      %v1173 = vld [vmem:[#allocation2 + $0xd0] sm:$0xff]
      %v1174 = vld [vmem:[#allocation2 + $0xd8] sm:$0xff]
      %v1175 = vld [vmem:[#allocation2 + $0xe0] sm:$0xff]
      %v1176 = vld [vmem:[#allocation2 + $0xe8] sm:$0xff]
      %v1177 = vld [vmem:[#allocation2 + $0xf0] sm:$0xff]
      %v1178 = vld [vmem:[#allocation2 + $0xf8] sm:$0xff]
      %v1179 = vpack.c.bf16 %v1116, %v1115
      %v1180 = vpack.c.bf16 %v1118, %v1117
      %v1181 = vpack.c.bf16 %v1120, %v1119
      %v1182 = vpack.c.bf16 %v1122, %v1121
      %v1183 = vpack.c.bf16 %v1124, %v1123
      %v1184 = vpack.c.bf16 %v1126, %v1125
      %v1185 = vpack.c.bf16 %v1128, %v1127
      %v1186 = vpack.c.bf16 %v1130, %v1129
      %v1187 = vpack.c.bf16 %v1132, %v1131
      %v1188 = vpack.c.bf16 %v1134, %v1133
      %v1189 = vpack.c.bf16 %v1136, %v1135
      %v1190 = vpack.c.bf16 %v1138, %v1137
      %v1191 = vpack.c.bf16 %v1140, %v1139
      %v1192 = vpack.c.bf16 %v1142, %v1141
      %v1193 = vpack.c.bf16 %v1144, %v1143
      %v1194 = vpack.c.bf16 %v1146, %v1145
      %s1195 = scalar_lea.vmem %s3, 192
      %v1196 = vld [vmem:[%s1195] sm:$0xf]
      %v1197 = vld [vmem:[%s1195 + $0x4] sm:$0xf]
      %v1198 = vld [vmem:[%s1195 + $0x8] sm:$0xf]
      %v1199 = vld [vmem:[%s1195 + $0xc] sm:$0xf]
      %v1200 = vld [vmem:[%s1195 + $0x10] sm:$0xf]
      %v1201 = vld [vmem:[%s1195 + $0x14] sm:$0xf]
      %v1202 = vld [vmem:[%s1195 + $0x18] sm:$0xf]
      %v1203 = vld [vmem:[%s1195 + $0x1c] sm:$0xf]
      %v1204 = vld [vmem:[%s1195 + $0x20] sm:$0xf]
      %v1205 = vld [vmem:[%s1195 + $0x24] sm:$0xf]
      %v1206 = vld [vmem:[%s1195 + $0x28] sm:$0xf]
      %v1207 = vld [vmem:[%s1195 + $0x2c] sm:$0xf]
      %v1208 = vld [vmem:[%s1195 + $0x30] sm:$0xf]
      %v1209 = vld [vmem:[%s1195 + $0x34] sm:$0xf]
      %v1210 = vld [vmem:[%s1195 + $0x38] sm:$0xf]
      %v1211 = vld [vmem:[%s1195 + $0x3c] sm:$0xf]
      %v1228 = vunpack.c.l.b16 %v1196
      %v1229 = vunpack.c.l.b16 %v1197
      %v1230 = vunpack.c.l.b16 %v1198
      %v1231 = vunpack.c.l.b16 %v1199
      %v1232 = vunpack.c.l.b16 %v1200
      %v1233 = vunpack.c.l.b16 %v1201
      %v1234 = vunpack.c.l.b16 %v1202
      %v1235 = vunpack.c.l.b16 %v1203
      %v1236 = vunpack.c.l.b16 %v1204
      %v1237 = vunpack.c.l.b16 %v1205
      %v1238 = vunpack.c.l.b16 %v1206
      %v1239 = vunpack.c.l.b16 %v1207
      %v1240 = vunpack.c.l.b16 %v1208
      %v1241 = vunpack.c.l.b16 %v1209
      %v1242 = vunpack.c.l.b16 %v1210
      %v1243 = vunpack.c.l.b16 %v1211
      %v1244 = vpack.c.b16 %v1229, %v1228
      %v1245 = vpack.c.b16 %v1231, %v1230
      %v1246 = vpack.c.b16 %v1233, %v1232
      %v1247 = vpack.c.b16 %v1235, %v1234
      %v1248 = vpack.c.b16 %v1237, %v1236
      %v1249 = vpack.c.b16 %v1239, %v1238
      %v1250 = vpack.c.b16 %v1241, %v1240
      %v1251 = vpack.c.b16 %v1243, %v1242
      %1260 = vmatprep.subr.bf16.mxu0 0
      %1261 = vmatpush1.bf16.msra.mxu0 %v1244
      %1262 = vmatprep.subr.bf16.mxu0 0
      %1263 = vmatpush1.bf16.msra.mxu0 %v1245
      %1264 = vmatprep.subr.bf16.mxu0 0
      %1265 = vmatpush1.bf16.msra.mxu0 %v1246
      %1266 = vmatprep.subr.bf16.mxu0 0
      %1267 = vmatpush1.bf16.msra.mxu0 %v1247
      %1268 = vmatprep.subr.bf16.mxu0 0
      %1269 = vmatpush1.bf16.msra.mxu0 %v1248
      %1270 = vmatprep.subr.bf16.mxu0 0
      %1271 = vmatpush1.bf16.msra.mxu0 %v1249
      %1272 = vmatprep.subr.bf16.mxu0 0
      %1273 = vmatpush1.bf16.msra.mxu0 %v1250
      %1274 = vmatprep.subr.bf16.mxu0 0
      %1275 = vmatpush1.bf16.msra.mxu0 %v1251
      %1276 = vmatprep.subr.bf16.mxu0 0
      %1277 = vmatpush1.bf16.msra.mxu0 0
      %1278 = vmatprep.subr.bf16.mxu0 0
      %1279 = vmatpush1.bf16.msra.mxu0 0
      %1280 = vmatprep.subr.bf16.mxu0 0
      %1281 = vmatpush1.bf16.msra.mxu0 0
      %1282 = vmatprep.subr.bf16.mxu0 0
      %1283 = vmatpush1.bf16.msra.mxu0 0
      %1284 = vmatprep.subr.bf16.mxu0 0
      %1285 = vmatpush1.bf16.msra.mxu0 0
      %1286 = vmatprep.subr.bf16.mxu0 0
      %1287 = vmatpush1.bf16.msra.mxu0 0
      %1288 = vmatprep.subr.bf16.mxu0 0
      %1289 = vmatpush1.bf16.msra.mxu0 0
      %1290 = vmatprep.subr.bf16.mxu0 0
      %1291 = vmatpush1.bf16.msra.mxu0 0
      %1292 = vmatprep.mubr.bf16.mxu0 0
      %1293 = vmatmul.mubr.bf16.gmra.mrb[0].mxu0 %v1179
      %v1294 = vpop.f32.mrb[0].mxu0
      %v1295 = vadd.f32 0.0, %v1294
      %v1296 = vpop.f32.mrb[0].mxu0
      %v1297 = vpop.f32.mrb[0].mxu0
      %v1298 = vadd.f32 0.0, %v1297
      %v1299 = vpop.f32.mrb[0].mxu0
      %1300 = vmatprep.mubr.bf16.mxu0 0
      %1301 = vmatmul.mubr.bf16.gmra.mrb[0].mxu0 %v1180
      %v1302 = vpop.f32.mrb[0].mxu0
      %v1303 = vadd.f32 0.0, %v1302
      %v1304 = vpop.f32.mrb[0].mxu0
      %v1305 = vpop.f32.mrb[0].mxu0
      %v1306 = vadd.f32 0.0, %v1305
      %v1307 = vpop.f32.mrb[0].mxu0
      %1308 = vmatprep.mubr.bf16.mxu0 0
      %1309 = vmatmul.mubr.bf16.gmra.mrb[0].mxu0 %v1181
      %v1310 = vpop.f32.mrb[0].mxu0
      %v1311 = vadd.f32 0.0, %v1310
      %v1312 = vpop.f32.mrb[0].mxu0
      %v1313 = vpop.f32.mrb[0].mxu0
      %v1314 = vadd.f32 0.0, %v1313
      %v1315 = vpop.f32.mrb[0].mxu0
      %1316 = vmatprep.mubr.bf16.mxu0 0
      %1317 = vmatmul.mubr.bf16.gmra.mrb[0].mxu0 %v1182
      %v1318 = vpop.f32.mrb[0].mxu0
      %v1319 = vadd.f32 0.0, %v1318
      %v1320 = vpop.f32.mrb[0].mxu0
      %v1321 = vpop.f32.mrb[0].mxu0
      %v1322 = vadd.f32 0.0, %v1321
      %v1323 = vpop.f32.mrb[0].mxu0
      %1324 = vmatprep.mubr.bf16.mxu0 0
      %1325 = vmatmul.mubr.bf16.gmra.mrb[0].mxu0 %v1183
      %v1326 = vpop.f32.mrb[0].mxu0
      %v1327 = vadd.f32 0.0, %v1326
      %v1328 = vpop.f32.mrb[0].mxu0
      %v1329 = vpop.f32.mrb[0].mxu0
      %v1330 = vadd.f32 0.0, %v1329
      %v1331 = vpop.f32.mrb[0].mxu0
      %1332 = vmatprep.mubr.bf16.mxu0 0
      %1333 = vmatmul.mubr.bf16.gmra.mrb[0].mxu0 %v1184
      %v1334 = vpop.f32.mrb[0].mxu0
      %v1335 = vadd.f32 0.0, %v1334
      %v1336 = vpop.f32.mrb[0].mxu0
      %v1337 = vpop.f32.mrb[0].mxu0
      %v1338 = vadd.f32 0.0, %v1337
      %v1339 = vpop.f32.mrb[0].mxu0
      %1340 = vmatprep.mubr.bf16.mxu0 0
      %1341 = vmatmul.mubr.bf16.gmra.mrb[0].mxu0 %v1185
      %v1342 = vpop.f32.mrb[0].mxu0
      %v1343 = vadd.f32 0.0, %v1342
      %v1344 = vpop.f32.mrb[0].mxu0
      %v1345 = vpop.f32.mrb[0].mxu0
      %v1346 = vadd.f32 0.0, %v1345
      %v1347 = vpop.f32.mrb[0].mxu0
      %1348 = vmatprep.mubr.bf16.mxu0 0
      %1349 = vmatmul.mubr.bf16.gmra.mrb[0].mxu0 %v1186
      %v1350 = vpop.f32.mrb[0].mxu0
      %v1351 = vadd.f32 0.0, %v1350
      %v1352 = vpop.f32.mrb[0].mxu0
      %v1353 = vpop.f32.mrb[0].mxu0
      %v1354 = vadd.f32 0.0, %v1353
      %v1355 = vpop.f32.mrb[0].mxu0
      %1356 = vmatprep.mubr.bf16.mxu0 0
      %1357 = vmatmul.mubr.bf16.gmra.mrb[0].mxu0 %v1187
      %v1358 = vpop.f32.mrb[0].mxu0
      %v1359 = vadd.f32 0.0, %v1358
      %v1360 = vpop.f32.mrb[0].mxu0
      %v1361 = vpop.f32.mrb[0].mxu0
      %v1362 = vadd.f32 0.0, %v1361
      %v1363 = vpop.f32.mrb[0].mxu0
      %1364 = vmatprep.mubr.bf16.mxu0 0
      %1365 = vmatmul.mubr.bf16.gmra.mrb[0].mxu0 %v1188
      %v1366 = vpop.f32.mrb[0].mxu0
      %v1367 = vadd.f32 0.0, %v1366
      %v1368 = vpop.f32.mrb[0].mxu0
      %v1369 = vpop.f32.mrb[0].mxu0
      %v1370 = vadd.f32 0.0, %v1369
      %v1371 = vpop.f32.mrb[0].mxu0
      %1372 = vmatprep.mubr.bf16.mxu0 0
      %1373 = vmatmul.mubr.bf16.gmra.mrb[0].mxu0 %v1189
      %v1374 = vpop.f32.mrb[0].mxu0
      %v1375 = vadd.f32 0.0, %v1374
      %v1376 = vpop.f32.mrb[0].mxu0
      %v1377 = vpop.f32.mrb[0].mxu0
      %v1378 = vadd.f32 0.0, %v1377
      %v1379 = vpop.f32.mrb[0].mxu0
      %1380 = vmatprep.mubr.bf16.mxu0 0
      %1381 = vmatmul.mubr.bf16.gmra.mrb[0].mxu0 %v1190
      %v1382 = vpop.f32.mrb[0].mxu0
      %v1383 = vadd.f32 0.0, %v1382
      %v1384 = vpop.f32.mrb[0].mxu0
      %v1385 = vpop.f32.mrb[0].mxu0
      %v1386 = vadd.f32 0.0, %v1385
      %v1387 = vpop.f32.mrb[0].mxu0
      %1388 = vmatprep.mubr.bf16.mxu0 0
      %1389 = vmatmul.mubr.bf16.gmra.mrb[0].mxu0 %v1191
      %v1390 = vpop.f32.mrb[0].mxu0
      %v1391 = vadd.f32 0.0, %v1390
      %v1392 = vpop.f32.mrb[0].mxu0
      %v1393 = vpop.f32.mrb[0].mxu0
      %v1394 = vadd.f32 0.0, %v1393
      %v1395 = vpop.f32.mrb[0].mxu0
      %1396 = vmatprep.mubr.bf16.mxu0 0
      %1397 = vmatmul.mubr.bf16.gmra.mrb[0].mxu0 %v1192
      %v1398 = vpop.f32.mrb[0].mxu0
      %v1399 = vadd.f32 0.0, %v1398
      %v1400 = vpop.f32.mrb[0].mxu0
      %v1401 = vpop.f32.mrb[0].mxu0
      %v1402 = vadd.f32 0.0, %v1401
      %v1403 = vpop.f32.mrb[0].mxu0
      %1404 = vmatprep.mubr.bf16.mxu0 0
      %1405 = vmatmul.mubr.bf16.gmra.mrb[0].mxu0 %v1193
      %v1406 = vpop.f32.mrb[0].mxu0
      %v1407 = vadd.f32 0.0, %v1406
      %v1408 = vpop.f32.mrb[0].mxu0
      %v1409 = vpop.f32.mrb[0].mxu0
      %v1410 = vadd.f32 0.0, %v1409
      %v1411 = vpop.f32.mrb[0].mxu0
      %1412 = vmatprep.mubr.bf16.mxu0 0
      %1413 = vmatmul.mubr.bf16.gmra.mrb[0].mxu0 %v1194
      %v1414 = vpop.f32.mrb[0].mxu0
      %v1415 = vadd.f32 0.0, %v1414
      %v1416 = vpop.f32.mrb[0].mxu0
      %v1417 = vpop.f32.mrb[0].mxu0
      %v1418 = vadd.f32 0.0, %v1417
      %v1419 = vpop.f32.mrb[0].mxu0
      %1420 = vdwg.mxu0
      %v1421 = vadd.f32 %v1147, %v1295
      %v1422 = vadd.f32 %v1148, %v1298
      %v1423 = vadd.f32 %v1149, %v1303
      %v1424 = vadd.f32 %v1150, %v1306
      %v1425 = vadd.f32 %v1151, %v1311
      %v1426 = vadd.f32 %v1152, %v1314
      %v1427 = vadd.f32 %v1153, %v1319
      %v1428 = vadd.f32 %v1154, %v1322
      %v1429 = vadd.f32 %v1155, %v1327
      %v1430 = vadd.f32 %v1156, %v1330
      %v1431 = vadd.f32 %v1157, %v1335
      %v1432 = vadd.f32 %v1158, %v1338
      %v1433 = vadd.f32 %v1159, %v1343
      %v1434 = vadd.f32 %v1160, %v1346
      %v1435 = vadd.f32 %v1161, %v1351
      %v1436 = vadd.f32 %v1162, %v1354
      %v1437 = vadd.f32 %v1163, %v1359
      %v1438 = vadd.f32 %v1164, %v1362
      %v1439 = vadd.f32 %v1165, %v1367
      %v1440 = vadd.f32 %v1166, %v1370
      %v1441 = vadd.f32 %v1167, %v1375
      %v1442 = vadd.f32 %v1168, %v1378
      %v1443 = vadd.f32 %v1169, %v1383
      %v1444 = vadd.f32 %v1170, %v1386
      %v1445 = vadd.f32 %v1171, %v1391
      %v1446 = vadd.f32 %v1172, %v1394
      %v1447 = vadd.f32 %v1173, %v1399
      %v1448 = vadd.f32 %v1174, %v1402
      %v1449 = vadd.f32 %v1175, %v1407
      %v1450 = vadd.f32 %v1176, %v1410
      %v1451 = vadd.f32 %v1177, %v1415
      %v1452 = vadd.f32 %v1178, %v1418
      %1453 = vst [vmem:[#allocation2] sm:$0xff] %v1421
      %1454 = vst [vmem:[#allocation2 + $0x8] sm:$0xff] %v1422
      %1455 = vst [vmem:[#allocation2 + $0x10] sm:$0xff] %v1423
      %1456 = vst [vmem:[#allocation2 + $0x18] sm:$0xff] %v1424
      %1457 = vst [vmem:[#allocation2 + $0x20] sm:$0xff] %v1425
      %1458 = vst [vmem:[#allocation2 + $0x28] sm:$0xff] %v1426
      %1459 = vst [vmem:[#allocation2 + $0x30] sm:$0xff] %v1427
      %1460 = vst [vmem:[#allocation2 + $0x38] sm:$0xff] %v1428
      %1461 = vst [vmem:[#allocation2 + $0x40] sm:$0xff] %v1429
      %1462 = vst [vmem:[#allocation2 + $0x48] sm:$0xff] %v1430
      %1463 = vst [vmem:[#allocation2 + $0x50] sm:$0xff] %v1431
      %1464 = vst [vmem:[#allocation2 + $0x58] sm:$0xff] %v1432
      %1465 = vst [vmem:[#allocation2 + $0x60] sm:$0xff] %v1433
      %1466 = vst [vmem:[#allocation2 + $0x68] sm:$0xff] %v1434
      %1467 = vst [vmem:[#allocation2 + $0x70] sm:$0xff] %v1435
      %1468 = vst [vmem:[#allocation2 + $0x78] sm:$0xff] %v1436
      %1469 = vst [vmem:[#allocation2 + $0x80] sm:$0xff] %v1437
      %1470 = vst [vmem:[#allocation2 + $0x88] sm:$0xff] %v1438
      %1471 = vst [vmem:[#allocation2 + $0x90] sm:$0xff] %v1439
      %1472 = vst [vmem:[#allocation2 + $0x98] sm:$0xff] %v1440
      %1473 = vst [vmem:[#allocation2 + $0xa0] sm:$0xff] %v1441
      %1474 = vst [vmem:[#allocation2 + $0xa8] sm:$0xff] %v1442
      %1475 = vst [vmem:[#allocation2 + $0xb0] sm:$0xff] %v1443
      %1476 = vst [vmem:[#allocation2 + $0xb8] sm:$0xff] %v1444
      %1477 = vst [vmem:[#allocation2 + $0xc0] sm:$0xff] %v1445
      %1478 = vst [vmem:[#allocation2 + $0xc8] sm:$0xff] %v1446
      %1479 = vst [vmem:[#allocation2 + $0xd0] sm:$0xff] %v1447
      %1480 = vst [vmem:[#allocation2 + $0xd8] sm:$0xff] %v1448
      %1481 = vst [vmem:[#allocation2 + $0xe0] sm:$0xff] %v1449
      %1482 = vst [vmem:[#allocation2 + $0xe8] sm:$0xff] %v1450
      %1483 = vst [vmem:[#allocation2 + $0xf0] sm:$0xff] %v1451
      %1484 = vst [vmem:[#allocation2 + $0xf8] sm:$0xff] %v1452
      %v1485 = vld [vmem:[#allocation3 + $0x27] sm:$0xff]
      %v1486 = vld [vmem:[#allocation3 + $0x2f] sm:$0xff]
      %v1487 = vld [vmem:[#allocation3 + $0x37] sm:$0xff]
      %v1488 = vld [vmem:[#allocation3 + $0x3f] sm:$0xff]
      %v1489 = vld [vmem:[#allocation3 + $0x47] sm:$0xff]
      %v1490 = vld [vmem:[#allocation3 + $0x4f] sm:$0xff]
      %v1491 = vld [vmem:[#allocation3 + $0x57] sm:$0xff]
      %v1492 = vld [vmem:[#allocation3 + $0x5f] sm:$0xff]
      %v1493 = vld [vmem:[#allocation3 + $0x67] sm:$0xff]
      %v1494 = vld [vmem:[#allocation3 + $0x6f] sm:$0xff]
      %v1495 = vld [vmem:[#allocation3 + $0x77] sm:$0xff]
      %v1496 = vld [vmem:[#allocation3 + $0x7f] sm:$0xff]
      %v1497 = vld [vmem:[#allocation3 + $0x87] sm:$0xff]
      %v1498 = vld [vmem:[#allocation3 + $0x8f] sm:$0xff]
      %v1499 = vld [vmem:[#allocation3 + $0x97] sm:$0xff]
      %v1500 = vld [vmem:[#allocation3 + $0x9f] sm:$0xff]
      %v1501 = vld [vmem:[#allocation3 + $0xa7] sm:$0xff]
      %v1502 = vld [vmem:[#allocation3 + $0xaf] sm:$0xff]
      %v1503 = vld [vmem:[#allocation3 + $0xb7] sm:$0xff]
      %v1504 = vld [vmem:[#allocation3 + $0xbf] sm:$0xff]
      %v1505 = vld [vmem:[#allocation3 + $0xc7] sm:$0xff]
      %v1506 = vld [vmem:[#allocation3 + $0xcf] sm:$0xff]
      %v1507 = vld [vmem:[#allocation3 + $0xd7] sm:$0xff]
      %v1508 = vld [vmem:[#allocation3 + $0xdf] sm:$0xff]
      %v1509 = vld [vmem:[#allocation3 + $0xe7] sm:$0xff]
      %v1510 = vld [vmem:[#allocation3 + $0xef] sm:$0xff]
      %v1511 = vld [vmem:[#allocation3 + $0xf7] sm:$0xff]
      %v1512 = vld [vmem:[#allocation3 + $0xff] sm:$0xff]
      %v1513 = vld [vmem:[#allocation3 + $0x107] sm:$0xff]
      %v1514 = vld [vmem:[#allocation3 + $0x10f] sm:$0xff]
      %v1515 = vld [vmem:[#allocation3 + $0x117] sm:$0xff]
      %v1516 = vld [vmem:[#allocation3 + $0x11f] sm:$0xff]
      %v1517 = vld [vmem:[#allocation2] sm:$0xff]
      %v1518 = vld [vmem:[#allocation2 + $0x8] sm:$0xff]
      %v1519 = vld [vmem:[#allocation2 + $0x10] sm:$0xff]
      %v1520 = vld [vmem:[#allocation2 + $0x18] sm:$0xff]
      %v1521 = vld [vmem:[#allocation2 + $0x20] sm:$0xff]
      %v1522 = vld [vmem:[#allocation2 + $0x28] sm:$0xff]
      %v1523 = vld [vmem:[#allocation2 + $0x30] sm:$0xff]
      %v1524 = vld [vmem:[#allocation2 + $0x38] sm:$0xff]
      %v1525 = vld [vmem:[#allocation2 + $0x40] sm:$0xff]
      %v1526 = vld [vmem:[#allocation2 + $0x48] sm:$0xff]
      %v1527 = vld [vmem:[#allocation2 + $0x50] sm:$0xff]
      %v1528 = vld [vmem:[#allocation2 + $0x58] sm:$0xff]
      %v1529 = vld [vmem:[#allocation2 + $0x60] sm:$0xff]
      %v1530 = vld [vmem:[#allocation2 + $0x68] sm:$0xff]
      %v1531 = vld [vmem:[#allocation2 + $0x70] sm:$0xff]
      %v1532 = vld [vmem:[#allocation2 + $0x78] sm:$0xff]
      %v1533 = vld [vmem:[#allocation2 + $0x80] sm:$0xff]
      %v1534 = vld [vmem:[#allocation2 + $0x88] sm:$0xff]
      %v1535 = vld [vmem:[#allocation2 + $0x90] sm:$0xff]
      %v1536 = vld [vmem:[#allocation2 + $0x98] sm:$0xff]
      %v1537 = vld [vmem:[#allocation2 + $0xa0] sm:$0xff]
      %v1538 = vld [vmem:[#allocation2 + $0xa8] sm:$0xff]
      %v1539 = vld [vmem:[#allocation2 + $0xb0] sm:$0xff]
      %v1540 = vld [vmem:[#allocation2 + $0xb8] sm:$0xff]
      %v1541 = vld [vmem:[#allocation2 + $0xc0] sm:$0xff]
      %v1542 = vld [vmem:[#allocation2 + $0xc8] sm:$0xff]
      %v1543 = vld [vmem:[#allocation2 + $0xd0] sm:$0xff]
      %v1544 = vld [vmem:[#allocation2 + $0xd8] sm:$0xff]
      %v1545 = vld [vmem:[#allocation2 + $0xe0] sm:$0xff]
      %v1546 = vld [vmem:[#allocation2 + $0xe8] sm:$0xff]
      %v1547 = vld [vmem:[#allocation2 + $0xf0] sm:$0xff]
      %v1548 = vld [vmem:[#allocation2 + $0xf8] sm:$0xff]
      %v1549 = vpack.c.bf16 %v1486, %v1485
      %v1550 = vpack.c.bf16 %v1488, %v1487
      %v1551 = vpack.c.bf16 %v1490, %v1489
      %v1552 = vpack.c.bf16 %v1492, %v1491
      %v1553 = vpack.c.bf16 %v1494, %v1493
      %v1554 = vpack.c.bf16 %v1496, %v1495
      %v1555 = vpack.c.bf16 %v1498, %v1497
      %v1556 = vpack.c.bf16 %v1500, %v1499
      %v1557 = vpack.c.bf16 %v1502, %v1501
      %v1558 = vpack.c.bf16 %v1504, %v1503
      %v1559 = vpack.c.bf16 %v1506, %v1505
      %v1560 = vpack.c.bf16 %v1508, %v1507
      %v1561 = vpack.c.bf16 %v1510, %v1509
      %v1562 = vpack.c.bf16 %v1512, %v1511
      %v1563 = vpack.c.bf16 %v1514, %v1513
      %v1564 = vpack.c.bf16 %v1516, %v1515
      %s1565 = scalar_lea.vmem %s3, 384
      %v1566 = vld [vmem:[%s1565] sm:$0xf]
      %v1567 = vld [vmem:[%s1565 + $0x4] sm:$0xf]
      %v1568 = vld [vmem:[%s1565 + $0x8] sm:$0xf]
      %v1569 = vld [vmem:[%s1565 + $0xc] sm:$0xf]
      %v1570 = vld [vmem:[%s1565 + $0x10] sm:$0xf]
      %v1571 = vld [vmem:[%s1565 + $0x14] sm:$0xf]
      %v1572 = vld [vmem:[%s1565 + $0x18] sm:$0xf]
      %v1573 = vld [vmem:[%s1565 + $0x1c] sm:$0xf]
      %v1574 = vld [vmem:[%s1565 + $0x20] sm:$0xf]
      %v1575 = vld [vmem:[%s1565 + $0x24] sm:$0xf]
      %v1576 = vld [vmem:[%s1565 + $0x28] sm:$0xf]
      %v1577 = vld [vmem:[%s1565 + $0x2c] sm:$0xf]
      %v1578 = vld [vmem:[%s1565 + $0x30] sm:$0xf]
      %v1579 = vld [vmem:[%s1565 + $0x34] sm:$0xf]
      %v1580 = vld [vmem:[%s1565 + $0x38] sm:$0xf]
      %v1581 = vld [vmem:[%s1565 + $0x3c] sm:$0xf]
      %v1598 = vunpack.c.l.b16 %v1566
      %v1599 = vunpack.c.l.b16 %v1567
      %v1600 = vunpack.c.l.b16 %v1568
      %v1601 = vunpack.c.l.b16 %v1569
      %v1602 = vunpack.c.l.b16 %v1570
      %v1603 = vunpack.c.l.b16 %v1571
      %v1604 = vunpack.c.l.b16 %v1572
      %v1605 = vunpack.c.l.b16 %v1573
      %v1606 = vunpack.c.l.b16 %v1574
      %v1607 = vunpack.c.l.b16 %v1575
      %v1608 = vunpack.c.l.b16 %v1576
      %v1609 = vunpack.c.l.b16 %v1577
      %v1610 = vunpack.c.l.b16 %v1578
      %v1611 = vunpack.c.l.b16 %v1579
      %v1612 = vunpack.c.l.b16 %v1580
      %v1613 = vunpack.c.l.b16 %v1581
      %v1614 = vpack.c.b16 %v1599, %v1598
      %v1615 = vpack.c.b16 %v1601, %v1600
      %v1616 = vpack.c.b16 %v1603, %v1602
      %v1617 = vpack.c.b16 %v1605, %v1604
      %v1618 = vpack.c.b16 %v1607, %v1606
      %v1619 = vpack.c.b16 %v1609, %v1608
      %v1620 = vpack.c.b16 %v1611, %v1610
      %v1621 = vpack.c.b16 %v1613, %v1612
      %1630 = vmatprep.subr.bf16.mxu0 0
      %1631 = vmatpush1.bf16.msra.mxu0 %v1614
      %1632 = vmatprep.subr.bf16.mxu0 0
      %1633 = vmatpush1.bf16.msra.mxu0 %v1615
      %1634 = vmatprep.subr.bf16.mxu0 0
      %1635 = vmatpush1.bf16.msra.mxu0 %v1616
      %1636 = vmatprep.subr.bf16.mxu0 0
      %1637 = vmatpush1.bf16.msra.mxu0 %v1617
      %1638 = vmatprep.subr.bf16.mxu0 0
      %1639 = vmatpush1.bf16.msra.mxu0 %v1618
      %1640 = vmatprep.subr.bf16.mxu0 0
      %1641 = vmatpush1.bf16.msra.mxu0 %v1619
      %1642 = vmatprep.subr.bf16.mxu0 0
      %1643 = vmatpush1.bf16.msra.mxu0 %v1620
      %1644 = vmatprep.subr.bf16.mxu0 0
      %1645 = vmatpush1.bf16.msra.mxu0 %v1621
      %1646 = vmatprep.subr.bf16.mxu0 0
      %1647 = vmatpush1.bf16.msra.mxu0 0
      %1648 = vmatprep.subr.bf16.mxu0 0
      %1649 = vmatpush1.bf16.msra.mxu0 0
      %1650 = vmatprep.subr.bf16.mxu0 0
      %1651 = vmatpush1.bf16.msra.mxu0 0
      %1652 = vmatprep.subr.bf16.mxu0 0
      %1653 = vmatpush1.bf16.msra.mxu0 0
      %1654 = vmatprep.subr.bf16.mxu0 0
      %1655 = vmatpush1.bf16.msra.mxu0 0
      %1656 = vmatprep.subr.bf16.mxu0 0
      %1657 = vmatpush1.bf16.msra.mxu0 0
      %1658 = vmatprep.subr.bf16.mxu0 0
      %1659 = vmatpush1.bf16.msra.mxu0 0
      %1660 = vmatprep.subr.bf16.mxu0 0
      %1661 = vmatpush1.bf16.msra.mxu0 0
      %1662 = vmatprep.mubr.bf16.mxu0 0
      %1663 = vmatmul.mubr.bf16.gmra.mrb[0].mxu0 %v1549
      %v1664 = vpop.f32.mrb[0].mxu0
      %v1665 = vadd.f32 0.0, %v1664
      %v1666 = vpop.f32.mrb[0].mxu0
      %v1667 = vpop.f32.mrb[0].mxu0
      %v1668 = vadd.f32 0.0, %v1667
      %v1669 = vpop.f32.mrb[0].mxu0
      %1670 = vmatprep.mubr.bf16.mxu0 0
      %1671 = vmatmul.mubr.bf16.gmra.mrb[0].mxu0 %v1550
      %v1672 = vpop.f32.mrb[0].mxu0
      %v1673 = vadd.f32 0.0, %v1672
      %v1674 = vpop.f32.mrb[0].mxu0
      %v1675 = vpop.f32.mrb[0].mxu0
      %v1676 = vadd.f32 0.0, %v1675
      %v1677 = vpop.f32.mrb[0].mxu0
      %1678 = vmatprep.mubr.bf16.mxu0 0
      %1679 = vmatmul.mubr.bf16.gmra.mrb[0].mxu0 %v1551
      %v1680 = vpop.f32.mrb[0].mxu0
      %v1681 = vadd.f32 0.0, %v1680
      %v1682 = vpop.f32.mrb[0].mxu0
      %v1683 = vpop.f32.mrb[0].mxu0
      %v1684 = vadd.f32 0.0, %v1683
      %v1685 = vpop.f32.mrb[0].mxu0
      %1686 = vmatprep.mubr.bf16.mxu0 0
      %1687 = vmatmul.mubr.bf16.gmra.mrb[0].mxu0 %v1552
      %v1688 = vpop.f32.mrb[0].mxu0
      %v1689 = vadd.f32 0.0, %v1688
      %v1690 = vpop.f32.mrb[0].mxu0
      %v1691 = vpop.f32.mrb[0].mxu0
      %v1692 = vadd.f32 0.0, %v1691
      %v1693 = vpop.f32.mrb[0].mxu0
      %1694 = vmatprep.mubr.bf16.mxu0 0
      %1695 = vmatmul.mubr.bf16.gmra.mrb[0].mxu0 %v1553
      %v1696 = vpop.f32.mrb[0].mxu0
      %v1697 = vadd.f32 0.0, %v1696
      %v1698 = vpop.f32.mrb[0].mxu0
      %v1699 = vpop.f32.mrb[0].mxu0
      %v1700 = vadd.f32 0.0, %v1699
      %v1701 = vpop.f32.mrb[0].mxu0
      %1702 = vmatprep.mubr.bf16.mxu0 0
      %1703 = vmatmul.mubr.bf16.gmra.mrb[0].mxu0 %v1554
      %v1704 = vpop.f32.mrb[0].mxu0
      %v1705 = vadd.f32 0.0, %v1704
      %v1706 = vpop.f32.mrb[0].mxu0
      %v1707 = vpop.f32.mrb[0].mxu0
      %v1708 = vadd.f32 0.0, %v1707
      %v1709 = vpop.f32.mrb[0].mxu0
      %1710 = vmatprep.mubr.bf16.mxu0 0
      %1711 = vmatmul.mubr.bf16.gmra.mrb[0].mxu0 %v1555
      %v1712 = vpop.f32.mrb[0].mxu0
      %v1713 = vadd.f32 0.0, %v1712
      %v1714 = vpop.f32.mrb[0].mxu0
      %v1715 = vpop.f32.mrb[0].mxu0
      %v1716 = vadd.f32 0.0, %v1715
      %v1717 = vpop.f32.mrb[0].mxu0
      %1718 = vmatprep.mubr.bf16.mxu0 0
      %1719 = vmatmul.mubr.bf16.gmra.mrb[0].mxu0 %v1556
      %v1720 = vpop.f32.mrb[0].mxu0
      %v1721 = vadd.f32 0.0, %v1720
      %v1722 = vpop.f32.mrb[0].mxu0
      %v1723 = vpop.f32.mrb[0].mxu0
      %v1724 = vadd.f32 0.0, %v1723
      %v1725 = vpop.f32.mrb[0].mxu0
      %1726 = vmatprep.mubr.bf16.mxu0 0
      %1727 = vmatmul.mubr.bf16.gmra.mrb[0].mxu0 %v1557
      %v1728 = vpop.f32.mrb[0].mxu0
      %v1729 = vadd.f32 0.0, %v1728
      %v1730 = vpop.f32.mrb[0].mxu0
      %v1731 = vpop.f32.mrb[0].mxu0
      %v1732 = vadd.f32 0.0, %v1731
      %v1733 = vpop.f32.mrb[0].mxu0
      %1734 = vmatprep.mubr.bf16.mxu0 0
      %1735 = vmatmul.mubr.bf16.gmra.mrb[0].mxu0 %v1558
      %v1736 = vpop.f32.mrb[0].mxu0
      %v1737 = vadd.f32 0.0, %v1736
      %v1738 = vpop.f32.mrb[0].mxu0
      %v1739 = vpop.f32.mrb[0].mxu0
      %v1740 = vadd.f32 0.0, %v1739
      %v1741 = vpop.f32.mrb[0].mxu0
      %1742 = vmatprep.mubr.bf16.mxu0 0
      %1743 = vmatmul.mubr.bf16.gmra.mrb[0].mxu0 %v1559
      %v1744 = vpop.f32.mrb[0].mxu0
      %v1745 = vadd.f32 0.0, %v1744
      %v1746 = vpop.f32.mrb[0].mxu0
      %v1747 = vpop.f32.mrb[0].mxu0
      %v1748 = vadd.f32 0.0, %v1747
      %v1749 = vpop.f32.mrb[0].mxu0
      %1750 = vmatprep.mubr.bf16.mxu0 0
      %1751 = vmatmul.mubr.bf16.gmra.mrb[0].mxu0 %v1560
      %v1752 = vpop.f32.mrb[0].mxu0
      %v1753 = vadd.f32 0.0, %v1752
      %v1754 = vpop.f32.mrb[0].mxu0
      %v1755 = vpop.f32.mrb[0].mxu0
      %v1756 = vadd.f32 0.0, %v1755
      %v1757 = vpop.f32.mrb[0].mxu0
      %1758 = vmatprep.mubr.bf16.mxu0 0
      %1759 = vmatmul.mubr.bf16.gmra.mrb[0].mxu0 %v1561
      %v1760 = vpop.f32.mrb[0].mxu0
      %v1761 = vadd.f32 0.0, %v1760
      %v1762 = vpop.f32.mrb[0].mxu0
      %v1763 = vpop.f32.mrb[0].mxu0
      %v1764 = vadd.f32 0.0, %v1763
      %v1765 = vpop.f32.mrb[0].mxu0
      %1766 = vmatprep.mubr.bf16.mxu0 0
      %1767 = vmatmul.mubr.bf16.gmra.mrb[0].mxu0 %v1562
      %v1768 = vpop.f32.mrb[0].mxu0
      %v1769 = vadd.f32 0.0, %v1768
      %v1770 = vpop.f32.mrb[0].mxu0
      %v1771 = vpop.f32.mrb[0].mxu0
      %v1772 = vadd.f32 0.0, %v1771
      %v1773 = vpop.f32.mrb[0].mxu0
      %1774 = vmatprep.mubr.bf16.mxu0 0
      %1775 = vmatmul.mubr.bf16.gmra.mrb[0].mxu0 %v1563
      %v1776 = vpop.f32.mrb[0].mxu0
      %v1777 = vadd.f32 0.0, %v1776
      %v1778 = vpop.f32.mrb[0].mxu0
      %v1779 = vpop.f32.mrb[0].mxu0
      %v1780 = vadd.f32 0.0, %v1779
      %v1781 = vpop.f32.mrb[0].mxu0
      %1782 = vmatprep.mubr.bf16.mxu0 0
      %1783 = vmatmul.mubr.bf16.gmra.mrb[0].mxu0 %v1564
      %v1784 = vpop.f32.mrb[0].mxu0
      %v1785 = vadd.f32 0.0, %v1784
      %v1786 = vpop.f32.mrb[0].mxu0
      %v1787 = vpop.f32.mrb[0].mxu0
      %v1788 = vadd.f32 0.0, %v1787
      %v1789 = vpop.f32.mrb[0].mxu0
      %1790 = vdwg.mxu0
      %v1791 = vadd.f32 %v1517, %v1665
      %v1792 = vadd.f32 %v1518, %v1668
      %v1793 = vadd.f32 %v1519, %v1673
      %v1794 = vadd.f32 %v1520, %v1676
      %v1795 = vadd.f32 %v1521, %v1681
      %v1796 = vadd.f32 %v1522, %v1684
      %v1797 = vadd.f32 %v1523, %v1689
      %v1798 = vadd.f32 %v1524, %v1692
      %v1799 = vadd.f32 %v1525, %v1697
      %v1800 = vadd.f32 %v1526, %v1700
      %v1801 = vadd.f32 %v1527, %v1705
      %v1802 = vadd.f32 %v1528, %v1708
      %v1803 = vadd.f32 %v1529, %v1713
      %v1804 = vadd.f32 %v1530, %v1716
      %v1805 = vadd.f32 %v1531, %v1721
      %v1806 = vadd.f32 %v1532, %v1724
      %v1807 = vadd.f32 %v1533, %v1729
      %v1808 = vadd.f32 %v1534, %v1732
      %v1809 = vadd.f32 %v1535, %v1737
      %v1810 = vadd.f32 %v1536, %v1740
      %v1811 = vadd.f32 %v1537, %v1745
      %v1812 = vadd.f32 %v1538, %v1748
      %v1813 = vadd.f32 %v1539, %v1753
      %v1814 = vadd.f32 %v1540, %v1756
      %v1815 = vadd.f32 %v1541, %v1761
      %v1816 = vadd.f32 %v1542, %v1764
      %v1817 = vadd.f32 %v1543, %v1769
      %v1818 = vadd.f32 %v1544, %v1772
      %v1819 = vadd.f32 %v1545, %v1777
      %v1820 = vadd.f32 %v1546, %v1780
      %v1821 = vadd.f32 %v1547, %v1785
      %v1822 = vadd.f32 %v1548, %v1788
      %1823 = vst [vmem:[#allocation2] sm:$0xff] %v1791
      %1824 = vst [vmem:[#allocation2 + $0x8] sm:$0xff] %v1792
      %1825 = vst [vmem:[#allocation2 + $0x10] sm:$0xff] %v1793
      %1826 = vst [vmem:[#allocation2 + $0x18] sm:$0xff] %v1794
      %1827 = vst [vmem:[#allocation2 + $0x20] sm:$0xff] %v1795
      %1828 = vst [vmem:[#allocation2 + $0x28] sm:$0xff] %v1796
      %1829 = vst [vmem:[#allocation2 + $0x30] sm:$0xff] %v1797
      %1830 = vst [vmem:[#allocation2 + $0x38] sm:$0xff] %v1798
      %1831 = vst [vmem:[#allocation2 + $0x40] sm:$0xff] %v1799
      %1832 = vst [vmem:[#allocation2 + $0x48] sm:$0xff] %v1800
      %1833 = vst [vmem:[#allocation2 + $0x50] sm:$0xff] %v1801
      %1834 = vst [vmem:[#allocation2 + $0x58] sm:$0xff] %v1802
      %1835 = vst [vmem:[#allocation2 + $0x60] sm:$0xff] %v1803
      %1836 = vst [vmem:[#allocation2 + $0x68] sm:$0xff] %v1804
      %1837 = vst [vmem:[#allocation2 + $0x70] sm:$0xff] %v1805
      %1838 = vst [vmem:[#allocation2 + $0x78] sm:$0xff] %v1806
      %1839 = vst [vmem:[#allocation2 + $0x80] sm:$0xff] %v1807
      %1840 = vst [vmem:[#allocation2 + $0x88] sm:$0xff] %v1808
      %1841 = vst [vmem:[#allocation2 + $0x90] sm:$0xff] %v1809
      %1842 = vst [vmem:[#allocation2 + $0x98] sm:$0xff] %v1810
      %1843 = vst [vmem:[#allocation2 + $0xa0] sm:$0xff] %v1811
      %1844 = vst [vmem:[#allocation2 + $0xa8] sm:$0xff] %v1812
      %1845 = vst [vmem:[#allocation2 + $0xb0] sm:$0xff] %v1813
      %1846 = vst [vmem:[#allocation2 + $0xb8] sm:$0xff] %v1814
      %1847 = vst [vmem:[#allocation2 + $0xc0] sm:$0xff] %v1815
      %1848 = vst [vmem:[#allocation2 + $0xc8] sm:$0xff] %v1816
      %1849 = vst [vmem:[#allocation2 + $0xd0] sm:$0xff] %v1817
      %1850 = vst [vmem:[#allocation2 + $0xd8] sm:$0xff] %v1818
      %1851 = vst [vmem:[#allocation2 + $0xe0] sm:$0xff] %v1819
      %1852 = vst [vmem:[#allocation2 + $0xe8] sm:$0xff] %v1820
      %1853 = vst [vmem:[#allocation2 + $0xf0] sm:$0xff] %v1821
      %1854 = vst [vmem:[#allocation2 + $0xf8] sm:$0xff] %v1822
      %1855 = vst [vmem:[#allocation3 + $0x18] sm:$0xff] %v458
      %1856 = vst [vmem:[#allocation3 + $0x20] sm:$0xff] %v459
      %1857 = vst [vmem:[#allocation3 + $0x28] sm:$0xff] %v460
      %1858 = vst [vmem:[#allocation3 + $0x30] sm:$0xff] %v461
      %1859 = vst [vmem:[#allocation3 + $0x38] sm:$0xff] %v462
      %1860 = vst [vmem:[#allocation3 + $0x40] sm:$0xff] %v463
      %1861 = vst [vmem:[#allocation3 + $0x48] sm:$0xff] %v464
      %1862 = vst [vmem:[#allocation3 + $0x50] sm:$0xff] %v465
      %1863 = vst [vmem:[#allocation3 + $0x58] sm:$0xff] %v466
      %1864 = vst [vmem:[#allocation3 + $0x60] sm:$0xff] %v467
      %1865 = vst [vmem:[#allocation3 + $0x68] sm:$0xff] %v468
      %1866 = vst [vmem:[#allocation3 + $0x70] sm:$0xff] %v469
      %1867 = vst [vmem:[#allocation3 + $0x78] sm:$0xff] %v470
      %1868 = vst [vmem:[#allocation3 + $0x80] sm:$0xff] %v471
      %1869 = vst [vmem:[#allocation3 + $0x88] sm:$0xff] %v472
      %1870 = vst [vmem:[#allocation3 + $0x90] sm:$0xff] %v473
      %1871 = vst [vmem:[#allocation3 + $0x98] sm:$0xff] %v474
      %1872 = vst [vmem:[#allocation3 + $0xa0] sm:$0xff] %v475
      %1873 = vst [vmem:[#allocation3 + $0xa8] sm:$0xff] %v476
      %1874 = vst [vmem:[#allocation3 + $0xb0] sm:$0xff] %v477
      %1875 = vst [vmem:[#allocation3 + $0xb8] sm:$0xff] %v478
      %1876 = vst [vmem:[#allocation3 + $0xc0] sm:$0xff] %v479
      %1877 = vst [vmem:[#allocation3 + $0xc8] sm:$0xff] %v480
      %1878 = vst [vmem:[#allocation3 + $0xd0] sm:$0xff] %v481
      %1879 = vst [vmem:[#allocation3 + $0xd8] sm:$0xff] %v482
      %1880 = vst [vmem:[#allocation3 + $0xe0] sm:$0xff] %v483
      %1881 = vst [vmem:[#allocation3 + $0xe8] sm:$0xff] %v484
      %1882 = vst [vmem:[#allocation3 + $0xf0] sm:$0xff] %v485
      %1883 = vst [vmem:[#allocation3 + $0xf8] sm:$0xff] %v486
      %1884 = vst [vmem:[#allocation3 + $0x100] sm:$0xff] %v487
      %1885 = vst [vmem:[#allocation3 + $0x108] sm:$0xff] %v488
      %1886 = vst [vmem:[#allocation3 + $0x110] sm:$0xff] %v489
      %v1887 = vld [vmem:[#allocation3 + $0x8] sm:$0xff]
      %v1888 = vld [vmem:[#allocation3 + $0x10] sm:$0xff]
      %v1889 = vld [vmem:[#allocation3 + $0x18] sm:$0xff]
      %v1890 = vld [vmem:[#allocation3 + $0x20] sm:$0xff]
      %v1891 = vld [vmem:[#allocation3 + $0x28] sm:$0xff]
      %v1892 = vld [vmem:[#allocation3 + $0x30] sm:$0xff]
      %v1893 = vld [vmem:[#allocation3 + $0x38] sm:$0xff]
      %v1894 = vld [vmem:[#allocation3 + $0x40] sm:$0xff]
      %v1895 = vld [vmem:[#allocation3 + $0x48] sm:$0xff]
      %v1896 = vld [vmem:[#allocation3 + $0x50] sm:$0xff]
      %v1897 = vld [vmem:[#allocation3 + $0x58] sm:$0xff]
      %v1898 = vld [vmem:[#allocation3 + $0x60] sm:$0xff]
      %v1899 = vld [vmem:[#allocation3 + $0x68] sm:$0xff]
      %v1900 = vld [vmem:[#allocation3 + $0x70] sm:$0xff]
      %v1901 = vld [vmem:[#allocation3 + $0x78] sm:$0xff]
      %v1902 = vld [vmem:[#allocation3 + $0x80] sm:$0xff]
      %v1903 = vld [vmem:[#allocation3 + $0x88] sm:$0xff]
      %v1904 = vld [vmem:[#allocation3 + $0x90] sm:$0xff]
      %v1905 = vld [vmem:[#allocation3 + $0x98] sm:$0xff]
      %v1906 = vld [vmem:[#allocation3 + $0xa0] sm:$0xff]
      %v1907 = vld [vmem:[#allocation3 + $0xa8] sm:$0xff]
      %v1908 = vld [vmem:[#allocation3 + $0xb0] sm:$0xff]
      %v1909 = vld [vmem:[#allocation3 + $0xb8] sm:$0xff]
      %v1910 = vld [vmem:[#allocation3 + $0xc0] sm:$0xff]
      %v1911 = vld [vmem:[#allocation3 + $0xc8] sm:$0xff]
      %v1912 = vld [vmem:[#allocation3 + $0xd0] sm:$0xff]
      %v1913 = vld [vmem:[#allocation3 + $0xd8] sm:$0xff]
      %v1914 = vld [vmem:[#allocation3 + $0xe0] sm:$0xff]
      %v1915 = vld [vmem:[#allocation3 + $0xe8] sm:$0xff]
      %v1916 = vld [vmem:[#allocation3 + $0xf0] sm:$0xff]
      %v1917 = vld [vmem:[#allocation3 + $0xf8] sm:$0xff]
      %v1918 = vld [vmem:[#allocation3 + $0x100] sm:$0xff]
      %v1919 = vld [vmem:[#allocation2] sm:$0xff]
      %v1920 = vld [vmem:[#allocation2 + $0x8] sm:$0xff]
      %v1921 = vld [vmem:[#allocation2 + $0x10] sm:$0xff]
      %v1922 = vld [vmem:[#allocation2 + $0x18] sm:$0xff]
      %v1923 = vld [vmem:[#allocation2 + $0x20] sm:$0xff]
      %v1924 = vld [vmem:[#allocation2 + $0x28] sm:$0xff]
      %v1925 = vld [vmem:[#allocation2 + $0x30] sm:$0xff]
      %v1926 = vld [vmem:[#allocation2 + $0x38] sm:$0xff]
      %v1927 = vld [vmem:[#allocation2 + $0x40] sm:$0xff]
      %v1928 = vld [vmem:[#allocation2 + $0x48] sm:$0xff]
      %v1929 = vld [vmem:[#allocation2 + $0x50] sm:$0xff]
      %v1930 = vld [vmem:[#allocation2 + $0x58] sm:$0xff]
      %v1931 = vld [vmem:[#allocation2 + $0x60] sm:$0xff]
      %v1932 = vld [vmem:[#allocation2 + $0x68] sm:$0xff]
      %v1933 = vld [vmem:[#allocation2 + $0x70] sm:$0xff]
      %v1934 = vld [vmem:[#allocation2 + $0x78] sm:$0xff]
      %v1935 = vld [vmem:[#allocation2 + $0x80] sm:$0xff]
      %v1936 = vld [vmem:[#allocation2 + $0x88] sm:$0xff]
      %v1937 = vld [vmem:[#allocation2 + $0x90] sm:$0xff]
      %v1938 = vld [vmem:[#allocation2 + $0x98] sm:$0xff]
      %v1939 = vld [vmem:[#allocation2 + $0xa0] sm:$0xff]
      %v1940 = vld [vmem:[#allocation2 + $0xa8] sm:$0xff]
      %v1941 = vld [vmem:[#allocation2 + $0xb0] sm:$0xff]
      %v1942 = vld [vmem:[#allocation2 + $0xb8] sm:$0xff]
      %v1943 = vld [vmem:[#allocation2 + $0xc0] sm:$0xff]
      %v1944 = vld [vmem:[#allocation2 + $0xc8] sm:$0xff]
      %v1945 = vld [vmem:[#allocation2 + $0xd0] sm:$0xff]
      %v1946 = vld [vmem:[#allocation2 + $0xd8] sm:$0xff]
      %v1947 = vld [vmem:[#allocation2 + $0xe0] sm:$0xff]
      %v1948 = vld [vmem:[#allocation2 + $0xe8] sm:$0xff]
      %v1949 = vld [vmem:[#allocation2 + $0xf0] sm:$0xff]
      %v1950 = vld [vmem:[#allocation2 + $0xf8] sm:$0xff]
      %v1951 = vpack.c.bf16 %v1888, %v1887
      %v1952 = vpack.c.bf16 %v1890, %v1889
      %v1953 = vpack.c.bf16 %v1892, %v1891
      %v1954 = vpack.c.bf16 %v1894, %v1893
      %v1955 = vpack.c.bf16 %v1896, %v1895
      %v1956 = vpack.c.bf16 %v1898, %v1897
      %v1957 = vpack.c.bf16 %v1900, %v1899
      %v1958 = vpack.c.bf16 %v1902, %v1901
      %v1959 = vpack.c.bf16 %v1904, %v1903
      %v1960 = vpack.c.bf16 %v1906, %v1905
      %v1961 = vpack.c.bf16 %v1908, %v1907
      %v1962 = vpack.c.bf16 %v1910, %v1909
      %v1963 = vpack.c.bf16 %v1912, %v1911
      %v1964 = vpack.c.bf16 %v1914, %v1913
      %v1965 = vpack.c.bf16 %v1916, %v1915
      %v1966 = vpack.c.bf16 %v1918, %v1917
      %s1967 = scalar_lea.vmem %s3, 64
      %v1968 = vld [vmem:[%s1967] sm:$0xf]
      %v1969 = vld [vmem:[%s1967 + $0x4] sm:$0xf]
      %v1970 = vld [vmem:[%s1967 + $0x8] sm:$0xf]
      %v1971 = vld [vmem:[%s1967 + $0xc] sm:$0xf]
      %v1972 = vld [vmem:[%s1967 + $0x10] sm:$0xf]
      %v1973 = vld [vmem:[%s1967 + $0x14] sm:$0xf]
      %v1974 = vld [vmem:[%s1967 + $0x18] sm:$0xf]
      %v1975 = vld [vmem:[%s1967 + $0x1c] sm:$0xf]
      %v1976 = vld [vmem:[%s1967 + $0x20] sm:$0xf]
      %v1977 = vld [vmem:[%s1967 + $0x24] sm:$0xf]
      %v1978 = vld [vmem:[%s1967 + $0x28] sm:$0xf]
      %v1979 = vld [vmem:[%s1967 + $0x2c] sm:$0xf]
      %v1980 = vld [vmem:[%s1967 + $0x30] sm:$0xf]
      %v1981 = vld [vmem:[%s1967 + $0x34] sm:$0xf]
      %v1982 = vld [vmem:[%s1967 + $0x38] sm:$0xf]
      %v1983 = vld [vmem:[%s1967 + $0x3c] sm:$0xf]
      %v2000 = vunpack.c.l.b16 %v1968
      %v2001 = vunpack.c.l.b16 %v1969
      %v2002 = vunpack.c.l.b16 %v1970
      %v2003 = vunpack.c.l.b16 %v1971
      %v2004 = vunpack.c.l.b16 %v1972
      %v2005 = vunpack.c.l.b16 %v1973
      %v2006 = vunpack.c.l.b16 %v1974
      %v2007 = vunpack.c.l.b16 %v1975
      %v2008 = vunpack.c.l.b16 %v1976
      %v2009 = vunpack.c.l.b16 %v1977
      %v2010 = vunpack.c.l.b16 %v1978
      %v2011 = vunpack.c.l.b16 %v1979
      %v2012 = vunpack.c.l.b16 %v1980
      %v2013 = vunpack.c.l.b16 %v1981
      %v2014 = vunpack.c.l.b16 %v1982
      %v2015 = vunpack.c.l.b16 %v1983
      %v2016 = vpack.c.b16 %v2001, %v2000
      %v2017 = vpack.c.b16 %v2003, %v2002
      %v2018 = vpack.c.b16 %v2005, %v2004
      %v2019 = vpack.c.b16 %v2007, %v2006
      %v2020 = vpack.c.b16 %v2009, %v2008
      %v2021 = vpack.c.b16 %v2011, %v2010
      %v2022 = vpack.c.b16 %v2013, %v2012
      %v2023 = vpack.c.b16 %v2015, %v2014
      %2032 = vmatprep.subr.bf16.mxu0 0
      %2033 = vmatpush1.bf16.msra.mxu0 %v2016
      %2034 = vmatprep.subr.bf16.mxu0 0
      %2035 = vmatpush1.bf16.msra.mxu0 %v2017
      %2036 = vmatprep.subr.bf16.mxu0 0
      %2037 = vmatpush1.bf16.msra.mxu0 %v2018
      %2038 = vmatprep.subr.bf16.mxu0 0
      %2039 = vmatpush1.bf16.msra.mxu0 %v2019
      %2040 = vmatprep.subr.bf16.mxu0 0
      %2041 = vmatpush1.bf16.msra.mxu0 %v2020
      %2042 = vmatprep.subr.bf16.mxu0 0
      %2043 = vmatpush1.bf16.msra.mxu0 %v2021
      %2044 = vmatprep.subr.bf16.mxu0 0
      %2045 = vmatpush1.bf16.msra.mxu0 %v2022
      %2046 = vmatprep.subr.bf16.mxu0 0
      %2047 = vmatpush1.bf16.msra.mxu0 %v2023
      %2048 = vmatprep.subr.bf16.mxu0 0
      %2049 = vmatpush1.bf16.msra.mxu0 0
      %2050 = vmatprep.subr.bf16.mxu0 0
      %2051 = vmatpush1.bf16.msra.mxu0 0
      %2052 = vmatprep.subr.bf16.mxu0 0
      %2053 = vmatpush1.bf16.msra.mxu0 0
      %2054 = vmatprep.subr.bf16.mxu0 0
      %2055 = vmatpush1.bf16.msra.mxu0 0
      %2056 = vmatprep.subr.bf16.mxu0 0
      %2057 = vmatpush1.bf16.msra.mxu0 0
      %2058 = vmatprep.subr.bf16.mxu0 0
      %2059 = vmatpush1.bf16.msra.mxu0 0
      %2060 = vmatprep.subr.bf16.mxu0 0
      %2061 = vmatpush1.bf16.msra.mxu0 0
      %2062 = vmatprep.subr.bf16.mxu0 0
      %2063 = vmatpush1.bf16.msra.mxu0 0
      %2064 = vmatprep.mubr.bf16.mxu0 0
      %2065 = vmatmul.mubr.bf16.gmra.mrb[0].mxu0 %v1951
      %v2066 = vpop.f32.mrb[0].mxu0
      %v2067 = vadd.f32 0.0, %v2066
      %v2068 = vpop.f32.mrb[0].mxu0
      %v2069 = vpop.f32.mrb[0].mxu0
      %v2070 = vadd.f32 0.0, %v2069
      %v2071 = vpop.f32.mrb[0].mxu0
      %2072 = vmatprep.mubr.bf16.mxu0 0
      %2073 = vmatmul.mubr.bf16.gmra.mrb[0].mxu0 %v1952
      %v2074 = vpop.f32.mrb[0].mxu0
      %v2075 = vadd.f32 0.0, %v2074
      %v2076 = vpop.f32.mrb[0].mxu0
      %v2077 = vpop.f32.mrb[0].mxu0
      %v2078 = vadd.f32 0.0, %v2077
      %v2079 = vpop.f32.mrb[0].mxu0
      %2080 = vmatprep.mubr.bf16.mxu0 0
      %2081 = vmatmul.mubr.bf16.gmra.mrb[0].mxu0 %v1953
      %v2082 = vpop.f32.mrb[0].mxu0
      %v2083 = vadd.f32 0.0, %v2082
      %v2084 = vpop.f32.mrb[0].mxu0
      %v2085 = vpop.f32.mrb[0].mxu0
      %v2086 = vadd.f32 0.0, %v2085
      %v2087 = vpop.f32.mrb[0].mxu0
      %2088 = vmatprep.mubr.bf16.mxu0 0
      %2089 = vmatmul.mubr.bf16.gmra.mrb[0].mxu0 %v1954
      %v2090 = vpop.f32.mrb[0].mxu0
      %v2091 = vadd.f32 0.0, %v2090
      %v2092 = vpop.f32.mrb[0].mxu0
      %v2093 = vpop.f32.mrb[0].mxu0
      %v2094 = vadd.f32 0.0, %v2093
      %v2095 = vpop.f32.mrb[0].mxu0
      %2096 = vmatprep.mubr.bf16.mxu0 0
      %2097 = vmatmul.mubr.bf16.gmra.mrb[0].mxu0 %v1955
      %v2098 = vpop.f32.mrb[0].mxu0
      %v2099 = vadd.f32 0.0, %v2098
      %v2100 = vpop.f32.mrb[0].mxu0
      %v2101 = vpop.f32.mrb[0].mxu0
      %v2102 = vadd.f32 0.0, %v2101
      %v2103 = vpop.f32.mrb[0].mxu0
      %2104 = vmatprep.mubr.bf16.mxu0 0
      %2105 = vmatmul.mubr.bf16.gmra.mrb[0].mxu0 %v1956
      %v2106 = vpop.f32.mrb[0].mxu0
      %v2107 = vadd.f32 0.0, %v2106
      %v2108 = vpop.f32.mrb[0].mxu0
      %v2109 = vpop.f32.mrb[0].mxu0
      %v2110 = vadd.f32 0.0, %v2109
      %v2111 = vpop.f32.mrb[0].mxu0
      %2112 = vmatprep.mubr.bf16.mxu0 0
      %2113 = vmatmul.mubr.bf16.gmra.mrb[0].mxu0 %v1957
      %v2114 = vpop.f32.mrb[0].mxu0
      %v2115 = vadd.f32 0.0, %v2114
      %v2116 = vpop.f32.mrb[0].mxu0
      %v2117 = vpop.f32.mrb[0].mxu0
      %v2118 = vadd.f32 0.0, %v2117
      %v2119 = vpop.f32.mrb[0].mxu0
      %2120 = vmatprep.mubr.bf16.mxu0 0
      %2121 = vmatmul.mubr.bf16.gmra.mrb[0].mxu0 %v1958
      %v2122 = vpop.f32.mrb[0].mxu0
      %v2123 = vadd.f32 0.0, %v2122
      %v2124 = vpop.f32.mrb[0].mxu0
      %v2125 = vpop.f32.mrb[0].mxu0
      %v2126 = vadd.f32 0.0, %v2125
      %v2127 = vpop.f32.mrb[0].mxu0
      %2128 = vmatprep.mubr.bf16.mxu0 0
      %2129 = vmatmul.mubr.bf16.gmra.mrb[0].mxu0 %v1959
      %v2130 = vpop.f32.mrb[0].mxu0
      %v2131 = vadd.f32 0.0, %v2130
      %v2132 = vpop.f32.mrb[0].mxu0
      %v2133 = vpop.f32.mrb[0].mxu0
      %v2134 = vadd.f32 0.0, %v2133
      %v2135 = vpop.f32.mrb[0].mxu0
      %2136 = vmatprep.mubr.bf16.mxu0 0
      %2137 = vmatmul.mubr.bf16.gmra.mrb[0].mxu0 %v1960
      %v2138 = vpop.f32.mrb[0].mxu0
      %v2139 = vadd.f32 0.0, %v2138
      %v2140 = vpop.f32.mrb[0].mxu0
      %v2141 = vpop.f32.mrb[0].mxu0
      %v2142 = vadd.f32 0.0, %v2141
      %v2143 = vpop.f32.mrb[0].mxu0
      %2144 = vmatprep.mubr.bf16.mxu0 0
      %2145 = vmatmul.mubr.bf16.gmra.mrb[0].mxu0 %v1961
      %v2146 = vpop.f32.mrb[0].mxu0
      %v2147 = vadd.f32 0.0, %v2146
      %v2148 = vpop.f32.mrb[0].mxu0
      %v2149 = vpop.f32.mrb[0].mxu0
      %v2150 = vadd.f32 0.0, %v2149
      %v2151 = vpop.f32.mrb[0].mxu0
      %2152 = vmatprep.mubr.bf16.mxu0 0
      %2153 = vmatmul.mubr.bf16.gmra.mrb[0].mxu0 %v1962
      %v2154 = vpop.f32.mrb[0].mxu0
      %v2155 = vadd.f32 0.0, %v2154
      %v2156 = vpop.f32.mrb[0].mxu0
      %v2157 = vpop.f32.mrb[0].mxu0
      %v2158 = vadd.f32 0.0, %v2157
      %v2159 = vpop.f32.mrb[0].mxu0
      %2160 = vmatprep.mubr.bf16.mxu0 0
      %2161 = vmatmul.mubr.bf16.gmra.mrb[0].mxu0 %v1963
      %v2162 = vpop.f32.mrb[0].mxu0
      %v2163 = vadd.f32 0.0, %v2162
      %v2164 = vpop.f32.mrb[0].mxu0
      %v2165 = vpop.f32.mrb[0].mxu0
      %v2166 = vadd.f32 0.0, %v2165
      %v2167 = vpop.f32.mrb[0].mxu0
      %2168 = vmatprep.mubr.bf16.mxu0 0
      %2169 = vmatmul.mubr.bf16.gmra.mrb[0].mxu0 %v1964
      %v2170 = vpop.f32.mrb[0].mxu0
      %v2171 = vadd.f32 0.0, %v2170
      %v2172 = vpop.f32.mrb[0].mxu0
      %v2173 = vpop.f32.mrb[0].mxu0
      %v2174 = vadd.f32 0.0, %v2173
      %v2175 = vpop.f32.mrb[0].mxu0
      %2176 = vmatprep.mubr.bf16.mxu0 0
      %2177 = vmatmul.mubr.bf16.gmra.mrb[0].mxu0 %v1965
      %v2178 = vpop.f32.mrb[0].mxu0
      %v2179 = vadd.f32 0.0, %v2178
      %v2180 = vpop.f32.mrb[0].mxu0
      %v2181 = vpop.f32.mrb[0].mxu0
      %v2182 = vadd.f32 0.0, %v2181
      %v2183 = vpop.f32.mrb[0].mxu0
      %2184 = vmatprep.mubr.bf16.mxu0 0
      %2185 = vmatmul.mubr.bf16.gmra.mrb[0].mxu0 %v1966
      %v2186 = vpop.f32.mrb[0].mxu0
      %v2187 = vadd.f32 0.0, %v2186
      %v2188 = vpop.f32.mrb[0].mxu0
      %v2189 = vpop.f32.mrb[0].mxu0
      %v2190 = vadd.f32 0.0, %v2189
      %v2191 = vpop.f32.mrb[0].mxu0
      %2192 = vdwg.mxu0
      %v2193 = vadd.f32 %v1919, %v2067
      %v2194 = vadd.f32 %v1920, %v2070
      %v2195 = vadd.f32 %v1921, %v2075
      %v2196 = vadd.f32 %v1922, %v2078
      %v2197 = vadd.f32 %v1923, %v2083
      %v2198 = vadd.f32 %v1924, %v2086
      %v2199 = vadd.f32 %v1925, %v2091
      %v2200 = vadd.f32 %v1926, %v2094
      %v2201 = vadd.f32 %v1927, %v2099
      %v2202 = vadd.f32 %v1928, %v2102
      %v2203 = vadd.f32 %v1929, %v2107
      %v2204 = vadd.f32 %v1930, %v2110
      %v2205 = vadd.f32 %v1931, %v2115
      %v2206 = vadd.f32 %v1932, %v2118
      %v2207 = vadd.f32 %v1933, %v2123
      %v2208 = vadd.f32 %v1934, %v2126
      %v2209 = vadd.f32 %v1935, %v2131
      %v2210 = vadd.f32 %v1936, %v2134
      %v2211 = vadd.f32 %v1937, %v2139
      %v2212 = vadd.f32 %v1938, %v2142
      %v2213 = vadd.f32 %v1939, %v2147
      %v2214 = vadd.f32 %v1940, %v2150
      %v2215 = vadd.f32 %v1941, %v2155
      %v2216 = vadd.f32 %v1942, %v2158
      %v2217 = vadd.f32 %v1943, %v2163
      %v2218 = vadd.f32 %v1944, %v2166
      %v2219 = vadd.f32 %v1945, %v2171
      %v2220 = vadd.f32 %v1946, %v2174
      %v2221 = vadd.f32 %v1947, %v2179
      %v2222 = vadd.f32 %v1948, %v2182
      %v2223 = vadd.f32 %v1949, %v2187
      %v2224 = vadd.f32 %v1950, %v2190
      %2225 = vst [vmem:[#allocation2] sm:$0xff] %v2193
      %2226 = vst [vmem:[#allocation2 + $0x8] sm:$0xff] %v2194
      %2227 = vst [vmem:[#allocation2 + $0x10] sm:$0xff] %v2195
      %2228 = vst [vmem:[#allocation2 + $0x18] sm:$0xff] %v2196
      %2229 = vst [vmem:[#allocation2 + $0x20] sm:$0xff] %v2197
      %2230 = vst [vmem:[#allocation2 + $0x28] sm:$0xff] %v2198
      %2231 = vst [vmem:[#allocation2 + $0x30] sm:$0xff] %v2199
      %2232 = vst [vmem:[#allocation2 + $0x38] sm:$0xff] %v2200
      %2233 = vst [vmem:[#allocation2 + $0x40] sm:$0xff] %v2201
      %2234 = vst [vmem:[#allocation2 + $0x48] sm:$0xff] %v2202
      %2235 = vst [vmem:[#allocation2 + $0x50] sm:$0xff] %v2203
      %2236 = vst [vmem:[#allocation2 + $0x58] sm:$0xff] %v2204
      %2237 = vst [vmem:[#allocation2 + $0x60] sm:$0xff] %v2205
      %2238 = vst [vmem:[#allocation2 + $0x68] sm:$0xff] %v2206
      %2239 = vst [vmem:[#allocation2 + $0x70] sm:$0xff] %v2207
      %2240 = vst [vmem:[#allocation2 + $0x78] sm:$0xff] %v2208
      %2241 = vst [vmem:[#allocation2 + $0x80] sm:$0xff] %v2209
      %2242 = vst [vmem:[#allocation2 + $0x88] sm:$0xff] %v2210
      %2243 = vst [vmem:[#allocation2 + $0x90] sm:$0xff] %v2211
      %2244 = vst [vmem:[#allocation2 + $0x98] sm:$0xff] %v2212
      %2245 = vst [vmem:[#allocation2 + $0xa0] sm:$0xff] %v2213
      %2246 = vst [vmem:[#allocation2 + $0xa8] sm:$0xff] %v2214
      %2247 = vst [vmem:[#allocation2 + $0xb0] sm:$0xff] %v2215
      %2248 = vst [vmem:[#allocation2 + $0xb8] sm:$0xff] %v2216
      %2249 = vst [vmem:[#allocation2 + $0xc0] sm:$0xff] %v2217
      %2250 = vst [vmem:[#allocation2 + $0xc8] sm:$0xff] %v2218
      %2251 = vst [vmem:[#allocation2 + $0xd0] sm:$0xff] %v2219
      %2252 = vst [vmem:[#allocation2 + $0xd8] sm:$0xff] %v2220
      %2253 = vst [vmem:[#allocation2 + $0xe0] sm:$0xff] %v2221
      %2254 = vst [vmem:[#allocation2 + $0xe8] sm:$0xff] %v2222
      %2255 = vst [vmem:[#allocation2 + $0xf0] sm:$0xff] %v2223
      %2256 = vst [vmem:[#allocation2 + $0xf8] sm:$0xff] %v2224
      %v2257 = vld [vmem:[#allocation3 + $0x18] sm:$0xff]
      %v2258 = vld [vmem:[#allocation3 + $0x20] sm:$0xff]
      %v2259 = vld [vmem:[#allocation3 + $0x28] sm:$0xff]
      %v2260 = vld [vmem:[#allocation3 + $0x30] sm:$0xff]
      %v2261 = vld [vmem:[#allocation3 + $0x38] sm:$0xff]
      %v2262 = vld [vmem:[#allocation3 + $0x40] sm:$0xff]
      %v2263 = vld [vmem:[#allocation3 + $0x48] sm:$0xff]
      %v2264 = vld [vmem:[#allocation3 + $0x50] sm:$0xff]
      %v2265 = vld [vmem:[#allocation3 + $0x58] sm:$0xff]
      %v2266 = vld [vmem:[#allocation3 + $0x60] sm:$0xff]
      %v2267 = vld [vmem:[#allocation3 + $0x68] sm:$0xff]
      %v2268 = vld [vmem:[#allocation3 + $0x70] sm:$0xff]
      %v2269 = vld [vmem:[#allocation3 + $0x78] sm:$0xff]
      %v2270 = vld [vmem:[#allocation3 + $0x80] sm:$0xff]
      %v2271 = vld [vmem:[#allocation3 + $0x88] sm:$0xff]
      %v2272 = vld [vmem:[#allocation3 + $0x90] sm:$0xff]
      %v2273 = vld [vmem:[#allocation3 + $0x98] sm:$0xff]
      %v2274 = vld [vmem:[#allocation3 + $0xa0] sm:$0xff]
      %v2275 = vld [vmem:[#allocation3 + $0xa8] sm:$0xff]
      %v2276 = vld [vmem:[#allocation3 + $0xb0] sm:$0xff]
      %v2277 = vld [vmem:[#allocation3 + $0xb8] sm:$0xff]
      %v2278 = vld [vmem:[#allocation3 + $0xc0] sm:$0xff]
      %v2279 = vld [vmem:[#allocation3 + $0xc8] sm:$0xff]
      %v2280 = vld [vmem:[#allocation3 + $0xd0] sm:$0xff]
      %v2281 = vld [vmem:[#allocation3 + $0xd8] sm:$0xff]
      %v2282 = vld [vmem:[#allocation3 + $0xe0] sm:$0xff]
      %v2283 = vld [vmem:[#allocation3 + $0xe8] sm:$0xff]
      %v2284 = vld [vmem:[#allocation3 + $0xf0] sm:$0xff]
      %v2285 = vld [vmem:[#allocation3 + $0xf8] sm:$0xff]
      %v2286 = vld [vmem:[#allocation3 + $0x100] sm:$0xff]
      %v2287 = vld [vmem:[#allocation3 + $0x108] sm:$0xff]
      %v2288 = vld [vmem:[#allocation3 + $0x110] sm:$0xff]
      %v2289 = vld [vmem:[#allocation2] sm:$0xff]
      %v2290 = vld [vmem:[#allocation2 + $0x8] sm:$0xff]
      %v2291 = vld [vmem:[#allocation2 + $0x10] sm:$0xff]
      %v2292 = vld [vmem:[#allocation2 + $0x18] sm:$0xff]
      %v2293 = vld [vmem:[#allocation2 + $0x20] sm:$0xff]
      %v2294 = vld [vmem:[#allocation2 + $0x28] sm:$0xff]
      %v2295 = vld [vmem:[#allocation2 + $0x30] sm:$0xff]
      %v2296 = vld [vmem:[#allocation2 + $0x38] sm:$0xff]
      %v2297 = vld [vmem:[#allocation2 + $0x40] sm:$0xff]
      %v2298 = vld [vmem:[#allocation2 + $0x48] sm:$0xff]
      %v2299 = vld [vmem:[#allocation2 + $0x50] sm:$0xff]
      %v2300 = vld [vmem:[#allocation2 + $0x58] sm:$0xff]
      %v2301 = vld [vmem:[#allocation2 + $0x60] sm:$0xff]
      %v2302 = vld [vmem:[#allocation2 + $0x68] sm:$0xff]
      %v2303 = vld [vmem:[#allocation2 + $0x70] sm:$0xff]
      %v2304 = vld [vmem:[#allocation2 + $0x78] sm:$0xff]
      %v2305 = vld [vmem:[#allocation2 + $0x80] sm:$0xff]
      %v2306 = vld [vmem:[#allocation2 + $0x88] sm:$0xff]
      %v2307 = vld [vmem:[#allocation2 + $0x90] sm:$0xff]
      %v2308 = vld [vmem:[#allocation2 + $0x98] sm:$0xff]
      %v2309 = vld [vmem:[#allocation2 + $0xa0] sm:$0xff]
      %v2310 = vld [vmem:[#allocation2 + $0xa8] sm:$0xff]
      %v2311 = vld [vmem:[#allocation2 + $0xb0] sm:$0xff]
      %v2312 = vld [vmem:[#allocation2 + $0xb8] sm:$0xff]
      %v2313 = vld [vmem:[#allocation2 + $0xc0] sm:$0xff]
      %v2314 = vld [vmem:[#allocation2 + $0xc8] sm:$0xff]
      %v2315 = vld [vmem:[#allocation2 + $0xd0] sm:$0xff]
      %v2316 = vld [vmem:[#allocation2 + $0xd8] sm:$0xff]
      %v2317 = vld [vmem:[#allocation2 + $0xe0] sm:$0xff]
      %v2318 = vld [vmem:[#allocation2 + $0xe8] sm:$0xff]
      %v2319 = vld [vmem:[#allocation2 + $0xf0] sm:$0xff]
      %v2320 = vld [vmem:[#allocation2 + $0xf8] sm:$0xff]
      %v2321 = vpack.c.bf16 %v2258, %v2257
      %v2322 = vpack.c.bf16 %v2260, %v2259
      %v2323 = vpack.c.bf16 %v2262, %v2261
      %v2324 = vpack.c.bf16 %v2264, %v2263
      %v2325 = vpack.c.bf16 %v2266, %v2265
      %v2326 = vpack.c.bf16 %v2268, %v2267
      %v2327 = vpack.c.bf16 %v2270, %v2269
      %v2328 = vpack.c.bf16 %v2272, %v2271
      %v2329 = vpack.c.bf16 %v2274, %v2273
      %v2330 = vpack.c.bf16 %v2276, %v2275
      %v2331 = vpack.c.bf16 %v2278, %v2277
      %v2332 = vpack.c.bf16 %v2280, %v2279
      %v2333 = vpack.c.bf16 %v2282, %v2281
      %v2334 = vpack.c.bf16 %v2284, %v2283
      %v2335 = vpack.c.bf16 %v2286, %v2285
      %v2336 = vpack.c.bf16 %v2288, %v2287
      %s2337 = scalar_lea.vmem %s3, 256
      %v2338 = vld [vmem:[%s2337] sm:$0xf]
      %v2339 = vld [vmem:[%s2337 + $0x4] sm:$0xf]
      %v2340 = vld [vmem:[%s2337 + $0x8] sm:$0xf]
      %v2341 = vld [vmem:[%s2337 + $0xc] sm:$0xf]
      %v2342 = vld [vmem:[%s2337 + $0x10] sm:$0xf]
      %v2343 = vld [vmem:[%s2337 + $0x14] sm:$0xf]
      %v2344 = vld [vmem:[%s2337 + $0x18] sm:$0xf]
      %v2345 = vld [vmem:[%s2337 + $0x1c] sm:$0xf]
      %v2346 = vld [vmem:[%s2337 + $0x20] sm:$0xf]
      %v2347 = vld [vmem:[%s2337 + $0x24] sm:$0xf]
      %v2348 = vld [vmem:[%s2337 + $0x28] sm:$0xf]
      %v2349 = vld [vmem:[%s2337 + $0x2c] sm:$0xf]
      %v2350 = vld [vmem:[%s2337 + $0x30] sm:$0xf]
      %v2351 = vld [vmem:[%s2337 + $0x34] sm:$0xf]
      %v2352 = vld [vmem:[%s2337 + $0x38] sm:$0xf]
      %v2353 = vld [vmem:[%s2337 + $0x3c] sm:$0xf]
      %v2370 = vunpack.c.l.b16 %v2338
      %v2371 = vunpack.c.l.b16 %v2339
      %v2372 = vunpack.c.l.b16 %v2340
      %v2373 = vunpack.c.l.b16 %v2341
      %v2374 = vunpack.c.l.b16 %v2342
      %v2375 = vunpack.c.l.b16 %v2343
      %v2376 = vunpack.c.l.b16 %v2344
      %v2377 = vunpack.c.l.b16 %v2345
      %v2378 = vunpack.c.l.b16 %v2346
      %v2379 = vunpack.c.l.b16 %v2347
      %v2380 = vunpack.c.l.b16 %v2348
      %v2381 = vunpack.c.l.b16 %v2349
      %v2382 = vunpack.c.l.b16 %v2350
      %v2383 = vunpack.c.l.b16 %v2351
      %v2384 = vunpack.c.l.b16 %v2352
      %v2385 = vunpack.c.l.b16 %v2353
      %v2386 = vpack.c.b16 %v2371, %v2370
      %v2387 = vpack.c.b16 %v2373, %v2372
      %v2388 = vpack.c.b16 %v2375, %v2374
      %v2389 = vpack.c.b16 %v2377, %v2376
      %v2390 = vpack.c.b16 %v2379, %v2378
      %v2391 = vpack.c.b16 %v2381, %v2380
      %v2392 = vpack.c.b16 %v2383, %v2382
      %v2393 = vpack.c.b16 %v2385, %v2384
      %2402 = vmatprep.subr.bf16.mxu0 0
      %2403 = vmatpush1.bf16.msra.mxu0 %v2386
      %2404 = vmatprep.subr.bf16.mxu0 0
      %2405 = vmatpush1.bf16.msra.mxu0 %v2387
      %2406 = vmatprep.subr.bf16.mxu0 0
      %2407 = vmatpush1.bf16.msra.mxu0 %v2388
      %2408 = vmatprep.subr.bf16.mxu0 0
      %2409 = vmatpush1.bf16.msra.mxu0 %v2389
      %2410 = vmatprep.subr.bf16.mxu0 0
      %2411 = vmatpush1.bf16.msra.mxu0 %v2390
      %2412 = vmatprep.subr.bf16.mxu0 0
      %2413 = vmatpush1.bf16.msra.mxu0 %v2391
      %2414 = vmatprep.subr.bf16.mxu0 0
      %2415 = vmatpush1.bf16.msra.mxu0 %v2392
      %2416 = vmatprep.subr.bf16.mxu0 0
      %2417 = vmatpush1.bf16.msra.mxu0 %v2393
      %2418 = vmatprep.subr.bf16.mxu0 0
      %2419 = vmatpush1.bf16.msra.mxu0 0
      %2420 = vmatprep.subr.bf16.mxu0 0
      %2421 = vmatpush1.bf16.msra.mxu0 0
      %2422 = vmatprep.subr.bf16.mxu0 0
      %2423 = vmatpush1.bf16.msra.mxu0 0
      %2424 = vmatprep.subr.bf16.mxu0 0
      %2425 = vmatpush1.bf16.msra.mxu0 0
      %2426 = vmatprep.subr.bf16.mxu0 0
      %2427 = vmatpush1.bf16.msra.mxu0 0
      %2428 = vmatprep.subr.bf16.mxu0 0
      %2429 = vmatpush1.bf16.msra.mxu0 0
      %2430 = vmatprep.subr.bf16.mxu0 0
      %2431 = vmatpush1.bf16.msra.mxu0 0
      %2432 = vmatprep.subr.bf16.mxu0 0
      %2433 = vmatpush1.bf16.msra.mxu0 0
      %2434 = vmatprep.mubr.bf16.mxu0 0
      %2435 = vmatmul.mubr.bf16.gmra.mrb[0].mxu0 %v2321
      %v2436 = vpop.f32.mrb[0].mxu0
      %v2437 = vadd.f32 0.0, %v2436
      %v2438 = vpop.f32.mrb[0].mxu0
      %v2439 = vpop.f32.mrb[0].mxu0
      %v2440 = vadd.f32 0.0, %v2439
      %v2441 = vpop.f32.mrb[0].mxu0
      %2442 = vmatprep.mubr.bf16.mxu0 0
      %2443 = vmatmul.mubr.bf16.gmra.mrb[0].mxu0 %v2322
      %v2444 = vpop.f32.mrb[0].mxu0
      %v2445 = vadd.f32 0.0, %v2444
      %v2446 = vpop.f32.mrb[0].mxu0
      %v2447 = vpop.f32.mrb[0].mxu0
      %v2448 = vadd.f32 0.0, %v2447
      %v2449 = vpop.f32.mrb[0].mxu0
      %2450 = vmatprep.mubr.bf16.mxu0 0
      %2451 = vmatmul.mubr.bf16.gmra.mrb[0].mxu0 %v2323
      %v2452 = vpop.f32.mrb[0].mxu0
      %v2453 = vadd.f32 0.0, %v2452
      %v2454 = vpop.f32.mrb[0].mxu0
      %v2455 = vpop.f32.mrb[0].mxu0
      %v2456 = vadd.f32 0.0, %v2455
      %v2457 = vpop.f32.mrb[0].mxu0
      %2458 = vmatprep.mubr.bf16.mxu0 0
      %2459 = vmatmul.mubr.bf16.gmra.mrb[0].mxu0 %v2324
      %v2460 = vpop.f32.mrb[0].mxu0
      %v2461 = vadd.f32 0.0, %v2460
      %v2462 = vpop.f32.mrb[0].mxu0
      %v2463 = vpop.f32.mrb[0].mxu0
      %v2464 = vadd.f32 0.0, %v2463
      %v2465 = vpop.f32.mrb[0].mxu0
      %2466 = vmatprep.mubr.bf16.mxu0 0
      %2467 = vmatmul.mubr.bf16.gmra.mrb[0].mxu0 %v2325
      %v2468 = vpop.f32.mrb[0].mxu0
      %v2469 = vadd.f32 0.0, %v2468
      %v2470 = vpop.f32.mrb[0].mxu0
      %v2471 = vpop.f32.mrb[0].mxu0
      %v2472 = vadd.f32 0.0, %v2471
      %v2473 = vpop.f32.mrb[0].mxu0
      %2474 = vmatprep.mubr.bf16.mxu0 0
      %2475 = vmatmul.mubr.bf16.gmra.mrb[0].mxu0 %v2326
      %v2476 = vpop.f32.mrb[0].mxu0
      %v2477 = vadd.f32 0.0, %v2476
      %v2478 = vpop.f32.mrb[0].mxu0
      %v2479 = vpop.f32.mrb[0].mxu0
      %v2480 = vadd.f32 0.0, %v2479
      %v2481 = vpop.f32.mrb[0].mxu0
      %2482 = vmatprep.mubr.bf16.mxu0 0
      %2483 = vmatmul.mubr.bf16.gmra.mrb[0].mxu0 %v2327
      %v2484 = vpop.f32.mrb[0].mxu0
      %v2485 = vadd.f32 0.0, %v2484
      %v2486 = vpop.f32.mrb[0].mxu0
      %v2487 = vpop.f32.mrb[0].mxu0
      %v2488 = vadd.f32 0.0, %v2487
      %v2489 = vpop.f32.mrb[0].mxu0
      %2490 = vmatprep.mubr.bf16.mxu0 0
      %2491 = vmatmul.mubr.bf16.gmra.mrb[0].mxu0 %v2328
      %v2492 = vpop.f32.mrb[0].mxu0
      %v2493 = vadd.f32 0.0, %v2492
      %v2494 = vpop.f32.mrb[0].mxu0
      %v2495 = vpop.f32.mrb[0].mxu0
      %v2496 = vadd.f32 0.0, %v2495
      %v2497 = vpop.f32.mrb[0].mxu0
      %2498 = vmatprep.mubr.bf16.mxu0 0
      %2499 = vmatmul.mubr.bf16.gmra.mrb[0].mxu0 %v2329
      %v2500 = vpop.f32.mrb[0].mxu0
      %v2501 = vadd.f32 0.0, %v2500
      %v2502 = vpop.f32.mrb[0].mxu0
      %v2503 = vpop.f32.mrb[0].mxu0
      %v2504 = vadd.f32 0.0, %v2503
      %v2505 = vpop.f32.mrb[0].mxu0
      %2506 = vmatprep.mubr.bf16.mxu0 0
      %2507 = vmatmul.mubr.bf16.gmra.mrb[0].mxu0 %v2330
      %v2508 = vpop.f32.mrb[0].mxu0
      %v2509 = vadd.f32 0.0, %v2508
      %v2510 = vpop.f32.mrb[0].mxu0
      %v2511 = vpop.f32.mrb[0].mxu0
      %v2512 = vadd.f32 0.0, %v2511
      %v2513 = vpop.f32.mrb[0].mxu0
      %2514 = vmatprep.mubr.bf16.mxu0 0
      %2515 = vmatmul.mubr.bf16.gmra.mrb[0].mxu0 %v2331
      %v2516 = vpop.f32.mrb[0].mxu0
      %v2517 = vadd.f32 0.0, %v2516
      %v2518 = vpop.f32.mrb[0].mxu0
      %v2519 = vpop.f32.mrb[0].mxu0
      %v2520 = vadd.f32 0.0, %v2519
      %v2521 = vpop.f32.mrb[0].mxu0
      %2522 = vmatprep.mubr.bf16.mxu0 0
      %2523 = vmatmul.mubr.bf16.gmra.mrb[0].mxu0 %v2332
      %v2524 = vpop.f32.mrb[0].mxu0
      %v2525 = vadd.f32 0.0, %v2524
      %v2526 = vpop.f32.mrb[0].mxu0
      %v2527 = vpop.f32.mrb[0].mxu0
      %v2528 = vadd.f32 0.0, %v2527
      %v2529 = vpop.f32.mrb[0].mxu0
      %2530 = vmatprep.mubr.bf16.mxu0 0
      %2531 = vmatmul.mubr.bf16.gmra.mrb[0].mxu0 %v2333
      %v2532 = vpop.f32.mrb[0].mxu0
      %v2533 = vadd.f32 0.0, %v2532
      %v2534 = vpop.f32.mrb[0].mxu0
      %v2535 = vpop.f32.mrb[0].mxu0
      %v2536 = vadd.f32 0.0, %v2535
      %v2537 = vpop.f32.mrb[0].mxu0
      %2538 = vmatprep.mubr.bf16.mxu0 0
      %2539 = vmatmul.mubr.bf16.gmra.mrb[0].mxu0 %v2334
      %v2540 = vpop.f32.mrb[0].mxu0
      %v2541 = vadd.f32 0.0, %v2540
      %v2542 = vpop.f32.mrb[0].mxu0
      %v2543 = vpop.f32.mrb[0].mxu0
      %v2544 = vadd.f32 0.0, %v2543
      %v2545 = vpop.f32.mrb[0].mxu0
      %2546 = vmatprep.mubr.bf16.mxu0 0
      %2547 = vmatmul.mubr.bf16.gmra.mrb[0].mxu0 %v2335
      %v2548 = vpop.f32.mrb[0].mxu0
      %v2549 = vadd.f32 0.0, %v2548
      %v2550 = vpop.f32.mrb[0].mxu0
      %v2551 = vpop.f32.mrb[0].mxu0
      %v2552 = vadd.f32 0.0, %v2551
      %v2553 = vpop.f32.mrb[0].mxu0
      %2554 = vmatprep.mubr.bf16.mxu0 0
      %2555 = vmatmul.mubr.bf16.gmra.mrb[0].mxu0 %v2336
      %v2556 = vpop.f32.mrb[0].mxu0
      %v2557 = vadd.f32 0.0, %v2556
      %v2558 = vpop.f32.mrb[0].mxu0
      %v2559 = vpop.f32.mrb[0].mxu0
      %v2560 = vadd.f32 0.0, %v2559
      %v2561 = vpop.f32.mrb[0].mxu0
      %2562 = vdwg.mxu0
      %v2563 = vadd.f32 %v2289, %v2437
      %v2564 = vadd.f32 %v2290, %v2440
      %v2565 = vadd.f32 %v2291, %v2445
      %v2566 = vadd.f32 %v2292, %v2448
      %v2567 = vadd.f32 %v2293, %v2453
      %v2568 = vadd.f32 %v2294, %v2456
      %v2569 = vadd.f32 %v2295, %v2461
      %v2570 = vadd.f32 %v2296, %v2464
      %v2571 = vadd.f32 %v2297, %v2469
      %v2572 = vadd.f32 %v2298, %v2472
      %v2573 = vadd.f32 %v2299, %v2477
      %v2574 = vadd.f32 %v2300, %v2480
      %v2575 = vadd.f32 %v2301, %v2485
      %v2576 = vadd.f32 %v2302, %v2488
      %v2577 = vadd.f32 %v2303, %v2493
      %v2578 = vadd.f32 %v2304, %v2496
      %v2579 = vadd.f32 %v2305, %v2501
      %v2580 = vadd.f32 %v2306, %v2504
      %v2581 = vadd.f32 %v2307, %v2509
      %v2582 = vadd.f32 %v2308, %v2512
      %v2583 = vadd.f32 %v2309, %v2517
      %v2584 = vadd.f32 %v2310, %v2520
      %v2585 = vadd.f32 %v2311, %v2525
      %v2586 = vadd.f32 %v2312, %v2528
      %v2587 = vadd.f32 %v2313, %v2533
      %v2588 = vadd.f32 %v2314, %v2536
      %v2589 = vadd.f32 %v2315, %v2541
      %v2590 = vadd.f32 %v2316, %v2544
      %v2591 = vadd.f32 %v2317, %v2549
      %v2592 = vadd.f32 %v2318, %v2552
      %v2593 = vadd.f32 %v2319, %v2557
      %v2594 = vadd.f32 %v2320, %v2560
      %2595 = vst [vmem:[#allocation2] sm:$0xff] %v2563
      %2596 = vst [vmem:[#allocation2 + $0x8] sm:$0xff] %v2564
      %2597 = vst [vmem:[#allocation2 + $0x10] sm:$0xff] %v2565
      %2598 = vst [vmem:[#allocation2 + $0x18] sm:$0xff] %v2566
      %2599 = vst [vmem:[#allocation2 + $0x20] sm:$0xff] %v2567
      %2600 = vst [vmem:[#allocation2 + $0x28] sm:$0xff] %v2568
      %2601 = vst [vmem:[#allocation2 + $0x30] sm:$0xff] %v2569
      %2602 = vst [vmem:[#allocation2 + $0x38] sm:$0xff] %v2570
      %2603 = vst [vmem:[#allocation2 + $0x40] sm:$0xff] %v2571
      %2604 = vst [vmem:[#allocation2 + $0x48] sm:$0xff] %v2572
      %2605 = vst [vmem:[#allocation2 + $0x50] sm:$0xff] %v2573
      %2606 = vst [vmem:[#allocation2 + $0x58] sm:$0xff] %v2574
      %2607 = vst [vmem:[#allocation2 + $0x60] sm:$0xff] %v2575
      %2608 = vst [vmem:[#allocation2 + $0x68] sm:$0xff] %v2576
      %2609 = vst [vmem:[#allocation2 + $0x70] sm:$0xff] %v2577
      %2610 = vst [vmem:[#allocation2 + $0x78] sm:$0xff] %v2578
      %2611 = vst [vmem:[#allocation2 + $0x80] sm:$0xff] %v2579
      %2612 = vst [vmem:[#allocation2 + $0x88] sm:$0xff] %v2580
      %2613 = vst [vmem:[#allocation2 + $0x90] sm:$0xff] %v2581
      %2614 = vst [vmem:[#allocation2 + $0x98] sm:$0xff] %v2582
      %2615 = vst [vmem:[#allocation2 + $0xa0] sm:$0xff] %v2583
      %2616 = vst [vmem:[#allocation2 + $0xa8] sm:$0xff] %v2584
      %2617 = vst [vmem:[#allocation2 + $0xb0] sm:$0xff] %v2585
      %2618 = vst [vmem:[#allocation2 + $0xb8] sm:$0xff] %v2586
      %2619 = vst [vmem:[#allocation2 + $0xc0] sm:$0xff] %v2587
      %2620 = vst [vmem:[#allocation2 + $0xc8] sm:$0xff] %v2588
      %2621 = vst [vmem:[#allocation2 + $0xd0] sm:$0xff] %v2589
      %2622 = vst [vmem:[#allocation2 + $0xd8] sm:$0xff] %v2590
      %2623 = vst [vmem:[#allocation2 + $0xe0] sm:$0xff] %v2591
      %2624 = vst [vmem:[#allocation2 + $0xe8] sm:$0xff] %v2592
      %2625 = vst [vmem:[#allocation2 + $0xf0] sm:$0xff] %v2593
      %2626 = vst [vmem:[#allocation2 + $0xf8] sm:$0xff] %v2594
      %v2627 = vld [vmem:[#allocation3 + $0x28] sm:$0xff]
      %v2628 = vld [vmem:[#allocation3 + $0x30] sm:$0xff]
      %v2629 = vld [vmem:[#allocation3 + $0x38] sm:$0xff]
      %v2630 = vld [vmem:[#allocation3 + $0x40] sm:$0xff]
      %v2631 = vld [vmem:[#allocation3 + $0x48] sm:$0xff]
      %v2632 = vld [vmem:[#allocation3 + $0x50] sm:$0xff]
      %v2633 = vld [vmem:[#allocation3 + $0x58] sm:$0xff]
      %v2634 = vld [vmem:[#allocation3 + $0x60] sm:$0xff]
      %v2635 = vld [vmem:[#allocation3 + $0x68] sm:$0xff]
      %v2636 = vld [vmem:[#allocation3 + $0x70] sm:$0xff]
      %v2637 = vld [vmem:[#allocation3 + $0x78] sm:$0xff]
      %v2638 = vld [vmem:[#allocation3 + $0x80] sm:$0xff]
      %v2639 = vld [vmem:[#allocation3 + $0x88] sm:$0xff]
      %v2640 = vld [vmem:[#allocation3 + $0x90] sm:$0xff]
      %v2641 = vld [vmem:[#allocation3 + $0x98] sm:$0xff]
      %v2642 = vld [vmem:[#allocation3 + $0xa0] sm:$0xff]
      %v2643 = vld [vmem:[#allocation3 + $0xa8] sm:$0xff]
      %v2644 = vld [vmem:[#allocation3 + $0xb0] sm:$0xff]
      %v2645 = vld [vmem:[#allocation3 + $0xb8] sm:$0xff]
      %v2646 = vld [vmem:[#allocation3 + $0xc0] sm:$0xff]
      %v2647 = vld [vmem:[#allocation3 + $0xc8] sm:$0xff]
      %v2648 = vld [vmem:[#allocation3 + $0xd0] sm:$0xff]
      %v2649 = vld [vmem:[#allocation3 + $0xd8] sm:$0xff]
      %v2650 = vld [vmem:[#allocation3 + $0xe0] sm:$0xff]
      %v2651 = vld [vmem:[#allocation3 + $0xe8] sm:$0xff]
      %v2652 = vld [vmem:[#allocation3 + $0xf0] sm:$0xff]
      %v2653 = vld [vmem:[#allocation3 + $0xf8] sm:$0xff]
      %v2654 = vld [vmem:[#allocation3 + $0x100] sm:$0xff]
      %v2655 = vld [vmem:[#allocation3 + $0x108] sm:$0xff]
      %v2656 = vld [vmem:[#allocation3 + $0x110] sm:$0xff]
      %v2657 = vld [vmem:[#allocation3 + $0x118] sm:$0xff]
      %v2658 = vld [vmem:[#allocation3 + $0x120] sm:$0xff]
      %v2659 = vld [vmem:[#allocation2] sm:$0xff]
      %v2660 = vld [vmem:[#allocation2 + $0x8] sm:$0xff]
      %v2661 = vld [vmem:[#allocation2 + $0x10] sm:$0xff]
      %v2662 = vld [vmem:[#allocation2 + $0x18] sm:$0xff]
      %v2663 = vld [vmem:[#allocation2 + $0x20] sm:$0xff]
      %v2664 = vld [vmem:[#allocation2 + $0x28] sm:$0xff]
      %v2665 = vld [vmem:[#allocation2 + $0x30] sm:$0xff]
      %v2666 = vld [vmem:[#allocation2 + $0x38] sm:$0xff]
      %v2667 = vld [vmem:[#allocation2 + $0x40] sm:$0xff]
      %v2668 = vld [vmem:[#allocation2 + $0x48] sm:$0xff]
      %v2669 = vld [vmem:[#allocation2 + $0x50] sm:$0xff]
      %v2670 = vld [vmem:[#allocation2 + $0x58] sm:$0xff]
      %v2671 = vld [vmem:[#allocation2 + $0x60] sm:$0xff]
      %v2672 = vld [vmem:[#allocation2 + $0x68] sm:$0xff]
      %v2673 = vld [vmem:[#allocation2 + $0x70] sm:$0xff]
      %v2674 = vld [vmem:[#allocation2 + $0x78] sm:$0xff]
      %v2675 = vld [vmem:[#allocation2 + $0x80] sm:$0xff]
      %v2676 = vld [vmem:[#allocation2 + $0x88] sm:$0xff]
      %v2677 = vld [vmem:[#allocation2 + $0x90] sm:$0xff]
      %v2678 = vld [vmem:[#allocation2 + $0x98] sm:$0xff]
      %v2679 = vld [vmem:[#allocation2 + $0xa0] sm:$0xff]
      %v2680 = vld [vmem:[#allocation2 + $0xa8] sm:$0xff]
      %v2681 = vld [vmem:[#allocation2 + $0xb0] sm:$0xff]
      %v2682 = vld [vmem:[#allocation2 + $0xb8] sm:$0xff]
      %v2683 = vld [vmem:[#allocation2 + $0xc0] sm:$0xff]
      %v2684 = vld [vmem:[#allocation2 + $0xc8] sm:$0xff]
      %v2685 = vld [vmem:[#allocation2 + $0xd0] sm:$0xff]
      %v2686 = vld [vmem:[#allocation2 + $0xd8] sm:$0xff]
      %v2687 = vld [vmem:[#allocation2 + $0xe0] sm:$0xff]
      %v2688 = vld [vmem:[#allocation2 + $0xe8] sm:$0xff]
      %v2689 = vld [vmem:[#allocation2 + $0xf0] sm:$0xff]
      %v2690 = vld [vmem:[#allocation2 + $0xf8] sm:$0xff]
      %v2691 = vpack.c.bf16 %v2628, %v2627
      %v2692 = vpack.c.bf16 %v2630, %v2629
      %v2693 = vpack.c.bf16 %v2632, %v2631
      %v2694 = vpack.c.bf16 %v2634, %v2633
      %v2695 = vpack.c.bf16 %v2636, %v2635
      %v2696 = vpack.c.bf16 %v2638, %v2637
      %v2697 = vpack.c.bf16 %v2640, %v2639
      %v2698 = vpack.c.bf16 %v2642, %v2641
      %v2699 = vpack.c.bf16 %v2644, %v2643
      %v2700 = vpack.c.bf16 %v2646, %v2645
      %v2701 = vpack.c.bf16 %v2648, %v2647
      %v2702 = vpack.c.bf16 %v2650, %v2649
      %v2703 = vpack.c.bf16 %v2652, %v2651
      %v2704 = vpack.c.bf16 %v2654, %v2653
      %v2705 = vpack.c.bf16 %v2656, %v2655
      %v2706 = vpack.c.bf16 %v2658, %v2657
      %s2707 = scalar_lea.vmem %s3, 448
      %v2708 = vld [vmem:[%s2707] sm:$0xf]
      %v2709 = vld [vmem:[%s2707 + $0x4] sm:$0xf]
      %v2710 = vld [vmem:[%s2707 + $0x8] sm:$0xf]
      %v2711 = vld [vmem:[%s2707 + $0xc] sm:$0xf]
      %v2712 = vld [vmem:[%s2707 + $0x10] sm:$0xf]
      %v2713 = vld [vmem:[%s2707 + $0x14] sm:$0xf]
      %v2714 = vld [vmem:[%s2707 + $0x18] sm:$0xf]
      %v2715 = vld [vmem:[%s2707 + $0x1c] sm:$0xf]
      %v2716 = vld [vmem:[%s2707 + $0x20] sm:$0xf]
      %v2717 = vld [vmem:[%s2707 + $0x24] sm:$0xf]
      %v2718 = vld [vmem:[%s2707 + $0x28] sm:$0xf]
      %v2719 = vld [vmem:[%s2707 + $0x2c] sm:$0xf]
      %v2720 = vld [vmem:[%s2707 + $0x30] sm:$0xf]
      %v2721 = vld [vmem:[%s2707 + $0x34] sm:$0xf]
      %v2722 = vld [vmem:[%s2707 + $0x38] sm:$0xf]
      %v2723 = vld [vmem:[%s2707 + $0x3c] sm:$0xf]
      %v2740 = vunpack.c.l.b16 %v2708
      %v2741 = vunpack.c.l.b16 %v2709
      %v2742 = vunpack.c.l.b16 %v2710
      %v2743 = vunpack.c.l.b16 %v2711
      %v2744 = vunpack.c.l.b16 %v2712
      %v2745 = vunpack.c.l.b16 %v2713
      %v2746 = vunpack.c.l.b16 %v2714
      %v2747 = vunpack.c.l.b16 %v2715
      %v2748 = vunpack.c.l.b16 %v2716
      %v2749 = vunpack.c.l.b16 %v2717
      %v2750 = vunpack.c.l.b16 %v2718
      %v2751 = vunpack.c.l.b16 %v2719
      %v2752 = vunpack.c.l.b16 %v2720
      %v2753 = vunpack.c.l.b16 %v2721
      %v2754 = vunpack.c.l.b16 %v2722
      %v2755 = vunpack.c.l.b16 %v2723
      %v2756 = vpack.c.b16 %v2741, %v2740
      %v2757 = vpack.c.b16 %v2743, %v2742
      %v2758 = vpack.c.b16 %v2745, %v2744
      %v2759 = vpack.c.b16 %v2747, %v2746
      %v2760 = vpack.c.b16 %v2749, %v2748
      %v2761 = vpack.c.b16 %v2751, %v2750
      %v2762 = vpack.c.b16 %v2753, %v2752
      %v2763 = vpack.c.b16 %v2755, %v2754
      %2772 = vmatprep.subr.bf16.mxu0 0
      %2773 = vmatpush1.bf16.msra.mxu0 %v2756
      %2774 = vmatprep.subr.bf16.mxu0 0
      %2775 = vmatpush1.bf16.msra.mxu0 %v2757
      %2776 = vmatprep.subr.bf16.mxu0 0
      %2777 = vmatpush1.bf16.msra.mxu0 %v2758
      %2778 = vmatprep.subr.bf16.mxu0 0
      %2779 = vmatpush1.bf16.msra.mxu0 %v2759
      %2780 = vmatprep.subr.bf16.mxu0 0
      %2781 = vmatpush1.bf16.msra.mxu0 %v2760
      %2782 = vmatprep.subr.bf16.mxu0 0
      %2783 = vmatpush1.bf16.msra.mxu0 %v2761
      %2784 = vmatprep.subr.bf16.mxu0 0
      %2785 = vmatpush1.bf16.msra.mxu0 %v2762
      %2786 = vmatprep.subr.bf16.mxu0 0
      %2787 = vmatpush1.bf16.msra.mxu0 %v2763
      %2788 = vmatprep.subr.bf16.mxu0 0
      %2789 = vmatpush1.bf16.msra.mxu0 0
      %2790 = vmatprep.subr.bf16.mxu0 0
      %2791 = vmatpush1.bf16.msra.mxu0 0
      %2792 = vmatprep.subr.bf16.mxu0 0
      %2793 = vmatpush1.bf16.msra.mxu0 0
      %2794 = vmatprep.subr.bf16.mxu0 0
      %2795 = vmatpush1.bf16.msra.mxu0 0
      %2796 = vmatprep.subr.bf16.mxu0 0
      %2797 = vmatpush1.bf16.msra.mxu0 0
      %2798 = vmatprep.subr.bf16.mxu0 0
      %2799 = vmatpush1.bf16.msra.mxu0 0
      %2800 = vmatprep.subr.bf16.mxu0 0
      %2801 = vmatpush1.bf16.msra.mxu0 0
      %2802 = vmatprep.subr.bf16.mxu0 0
      %2803 = vmatpush1.bf16.msra.mxu0 0
      %2804 = vmatprep.mubr.bf16.mxu0 0
      %2805 = vmatmul.mubr.bf16.gmra.mrb[0].mxu0 %v2691
      %v2806 = vpop.f32.mrb[0].mxu0
      %v2807 = vadd.f32 0.0, %v2806
      %v2808 = vpop.f32.mrb[0].mxu0
      %v2809 = vpop.f32.mrb[0].mxu0
      %v2810 = vadd.f32 0.0, %v2809
      %v2811 = vpop.f32.mrb[0].mxu0
      %2812 = vmatprep.mubr.bf16.mxu0 0
      %2813 = vmatmul.mubr.bf16.gmra.mrb[0].mxu0 %v2692
      %v2814 = vpop.f32.mrb[0].mxu0
      %v2815 = vadd.f32 0.0, %v2814
      %v2816 = vpop.f32.mrb[0].mxu0
      %v2817 = vpop.f32.mrb[0].mxu0
      %v2818 = vadd.f32 0.0, %v2817
      %v2819 = vpop.f32.mrb[0].mxu0
      %2820 = vmatprep.mubr.bf16.mxu0 0
      %2821 = vmatmul.mubr.bf16.gmra.mrb[0].mxu0 %v2693
      %v2822 = vpop.f32.mrb[0].mxu0
      %v2823 = vadd.f32 0.0, %v2822
      %v2824 = vpop.f32.mrb[0].mxu0
      %v2825 = vpop.f32.mrb[0].mxu0
      %v2826 = vadd.f32 0.0, %v2825
      %v2827 = vpop.f32.mrb[0].mxu0
      %2828 = vmatprep.mubr.bf16.mxu0 0
      %2829 = vmatmul.mubr.bf16.gmra.mrb[0].mxu0 %v2694
      %v2830 = vpop.f32.mrb[0].mxu0
      %v2831 = vadd.f32 0.0, %v2830
      %v2832 = vpop.f32.mrb[0].mxu0
      %v2833 = vpop.f32.mrb[0].mxu0
      %v2834 = vadd.f32 0.0, %v2833
      %v2835 = vpop.f32.mrb[0].mxu0
      %2836 = vmatprep.mubr.bf16.mxu0 0
      %2837 = vmatmul.mubr.bf16.gmra.mrb[0].mxu0 %v2695
      %v2838 = vpop.f32.mrb[0].mxu0
      %v2839 = vadd.f32 0.0, %v2838
      %v2840 = vpop.f32.mrb[0].mxu0
      %v2841 = vpop.f32.mrb[0].mxu0
      %v2842 = vadd.f32 0.0, %v2841
      %v2843 = vpop.f32.mrb[0].mxu0
      %2844 = vmatprep.mubr.bf16.mxu0 0
      %2845 = vmatmul.mubr.bf16.gmra.mrb[0].mxu0 %v2696
      %v2846 = vpop.f32.mrb[0].mxu0
      %v2847 = vadd.f32 0.0, %v2846
      %v2848 = vpop.f32.mrb[0].mxu0
      %v2849 = vpop.f32.mrb[0].mxu0
      %v2850 = vadd.f32 0.0, %v2849
      %v2851 = vpop.f32.mrb[0].mxu0
      %2852 = vmatprep.mubr.bf16.mxu0 0
      %2853 = vmatmul.mubr.bf16.gmra.mrb[0].mxu0 %v2697
      %v2854 = vpop.f32.mrb[0].mxu0
      %v2855 = vadd.f32 0.0, %v2854
      %v2856 = vpop.f32.mrb[0].mxu0
      %v2857 = vpop.f32.mrb[0].mxu0
      %v2858 = vadd.f32 0.0, %v2857
      %v2859 = vpop.f32.mrb[0].mxu0
      %2860 = vmatprep.mubr.bf16.mxu0 0
      %2861 = vmatmul.mubr.bf16.gmra.mrb[0].mxu0 %v2698
      %v2862 = vpop.f32.mrb[0].mxu0
      %v2863 = vadd.f32 0.0, %v2862
      %v2864 = vpop.f32.mrb[0].mxu0
      %v2865 = vpop.f32.mrb[0].mxu0
      %v2866 = vadd.f32 0.0, %v2865
      %v2867 = vpop.f32.mrb[0].mxu0
      %2868 = vmatprep.mubr.bf16.mxu0 0
      %2869 = vmatmul.mubr.bf16.gmra.mrb[0].mxu0 %v2699
      %v2870 = vpop.f32.mrb[0].mxu0
      %v2871 = vadd.f32 0.0, %v2870
      %v2872 = vpop.f32.mrb[0].mxu0
      %v2873 = vpop.f32.mrb[0].mxu0
      %v2874 = vadd.f32 0.0, %v2873
      %v2875 = vpop.f32.mrb[0].mxu0
      %2876 = vmatprep.mubr.bf16.mxu0 0
      %2877 = vmatmul.mubr.bf16.gmra.mrb[0].mxu0 %v2700
      %v2878 = vpop.f32.mrb[0].mxu0
      %v2879 = vadd.f32 0.0, %v2878
      %v2880 = vpop.f32.mrb[0].mxu0
      %v2881 = vpop.f32.mrb[0].mxu0
      %v2882 = vadd.f32 0.0, %v2881
      %v2883 = vpop.f32.mrb[0].mxu0
      %2884 = vmatprep.mubr.bf16.mxu0 0
      %2885 = vmatmul.mubr.bf16.gmra.mrb[0].mxu0 %v2701
      %v2886 = vpop.f32.mrb[0].mxu0
      %v2887 = vadd.f32 0.0, %v2886
      %v2888 = vpop.f32.mrb[0].mxu0
      %v2889 = vpop.f32.mrb[0].mxu0
      %v2890 = vadd.f32 0.0, %v2889
      %v2891 = vpop.f32.mrb[0].mxu0
      %2892 = vmatprep.mubr.bf16.mxu0 0
      %2893 = vmatmul.mubr.bf16.gmra.mrb[0].mxu0 %v2702
      %v2894 = vpop.f32.mrb[0].mxu0
      %v2895 = vadd.f32 0.0, %v2894
      %v2896 = vpop.f32.mrb[0].mxu0
      %v2897 = vpop.f32.mrb[0].mxu0
      %v2898 = vadd.f32 0.0, %v2897
      %v2899 = vpop.f32.mrb[0].mxu0
      %2900 = vmatprep.mubr.bf16.mxu0 0
      %2901 = vmatmul.mubr.bf16.gmra.mrb[0].mxu0 %v2703
      %v2902 = vpop.f32.mrb[0].mxu0
      %v2903 = vadd.f32 0.0, %v2902
      %v2904 = vpop.f32.mrb[0].mxu0
      %v2905 = vpop.f32.mrb[0].mxu0
      %v2906 = vadd.f32 0.0, %v2905
      %v2907 = vpop.f32.mrb[0].mxu0
      %2908 = vmatprep.mubr.bf16.mxu0 0
      %2909 = vmatmul.mubr.bf16.gmra.mrb[0].mxu0 %v2704
      %v2910 = vpop.f32.mrb[0].mxu0
      %v2911 = vadd.f32 0.0, %v2910
      %v2912 = vpop.f32.mrb[0].mxu0
      %v2913 = vpop.f32.mrb[0].mxu0
      %v2914 = vadd.f32 0.0, %v2913
      %v2915 = vpop.f32.mrb[0].mxu0
      %2916 = vmatprep.mubr.bf16.mxu0 0
      %2917 = vmatmul.mubr.bf16.gmra.mrb[0].mxu0 %v2705
      %v2918 = vpop.f32.mrb[0].mxu0
      %v2919 = vadd.f32 0.0, %v2918
      %v2920 = vpop.f32.mrb[0].mxu0
      %v2921 = vpop.f32.mrb[0].mxu0
      %v2922 = vadd.f32 0.0, %v2921
      %v2923 = vpop.f32.mrb[0].mxu0
      %2924 = vmatprep.mubr.bf16.mxu0 0
      %2925 = vmatmul.mubr.bf16.gmra.mrb[0].mxu0 %v2706
      %v2926 = vpop.f32.mrb[0].mxu0
      %v2927 = vadd.f32 0.0, %v2926
      %v2928 = vpop.f32.mrb[0].mxu0
      %v2929 = vpop.f32.mrb[0].mxu0
      %v2930 = vadd.f32 0.0, %v2929
      %v2931 = vpop.f32.mrb[0].mxu0
      %2932 = vdwg.mxu0
      %v2933 = vadd.f32 %v2659, %v2807
      %v2934 = vadd.f32 %v2660, %v2810
      %v2935 = vadd.f32 %v2661, %v2815
      %v2936 = vadd.f32 %v2662, %v2818
      %v2937 = vadd.f32 %v2663, %v2823
      %v2938 = vadd.f32 %v2664, %v2826
      %v2939 = vadd.f32 %v2665, %v2831
      %v2940 = vadd.f32 %v2666, %v2834
      %v2941 = vadd.f32 %v2667, %v2839
      %v2942 = vadd.f32 %v2668, %v2842
      %v2943 = vadd.f32 %v2669, %v2847
      %v2944 = vadd.f32 %v2670, %v2850
      %v2945 = vadd.f32 %v2671, %v2855
      %v2946 = vadd.f32 %v2672, %v2858
      %v2947 = vadd.f32 %v2673, %v2863
      %v2948 = vadd.f32 %v2674, %v2866
      %v2949 = vadd.f32 %v2675, %v2871
      %v2950 = vadd.f32 %v2676, %v2874
      %v2951 = vadd.f32 %v2677, %v2879
      %v2952 = vadd.f32 %v2678, %v2882
      %v2953 = vadd.f32 %v2679, %v2887
      %v2954 = vadd.f32 %v2680, %v2890
      %v2955 = vadd.f32 %v2681, %v2895
      %v2956 = vadd.f32 %v2682, %v2898
      %v2957 = vadd.f32 %v2683, %v2903
      %v2958 = vadd.f32 %v2684, %v2906
      %v2959 = vadd.f32 %v2685, %v2911
      %v2960 = vadd.f32 %v2686, %v2914
      %v2961 = vadd.f32 %v2687, %v2919
      %v2962 = vadd.f32 %v2688, %v2922
      %v2963 = vadd.f32 %v2689, %v2927
      %v2964 = vadd.f32 %v2690, %v2930
      %2965 = vst [vmem:[#allocation2] sm:$0xff] %v2933
      %2966 = vst [vmem:[#allocation2 + $0x8] sm:$0xff] %v2934
      %2967 = vst [vmem:[#allocation2 + $0x10] sm:$0xff] %v2935
      %2968 = vst [vmem:[#allocation2 + $0x18] sm:$0xff] %v2936
      %2969 = vst [vmem:[#allocation2 + $0x20] sm:$0xff] %v2937
      %2970 = vst [vmem:[#allocation2 + $0x28] sm:$0xff] %v2938
      %2971 = vst [vmem:[#allocation2 + $0x30] sm:$0xff] %v2939
      %2972 = vst [vmem:[#allocation2 + $0x38] sm:$0xff] %v2940
      %2973 = vst [vmem:[#allocation2 + $0x40] sm:$0xff] %v2941
      %2974 = vst [vmem:[#allocation2 + $0x48] sm:$0xff] %v2942
      %2975 = vst [vmem:[#allocation2 + $0x50] sm:$0xff] %v2943
      %2976 = vst [vmem:[#allocation2 + $0x58] sm:$0xff] %v2944
      %2977 = vst [vmem:[#allocation2 + $0x60] sm:$0xff] %v2945
      %2978 = vst [vmem:[#allocation2 + $0x68] sm:$0xff] %v2946
      %2979 = vst [vmem:[#allocation2 + $0x70] sm:$0xff] %v2947
      %2980 = vst [vmem:[#allocation2 + $0x78] sm:$0xff] %v2948
      %2981 = vst [vmem:[#allocation2 + $0x80] sm:$0xff] %v2949
      %2982 = vst [vmem:[#allocation2 + $0x88] sm:$0xff] %v2950
      %2983 = vst [vmem:[#allocation2 + $0x90] sm:$0xff] %v2951
      %2984 = vst [vmem:[#allocation2 + $0x98] sm:$0xff] %v2952
      %2985 = vst [vmem:[#allocation2 + $0xa0] sm:$0xff] %v2953
      %2986 = vst [vmem:[#allocation2 + $0xa8] sm:$0xff] %v2954
      %2987 = vst [vmem:[#allocation2 + $0xb0] sm:$0xff] %v2955
      %2988 = vst [vmem:[#allocation2 + $0xb8] sm:$0xff] %v2956
      %2989 = vst [vmem:[#allocation2 + $0xc0] sm:$0xff] %v2957
      %2990 = vst [vmem:[#allocation2 + $0xc8] sm:$0xff] %v2958
      %2991 = vst [vmem:[#allocation2 + $0xd0] sm:$0xff] %v2959
      %2992 = vst [vmem:[#allocation2 + $0xd8] sm:$0xff] %v2960
      %2993 = vst [vmem:[#allocation2 + $0xe0] sm:$0xff] %v2961
      %2994 = vst [vmem:[#allocation2 + $0xe8] sm:$0xff] %v2962
      %2995 = vst [vmem:[#allocation2 + $0xf0] sm:$0xff] %v2963
      %2996 = vst [vmem:[#allocation2 + $0xf8] sm:$0xff] %v2964
      %2998 = vset.pattern.permute.xlu0 0
      %2999 = vperm.xlu0 %2998, %v426
      %v3000 = vpop.permute.xlu0 %2999
      %3003 = vset.pattern.permute.xlu0 0
      %3004 = vperm.xlu0 %3003, %v427
      %v3005 = vpop.permute.xlu0 %3004
      %3008 = vset.pattern.permute.xlu0 0
      %3009 = vperm.xlu0 %3008, %v428
      %v3010 = vpop.permute.xlu0 %3009
      %3013 = vset.pattern.permute.xlu0 0
      %3014 = vperm.xlu0 %3013, %v429
      %v3015 = vpop.permute.xlu0 %3014
      %3018 = vset.pattern.permute.xlu0 0
      %3019 = vperm.xlu0 %3018, %v430
      %v3020 = vpop.permute.xlu0 %3019
      %3023 = vset.pattern.permute.xlu0 0
      %3024 = vperm.xlu0 %3023, %v431
      %v3025 = vpop.permute.xlu0 %3024
      %3028 = vset.pattern.permute.xlu0 0
      %3029 = vperm.xlu0 %3028, %v432
      %v3030 = vpop.permute.xlu0 %3029
      %3033 = vset.pattern.permute.xlu0 0
      %3034 = vperm.xlu0 %3033, %v433
      %v3035 = vpop.permute.xlu0 %3034
      %3038 = vset.pattern.permute.xlu0 0
      %3039 = vperm.xlu0 %3038, %v434
      %v3040 = vpop.permute.xlu0 %3039
      %3043 = vset.pattern.permute.xlu0 0
      %3044 = vperm.xlu0 %3043, %v435
      %v3045 = vpop.permute.xlu0 %3044
      %3048 = vset.pattern.permute.xlu0 0
      %3049 = vperm.xlu0 %3048, %v436
      %v3050 = vpop.permute.xlu0 %3049
      %3053 = vset.pattern.permute.xlu0 0
      %3054 = vperm.xlu0 %3053, %v437
      %v3055 = vpop.permute.xlu0 %3054
      %3058 = vset.pattern.permute.xlu0 0
      %3059 = vperm.xlu0 %3058, %v438
      %v3060 = vpop.permute.xlu0 %3059
      %3063 = vset.pattern.permute.xlu0 0
      %3064 = vperm.xlu0 %3063, %v439
      %v3065 = vpop.permute.xlu0 %3064
      %3068 = vset.pattern.permute.xlu0 0
      %3069 = vperm.xlu0 %3068, %v440
      %v3070 = vpop.permute.xlu0 %3069
      %3073 = vset.pattern.permute.xlu0 0
      %3074 = vperm.xlu0 %3073, %v441
      %v3075 = vpop.permute.xlu0 %3074
      %3078 = vset.pattern.permute.xlu0 0
      %3079 = vperm.xlu0 %3078, %v442
      %v3080 = vpop.permute.xlu0 %3079
      %3083 = vset.pattern.permute.xlu0 0
      %3084 = vperm.xlu0 %3083, %v443
      %v3085 = vpop.permute.xlu0 %3084
      %3088 = vset.pattern.permute.xlu0 0
      %3089 = vperm.xlu0 %3088, %v444
      %v3090 = vpop.permute.xlu0 %3089
      %3093 = vset.pattern.permute.xlu0 0
      %3094 = vperm.xlu0 %3093, %v445
      %v3095 = vpop.permute.xlu0 %3094
      %3098 = vset.pattern.permute.xlu0 0
      %3099 = vperm.xlu0 %3098, %v446
      %v3100 = vpop.permute.xlu0 %3099
      %3103 = vset.pattern.permute.xlu0 0
      %3104 = vperm.xlu0 %3103, %v447
      %v3105 = vpop.permute.xlu0 %3104
      %3108 = vset.pattern.permute.xlu0 0
      %3109 = vperm.xlu0 %3108, %v448
      %v3110 = vpop.permute.xlu0 %3109
      %3113 = vset.pattern.permute.xlu0 0
      %3114 = vperm.xlu0 %3113, %v449
      %v3115 = vpop.permute.xlu0 %3114
      %3118 = vset.pattern.permute.xlu0 0
      %3119 = vperm.xlu0 %3118, %v450
      %v3120 = vpop.permute.xlu0 %3119
      %3123 = vset.pattern.permute.xlu0 0
      %3124 = vperm.xlu0 %3123, %v451
      %v3125 = vpop.permute.xlu0 %3124
      %3128 = vset.pattern.permute.xlu0 0
      %3129 = vperm.xlu0 %3128, %v452
      %v3130 = vpop.permute.xlu0 %3129
      %3133 = vset.pattern.permute.xlu0 0
      %3134 = vperm.xlu0 %3133, %v453
      %v3135 = vpop.permute.xlu0 %3134
      %3138 = vset.pattern.permute.xlu0 0
      %3139 = vperm.xlu0 %3138, %v454
      %v3140 = vpop.permute.xlu0 %3139
      %3143 = vset.pattern.permute.xlu0 0
      %3144 = vperm.xlu0 %3143, %v455
      %v3145 = vpop.permute.xlu0 %3144
      %3148 = vset.pattern.permute.xlu0 0
      %3149 = vperm.xlu0 %3148, %v456
      %v3150 = vpop.permute.xlu0 %3149
      %3153 = vset.pattern.permute.xlu0 0
      %3154 = vperm.xlu0 %3153, %v457
      %v3155 = vpop.permute.xlu0 %3154
      %v3157 = vmul.f32 %v458, %v3000
      %v3158 = vmul.f32 %v459, %v3005
      %v3159 = vmul.f32 %v460, %v3010
      %v3160 = vmul.f32 %v461, %v3015
      %v3161 = vmul.f32 %v462, %v3020
      %v3162 = vmul.f32 %v463, %v3025
      %v3163 = vmul.f32 %v464, %v3030
      %v3164 = vmul.f32 %v465, %v3035
      %v3165 = vmul.f32 %v466, %v3040
      %v3166 = vmul.f32 %v467, %v3045
      %v3167 = vmul.f32 %v468, %v3050
      %v3168 = vmul.f32 %v469, %v3055
      %v3169 = vmul.f32 %v470, %v3060
      %v3170 = vmul.f32 %v471, %v3065
      %v3171 = vmul.f32 %v472, %v3070
      %v3172 = vmul.f32 %v473, %v3075
      %v3173 = vmul.f32 %v474, %v3080
      %v3174 = vmul.f32 %v475, %v3085
      %v3175 = vmul.f32 %v476, %v3090
      %v3176 = vmul.f32 %v477, %v3095
      %v3177 = vmul.f32 %v478, %v3100
      %v3178 = vmul.f32 %v479, %v3105
      %v3179 = vmul.f32 %v480, %v3110
      %v3180 = vmul.f32 %v481, %v3115
      %v3181 = vmul.f32 %v482, %v3120
      %v3182 = vmul.f32 %v483, %v3125
      %v3183 = vmul.f32 %v484, %v3130
      %v3184 = vmul.f32 %v485, %v3135
      %v3185 = vmul.f32 %v486, %v3140
      %v3186 = vmul.f32 %v487, %v3145
      %v3187 = vmul.f32 %v488, %v3150
      %v3188 = vmul.f32 %v489, %v3155
      %3189 = vst [vmem:[#allocation3 + $0x18] sm:$0xff] %v3157
      %3190 = vst [vmem:[#allocation3 + $0x20] sm:$0xff] %v3158
      %3191 = vst [vmem:[#allocation3 + $0x28] sm:$0xff] %v3159
      %3192 = vst [vmem:[#allocation3 + $0x30] sm:$0xff] %v3160
      %3193 = vst [vmem:[#allocation3 + $0x38] sm:$0xff] %v3161
      %3194 = vst [vmem:[#allocation3 + $0x40] sm:$0xff] %v3162
      %3195 = vst [vmem:[#allocation3 + $0x48] sm:$0xff] %v3163
      %3196 = vst [vmem:[#allocation3 + $0x50] sm:$0xff] %v3164
      %3197 = vst [vmem:[#allocation3 + $0x58] sm:$0xff] %v3165
      %3198 = vst [vmem:[#allocation3 + $0x60] sm:$0xff] %v3166
      %3199 = vst [vmem:[#allocation3 + $0x68] sm:$0xff] %v3167
      %3200 = vst [vmem:[#allocation3 + $0x70] sm:$0xff] %v3168
      %3201 = vst [vmem:[#allocation3 + $0x78] sm:$0xff] %v3169
      %3202 = vst [vmem:[#allocation3 + $0x80] sm:$0xff] %v3170
      %3203 = vst [vmem:[#allocation3 + $0x88] sm:$0xff] %v3171
      %3204 = vst [vmem:[#allocation3 + $0x90] sm:$0xff] %v3172
      %3205 = vst [vmem:[#allocation3 + $0x98] sm:$0xff] %v3173
      %3206 = vst [vmem:[#allocation3 + $0xa0] sm:$0xff] %v3174
      %3207 = vst [vmem:[#allocation3 + $0xa8] sm:$0xff] %v3175
      %3208 = vst [vmem:[#allocation3 + $0xb0] sm:$0xff] %v3176
      %3209 = vst [vmem:[#allocation3 + $0xb8] sm:$0xff] %v3177
      %3210 = vst [vmem:[#allocation3 + $0xc0] sm:$0xff] %v3178
      %3211 = vst [vmem:[#allocation3 + $0xc8] sm:$0xff] %v3179
      %3212 = vst [vmem:[#allocation3 + $0xd0] sm:$0xff] %v3180
      %3213 = vst [vmem:[#allocation3 + $0xd8] sm:$0xff] %v3181
      %3214 = vst [vmem:[#allocation3 + $0xe0] sm:$0xff] %v3182
      %3215 = vst [vmem:[#allocation3 + $0xe8] sm:$0xff] %v3183
      %3216 = vst [vmem:[#allocation3 + $0xf0] sm:$0xff] %v3184
      %3217 = vst [vmem:[#allocation3 + $0xf8] sm:$0xff] %v3185
      %3218 = vst [vmem:[#allocation3 + $0x100] sm:$0xff] %v3186
      %3219 = vst [vmem:[#allocation3 + $0x108] sm:$0xff] %v3187
      %3220 = vst [vmem:[#allocation3 + $0x110] sm:$0xff] %v3188
      %v3221 = vld [vmem:[#allocation3 + $0x9] sm:$0xff]
      %v3222 = vld [vmem:[#allocation3 + $0x11] sm:$0xff]
      %v3223 = vld [vmem:[#allocation3 + $0x19] sm:$0xff]
      %v3224 = vld [vmem:[#allocation3 + $0x21] sm:$0xff]
      %v3225 = vld [vmem:[#allocation3 + $0x29] sm:$0xff]
      %v3226 = vld [vmem:[#allocation3 + $0x31] sm:$0xff]
      %v3227 = vld [vmem:[#allocation3 + $0x39] sm:$0xff]
      %v3228 = vld [vmem:[#allocation3 + $0x41] sm:$0xff]
      %v3229 = vld [vmem:[#allocation3 + $0x49] sm:$0xff]
      %v3230 = vld [vmem:[#allocation3 + $0x51] sm:$0xff]
      %v3231 = vld [vmem:[#allocation3 + $0x59] sm:$0xff]
      %v3232 = vld [vmem:[#allocation3 + $0x61] sm:$0xff]
      %v3233 = vld [vmem:[#allocation3 + $0x69] sm:$0xff]
      %v3234 = vld [vmem:[#allocation3 + $0x71] sm:$0xff]
      %v3235 = vld [vmem:[#allocation3 + $0x79] sm:$0xff]
      %v3236 = vld [vmem:[#allocation3 + $0x81] sm:$0xff]
      %v3237 = vld [vmem:[#allocation3 + $0x89] sm:$0xff]
      %v3238 = vld [vmem:[#allocation3 + $0x91] sm:$0xff]
      %v3239 = vld [vmem:[#allocation3 + $0x99] sm:$0xff]
      %v3240 = vld [vmem:[#allocation3 + $0xa1] sm:$0xff]
      %v3241 = vld [vmem:[#allocation3 + $0xa9] sm:$0xff]
      %v3242 = vld [vmem:[#allocation3 + $0xb1] sm:$0xff]
      %v3243 = vld [vmem:[#allocation3 + $0xb9] sm:$0xff]
      %v3244 = vld [vmem:[#allocation3 + $0xc1] sm:$0xff]
      %v3245 = vld [vmem:[#allocation3 + $0xc9] sm:$0xff]
      %v3246 = vld [vmem:[#allocation3 + $0xd1] sm:$0xff]
      %v3247 = vld [vmem:[#allocation3 + $0xd9] sm:$0xff]
      %v3248 = vld [vmem:[#allocation3 + $0xe1] sm:$0xff]
      %v3249 = vld [vmem:[#allocation3 + $0xe9] sm:$0xff]
      %v3250 = vld [vmem:[#allocation3 + $0xf1] sm:$0xff]
      %v3251 = vld [vmem:[#allocation3 + $0xf9] sm:$0xff]
      %v3252 = vld [vmem:[#allocation3 + $0x101] sm:$0xff]
      %v3253 = vld [vmem:[#allocation2] sm:$0xff]
      %v3254 = vld [vmem:[#allocation2 + $0x8] sm:$0xff]
      %v3255 = vld [vmem:[#allocation2 + $0x10] sm:$0xff]
      %v3256 = vld [vmem:[#allocation2 + $0x18] sm:$0xff]
      %v3257 = vld [vmem:[#allocation2 + $0x20] sm:$0xff]
      %v3258 = vld [vmem:[#allocation2 + $0x28] sm:$0xff]
      %v3259 = vld [vmem:[#allocation2 + $0x30] sm:$0xff]
      %v3260 = vld [vmem:[#allocation2 + $0x38] sm:$0xff]
      %v3261 = vld [vmem:[#allocation2 + $0x40] sm:$0xff]
      %v3262 = vld [vmem:[#allocation2 + $0x48] sm:$0xff]
      %v3263 = vld [vmem:[#allocation2 + $0x50] sm:$0xff]
      %v3264 = vld [vmem:[#allocation2 + $0x58] sm:$0xff]
      %v3265 = vld [vmem:[#allocation2 + $0x60] sm:$0xff]
      %v3266 = vld [vmem:[#allocation2 + $0x68] sm:$0xff]
      %v3267 = vld [vmem:[#allocation2 + $0x70] sm:$0xff]
      %v3268 = vld [vmem:[#allocation2 + $0x78] sm:$0xff]
      %v3269 = vld [vmem:[#allocation2 + $0x80] sm:$0xff]
      %v3270 = vld [vmem:[#allocation2 + $0x88] sm:$0xff]
      %v3271 = vld [vmem:[#allocation2 + $0x90] sm:$0xff]
      %v3272 = vld [vmem:[#allocation2 + $0x98] sm:$0xff]
      %v3273 = vld [vmem:[#allocation2 + $0xa0] sm:$0xff]
      %v3274 = vld [vmem:[#allocation2 + $0xa8] sm:$0xff]
      %v3275 = vld [vmem:[#allocation2 + $0xb0] sm:$0xff]
      %v3276 = vld [vmem:[#allocation2 + $0xb8] sm:$0xff]
      %v3277 = vld [vmem:[#allocation2 + $0xc0] sm:$0xff]
      %v3278 = vld [vmem:[#allocation2 + $0xc8] sm:$0xff]
      %v3279 = vld [vmem:[#allocation2 + $0xd0] sm:$0xff]
      %v3280 = vld [vmem:[#allocation2 + $0xd8] sm:$0xff]
      %v3281 = vld [vmem:[#allocation2 + $0xe0] sm:$0xff]
      %v3282 = vld [vmem:[#allocation2 + $0xe8] sm:$0xff]
      %v3283 = vld [vmem:[#allocation2 + $0xf0] sm:$0xff]
      %v3284 = vld [vmem:[#allocation2 + $0xf8] sm:$0xff]
      %v3285 = vpack.c.bf16 %v3222, %v3221
      %v3286 = vpack.c.bf16 %v3224, %v3223
      %v3287 = vpack.c.bf16 %v3226, %v3225
      %v3288 = vpack.c.bf16 %v3228, %v3227
      %v3289 = vpack.c.bf16 %v3230, %v3229
      %v3290 = vpack.c.bf16 %v3232, %v3231
      %v3291 = vpack.c.bf16 %v3234, %v3233
      %v3292 = vpack.c.bf16 %v3236, %v3235
      %v3293 = vpack.c.bf16 %v3238, %v3237
      %v3294 = vpack.c.bf16 %v3240, %v3239
      %v3295 = vpack.c.bf16 %v3242, %v3241
      %v3296 = vpack.c.bf16 %v3244, %v3243
      %v3297 = vpack.c.bf16 %v3246, %v3245
      %v3298 = vpack.c.bf16 %v3248, %v3247
      %v3299 = vpack.c.bf16 %v3250, %v3249
      %v3300 = vpack.c.bf16 %v3252, %v3251
      %s3301 = scalar_lea.vmem %s3, 128
      %v3302 = vld [vmem:[%s3301] sm:$0xf]
      %v3303 = vld [vmem:[%s3301 + $0x4] sm:$0xf]
      %v3304 = vld [vmem:[%s3301 + $0x8] sm:$0xf]
      %v3305 = vld [vmem:[%s3301 + $0xc] sm:$0xf]
      %v3306 = vld [vmem:[%s3301 + $0x10] sm:$0xf]
      %v3307 = vld [vmem:[%s3301 + $0x14] sm:$0xf]
      %v3308 = vld [vmem:[%s3301 + $0x18] sm:$0xf]
      %v3309 = vld [vmem:[%s3301 + $0x1c] sm:$0xf]
      %v3310 = vld [vmem:[%s3301 + $0x20] sm:$0xf]
      %v3311 = vld [vmem:[%s3301 + $0x24] sm:$0xf]
      %v3312 = vld [vmem:[%s3301 + $0x28] sm:$0xf]
      %v3313 = vld [vmem:[%s3301 + $0x2c] sm:$0xf]
      %v3314 = vld [vmem:[%s3301 + $0x30] sm:$0xf]
      %v3315 = vld [vmem:[%s3301 + $0x34] sm:$0xf]
      %v3316 = vld [vmem:[%s3301 + $0x38] sm:$0xf]
      %v3317 = vld [vmem:[%s3301 + $0x3c] sm:$0xf]
      %v3334 = vunpack.c.l.b16 %v3302
      %v3335 = vunpack.c.l.b16 %v3303
      %v3336 = vunpack.c.l.b16 %v3304
      %v3337 = vunpack.c.l.b16 %v3305
      %v3338 = vunpack.c.l.b16 %v3306
      %v3339 = vunpack.c.l.b16 %v3307
      %v3340 = vunpack.c.l.b16 %v3308
      %v3341 = vunpack.c.l.b16 %v3309
      %v3342 = vunpack.c.l.b16 %v3310
      %v3343 = vunpack.c.l.b16 %v3311
      %v3344 = vunpack.c.l.b16 %v3312
      %v3345 = vunpack.c.l.b16 %v3313
      %v3346 = vunpack.c.l.b16 %v3314
      %v3347 = vunpack.c.l.b16 %v3315
      %v3348 = vunpack.c.l.b16 %v3316
      %v3349 = vunpack.c.l.b16 %v3317
      %v3350 = vpack.c.b16 %v3335, %v3334
      %v3351 = vpack.c.b16 %v3337, %v3336
      %v3352 = vpack.c.b16 %v3339, %v3338
      %v3353 = vpack.c.b16 %v3341, %v3340
      %v3354 = vpack.c.b16 %v3343, %v3342
      %v3355 = vpack.c.b16 %v3345, %v3344
      %v3356 = vpack.c.b16 %v3347, %v3346
      %v3357 = vpack.c.b16 %v3349, %v3348
      %3366 = vmatprep.subr.bf16.mxu0 0
      %3367 = vmatpush1.bf16.msra.mxu0 %v3350
      %3368 = vmatprep.subr.bf16.mxu0 0
      %3369 = vmatpush1.bf16.msra.mxu0 %v3351
      %3370 = vmatprep.subr.bf16.mxu0 0
      %3371 = vmatpush1.bf16.msra.mxu0 %v3352
      %3372 = vmatprep.subr.bf16.mxu0 0
      %3373 = vmatpush1.bf16.msra.mxu0 %v3353
      %3374 = vmatprep.subr.bf16.mxu0 0
      %3375 = vmatpush1.bf16.msra.mxu0 %v3354
      %3376 = vmatprep.subr.bf16.mxu0 0
      %3377 = vmatpush1.bf16.msra.mxu0 %v3355
      %3378 = vmatprep.subr.bf16.mxu0 0
      %3379 = vmatpush1.bf16.msra.mxu0 %v3356
      %3380 = vmatprep.subr.bf16.mxu0 0
      %3381 = vmatpush1.bf16.msra.mxu0 %v3357
      %3382 = vmatprep.subr.bf16.mxu0 0
      %3383 = vmatpush1.bf16.msra.mxu0 0
      %3384 = vmatprep.subr.bf16.mxu0 0
      %3385 = vmatpush1.bf16.msra.mxu0 0
      %3386 = vmatprep.subr.bf16.mxu0 0
      %3387 = vmatpush1.bf16.msra.mxu0 0
      %3388 = vmatprep.subr.bf16.mxu0 0
      %3389 = vmatpush1.bf16.msra.mxu0 0
      %3390 = vmatprep.subr.bf16.mxu0 0
      %3391 = vmatpush1.bf16.msra.mxu0 0
      %3392 = vmatprep.subr.bf16.mxu0 0
      %3393 = vmatpush1.bf16.msra.mxu0 0
      %3394 = vmatprep.subr.bf16.mxu0 0
      %3395 = vmatpush1.bf16.msra.mxu0 0
      %3396 = vmatprep.subr.bf16.mxu0 0
      %3397 = vmatpush1.bf16.msra.mxu0 0
      %3398 = vmatprep.mubr.bf16.mxu0 0
      %3399 = vmatmul.mubr.bf16.gmra.mrb[0].mxu0 %v3285
      %v3400 = vpop.f32.mrb[0].mxu0
      %v3401 = vadd.f32 0.0, %v3400
      %v3402 = vpop.f32.mrb[0].mxu0
      %v3403 = vpop.f32.mrb[0].mxu0
      %v3404 = vadd.f32 0.0, %v3403
      %v3405 = vpop.f32.mrb[0].mxu0
      %3406 = vmatprep.mubr.bf16.mxu0 0
      %3407 = vmatmul.mubr.bf16.gmra.mrb[0].mxu0 %v3286
      %v3408 = vpop.f32.mrb[0].mxu0
      %v3409 = vadd.f32 0.0, %v3408
      %v3410 = vpop.f32.mrb[0].mxu0
      %v3411 = vpop.f32.mrb[0].mxu0
      %v3412 = vadd.f32 0.0, %v3411
      %v3413 = vpop.f32.mrb[0].mxu0
      %3414 = vmatprep.mubr.bf16.mxu0 0
      %3415 = vmatmul.mubr.bf16.gmra.mrb[0].mxu0 %v3287
      %v3416 = vpop.f32.mrb[0].mxu0
      %v3417 = vadd.f32 0.0, %v3416
      %v3418 = vpop.f32.mrb[0].mxu0
      %v3419 = vpop.f32.mrb[0].mxu0
      %v3420 = vadd.f32 0.0, %v3419
      %v3421 = vpop.f32.mrb[0].mxu0
      %3422 = vmatprep.mubr.bf16.mxu0 0
      %3423 = vmatmul.mubr.bf16.gmra.mrb[0].mxu0 %v3288
      %v3424 = vpop.f32.mrb[0].mxu0
      %v3425 = vadd.f32 0.0, %v3424
      %v3426 = vpop.f32.mrb[0].mxu0
      %v3427 = vpop.f32.mrb[0].mxu0
      %v3428 = vadd.f32 0.0, %v3427
      %v3429 = vpop.f32.mrb[0].mxu0
      %3430 = vmatprep.mubr.bf16.mxu0 0
      %3431 = vmatmul.mubr.bf16.gmra.mrb[0].mxu0 %v3289
      %v3432 = vpop.f32.mrb[0].mxu0
      %v3433 = vadd.f32 0.0, %v3432
      %v3434 = vpop.f32.mrb[0].mxu0
      %v3435 = vpop.f32.mrb[0].mxu0
      %v3436 = vadd.f32 0.0, %v3435
      %v3437 = vpop.f32.mrb[0].mxu0
      %3438 = vmatprep.mubr.bf16.mxu0 0
      %3439 = vmatmul.mubr.bf16.gmra.mrb[0].mxu0 %v3290
      %v3440 = vpop.f32.mrb[0].mxu0
      %v3441 = vadd.f32 0.0, %v3440
      %v3442 = vpop.f32.mrb[0].mxu0
      %v3443 = vpop.f32.mrb[0].mxu0
      %v3444 = vadd.f32 0.0, %v3443
      %v3445 = vpop.f32.mrb[0].mxu0
      %3446 = vmatprep.mubr.bf16.mxu0 0
      %3447 = vmatmul.mubr.bf16.gmra.mrb[0].mxu0 %v3291
      %v3448 = vpop.f32.mrb[0].mxu0
      %v3449 = vadd.f32 0.0, %v3448
      %v3450 = vpop.f32.mrb[0].mxu0
      %v3451 = vpop.f32.mrb[0].mxu0
      %v3452 = vadd.f32 0.0, %v3451
      %v3453 = vpop.f32.mrb[0].mxu0
      %3454 = vmatprep.mubr.bf16.mxu0 0
      %3455 = vmatmul.mubr.bf16.gmra.mrb[0].mxu0 %v3292
      %v3456 = vpop.f32.mrb[0].mxu0
      %v3457 = vadd.f32 0.0, %v3456
      %v3458 = vpop.f32.mrb[0].mxu0
      %v3459 = vpop.f32.mrb[0].mxu0
      %v3460 = vadd.f32 0.0, %v3459
      %v3461 = vpop.f32.mrb[0].mxu0
      %3462 = vmatprep.mubr.bf16.mxu0 0
      %3463 = vmatmul.mubr.bf16.gmra.mrb[0].mxu0 %v3293
      %v3464 = vpop.f32.mrb[0].mxu0
      %v3465 = vadd.f32 0.0, %v3464
      %v3466 = vpop.f32.mrb[0].mxu0
      %v3467 = vpop.f32.mrb[0].mxu0
      %v3468 = vadd.f32 0.0, %v3467
      %v3469 = vpop.f32.mrb[0].mxu0
      %3470 = vmatprep.mubr.bf16.mxu0 0
      %3471 = vmatmul.mubr.bf16.gmra.mrb[0].mxu0 %v3294
      %v3472 = vpop.f32.mrb[0].mxu0
      %v3473 = vadd.f32 0.0, %v3472
      %v3474 = vpop.f32.mrb[0].mxu0
      %v3475 = vpop.f32.mrb[0].mxu0
      %v3476 = vadd.f32 0.0, %v3475
      %v3477 = vpop.f32.mrb[0].mxu0
      %3478 = vmatprep.mubr.bf16.mxu0 0
      %3479 = vmatmul.mubr.bf16.gmra.mrb[0].mxu0 %v3295
      %v3480 = vpop.f32.mrb[0].mxu0
      %v3481 = vadd.f32 0.0, %v3480
      %v3482 = vpop.f32.mrb[0].mxu0
      %v3483 = vpop.f32.mrb[0].mxu0
      %v3484 = vadd.f32 0.0, %v3483
      %v3485 = vpop.f32.mrb[0].mxu0
      %3486 = vmatprep.mubr.bf16.mxu0 0
      %3487 = vmatmul.mubr.bf16.gmra.mrb[0].mxu0 %v3296
      %v3488 = vpop.f32.mrb[0].mxu0
      %v3489 = vadd.f32 0.0, %v3488
      %v3490 = vpop.f32.mrb[0].mxu0
      %v3491 = vpop.f32.mrb[0].mxu0
      %v3492 = vadd.f32 0.0, %v3491
      %v3493 = vpop.f32.mrb[0].mxu0
      %3494 = vmatprep.mubr.bf16.mxu0 0
      %3495 = vmatmul.mubr.bf16.gmra.mrb[0].mxu0 %v3297
      %v3496 = vpop.f32.mrb[0].mxu0
      %v3497 = vadd.f32 0.0, %v3496
      %v3498 = vpop.f32.mrb[0].mxu0
      %v3499 = vpop.f32.mrb[0].mxu0
      %v3500 = vadd.f32 0.0, %v3499
      %v3501 = vpop.f32.mrb[0].mxu0
      %3502 = vmatprep.mubr.bf16.mxu0 0
      %3503 = vmatmul.mubr.bf16.gmra.mrb[0].mxu0 %v3298
      %v3504 = vpop.f32.mrb[0].mxu0
      %v3505 = vadd.f32 0.0, %v3504
      %v3506 = vpop.f32.mrb[0].mxu0
      %v3507 = vpop.f32.mrb[0].mxu0
      %v3508 = vadd.f32 0.0, %v3507
      %v3509 = vpop.f32.mrb[0].mxu0
      %3510 = vmatprep.mubr.bf16.mxu0 0
      %3511 = vmatmul.mubr.bf16.gmra.mrb[0].mxu0 %v3299
      %v3512 = vpop.f32.mrb[0].mxu0
      %v3513 = vadd.f32 0.0, %v3512
      %v3514 = vpop.f32.mrb[0].mxu0
      %v3515 = vpop.f32.mrb[0].mxu0
      %v3516 = vadd.f32 0.0, %v3515
      %v3517 = vpop.f32.mrb[0].mxu0
      %3518 = vmatprep.mubr.bf16.mxu0 0
      %3519 = vmatmul.mubr.bf16.gmra.mrb[0].mxu0 %v3300
      %v3520 = vpop.f32.mrb[0].mxu0
      %v3521 = vadd.f32 0.0, %v3520
      %v3522 = vpop.f32.mrb[0].mxu0
      %v3523 = vpop.f32.mrb[0].mxu0
      %v3524 = vadd.f32 0.0, %v3523
      %v3525 = vpop.f32.mrb[0].mxu0
      %3526 = vdwg.mxu0
      %v3527 = vadd.f32 %v3253, %v3401
      %v3528 = vadd.f32 %v3254, %v3404
      %v3529 = vadd.f32 %v3255, %v3409
      %v3530 = vadd.f32 %v3256, %v3412
      %v3531 = vadd.f32 %v3257, %v3417
      %v3532 = vadd.f32 %v3258, %v3420
      %v3533 = vadd.f32 %v3259, %v3425
      %v3534 = vadd.f32 %v3260, %v3428
      %v3535 = vadd.f32 %v3261, %v3433
      %v3536 = vadd.f32 %v3262, %v3436
      %v3537 = vadd.f32 %v3263, %v3441
      %v3538 = vadd.f32 %v3264, %v3444
      %v3539 = vadd.f32 %v3265, %v3449
      %v3540 = vadd.f32 %v3266, %v3452
      %v3541 = vadd.f32 %v3267, %v3457
      %v3542 = vadd.f32 %v3268, %v3460
      %v3543 = vadd.f32 %v3269, %v3465
      %v3544 = vadd.f32 %v3270, %v3468
      %v3545 = vadd.f32 %v3271, %v3473
      %v3546 = vadd.f32 %v3272, %v3476
      %v3547 = vadd.f32 %v3273, %v3481
      %v3548 = vadd.f32 %v3274, %v3484
      %v3549 = vadd.f32 %v3275, %v3489
      %v3550 = vadd.f32 %v3276, %v3492
      %v3551 = vadd.f32 %v3277, %v3497
      %v3552 = vadd.f32 %v3278, %v3500
      %v3553 = vadd.f32 %v3279, %v3505
      %v3554 = vadd.f32 %v3280, %v3508
      %v3555 = vadd.f32 %v3281, %v3513
      %v3556 = vadd.f32 %v3282, %v3516
      %v3557 = vadd.f32 %v3283, %v3521
      %v3558 = vadd.f32 %v3284, %v3524
      %3559 = vst [vmem:[#allocation2] sm:$0xff] %v3527
      %3560 = vst [vmem:[#allocation2 + $0x8] sm:$0xff] %v3528
      %3561 = vst [vmem:[#allocation2 + $0x10] sm:$0xff] %v3529
      %3562 = vst [vmem:[#allocation2 + $0x18] sm:$0xff] %v3530
      %3563 = vst [vmem:[#allocation2 + $0x20] sm:$0xff] %v3531
      %3564 = vst [vmem:[#allocation2 + $0x28] sm:$0xff] %v3532
      %3565 = vst [vmem:[#allocation2 + $0x30] sm:$0xff] %v3533
      %3566 = vst [vmem:[#allocation2 + $0x38] sm:$0xff] %v3534
      %3567 = vst [vmem:[#allocation2 + $0x40] sm:$0xff] %v3535
      %3568 = vst [vmem:[#allocation2 + $0x48] sm:$0xff] %v3536
      %3569 = vst [vmem:[#allocation2 + $0x50] sm:$0xff] %v3537
      %3570 = vst [vmem:[#allocation2 + $0x58] sm:$0xff] %v3538
      %3571 = vst [vmem:[#allocation2 + $0x60] sm:$0xff] %v3539
      %3572 = vst [vmem:[#allocation2 + $0x68] sm:$0xff] %v3540
      %3573 = vst [vmem:[#allocation2 + $0x70] sm:$0xff] %v3541
      %3574 = vst [vmem:[#allocation2 + $0x78] sm:$0xff] %v3542
      %3575 = vst [vmem:[#allocation2 + $0x80] sm:$0xff] %v3543
      %3576 = vst [vmem:[#allocation2 + $0x88] sm:$0xff] %v3544
      %3577 = vst [vmem:[#allocation2 + $0x90] sm:$0xff] %v3545
      %3578 = vst [vmem:[#allocation2 + $0x98] sm:$0xff] %v3546
      %3579 = vst [vmem:[#allocation2 + $0xa0] sm:$0xff] %v3547
      %3580 = vst [vmem:[#allocation2 + $0xa8] sm:$0xff] %v3548
      %3581 = vst [vmem:[#allocation2 + $0xb0] sm:$0xff] %v3549
      %3582 = vst [vmem:[#allocation2 + $0xb8] sm:$0xff] %v3550
      %3583 = vst [vmem:[#allocation2 + $0xc0] sm:$0xff] %v3551
      %3584 = vst [vmem:[#allocation2 + $0xc8] sm:$0xff] %v3552
      %3585 = vst [vmem:[#allocation2 + $0xd0] sm:$0xff] %v3553
      %3586 = vst [vmem:[#allocation2 + $0xd8] sm:$0xff] %v3554
      %3587 = vst [vmem:[#allocation2 + $0xe0] sm:$0xff] %v3555
      %3588 = vst [vmem:[#allocation2 + $0xe8] sm:$0xff] %v3556
      %3589 = vst [vmem:[#allocation2 + $0xf0] sm:$0xff] %v3557
      %3590 = vst [vmem:[#allocation2 + $0xf8] sm:$0xff] %v3558
      %v3591 = vld [vmem:[#allocation3 + $0x19] sm:$0xff]
      %v3592 = vld [vmem:[#allocation3 + $0x21] sm:$0xff]
      %v3593 = vld [vmem:[#allocation3 + $0x29] sm:$0xff]
      %v3594 = vld [vmem:[#allocation3 + $0x31] sm:$0xff]
      %v3595 = vld [vmem:[#allocation3 + $0x39] sm:$0xff]
      %v3596 = vld [vmem:[#allocation3 + $0x41] sm:$0xff]
      %v3597 = vld [vmem:[#allocation3 + $0x49] sm:$0xff]
      %v3598 = vld [vmem:[#allocation3 + $0x51] sm:$0xff]
      %v3599 = vld [vmem:[#allocation3 + $0x59] sm:$0xff]
      %v3600 = vld [vmem:[#allocation3 + $0x61] sm:$0xff]
      %v3601 = vld [vmem:[#allocation3 + $0x69] sm:$0xff]
      %v3602 = vld [vmem:[#allocation3 + $0x71] sm:$0xff]
      %v3603 = vld [vmem:[#allocation3 + $0x79] sm:$0xff]
      %v3604 = vld [vmem:[#allocation3 + $0x81] sm:$0xff]
      %v3605 = vld [vmem:[#allocation3 + $0x89] sm:$0xff]
      %v3606 = vld [vmem:[#allocation3 + $0x91] sm:$0xff]
      %v3607 = vld [vmem:[#allocation3 + $0x99] sm:$0xff]
      %v3608 = vld [vmem:[#allocation3 + $0xa1] sm:$0xff]
      %v3609 = vld [vmem:[#allocation3 + $0xa9] sm:$0xff]
      %v3610 = vld [vmem:[#allocation3 + $0xb1] sm:$0xff]
      %v3611 = vld [vmem:[#allocation3 + $0xb9] sm:$0xff]
      %v3612 = vld [vmem:[#allocation3 + $0xc1] sm:$0xff]
      %v3613 = vld [vmem:[#allocation3 + $0xc9] sm:$0xff]
      %v3614 = vld [vmem:[#allocation3 + $0xd1] sm:$0xff]
      %v3615 = vld [vmem:[#allocation3 + $0xd9] sm:$0xff]
      %v3616 = vld [vmem:[#allocation3 + $0xe1] sm:$0xff]
      %v3617 = vld [vmem:[#allocation3 + $0xe9] sm:$0xff]
      %v3618 = vld [vmem:[#allocation3 + $0xf1] sm:$0xff]
      %v3619 = vld [vmem:[#allocation3 + $0xf9] sm:$0xff]
      %v3620 = vld [vmem:[#allocation3 + $0x101] sm:$0xff]
      %v3621 = vld [vmem:[#allocation3 + $0x109] sm:$0xff]
      %v3622 = vld [vmem:[#allocation3 + $0x111] sm:$0xff]
      %v3623 = vld [vmem:[#allocation2] sm:$0xff]
      %v3624 = vld [vmem:[#allocation2 + $0x8] sm:$0xff]
      %v3625 = vld [vmem:[#allocation2 + $0x10] sm:$0xff]
      %v3626 = vld [vmem:[#allocation2 + $0x18] sm:$0xff]
      %v3627 = vld [vmem:[#allocation2 + $0x20] sm:$0xff]
      %v3628 = vld [vmem:[#allocation2 + $0x28] sm:$0xff]
      %v3629 = vld [vmem:[#allocation2 + $0x30] sm:$0xff]
      %v3630 = vld [vmem:[#allocation2 + $0x38] sm:$0xff]
      %v3631 = vld [vmem:[#allocation2 + $0x40] sm:$0xff]
      %v3632 = vld [vmem:[#allocation2 + $0x48] sm:$0xff]
      %v3633 = vld [vmem:[#allocation2 + $0x50] sm:$0xff]
      %v3634 = vld [vmem:[#allocation2 + $0x58] sm:$0xff]
      %v3635 = vld [vmem:[#allocation2 + $0x60] sm:$0xff]
      %v3636 = vld [vmem:[#allocation2 + $0x68] sm:$0xff]
      %v3637 = vld [vmem:[#allocation2 + $0x70] sm:$0xff]
      %v3638 = vld [vmem:[#allocation2 + $0x78] sm:$0xff]
      %v3639 = vld [vmem:[#allocation2 + $0x80] sm:$0xff]
      %v3640 = vld [vmem:[#allocation2 + $0x88] sm:$0xff]
      %v3641 = vld [vmem:[#allocation2 + $0x90] sm:$0xff]
      %v3642 = vld [vmem:[#allocation2 + $0x98] sm:$0xff]
      %v3643 = vld [vmem:[#allocation2 + $0xa0] sm:$0xff]
      %v3644 = vld [vmem:[#allocation2 + $0xa8] sm:$0xff]
      %v3645 = vld [vmem:[#allocation2 + $0xb0] sm:$0xff]
      %v3646 = vld [vmem:[#allocation2 + $0xb8] sm:$0xff]
      %v3647 = vld [vmem:[#allocation2 + $0xc0] sm:$0xff]
      %v3648 = vld [vmem:[#allocation2 + $0xc8] sm:$0xff]
      %v3649 = vld [vmem:[#allocation2 + $0xd0] sm:$0xff]
      %v3650 = vld [vmem:[#allocation2 + $0xd8] sm:$0xff]
      %v3651 = vld [vmem:[#allocation2 + $0xe0] sm:$0xff]
      %v3652 = vld [vmem:[#allocation2 + $0xe8] sm:$0xff]
      %v3653 = vld [vmem:[#allocation2 + $0xf0] sm:$0xff]
      %v3654 = vld [vmem:[#allocation2 + $0xf8] sm:$0xff]
      %v3655 = vpack.c.bf16 %v3592, %v3591
      %v3656 = vpack.c.bf16 %v3594, %v3593
      %v3657 = vpack.c.bf16 %v3596, %v3595
      %v3658 = vpack.c.bf16 %v3598, %v3597
      %v3659 = vpack.c.bf16 %v3600, %v3599
      %v3660 = vpack.c.bf16 %v3602, %v3601
      %v3661 = vpack.c.bf16 %v3604, %v3603
      %v3662 = vpack.c.bf16 %v3606, %v3605
      %v3663 = vpack.c.bf16 %v3608, %v3607
      %v3664 = vpack.c.bf16 %v3610, %v3609
      %v3665 = vpack.c.bf16 %v3612, %v3611
      %v3666 = vpack.c.bf16 %v3614, %v3613
      %v3667 = vpack.c.bf16 %v3616, %v3615
      %v3668 = vpack.c.bf16 %v3618, %v3617
      %v3669 = vpack.c.bf16 %v3620, %v3619
      %v3670 = vpack.c.bf16 %v3622, %v3621
      %s3671 = scalar_lea.vmem %s3, 320
      %v3672 = vld [vmem:[%s3671] sm:$0xf]
      %v3673 = vld [vmem:[%s3671 + $0x4] sm:$0xf]
      %v3674 = vld [vmem:[%s3671 + $0x8] sm:$0xf]
      %v3675 = vld [vmem:[%s3671 + $0xc] sm:$0xf]
      %v3676 = vld [vmem:[%s3671 + $0x10] sm:$0xf]
      %v3677 = vld [vmem:[%s3671 + $0x14] sm:$0xf]
      %v3678 = vld [vmem:[%s3671 + $0x18] sm:$0xf]
      %v3679 = vld [vmem:[%s3671 + $0x1c] sm:$0xf]
      %v3680 = vld [vmem:[%s3671 + $0x20] sm:$0xf]
      %v3681 = vld [vmem:[%s3671 + $0x24] sm:$0xf]
      %v3682 = vld [vmem:[%s3671 + $0x28] sm:$0xf]
      %v3683 = vld [vmem:[%s3671 + $0x2c] sm:$0xf]
      %v3684 = vld [vmem:[%s3671 + $0x30] sm:$0xf]
      %v3685 = vld [vmem:[%s3671 + $0x34] sm:$0xf]
      %v3686 = vld [vmem:[%s3671 + $0x38] sm:$0xf]
      %v3687 = vld [vmem:[%s3671 + $0x3c] sm:$0xf]
      %v3704 = vunpack.c.l.b16 %v3672
      %v3705 = vunpack.c.l.b16 %v3673
      %v3706 = vunpack.c.l.b16 %v3674
      %v3707 = vunpack.c.l.b16 %v3675
      %v3708 = vunpack.c.l.b16 %v3676
      %v3709 = vunpack.c.l.b16 %v3677
      %v3710 = vunpack.c.l.b16 %v3678
      %v3711 = vunpack.c.l.b16 %v3679
      %v3712 = vunpack.c.l.b16 %v3680
      %v3713 = vunpack.c.l.b16 %v3681
      %v3714 = vunpack.c.l.b16 %v3682
      %v3715 = vunpack.c.l.b16 %v3683
      %v3716 = vunpack.c.l.b16 %v3684
      %v3717 = vunpack.c.l.b16 %v3685
      %v3718 = vunpack.c.l.b16 %v3686
      %v3719 = vunpack.c.l.b16 %v3687
      %v3720 = vpack.c.b16 %v3705, %v3704
      %v3721 = vpack.c.b16 %v3707, %v3706
      %v3722 = vpack.c.b16 %v3709, %v3708
      %v3723 = vpack.c.b16 %v3711, %v3710
      %v3724 = vpack.c.b16 %v3713, %v3712
      %v3725 = vpack.c.b16 %v3715, %v3714
      %v3726 = vpack.c.b16 %v3717, %v3716
      %v3727 = vpack.c.b16 %v3719, %v3718
      %3736 = vmatprep.subr.bf16.mxu0 0
      %3737 = vmatpush1.bf16.msra.mxu0 %v3720
      %3738 = vmatprep.subr.bf16.mxu0 0
      %3739 = vmatpush1.bf16.msra.mxu0 %v3721
      %3740 = vmatprep.subr.bf16.mxu0 0
      %3741 = vmatpush1.bf16.msra.mxu0 %v3722
      %3742 = vmatprep.subr.bf16.mxu0 0
      %3743 = vmatpush1.bf16.msra.mxu0 %v3723
      %3744 = vmatprep.subr.bf16.mxu0 0
      %3745 = vmatpush1.bf16.msra.mxu0 %v3724
      %3746 = vmatprep.subr.bf16.mxu0 0
      %3747 = vmatpush1.bf16.msra.mxu0 %v3725
      %3748 = vmatprep.subr.bf16.mxu0 0
      %3749 = vmatpush1.bf16.msra.mxu0 %v3726
      %3750 = vmatprep.subr.bf16.mxu0 0
      %3751 = vmatpush1.bf16.msra.mxu0 %v3727
      %3752 = vmatprep.subr.bf16.mxu0 0
      %3753 = vmatpush1.bf16.msra.mxu0 0
      %3754 = vmatprep.subr.bf16.mxu0 0
      %3755 = vmatpush1.bf16.msra.mxu0 0
      %3756 = vmatprep.subr.bf16.mxu0 0
      %3757 = vmatpush1.bf16.msra.mxu0 0
      %3758 = vmatprep.subr.bf16.mxu0 0
      %3759 = vmatpush1.bf16.msra.mxu0 0
      %3760 = vmatprep.subr.bf16.mxu0 0
      %3761 = vmatpush1.bf16.msra.mxu0 0
      %3762 = vmatprep.subr.bf16.mxu0 0
      %3763 = vmatpush1.bf16.msra.mxu0 0
      %3764 = vmatprep.subr.bf16.mxu0 0
      %3765 = vmatpush1.bf16.msra.mxu0 0
      %3766 = vmatprep.subr.bf16.mxu0 0
      %3767 = vmatpush1.bf16.msra.mxu0 0
      %3768 = vmatprep.mubr.bf16.mxu0 0
      %3769 = vmatmul.mubr.bf16.gmra.mrb[0].mxu0 %v3655
      %v3770 = vpop.f32.mrb[0].mxu0
      %v3771 = vadd.f32 0.0, %v3770
      %v3772 = vpop.f32.mrb[0].mxu0
      %v3773 = vpop.f32.mrb[0].mxu0
      %v3774 = vadd.f32 0.0, %v3773
      %v3775 = vpop.f32.mrb[0].mxu0
      %3776 = vmatprep.mubr.bf16.mxu0 0
      %3777 = vmatmul.mubr.bf16.gmra.mrb[0].mxu0 %v3656
      %v3778 = vpop.f32.mrb[0].mxu0
      %v3779 = vadd.f32 0.0, %v3778
      %v3780 = vpop.f32.mrb[0].mxu0
      %v3781 = vpop.f32.mrb[0].mxu0
      %v3782 = vadd.f32 0.0, %v3781
      %v3783 = vpop.f32.mrb[0].mxu0
      %3784 = vmatprep.mubr.bf16.mxu0 0
      %3785 = vmatmul.mubr.bf16.gmra.mrb[0].mxu0 %v3657
      %v3786 = vpop.f32.mrb[0].mxu0
      %v3787 = vadd.f32 0.0, %v3786
      %v3788 = vpop.f32.mrb[0].mxu0
      %v3789 = vpop.f32.mrb[0].mxu0
      %v3790 = vadd.f32 0.0, %v3789
      %v3791 = vpop.f32.mrb[0].mxu0
      %3792 = vmatprep.mubr.bf16.mxu0 0
      %3793 = vmatmul.mubr.bf16.gmra.mrb[0].mxu0 %v3658
      %v3794 = vpop.f32.mrb[0].mxu0
      %v3795 = vadd.f32 0.0, %v3794
      %v3796 = vpop.f32.mrb[0].mxu0
      %v3797 = vpop.f32.mrb[0].mxu0
      %v3798 = vadd.f32 0.0, %v3797
      %v3799 = vpop.f32.mrb[0].mxu0
      %3800 = vmatprep.mubr.bf16.mxu0 0
      %3801 = vmatmul.mubr.bf16.gmra.mrb[0].mxu0 %v3659
      %v3802 = vpop.f32.mrb[0].mxu0
      %v3803 = vadd.f32 0.0, %v3802
      %v3804 = vpop.f32.mrb[0].mxu0
      %v3805 = vpop.f32.mrb[0].mxu0
      %v3806 = vadd.f32 0.0, %v3805
      %v3807 = vpop.f32.mrb[0].mxu0
      %3808 = vmatprep.mubr.bf16.mxu0 0
      %3809 = vmatmul.mubr.bf16.gmra.mrb[0].mxu0 %v3660
      %v3810 = vpop.f32.mrb[0].mxu0
      %v3811 = vadd.f32 0.0, %v3810
      %v3812 = vpop.f32.mrb[0].mxu0
      %v3813 = vpop.f32.mrb[0].mxu0
      %v3814 = vadd.f32 0.0, %v3813
      %v3815 = vpop.f32.mrb[0].mxu0
      %3816 = vmatprep.mubr.bf16.mxu0 0
      %3817 = vmatmul.mubr.bf16.gmra.mrb[0].mxu0 %v3661
      %v3818 = vpop.f32.mrb[0].mxu0
      %v3819 = vadd.f32 0.0, %v3818
      %v3820 = vpop.f32.mrb[0].mxu0
      %v3821 = vpop.f32.mrb[0].mxu0
      %v3822 = vadd.f32 0.0, %v3821
      %v3823 = vpop.f32.mrb[0].mxu0
      %3824 = vmatprep.mubr.bf16.mxu0 0
      %3825 = vmatmul.mubr.bf16.gmra.mrb[0].mxu0 %v3662
      %v3826 = vpop.f32.mrb[0].mxu0
      %v3827 = vadd.f32 0.0, %v3826
      %v3828 = vpop.f32.mrb[0].mxu0
      %v3829 = vpop.f32.mrb[0].mxu0
      %v3830 = vadd.f32 0.0, %v3829
      %v3831 = vpop.f32.mrb[0].mxu0
      %3832 = vmatprep.mubr.bf16.mxu0 0
      %3833 = vmatmul.mubr.bf16.gmra.mrb[0].mxu0 %v3663
      %v3834 = vpop.f32.mrb[0].mxu0
      %v3835 = vadd.f32 0.0, %v3834
      %v3836 = vpop.f32.mrb[0].mxu0
      %v3837 = vpop.f32.mrb[0].mxu0
      %v3838 = vadd.f32 0.0, %v3837
      %v3839 = vpop.f32.mrb[0].mxu0
      %3840 = vmatprep.mubr.bf16.mxu0 0
      %3841 = vmatmul.mubr.bf16.gmra.mrb[0].mxu0 %v3664
      %v3842 = vpop.f32.mrb[0].mxu0
      %v3843 = vadd.f32 0.0, %v3842
      %v3844 = vpop.f32.mrb[0].mxu0
      %v3845 = vpop.f32.mrb[0].mxu0
      %v3846 = vadd.f32 0.0, %v3845
      %v3847 = vpop.f32.mrb[0].mxu0
      %3848 = vmatprep.mubr.bf16.mxu0 0
      %3849 = vmatmul.mubr.bf16.gmra.mrb[0].mxu0 %v3665
      %v3850 = vpop.f32.mrb[0].mxu0
      %v3851 = vadd.f32 0.0, %v3850
      %v3852 = vpop.f32.mrb[0].mxu0
      %v3853 = vpop.f32.mrb[0].mxu0
      %v3854 = vadd.f32 0.0, %v3853
      %v3855 = vpop.f32.mrb[0].mxu0
      %3856 = vmatprep.mubr.bf16.mxu0 0
      %3857 = vmatmul.mubr.bf16.gmra.mrb[0].mxu0 %v3666
      %v3858 = vpop.f32.mrb[0].mxu0
      %v3859 = vadd.f32 0.0, %v3858
      %v3860 = vpop.f32.mrb[0].mxu0
      %v3861 = vpop.f32.mrb[0].mxu0
      %v3862 = vadd.f32 0.0, %v3861
      %v3863 = vpop.f32.mrb[0].mxu0
      %3864 = vmatprep.mubr.bf16.mxu0 0
      %3865 = vmatmul.mubr.bf16.gmra.mrb[0].mxu0 %v3667
      %v3866 = vpop.f32.mrb[0].mxu0
      %v3867 = vadd.f32 0.0, %v3866
      %v3868 = vpop.f32.mrb[0].mxu0
      %v3869 = vpop.f32.mrb[0].mxu0
      %v3870 = vadd.f32 0.0, %v3869
      %v3871 = vpop.f32.mrb[0].mxu0
      %3872 = vmatprep.mubr.bf16.mxu0 0
      %3873 = vmatmul.mubr.bf16.gmra.mrb[0].mxu0 %v3668
      %v3874 = vpop.f32.mrb[0].mxu0
      %v3875 = vadd.f32 0.0, %v3874
      %v3876 = vpop.f32.mrb[0].mxu0
      %v3877 = vpop.f32.mrb[0].mxu0
      %v3878 = vadd.f32 0.0, %v3877
      %v3879 = vpop.f32.mrb[0].mxu0
      %3880 = vmatprep.mubr.bf16.mxu0 0
      %3881 = vmatmul.mubr.bf16.gmra.mrb[0].mxu0 %v3669
      %v3882 = vpop.f32.mrb[0].mxu0
      %v3883 = vadd.f32 0.0, %v3882
      %v3884 = vpop.f32.mrb[0].mxu0
      %v3885 = vpop.f32.mrb[0].mxu0
      %v3886 = vadd.f32 0.0, %v3885
      %v3887 = vpop.f32.mrb[0].mxu0
      %3888 = vmatprep.mubr.bf16.mxu0 0
      %3889 = vmatmul.mubr.bf16.gmra.mrb[0].mxu0 %v3670
      %v3890 = vpop.f32.mrb[0].mxu0
      %v3891 = vadd.f32 0.0, %v3890
      %v3892 = vpop.f32.mrb[0].mxu0
      %v3893 = vpop.f32.mrb[0].mxu0
      %v3894 = vadd.f32 0.0, %v3893
      %v3895 = vpop.f32.mrb[0].mxu0
      %3896 = vdwg.mxu0
      %v3897 = vadd.f32 %v3623, %v3771
      %v3898 = vadd.f32 %v3624, %v3774
      %v3899 = vadd.f32 %v3625, %v3779
      %v3900 = vadd.f32 %v3626, %v3782
      %v3901 = vadd.f32 %v3627, %v3787
      %v3902 = vadd.f32 %v3628, %v3790
      %v3903 = vadd.f32 %v3629, %v3795
      %v3904 = vadd.f32 %v3630, %v3798
      %v3905 = vadd.f32 %v3631, %v3803
      %v3906 = vadd.f32 %v3632, %v3806
      %v3907 = vadd.f32 %v3633, %v3811
      %v3908 = vadd.f32 %v3634, %v3814
      %v3909 = vadd.f32 %v3635, %v3819
      %v3910 = vadd.f32 %v3636, %v3822
      %v3911 = vadd.f32 %v3637, %v3827
      %v3912 = vadd.f32 %v3638, %v3830
      %v3913 = vadd.f32 %v3639, %v3835
      %v3914 = vadd.f32 %v3640, %v3838
      %v3915 = vadd.f32 %v3641, %v3843
      %v3916 = vadd.f32 %v3642, %v3846
      %v3917 = vadd.f32 %v3643, %v3851
      %v3918 = vadd.f32 %v3644, %v3854
      %v3919 = vadd.f32 %v3645, %v3859
      %v3920 = vadd.f32 %v3646, %v3862
      %v3921 = vadd.f32 %v3647, %v3867
      %v3922 = vadd.f32 %v3648, %v3870
      %v3923 = vadd.f32 %v3649, %v3875
      %v3924 = vadd.f32 %v3650, %v3878
      %v3925 = vadd.f32 %v3651, %v3883
      %v3926 = vadd.f32 %v3652, %v3886
      %v3927 = vadd.f32 %v3653, %v3891
      %v3928 = vadd.f32 %v3654, %v3894
      %3929 = vst [vmem:[#allocation2] sm:$0xff] %v3897
      %3930 = vst [vmem:[#allocation2 + $0x8] sm:$0xff] %v3898
      %3931 = vst [vmem:[#allocation2 + $0x10] sm:$0xff] %v3899
      %3932 = vst [vmem:[#allocation2 + $0x18] sm:$0xff] %v3900
      %3933 = vst [vmem:[#allocation2 + $0x20] sm:$0xff] %v3901
      %3934 = vst [vmem:[#allocation2 + $0x28] sm:$0xff] %v3902
      %3935 = vst [vmem:[#allocation2 + $0x30] sm:$0xff] %v3903
      %3936 = vst [vmem:[#allocation2 + $0x38] sm:$0xff] %v3904
      %3937 = vst [vmem:[#allocation2 + $0x40] sm:$0xff] %v3905
      %3938 = vst [vmem:[#allocation2 + $0x48] sm:$0xff] %v3906
      %3939 = vst [vmem:[#allocation2 + $0x50] sm:$0xff] %v3907
      %3940 = vst [vmem:[#allocation2 + $0x58] sm:$0xff] %v3908
      %3941 = vst [vmem:[#allocation2 + $0x60] sm:$0xff] %v3909
      %3942 = vst [vmem:[#allocation2 + $0x68] sm:$0xff] %v3910
      %3943 = vst [vmem:[#allocation2 + $0x70] sm:$0xff] %v3911
      %3944 = vst [vmem:[#allocation2 + $0x78] sm:$0xff] %v3912
      %3945 = vst [vmem:[#allocation2 + $0x80] sm:$0xff] %v3913
      %3946 = vst [vmem:[#allocation2 + $0x88] sm:$0xff] %v3914
      %3947 = vst [vmem:[#allocation2 + $0x90] sm:$0xff] %v3915
      %3948 = vst [vmem:[#allocation2 + $0x98] sm:$0xff] %v3916
      %3949 = vst [vmem:[#allocation2 + $0xa0] sm:$0xff] %v3917
      %3950 = vst [vmem:[#allocation2 + $0xa8] sm:$0xff] %v3918
      %3951 = vst [vmem:[#allocation2 + $0xb0] sm:$0xff] %v3919
      %3952 = vst [vmem:[#allocation2 + $0xb8] sm:$0xff] %v3920
      %3953 = vst [vmem:[#allocation2 + $0xc0] sm:$0xff] %v3921
      %3954 = vst [vmem:[#allocation2 + $0xc8] sm:$0xff] %v3922
      %3955 = vst [vmem:[#allocation2 + $0xd0] sm:$0xff] %v3923
      %3956 = vst [vmem:[#allocation2 + $0xd8] sm:$0xff] %v3924
      %3957 = vst [vmem:[#allocation2 + $0xe0] sm:$0xff] %v3925
      %3958 = vst [vmem:[#allocation2 + $0xe8] sm:$0xff] %v3926
      %3959 = vst [vmem:[#allocation2 + $0xf0] sm:$0xff] %v3927
      %3960 = vst [vmem:[#allocation2 + $0xf8] sm:$0xff] %v3928
      %v3961 = vld [vmem:[#allocation3 + $0x29] sm:$0xff]
      %v3962 = vld [vmem:[#allocation3 + $0x31] sm:$0xff]
      %v3963 = vld [vmem:[#allocation3 + $0x39] sm:$0xff]
      %v3964 = vld [vmem:[#allocation3 + $0x41] sm:$0xff]
      %v3965 = vld [vmem:[#allocation3 + $0x49] sm:$0xff]
      %v3966 = vld [vmem:[#allocation3 + $0x51] sm:$0xff]
      %v3967 = vld [vmem:[#allocation3 + $0x59] sm:$0xff]
      %v3968 = vld [vmem:[#allocation3 + $0x61] sm:$0xff]
      %v3969 = vld [vmem:[#allocation3 + $0x69] sm:$0xff]
      %v3970 = vld [vmem:[#allocation3 + $0x71] sm:$0xff]
      %v3971 = vld [vmem:[#allocation3 + $0x79] sm:$0xff]
      %v3972 = vld [vmem:[#allocation3 + $0x81] sm:$0xff]
      %v3973 = vld [vmem:[#allocation3 + $0x89] sm:$0xff]
      %v3974 = vld [vmem:[#allocation3 + $0x91] sm:$0xff]
      %v3975 = vld [vmem:[#allocation3 + $0x99] sm:$0xff]
      %v3976 = vld [vmem:[#allocation3 + $0xa1] sm:$0xff]
      %v3977 = vld [vmem:[#allocation3 + $0xa9] sm:$0xff]
      %v3978 = vld [vmem:[#allocation3 + $0xb1] sm:$0xff]
      %v3979 = vld [vmem:[#allocation3 + $0xb9] sm:$0xff]
      %v3980 = vld [vmem:[#allocation3 + $0xc1] sm:$0xff]
      %v3981 = vld [vmem:[#allocation3 + $0xc9] sm:$0xff]
      %v3982 = vld [vmem:[#allocation3 + $0xd1] sm:$0xff]
      %v3983 = vld [vmem:[#allocation3 + $0xd9] sm:$0xff]
      %v3984 = vld [vmem:[#allocation3 + $0xe1] sm:$0xff]
      %v3985 = vld [vmem:[#allocation3 + $0xe9] sm:$0xff]
      %v3986 = vld [vmem:[#allocation3 + $0xf1] sm:$0xff]
      %v3987 = vld [vmem:[#allocation3 + $0xf9] sm:$0xff]
      %v3988 = vld [vmem:[#allocation3 + $0x101] sm:$0xff]
      %v3989 = vld [vmem:[#allocation3 + $0x109] sm:$0xff]
      %v3990 = vld [vmem:[#allocation3 + $0x111] sm:$0xff]
      %v3991 = vld [vmem:[#allocation3 + $0x119] sm:$0xff]
      %v3992 = vld [vmem:[#allocation3 + $0x121] sm:$0xff]
      %v3993 = vld [vmem:[#allocation2] sm:$0xff]
      %v3994 = vld [vmem:[#allocation2 + $0x8] sm:$0xff]
      %v3995 = vld [vmem:[#allocation2 + $0x10] sm:$0xff]
      %v3996 = vld [vmem:[#allocation2 + $0x18] sm:$0xff]
      %v3997 = vld [vmem:[#allocation2 + $0x20] sm:$0xff]
      %v3998 = vld [vmem:[#allocation2 + $0x28] sm:$0xff]
      %v3999 = vld [vmem:[#allocation2 + $0x30] sm:$0xff]
      %v4000 = vld [vmem:[#allocation2 + $0x38] sm:$0xff]
      %v4001 = vld [vmem:[#allocation2 + $0x40] sm:$0xff]
      %v4002 = vld [vmem:[#allocation2 + $0x48] sm:$0xff]
      %v4003 = vld [vmem:[#allocation2 + $0x50] sm:$0xff]
      %v4004 = vld [vmem:[#allocation2 + $0x58] sm:$0xff]
      %v4005 = vld [vmem:[#allocation2 + $0x60] sm:$0xff]
      %v4006 = vld [vmem:[#allocation2 + $0x68] sm:$0xff]
      %v4007 = vld [vmem:[#allocation2 + $0x70] sm:$0xff]
      %v4008 = vld [vmem:[#allocation2 + $0x78] sm:$0xff]
      %v4009 = vld [vmem:[#allocation2 + $0x80] sm:$0xff]
      %v4010 = vld [vmem:[#allocation2 + $0x88] sm:$0xff]
      %v4011 = vld [vmem:[#allocation2 + $0x90] sm:$0xff]
      %v4012 = vld [vmem:[#allocation2 + $0x98] sm:$0xff]
      %v4013 = vld [vmem:[#allocation2 + $0xa0] sm:$0xff]
      %v4014 = vld [vmem:[#allocation2 + $0xa8] sm:$0xff]
      %v4015 = vld [vmem:[#allocation2 + $0xb0] sm:$0xff]
      %v4016 = vld [vmem:[#allocation2 + $0xb8] sm:$0xff]
      %v4017 = vld [vmem:[#allocation2 + $0xc0] sm:$0xff]
      %v4018 = vld [vmem:[#allocation2 + $0xc8] sm:$0xff]
      %v4019 = vld [vmem:[#allocation2 + $0xd0] sm:$0xff]
      %v4020 = vld [vmem:[#allocation2 + $0xd8] sm:$0xff]
      %v4021 = vld [vmem:[#allocation2 + $0xe0] sm:$0xff]
      %v4022 = vld [vmem:[#allocation2 + $0xe8] sm:$0xff]
      %v4023 = vld [vmem:[#allocation2 + $0xf0] sm:$0xff]
      %v4024 = vld [vmem:[#allocation2 + $0xf8] sm:$0xff]
      %v4025 = vpack.c.bf16 %v3962, %v3961
      %v4026 = vpack.c.bf16 %v3964, %v3963
      %v4027 = vpack.c.bf16 %v3966, %v3965
      %v4028 = vpack.c.bf16 %v3968, %v3967
      %v4029 = vpack.c.bf16 %v3970, %v3969
      %v4030 = vpack.c.bf16 %v3972, %v3971
      %v4031 = vpack.c.bf16 %v3974, %v3973
      %v4032 = vpack.c.bf16 %v3976, %v3975
      %v4033 = vpack.c.bf16 %v3978, %v3977
      %v4034 = vpack.c.bf16 %v3980, %v3979
      %v4035 = vpack.c.bf16 %v3982, %v3981
      %v4036 = vpack.c.bf16 %v3984, %v3983
      %v4037 = vpack.c.bf16 %v3986, %v3985
      %v4038 = vpack.c.bf16 %v3988, %v3987
      %v4039 = vpack.c.bf16 %v3990, %v3989
      %v4040 = vpack.c.bf16 %v3992, %v3991
      %s4041 = scalar_lea.vmem %s3, 512
      %v4042 = vld [vmem:[%s4041] sm:$0xf]
      %v4043 = vld [vmem:[%s4041 + $0x4] sm:$0xf]
      %v4044 = vld [vmem:[%s4041 + $0x8] sm:$0xf]
      %v4045 = vld [vmem:[%s4041 + $0xc] sm:$0xf]
      %v4046 = vld [vmem:[%s4041 + $0x10] sm:$0xf]
      %v4047 = vld [vmem:[%s4041 + $0x14] sm:$0xf]
      %v4048 = vld [vmem:[%s4041 + $0x18] sm:$0xf]
      %v4049 = vld [vmem:[%s4041 + $0x1c] sm:$0xf]
      %v4050 = vld [vmem:[%s4041 + $0x20] sm:$0xf]
      %v4051 = vld [vmem:[%s4041 + $0x24] sm:$0xf]
      %v4052 = vld [vmem:[%s4041 + $0x28] sm:$0xf]
      %v4053 = vld [vmem:[%s4041 + $0x2c] sm:$0xf]
      %v4054 = vld [vmem:[%s4041 + $0x30] sm:$0xf]
      %v4055 = vld [vmem:[%s4041 + $0x34] sm:$0xf]
      %v4056 = vld [vmem:[%s4041 + $0x38] sm:$0xf]
      %v4057 = vld [vmem:[%s4041 + $0x3c] sm:$0xf]
      %v4074 = vunpack.c.l.b16 %v4042
      %v4075 = vunpack.c.l.b16 %v4043
      %v4076 = vunpack.c.l.b16 %v4044
      %v4077 = vunpack.c.l.b16 %v4045
      %v4078 = vunpack.c.l.b16 %v4046
      %v4079 = vunpack.c.l.b16 %v4047
      %v4080 = vunpack.c.l.b16 %v4048
      %v4081 = vunpack.c.l.b16 %v4049
      %v4082 = vunpack.c.l.b16 %v4050
      %v4083 = vunpack.c.l.b16 %v4051
      %v4084 = vunpack.c.l.b16 %v4052
      %v4085 = vunpack.c.l.b16 %v4053
      %v4086 = vunpack.c.l.b16 %v4054
      %v4087 = vunpack.c.l.b16 %v4055
      %v4088 = vunpack.c.l.b16 %v4056
      %v4089 = vunpack.c.l.b16 %v4057
      %v4090 = vpack.c.b16 %v4075, %v4074
      %v4091 = vpack.c.b16 %v4077, %v4076
      %v4092 = vpack.c.b16 %v4079, %v4078
      %v4093 = vpack.c.b16 %v4081, %v4080
      %v4094 = vpack.c.b16 %v4083, %v4082
      %v4095 = vpack.c.b16 %v4085, %v4084
      %v4096 = vpack.c.b16 %v4087, %v4086
      %v4097 = vpack.c.b16 %v4089, %v4088
      %4106 = vmatprep.subr.bf16.mxu0 0
      %4107 = vmatpush1.bf16.msra.mxu0 %v4090
      %4108 = vmatprep.subr.bf16.mxu0 0
      %4109 = vmatpush1.bf16.msra.mxu0 %v4091
      %4110 = vmatprep.subr.bf16.mxu0 0
      %4111 = vmatpush1.bf16.msra.mxu0 %v4092
      %4112 = vmatprep.subr.bf16.mxu0 0
      %4113 = vmatpush1.bf16.msra.mxu0 %v4093
      %4114 = vmatprep.subr.bf16.mxu0 0
      %4115 = vmatpush1.bf16.msra.mxu0 %v4094
      %4116 = vmatprep.subr.bf16.mxu0 0
      %4117 = vmatpush1.bf16.msra.mxu0 %v4095
      %4118 = vmatprep.subr.bf16.mxu0 0
      %4119 = vmatpush1.bf16.msra.mxu0 %v4096
      %4120 = vmatprep.subr.bf16.mxu0 0
      %4121 = vmatpush1.bf16.msra.mxu0 %v4097
      %4122 = vmatprep.subr.bf16.mxu0 0
      %4123 = vmatpush1.bf16.msra.mxu0 0
      %4124 = vmatprep.subr.bf16.mxu0 0
      %4125 = vmatpush1.bf16.msra.mxu0 0
      %4126 = vmatprep.subr.bf16.mxu0 0
      %4127 = vmatpush1.bf16.msra.mxu0 0
      %4128 = vmatprep.subr.bf16.mxu0 0
      %4129 = vmatpush1.bf16.msra.mxu0 0
      %4130 = vmatprep.subr.bf16.mxu0 0
      %4131 = vmatpush1.bf16.msra.mxu0 0
      %4132 = vmatprep.subr.bf16.mxu0 0
      %4133 = vmatpush1.bf16.msra.mxu0 0
      %4134 = vmatprep.subr.bf16.mxu0 0
      %4135 = vmatpush1.bf16.msra.mxu0 0
      %4136 = vmatprep.subr.bf16.mxu0 0
      %4137 = vmatpush1.bf16.msra.mxu0 0
      %4138 = vmatprep.mubr.bf16.mxu0 0
      %4139 = vmatmul.mubr.bf16.gmra.mrb[0].mxu0 %v4025
      %v4140 = vpop.f32.mrb[0].mxu0
      %v4141 = vadd.f32 0.0, %v4140
      %v4142 = vpop.f32.mrb[0].mxu0
      %v4143 = vpop.f32.mrb[0].mxu0
      %v4144 = vadd.f32 0.0, %v4143
      %v4145 = vpop.f32.mrb[0].mxu0
      %4146 = vmatprep.mubr.bf16.mxu0 0
      %4147 = vmatmul.mubr.bf16.gmra.mrb[0].mxu0 %v4026
      %v4148 = vpop.f32.mrb[0].mxu0
      %v4149 = vadd.f32 0.0, %v4148
      %v4150 = vpop.f32.mrb[0].mxu0
      %v4151 = vpop.f32.mrb[0].mxu0
      %v4152 = vadd.f32 0.0, %v4151
      %v4153 = vpop.f32.mrb[0].mxu0
      %4154 = vmatprep.mubr.bf16.mxu0 0
      %4155 = vmatmul.mubr.bf16.gmra.mrb[0].mxu0 %v4027
      %v4156 = vpop.f32.mrb[0].mxu0
      %v4157 = vadd.f32 0.0, %v4156
      %v4158 = vpop.f32.mrb[0].mxu0
      %v4159 = vpop.f32.mrb[0].mxu0
      %v4160 = vadd.f32 0.0, %v4159
      %v4161 = vpop.f32.mrb[0].mxu0
      %4162 = vmatprep.mubr.bf16.mxu0 0
      %4163 = vmatmul.mubr.bf16.gmra.mrb[0].mxu0 %v4028
      %v4164 = vpop.f32.mrb[0].mxu0
      %v4165 = vadd.f32 0.0, %v4164
      %v4166 = vpop.f32.mrb[0].mxu0
      %v4167 = vpop.f32.mrb[0].mxu0
      %v4168 = vadd.f32 0.0, %v4167
      %v4169 = vpop.f32.mrb[0].mxu0
      %4170 = vmatprep.mubr.bf16.mxu0 0
      %4171 = vmatmul.mubr.bf16.gmra.mrb[0].mxu0 %v4029
      %v4172 = vpop.f32.mrb[0].mxu0
      %v4173 = vadd.f32 0.0, %v4172
      %v4174 = vpop.f32.mrb[0].mxu0
      %v4175 = vpop.f32.mrb[0].mxu0
      %v4176 = vadd.f32 0.0, %v4175
      %v4177 = vpop.f32.mrb[0].mxu0
      %4178 = vmatprep.mubr.bf16.mxu0 0
      %4179 = vmatmul.mubr.bf16.gmra.mrb[0].mxu0 %v4030
      %v4180 = vpop.f32.mrb[0].mxu0
      %v4181 = vadd.f32 0.0, %v4180
      %v4182 = vpop.f32.mrb[0].mxu0
      %v4183 = vpop.f32.mrb[0].mxu0
      %v4184 = vadd.f32 0.0, %v4183
      %v4185 = vpop.f32.mrb[0].mxu0
      %4186 = vmatprep.mubr.bf16.mxu0 0
      %4187 = vmatmul.mubr.bf16.gmra.mrb[0].mxu0 %v4031
      %v4188 = vpop.f32.mrb[0].mxu0
      %v4189 = vadd.f32 0.0, %v4188
      %v4190 = vpop.f32.mrb[0].mxu0
      %v4191 = vpop.f32.mrb[0].mxu0
      %v4192 = vadd.f32 0.0, %v4191
      %v4193 = vpop.f32.mrb[0].mxu0
      %4194 = vmatprep.mubr.bf16.mxu0 0
      %4195 = vmatmul.mubr.bf16.gmra.mrb[0].mxu0 %v4032
      %v4196 = vpop.f32.mrb[0].mxu0
      %v4197 = vadd.f32 0.0, %v4196
      %v4198 = vpop.f32.mrb[0].mxu0
      %v4199 = vpop.f32.mrb[0].mxu0
      %v4200 = vadd.f32 0.0, %v4199
      %v4201 = vpop.f32.mrb[0].mxu0
      %4202 = vmatprep.mubr.bf16.mxu0 0
      %4203 = vmatmul.mubr.bf16.gmra.mrb[0].mxu0 %v4033
      %v4204 = vpop.f32.mrb[0].mxu0
      %v4205 = vadd.f32 0.0, %v4204
      %v4206 = vpop.f32.mrb[0].mxu0
      %v4207 = vpop.f32.mrb[0].mxu0
      %v4208 = vadd.f32 0.0, %v4207
      %v4209 = vpop.f32.mrb[0].mxu0
      %4210 = vmatprep.mubr.bf16.mxu0 0
      %4211 = vmatmul.mubr.bf16.gmra.mrb[0].mxu0 %v4034
      %v4212 = vpop.f32.mrb[0].mxu0
      %v4213 = vadd.f32 0.0, %v4212
      %v4214 = vpop.f32.mrb[0].mxu0
      %v4215 = vpop.f32.mrb[0].mxu0
      %v4216 = vadd.f32 0.0, %v4215
      %v4217 = vpop.f32.mrb[0].mxu0
      %4218 = vmatprep.mubr.bf16.mxu0 0
      %4219 = vmatmul.mubr.bf16.gmra.mrb[0].mxu0 %v4035
      %v4220 = vpop.f32.mrb[0].mxu0
      %v4221 = vadd.f32 0.0, %v4220
      %v4222 = vpop.f32.mrb[0].mxu0
      %v4223 = vpop.f32.mrb[0].mxu0
      %v4224 = vadd.f32 0.0, %v4223
      %v4225 = vpop.f32.mrb[0].mxu0
      %4226 = vmatprep.mubr.bf16.mxu0 0
      %4227 = vmatmul.mubr.bf16.gmra.mrb[0].mxu0 %v4036
      %v4228 = vpop.f32.mrb[0].mxu0
      %v4229 = vadd.f32 0.0, %v4228
      %v4230 = vpop.f32.mrb[0].mxu0
      %v4231 = vpop.f32.mrb[0].mxu0
      %v4232 = vadd.f32 0.0, %v4231
      %v4233 = vpop.f32.mrb[0].mxu0
      %4234 = vmatprep.mubr.bf16.mxu0 0
      %4235 = vmatmul.mubr.bf16.gmra.mrb[0].mxu0 %v4037
      %v4236 = vpop.f32.mrb[0].mxu0
      %v4237 = vadd.f32 0.0, %v4236
      %v4238 = vpop.f32.mrb[0].mxu0
      %v4239 = vpop.f32.mrb[0].mxu0
      %v4240 = vadd.f32 0.0, %v4239
      %v4241 = vpop.f32.mrb[0].mxu0
      %4242 = vmatprep.mubr.bf16.mxu0 0
      %4243 = vmatmul.mubr.bf16.gmra.mrb[0].mxu0 %v4038
      %v4244 = vpop.f32.mrb[0].mxu0
      %v4245 = vadd.f32 0.0, %v4244
      %v4246 = vpop.f32.mrb[0].mxu0
      %v4247 = vpop.f32.mrb[0].mxu0
      %v4248 = vadd.f32 0.0, %v4247
      %v4249 = vpop.f32.mrb[0].mxu0
      %4250 = vmatprep.mubr.bf16.mxu0 0
      %4251 = vmatmul.mubr.bf16.gmra.mrb[0].mxu0 %v4039
      %v4252 = vpop.f32.mrb[0].mxu0
      %v4253 = vadd.f32 0.0, %v4252
      %v4254 = vpop.f32.mrb[0].mxu0
      %v4255 = vpop.f32.mrb[0].mxu0
      %v4256 = vadd.f32 0.0, %v4255
      %v4257 = vpop.f32.mrb[0].mxu0
      %4258 = vmatprep.mubr.bf16.mxu0 0
      %4259 = vmatmul.mubr.bf16.gmra.mrb[0].mxu0 %v4040
      %v4260 = vpop.f32.mrb[0].mxu0
      %v4261 = vadd.f32 0.0, %v4260
      %v4262 = vpop.f32.mrb[0].mxu0
      %v4263 = vpop.f32.mrb[0].mxu0
      %v4264 = vadd.f32 0.0, %v4263
      %v4265 = vpop.f32.mrb[0].mxu0
      %4266 = vdwg.mxu0
      %v4267 = vadd.f32 %v3993, %v4141
      %v4268 = vadd.f32 %v3994, %v4144
      %v4269 = vadd.f32 %v3995, %v4149
      %v4270 = vadd.f32 %v3996, %v4152
      %v4271 = vadd.f32 %v3997, %v4157
      %v4272 = vadd.f32 %v3998, %v4160
      %v4273 = vadd.f32 %v3999, %v4165
      %v4274 = vadd.f32 %v4000, %v4168
      %v4275 = vadd.f32 %v4001, %v4173
      %v4276 = vadd.f32 %v4002, %v4176
      %v4277 = vadd.f32 %v4003, %v4181
      %v4278 = vadd.f32 %v4004, %v4184
      %v4279 = vadd.f32 %v4005, %v4189
      %v4280 = vadd.f32 %v4006, %v4192
      %v4281 = vadd.f32 %v4007, %v4197
      %v4282 = vadd.f32 %v4008, %v4200
      %v4283 = vadd.f32 %v4009, %v4205
      %v4284 = vadd.f32 %v4010, %v4208
      %v4285 = vadd.f32 %v4011, %v4213
      %v4286 = vadd.f32 %v4012, %v4216
      %v4287 = vadd.f32 %v4013, %v4221
      %v4288 = vadd.f32 %v4014, %v4224
      %v4289 = vadd.f32 %v4015, %v4229
      %v4290 = vadd.f32 %v4016, %v4232
      %v4291 = vadd.f32 %v4017, %v4237
      %v4292 = vadd.f32 %v4018, %v4240
      %v4293 = vadd.f32 %v4019, %v4245
      %v4294 = vadd.f32 %v4020, %v4248
      %v4295 = vadd.f32 %v4021, %v4253
      %v4296 = vadd.f32 %v4022, %v4256
      %v4297 = vadd.f32 %v4023, %v4261
      %v4298 = vadd.f32 %v4024, %v4264
      %4299 = vst [vmem:[#allocation2] sm:$0xff] %v4267
      %4300 = vst [vmem:[#allocation2 + $0x8] sm:$0xff] %v4268
      %4301 = vst [vmem:[#allocation2 + $0x10] sm:$0xff] %v4269
      %4302 = vst [vmem:[#allocation2 + $0x18] sm:$0xff] %v4270
      %4303 = vst [vmem:[#allocation2 + $0x20] sm:$0xff] %v4271
      %4304 = vst [vmem:[#allocation2 + $0x28] sm:$0xff] %v4272
      %4305 = vst [vmem:[#allocation2 + $0x30] sm:$0xff] %v4273
      %4306 = vst [vmem:[#allocation2 + $0x38] sm:$0xff] %v4274
      %4307 = vst [vmem:[#allocation2 + $0x40] sm:$0xff] %v4275
      %4308 = vst [vmem:[#allocation2 + $0x48] sm:$0xff] %v4276
      %4309 = vst [vmem:[#allocation2 + $0x50] sm:$0xff] %v4277
      %4310 = vst [vmem:[#allocation2 + $0x58] sm:$0xff] %v4278
      %4311 = vst [vmem:[#allocation2 + $0x60] sm:$0xff] %v4279
      %4312 = vst [vmem:[#allocation2 + $0x68] sm:$0xff] %v4280
      %4313 = vst [vmem:[#allocation2 + $0x70] sm:$0xff] %v4281
      %4314 = vst [vmem:[#allocation2 + $0x78] sm:$0xff] %v4282
      %4315 = vst [vmem:[#allocation2 + $0x80] sm:$0xff] %v4283
      %4316 = vst [vmem:[#allocation2 + $0x88] sm:$0xff] %v4284
      %4317 = vst [vmem:[#allocation2 + $0x90] sm:$0xff] %v4285
      %4318 = vst [vmem:[#allocation2 + $0x98] sm:$0xff] %v4286
      %4319 = vst [vmem:[#allocation2 + $0xa0] sm:$0xff] %v4287
      %4320 = vst [vmem:[#allocation2 + $0xa8] sm:$0xff] %v4288
      %4321 = vst [vmem:[#allocation2 + $0xb0] sm:$0xff] %v4289
      %4322 = vst [vmem:[#allocation2 + $0xb8] sm:$0xff] %v4290
      %4323 = vst [vmem:[#allocation2 + $0xc0] sm:$0xff] %v4291
      %4324 = vst [vmem:[#allocation2 + $0xc8] sm:$0xff] %v4292
      %4325 = vst [vmem:[#allocation2 + $0xd0] sm:$0xff] %v4293
      %4326 = vst [vmem:[#allocation2 + $0xd8] sm:$0xff] %v4294
      %4327 = vst [vmem:[#allocation2 + $0xe0] sm:$0xff] %v4295
      %4328 = vst [vmem:[#allocation2 + $0xe8] sm:$0xff] %v4296
      %4329 = vst [vmem:[#allocation2 + $0xf0] sm:$0xff] %v4297
      %4330 = vst [vmem:[#allocation2 + $0xf8] sm:$0xff] %v4298
      %v4331 = vld [vmem:[#allocation2] sm:$0xff]
      %v4332 = vld [vmem:[#allocation2 + $0x8] sm:$0xff]
      %v4333 = vld [vmem:[#allocation2 + $0x10] sm:$0xff]
      %v4334 = vld [vmem:[#allocation2 + $0x18] sm:$0xff]
      %v4335 = vld [vmem:[#allocation2 + $0x20] sm:$0xff]
      %v4336 = vld [vmem:[#allocation2 + $0x28] sm:$0xff]
      %v4337 = vld [vmem:[#allocation2 + $0x30] sm:$0xff]
      %v4338 = vld [vmem:[#allocation2 + $0x38] sm:$0xff]
      %v4339 = vld [vmem:[#allocation2 + $0x40] sm:$0xff]
      %v4340 = vld [vmem:[#allocation2 + $0x48] sm:$0xff]
      %v4341 = vld [vmem:[#allocation2 + $0x50] sm:$0xff]
      %v4342 = vld [vmem:[#allocation2 + $0x58] sm:$0xff]
      %v4343 = vld [vmem:[#allocation2 + $0x60] sm:$0xff]
      %v4344 = vld [vmem:[#allocation2 + $0x68] sm:$0xff]
      %v4345 = vld [vmem:[#allocation2 + $0x70] sm:$0xff]
      %v4346 = vld [vmem:[#allocation2 + $0x78] sm:$0xff]
      %v4347 = vld [vmem:[#allocation2 + $0x80] sm:$0xff]
      %v4348 = vld [vmem:[#allocation2 + $0x88] sm:$0xff]
      %v4349 = vld [vmem:[#allocation2 + $0x90] sm:$0xff]
      %v4350 = vld [vmem:[#allocation2 + $0x98] sm:$0xff]
      %v4351 = vld [vmem:[#allocation2 + $0xa0] sm:$0xff]
      %v4352 = vld [vmem:[#allocation2 + $0xa8] sm:$0xff]
      %v4353 = vld [vmem:[#allocation2 + $0xb0] sm:$0xff]
      %v4354 = vld [vmem:[#allocation2 + $0xb8] sm:$0xff]
      %v4355 = vld [vmem:[#allocation2 + $0xc0] sm:$0xff]
      %v4356 = vld [vmem:[#allocation2 + $0xc8] sm:$0xff]
      %v4357 = vld [vmem:[#allocation2 + $0xd0] sm:$0xff]
      %v4358 = vld [vmem:[#allocation2 + $0xd8] sm:$0xff]
      %v4359 = vld [vmem:[#allocation2 + $0xe0] sm:$0xff]
      %v4360 = vld [vmem:[#allocation2 + $0xe8] sm:$0xff]
      %v4361 = vld [vmem:[#allocation2 + $0xf0] sm:$0xff]
      %v4362 = vld [vmem:[#allocation2 + $0xf8] sm:$0xff]
      %v4363 = vld [vmem:[%s4] sm:$0x1]
      %v4365 = vlaneseq
      %v4366 = vshrl.u32 %v4365, 7
      %v4367 = vsub.s32 0, %v4366
      %v4368 = vrot.slane %v4363, %v4367
      %v4370 = vadd.f32 %v4331, %v4368
      %v4371 = vadd.f32 %v4332, %v4368
      %v4372 = vadd.f32 %v4333, %v4368
      %v4373 = vadd.f32 %v4334, %v4368
      %v4374 = vadd.f32 %v4335, %v4368
      %v4375 = vadd.f32 %v4336, %v4368
      %v4376 = vadd.f32 %v4337, %v4368
      %v4377 = vadd.f32 %v4338, %v4368
      %v4378 = vadd.f32 %v4339, %v4368
      %v4379 = vadd.f32 %v4340, %v4368
      %v4380 = vadd.f32 %v4341, %v4368
      %v4381 = vadd.f32 %v4342, %v4368
      %v4382 = vadd.f32 %v4343, %v4368
      %v4383 = vadd.f32 %v4344, %v4368
      %v4384 = vadd.f32 %v4345, %v4368
      %v4385 = vadd.f32 %v4346, %v4368
      %v4386 = vadd.f32 %v4347, %v4368
      %v4387 = vadd.f32 %v4348, %v4368
      %v4388 = vadd.f32 %v4349, %v4368
      %v4389 = vadd.f32 %v4350, %v4368
      %v4390 = vadd.f32 %v4351, %v4368
      %v4391 = vadd.f32 %v4352, %v4368
      %v4392 = vadd.f32 %v4353, %v4368
      %v4393 = vadd.f32 %v4354, %v4368
      %v4394 = vadd.f32 %v4355, %v4368
      %v4395 = vadd.f32 %v4356, %v4368
      %v4396 = vadd.f32 %v4357, %v4368
      %v4397 = vadd.f32 %v4358, %v4368
      %v4398 = vadd.f32 %v4359, %v4368
      %v4399 = vadd.f32 %v4360, %v4368
      %v4400 = vadd.f32 %v4361, %v4368
      %v4401 = vadd.f32 %v4362, %v4368
      %vm4402 = vcmp.gt.f32.partialorder %v4370, 0.0
      %vm4403 = vcmp.gt.f32.partialorder %v4371, 0.0
      %vm4404 = vcmp.gt.f32.partialorder %v4372, 0.0
      %vm4405 = vcmp.gt.f32.partialorder %v4373, 0.0
      %vm4406 = vcmp.gt.f32.partialorder %v4374, 0.0
      %vm4407 = vcmp.gt.f32.partialorder %v4375, 0.0
      %vm4408 = vcmp.gt.f32.partialorder %v4376, 0.0
      %vm4409 = vcmp.gt.f32.partialorder %v4377, 0.0
      %vm4410 = vcmp.gt.f32.partialorder %v4378, 0.0
      %vm4411 = vcmp.gt.f32.partialorder %v4379, 0.0
      %vm4412 = vcmp.gt.f32.partialorder %v4380, 0.0
      %vm4413 = vcmp.gt.f32.partialorder %v4381, 0.0
      %vm4414 = vcmp.gt.f32.partialorder %v4382, 0.0
      %vm4415 = vcmp.gt.f32.partialorder %v4383, 0.0
      %vm4416 = vcmp.gt.f32.partialorder %v4384, 0.0
      %vm4417 = vcmp.gt.f32.partialorder %v4385, 0.0
      %vm4418 = vcmp.gt.f32.partialorder %v4386, 0.0
      %vm4419 = vcmp.gt.f32.partialorder %v4387, 0.0
      %vm4420 = vcmp.gt.f32.partialorder %v4388, 0.0
      %vm4421 = vcmp.gt.f32.partialorder %v4389, 0.0
      %vm4422 = vcmp.gt.f32.partialorder %v4390, 0.0
      %vm4423 = vcmp.gt.f32.partialorder %v4391, 0.0
      %vm4424 = vcmp.gt.f32.partialorder %v4392, 0.0
      %vm4425 = vcmp.gt.f32.partialorder %v4393, 0.0
      %vm4426 = vcmp.gt.f32.partialorder %v4394, 0.0
      %vm4427 = vcmp.gt.f32.partialorder %v4395, 0.0
      %vm4428 = vcmp.gt.f32.partialorder %v4396, 0.0
      %vm4429 = vcmp.gt.f32.partialorder %v4397, 0.0
      %vm4430 = vcmp.gt.f32.partialorder %v4398, 0.0
      %vm4431 = vcmp.gt.f32.partialorder %v4399, 0.0
      %vm4432 = vcmp.gt.f32.partialorder %v4400, 0.0
      %vm4433 = vcmp.gt.f32.partialorder %v4401, 0.0
      %v4434 = vmul.f32 %v4370, 0.2
      %v4435 = vmul.f32 %v4371, 0.2
      %v4436 = vmul.f32 %v4372, 0.2
      %v4437 = vmul.f32 %v4373, 0.2
      %v4438 = vmul.f32 %v4374, 0.2
      %v4439 = vmul.f32 %v4375, 0.2
      %v4440 = vmul.f32 %v4376, 0.2
      %v4441 = vmul.f32 %v4377, 0.2
      %v4442 = vmul.f32 %v4378, 0.2
      %v4443 = vmul.f32 %v4379, 0.2
      %v4444 = vmul.f32 %v4380, 0.2
      %v4445 = vmul.f32 %v4381, 0.2
      %v4446 = vmul.f32 %v4382, 0.2
      %v4447 = vmul.f32 %v4383, 0.2
      %v4448 = vmul.f32 %v4384, 0.2
      %v4449 = vmul.f32 %v4385, 0.2
      %v4450 = vmul.f32 %v4386, 0.2
      %v4451 = vmul.f32 %v4387, 0.2
      %v4452 = vmul.f32 %v4388, 0.2
      %v4453 = vmul.f32 %v4389, 0.2
      %v4454 = vmul.f32 %v4390, 0.2
      %v4455 = vmul.f32 %v4391, 0.2
      %v4456 = vmul.f32 %v4392, 0.2
      %v4457 = vmul.f32 %v4393, 0.2
      %v4458 = vmul.f32 %v4394, 0.2
      %v4459 = vmul.f32 %v4395, 0.2
      %v4460 = vmul.f32 %v4396, 0.2
      %v4461 = vmul.f32 %v4397, 0.2
      %v4462 = vmul.f32 %v4398, 0.2
      %v4463 = vmul.f32 %v4399, 0.2
      %v4464 = vmul.f32 %v4400, 0.2
      %v4465 = vmul.f32 %v4401, 0.2
      %v4466 = vsel %vm4402, %v4370, %v4434
      %v4467 = vsel %vm4403, %v4371, %v4435
      %v4468 = vsel %vm4404, %v4372, %v4436
      %v4469 = vsel %vm4405, %v4373, %v4437
      %v4470 = vsel %vm4406, %v4374, %v4438
      %v4471 = vsel %vm4407, %v4375, %v4439
      %v4472 = vsel %vm4408, %v4376, %v4440
      %v4473 = vsel %vm4409, %v4377, %v4441
      %v4474 = vsel %vm4410, %v4378, %v4442
      %v4475 = vsel %vm4411, %v4379, %v4443
      %v4476 = vsel %vm4412, %v4380, %v4444
      %v4477 = vsel %vm4413, %v4381, %v4445
      %v4478 = vsel %vm4414, %v4382, %v4446
      %v4479 = vsel %vm4415, %v4383, %v4447
      %v4480 = vsel %vm4416, %v4384, %v4448
      %v4481 = vsel %vm4417, %v4385, %v4449
      %v4482 = vsel %vm4418, %v4386, %v4450
      %v4483 = vsel %vm4419, %v4387, %v4451
      %v4484 = vsel %vm4420, %v4388, %v4452
      %v4485 = vsel %vm4421, %v4389, %v4453
      %v4486 = vsel %vm4422, %v4390, %v4454
      %v4487 = vsel %vm4423, %v4391, %v4455
      %v4488 = vsel %vm4424, %v4392, %v4456
      %v4489 = vsel %vm4425, %v4393, %v4457
      %v4490 = vsel %vm4426, %v4394, %v4458
      %v4491 = vsel %vm4427, %v4395, %v4459
      %v4492 = vsel %vm4428, %v4396, %v4460
      %v4493 = vsel %vm4429, %v4397, %v4461
      %v4494 = vsel %vm4430, %v4398, %v4462
      %v4495 = vsel %vm4431, %v4399, %v4463
      %v4496 = vsel %vm4432, %v4400, %v4464
      %v4497 = vsel %vm4433, %v4401, %v4465
      %v4498 = vadd.f32 %v4466, %v4467
      %v4499 = vadd.f32 %v4498, %v4468
      %v4500 = vadd.f32 %v4499, %v4469
      %v4501 = vadd.f32 %v4500, %v4470
      %v4502 = vadd.f32 %v4501, %v4471
      %v4503 = vadd.f32 %v4502, %v4472
      %v4504 = vadd.f32 %v4503, %v4473
      %v4505 = vadd.f32 %v4504, %v4474
      %v4506 = vadd.f32 %v4505, %v4475
      %v4507 = vadd.f32 %v4506, %v4476
      %v4508 = vadd.f32 %v4507, %v4477
      %v4509 = vadd.f32 %v4508, %v4478
      %v4510 = vadd.f32 %v4509, %v4479
      %v4511 = vadd.f32 %v4510, %v4480
      %v4512 = vadd.f32 %v4511, %v4481
      %v4513 = vadd.f32 %v4512, %v4482
      %v4514 = vadd.f32 %v4513, %v4483
      %v4515 = vadd.f32 %v4514, %v4484
      %v4516 = vadd.f32 %v4515, %v4485
      %v4517 = vadd.f32 %v4516, %v4486
      %v4518 = vadd.f32 %v4517, %v4487
      %v4519 = vadd.f32 %v4518, %v4488
      %v4520 = vadd.f32 %v4519, %v4489
      %v4521 = vadd.f32 %v4520, %v4490
      %v4522 = vadd.f32 %v4521, %v4491
      %v4523 = vadd.f32 %v4522, %v4492
      %v4524 = vadd.f32 %v4523, %v4493
      %v4525 = vadd.f32 %v4524, %v4494
      %v4526 = vadd.f32 %v4525, %v4495
      %v4527 = vadd.f32 %v4526, %v4496
      %v4528 = vadd.f32 %v4527, %v4497
      %v4529 = vrot.slane %v4528, 4
      %v4530 = vadd.f32 %v4528, %v4529
      %v4531 = vrot.slane %v4530, 2
      %v4532 = vadd.f32 %v4530, %v4531
      %v4533 = vrot.slane %v4532, 1
      %v4534 = vadd.f32 %v4532, %v4533
      %v4535 = vmul.f32 %v4534, 0.00390625
      %v4536 = vmul.f32 %v4466, %v4466
      %v4537 = vmul.f32 %v4467, %v4467
      %v4538 = vmul.f32 %v4468, %v4468
      %v4539 = vmul.f32 %v4469, %v4469
      %v4540 = vmul.f32 %v4470, %v4470
      %v4541 = vmul.f32 %v4471, %v4471
      %v4542 = vmul.f32 %v4472, %v4472
      %v4543 = vmul.f32 %v4473, %v4473
      %v4544 = vmul.f32 %v4474, %v4474
      %v4545 = vmul.f32 %v4475, %v4475
      %v4546 = vmul.f32 %v4476, %v4476
      %v4547 = vmul.f32 %v4477, %v4477
      %v4548 = vmul.f32 %v4478, %v4478
      %v4549 = vmul.f32 %v4479, %v4479
      %v4550 = vmul.f32 %v4480, %v4480
      %v4551 = vmul.f32 %v4481, %v4481
      %v4552 = vmul.f32 %v4482, %v4482
      %v4553 = vmul.f32 %v4483, %v4483
      %v4554 = vmul.f32 %v4484, %v4484
      %v4555 = vmul.f32 %v4485, %v4485
      %v4556 = vmul.f32 %v4486, %v4486
      %v4557 = vmul.f32 %v4487, %v4487
      %v4558 = vmul.f32 %v4488, %v4488
      %v4559 = vmul.f32 %v4489, %v4489
      %v4560 = vmul.f32 %v4490, %v4490
      %v4561 = vmul.f32 %v4491, %v4491
      %v4562 = vmul.f32 %v4492, %v4492
      %v4563 = vmul.f32 %v4493, %v4493
      %v4564 = vmul.f32 %v4494, %v4494
      %v4565 = vmul.f32 %v4495, %v4495
      %v4566 = vmul.f32 %v4496, %v4496
      %v4567 = vmul.f32 %v4497, %v4497
      %v4568 = vadd.f32 %v4536, %v4537
      %v4569 = vadd.f32 %v4568, %v4538
      %v4570 = vadd.f32 %v4569, %v4539
      %v4571 = vadd.f32 %v4570, %v4540
      %v4572 = vadd.f32 %v4571, %v4541
      %v4573 = vadd.f32 %v4572, %v4542
      %v4574 = vadd.f32 %v4573, %v4543
      %v4575 = vadd.f32 %v4574, %v4544
      %v4576 = vadd.f32 %v4575, %v4545
      %v4577 = vadd.f32 %v4576, %v4546
      %v4578 = vadd.f32 %v4577, %v4547
      %v4579 = vadd.f32 %v4578, %v4548
      %v4580 = vadd.f32 %v4579, %v4549
      %v4581 = vadd.f32 %v4580, %v4550
      %v4582 = vadd.f32 %v4581, %v4551
      %v4583 = vadd.f32 %v4582, %v4552
      %v4584 = vadd.f32 %v4583, %v4553
      %v4585 = vadd.f32 %v4584, %v4554
      %v4586 = vadd.f32 %v4585, %v4555
      %v4587 = vadd.f32 %v4586, %v4556
      %v4588 = vadd.f32 %v4587, %v4557
      %v4589 = vadd.f32 %v4588, %v4558
      %v4590 = vadd.f32 %v4589, %v4559
      %v4591 = vadd.f32 %v4590, %v4560
      %v4592 = vadd.f32 %v4591, %v4561
      %v4593 = vadd.f32 %v4592, %v4562
      %v4594 = vadd.f32 %v4593, %v4563
      %v4595 = vadd.f32 %v4594, %v4564
      %v4596 = vadd.f32 %v4595, %v4565
      %v4597 = vadd.f32 %v4596, %v4566
      %v4598 = vadd.f32 %v4597, %v4567
      %v4599 = vrot.slane %v4598, 4
      %v4600 = vadd.f32 %v4598, %v4599
      %v4601 = vrot.slane %v4600, 2
      %v4602 = vadd.f32 %v4600, %v4601
      %v4603 = vrot.slane %v4602, 1
      %v4604 = vadd.f32 %v4602, %v4603
      %v4605 = vmul.f32 %v4604, 0.00390625
      %v4606 = vmul.f32 %v4535, %v4535
      %v4607 = vsub.f32 %v4605, %v4606
      %v4608 = vmax.f32 %v4607, 0.0
      %v4609 = vsub.f32 %v4466, %v4535
      %v4610 = vsub.f32 %v4467, %v4535
      %v4611 = vsub.f32 %v4468, %v4535
      %v4612 = vsub.f32 %v4469, %v4535
      %v4613 = vsub.f32 %v4470, %v4535
      %v4614 = vsub.f32 %v4471, %v4535
      %v4615 = vsub.f32 %v4472, %v4535
      %v4616 = vsub.f32 %v4473, %v4535
      %v4617 = vsub.f32 %v4474, %v4535
      %v4618 = vsub.f32 %v4475, %v4535
      %v4619 = vsub.f32 %v4476, %v4535
      %v4620 = vsub.f32 %v4477, %v4535
      %v4621 = vsub.f32 %v4478, %v4535
      %v4622 = vsub.f32 %v4479, %v4535
      %v4623 = vsub.f32 %v4480, %v4535
      %v4624 = vsub.f32 %v4481, %v4535
      %v4625 = vsub.f32 %v4482, %v4535
      %v4626 = vsub.f32 %v4483, %v4535
      %v4627 = vsub.f32 %v4484, %v4535
      %v4628 = vsub.f32 %v4485, %v4535
      %v4629 = vsub.f32 %v4486, %v4535
      %v4630 = vsub.f32 %v4487, %v4535
      %v4631 = vsub.f32 %v4488, %v4535
      %v4632 = vsub.f32 %v4489, %v4535
      %v4633 = vsub.f32 %v4490, %v4535
      %v4634 = vsub.f32 %v4491, %v4535
      %v4635 = vsub.f32 %v4492, %v4535
      %v4636 = vsub.f32 %v4493, %v4535
      %v4637 = vsub.f32 %v4494, %v4535
      %v4638 = vsub.f32 %v4495, %v4535
      %v4639 = vsub.f32 %v4496, %v4535
      %v4640 = vsub.f32 %v4497, %v4535
      %v4641 = vadd.f32 %v4608, 1e-05
      %v4642 = vrsqrt.pop %v4641
      %v4643 = vmul.f32 %v4609, %v4642
      %v4644 = vmul.f32 %v4610, %v4642
      %v4645 = vmul.f32 %v4611, %v4642
      %v4646 = vmul.f32 %v4612, %v4642
      %v4647 = vmul.f32 %v4613, %v4642
      %v4648 = vmul.f32 %v4614, %v4642
      %v4649 = vmul.f32 %v4615, %v4642
      %v4650 = vmul.f32 %v4616, %v4642
      %v4651 = vmul.f32 %v4617, %v4642
      %v4652 = vmul.f32 %v4618, %v4642
      %v4653 = vmul.f32 %v4619, %v4642
      %v4654 = vmul.f32 %v4620, %v4642
      %v4655 = vmul.f32 %v4621, %v4642
      %v4656 = vmul.f32 %v4622, %v4642
      %v4657 = vmul.f32 %v4623, %v4642
      %v4658 = vmul.f32 %v4624, %v4642
      %v4659 = vmul.f32 %v4625, %v4642
      %v4660 = vmul.f32 %v4626, %v4642
      %v4661 = vmul.f32 %v4627, %v4642
      %v4662 = vmul.f32 %v4628, %v4642
      %v4663 = vmul.f32 %v4629, %v4642
      %v4664 = vmul.f32 %v4630, %v4642
      %v4665 = vmul.f32 %v4631, %v4642
      %v4666 = vmul.f32 %v4632, %v4642
      %v4667 = vmul.f32 %v4633, %v4642
      %v4668 = vmul.f32 %v4634, %v4642
      %v4669 = vmul.f32 %v4635, %v4642
      %v4670 = vmul.f32 %v4636, %v4642
      %v4671 = vmul.f32 %v4637, %v4642
      %v4672 = vmul.f32 %v4638, %v4642
      %v4673 = vmul.f32 %v4639, %v4642
      %v4674 = vmul.f32 %v4640, %v4642
      %v4675 = vld [vmem:[%s5] sm:$0x1]
      %v4677 = vlaneseq
      %v4678 = vshrl.u32 %v4677, 7
      %v4679 = vsub.s32 0, %v4678
      %v4680 = vrot.slane %v4675, %v4679
      %v4682 = vmul.f32 %v4643, %v4680
      %v4683 = vmul.f32 %v4644, %v4680
      %v4684 = vmul.f32 %v4645, %v4680
      %v4685 = vmul.f32 %v4646, %v4680
      %v4686 = vmul.f32 %v4647, %v4680
      %v4687 = vmul.f32 %v4648, %v4680
      %v4688 = vmul.f32 %v4649, %v4680
      %v4689 = vmul.f32 %v4650, %v4680
      %v4690 = vmul.f32 %v4651, %v4680
      %v4691 = vmul.f32 %v4652, %v4680
      %v4692 = vmul.f32 %v4653, %v4680
      %v4693 = vmul.f32 %v4654, %v4680
      %v4694 = vmul.f32 %v4655, %v4680
      %v4695 = vmul.f32 %v4656, %v4680
      %v4696 = vmul.f32 %v4657, %v4680
      %v4697 = vmul.f32 %v4658, %v4680
      %v4698 = vmul.f32 %v4659, %v4680
      %v4699 = vmul.f32 %v4660, %v4680
      %v4700 = vmul.f32 %v4661, %v4680
      %v4701 = vmul.f32 %v4662, %v4680
      %v4702 = vmul.f32 %v4663, %v4680
      %v4703 = vmul.f32 %v4664, %v4680
      %v4704 = vmul.f32 %v4665, %v4680
      %v4705 = vmul.f32 %v4666, %v4680
      %v4706 = vmul.f32 %v4667, %v4680
      %v4707 = vmul.f32 %v4668, %v4680
      %v4708 = vmul.f32 %v4669, %v4680
      %v4709 = vmul.f32 %v4670, %v4680
      %v4710 = vmul.f32 %v4671, %v4680
      %v4711 = vmul.f32 %v4672, %v4680
      %v4712 = vmul.f32 %v4673, %v4680
      %v4713 = vmul.f32 %v4674, %v4680
      %v4714 = vld [vmem:[%s6] sm:$0x1]
      %v4716 = vlaneseq
      %v4717 = vshrl.u32 %v4716, 7
      %v4718 = vsub.s32 0, %v4717
      %v4719 = vrot.slane %v4714, %v4718
      %v4721 = vadd.f32 %v4682, %v4719
      %v4722 = vadd.f32 %v4683, %v4719
      %v4723 = vadd.f32 %v4684, %v4719
      %v4724 = vadd.f32 %v4685, %v4719
      %v4725 = vadd.f32 %v4686, %v4719
      %v4726 = vadd.f32 %v4687, %v4719
      %v4727 = vadd.f32 %v4688, %v4719
      %v4728 = vadd.f32 %v4689, %v4719
      %v4729 = vadd.f32 %v4690, %v4719
      %v4730 = vadd.f32 %v4691, %v4719
      %v4731 = vadd.f32 %v4692, %v4719
      %v4732 = vadd.f32 %v4693, %v4719
      %v4733 = vadd.f32 %v4694, %v4719
      %v4734 = vadd.f32 %v4695, %v4719
      %v4735 = vadd.f32 %v4696, %v4719
      %v4736 = vadd.f32 %v4697, %v4719
      %v4737 = vadd.f32 %v4698, %v4719
      %v4738 = vadd.f32 %v4699, %v4719
      %v4739 = vadd.f32 %v4700, %v4719
      %v4740 = vadd.f32 %v4701, %v4719
      %v4741 = vadd.f32 %v4702, %v4719
      %v4742 = vadd.f32 %v4703, %v4719
      %v4743 = vadd.f32 %v4704, %v4719
      %v4744 = vadd.f32 %v4705, %v4719
      %v4745 = vadd.f32 %v4706, %v4719
      %v4746 = vadd.f32 %v4707, %v4719
      %v4747 = vadd.f32 %v4708, %v4719
      %v4748 = vadd.f32 %v4709, %v4719
      %v4749 = vadd.f32 %v4710, %v4719
      %v4750 = vadd.f32 %v4711, %v4719
      %v4751 = vadd.f32 %v4712, %v4719
      %v4752 = vadd.f32 %v4713, %v4719
      %v4753 = vlaneseq
      %v4754 = vand.u32 %v4753, 127
      %vm4755 = vcmp.lt.s32.totalorder %v4754, 4
      %v4756 = vsel %vm4755, 1, 0
      %vm4757 = vcmp.eq.s32.totalorder %v4756, 1
      %v4758 = vsel %vm4757, %v4721, %v4466
      %v4759 = vsel %vm4757, %v4722, %v4467
      %v4760 = vsel %vm4757, %v4723, %v4468
      %v4761 = vsel %vm4757, %v4724, %v4469
      %v4762 = vsel %vm4757, %v4725, %v4470
      %v4763 = vsel %vm4757, %v4726, %v4471
      %v4764 = vsel %vm4757, %v4727, %v4472
      %v4765 = vsel %vm4757, %v4728, %v4473
      %v4766 = vsel %vm4757, %v4729, %v4474
      %v4767 = vsel %vm4757, %v4730, %v4475
      %v4768 = vsel %vm4757, %v4731, %v4476
      %v4769 = vsel %vm4757, %v4732, %v4477
      %v4770 = vsel %vm4757, %v4733, %v4478
      %v4771 = vsel %vm4757, %v4734, %v4479
      %v4772 = vsel %vm4757, %v4735, %v4480
      %v4773 = vsel %vm4757, %v4736, %v4481
      %v4774 = vsel %vm4757, %v4737, %v4482
      %v4775 = vsel %vm4757, %v4738, %v4483
      %v4776 = vsel %vm4757, %v4739, %v4484
      %v4777 = vsel %vm4757, %v4740, %v4485
      %v4778 = vsel %vm4757, %v4741, %v4486
      %v4779 = vsel %vm4757, %v4742, %v4487
      %v4780 = vsel %vm4757, %v4743, %v4488
      %v4781 = vsel %vm4757, %v4744, %v4489
      %v4782 = vsel %vm4757, %v4745, %v4490
      %v4783 = vsel %vm4757, %v4746, %v4491
      %v4784 = vsel %vm4757, %v4747, %v4492
      %v4785 = vsel %vm4757, %v4748, %v4493
      %v4786 = vsel %vm4757, %v4749, %v4494
      %v4787 = vsel %vm4757, %v4750, %v4495
      %v4788 = vsel %vm4757, %v4751, %v4496
      %v4789 = vsel %vm4757, %v4752, %v4497
      %4790 = vst [vmem:[#allocation2] sm:$0xff] 0.0
      %4791 = vst [vmem:[#allocation2 + $0x8] sm:$0xff] 0.0
      %4792 = vst [vmem:[#allocation2 + $0x10] sm:$0xff] 0.0
      %4793 = vst [vmem:[#allocation2 + $0x18] sm:$0xff] 0.0
      %4794 = vst [vmem:[#allocation2 + $0x20] sm:$0xff] 0.0
      %4795 = vst [vmem:[#allocation2 + $0x28] sm:$0xff] 0.0
      %4796 = vst [vmem:[#allocation2 + $0x30] sm:$0xff] 0.0
      %4797 = vst [vmem:[#allocation2 + $0x38] sm:$0xff] 0.0
      %4798 = vst [vmem:[#allocation2 + $0x40] sm:$0xff] 0.0
      %4799 = vst [vmem:[#allocation2 + $0x48] sm:$0xff] 0.0
      %4800 = vst [vmem:[#allocation2 + $0x50] sm:$0xff] 0.0
      %4801 = vst [vmem:[#allocation2 + $0x58] sm:$0xff] 0.0
      %4802 = vst [vmem:[#allocation2 + $0x60] sm:$0xff] 0.0
      %4803 = vst [vmem:[#allocation2 + $0x68] sm:$0xff] 0.0
      %4804 = vst [vmem:[#allocation2 + $0x70] sm:$0xff] 0.0
      %4805 = vst [vmem:[#allocation2 + $0x78] sm:$0xff] 0.0
      %4806 = vst [vmem:[#allocation2 + $0x80] sm:$0xff] 0.0
      %4807 = vst [vmem:[#allocation2 + $0x88] sm:$0xff] 0.0
      %4808 = vst [vmem:[#allocation2 + $0x90] sm:$0xff] 0.0
      %4809 = vst [vmem:[#allocation2 + $0x98] sm:$0xff] 0.0
      %4810 = vst [vmem:[#allocation2 + $0xa0] sm:$0xff] 0.0
      %4811 = vst [vmem:[#allocation2 + $0xa8] sm:$0xff] 0.0
      %4812 = vst [vmem:[#allocation2 + $0xb0] sm:$0xff] 0.0
      %4813 = vst [vmem:[#allocation2 + $0xb8] sm:$0xff] 0.0
      %4814 = vst [vmem:[#allocation2 + $0xc0] sm:$0xff] 0.0
      %4815 = vst [vmem:[#allocation2 + $0xc8] sm:$0xff] 0.0
      %4816 = vst [vmem:[#allocation2 + $0xd0] sm:$0xff] 0.0
      %4817 = vst [vmem:[#allocation2 + $0xd8] sm:$0xff] 0.0
      %4818 = vst [vmem:[#allocation2 + $0xe0] sm:$0xff] 0.0
      %4819 = vst [vmem:[#allocation2 + $0xe8] sm:$0xff] 0.0
      %4820 = vst [vmem:[#allocation2 + $0xf0] sm:$0xff] 0.0
      %4821 = vst [vmem:[#allocation2 + $0xf8] sm:$0xff] 0.0
      %v4822 = vmul.f32 %v4758, %v525
      %v4823 = vmul.f32 %v4759, %v530
      %v4824 = vmul.f32 %v4760, %v535
      %v4825 = vmul.f32 %v4761, %v540
      %v4826 = vmul.f32 %v4762, %v545
      %v4827 = vmul.f32 %v4763, %v550
      %v4828 = vmul.f32 %v4764, %v555
      %v4829 = vmul.f32 %v4765, %v560
      %v4830 = vmul.f32 %v4766, %v565
      %v4831 = vmul.f32 %v4767, %v570
      %v4832 = vmul.f32 %v4768, %v575
      %v4833 = vmul.f32 %v4769, %v580
      %v4834 = vmul.f32 %v4770, %v585
      %v4835 = vmul.f32 %v4771, %v590
      %v4836 = vmul.f32 %v4772, %v595
      %v4837 = vmul.f32 %v4773, %v600
      %v4838 = vmul.f32 %v4774, %v605
      %v4839 = vmul.f32 %v4775, %v610
      %v4840 = vmul.f32 %v4776, %v615
      %v4841 = vmul.f32 %v4777, %v620
      %v4842 = vmul.f32 %v4778, %v625
      %v4843 = vmul.f32 %v4779, %v630
      %v4844 = vmul.f32 %v4780, %v635
      %v4845 = vmul.f32 %v4781, %v640
      %v4846 = vmul.f32 %v4782, %v645
      %v4847 = vmul.f32 %v4783, %v650
      %v4848 = vmul.f32 %v4784, %v655
      %v4849 = vmul.f32 %v4785, %v660
      %v4850 = vmul.f32 %v4786, %v665
      %v4851 = vmul.f32 %v4787, %v670
      %v4852 = vmul.f32 %v4788, %v675
      %v4853 = vmul.f32 %v4789, %v680
      %4854 = vst [vmem:[#allocation3 + $0x18] sm:$0xff] %v4822
      %4855 = vst [vmem:[#allocation3 + $0x20] sm:$0xff] %v4823
      %4856 = vst [vmem:[#allocation3 + $0x28] sm:$0xff] %v4824
      %4857 = vst [vmem:[#allocation3 + $0x30] sm:$0xff] %v4825
      %4858 = vst [vmem:[#allocation3 + $0x38] sm:$0xff] %v4826
      %4859 = vst [vmem:[#allocation3 + $0x40] sm:$0xff] %v4827
      %4860 = vst [vmem:[#allocation3 + $0x48] sm:$0xff] %v4828
      %4861 = vst [vmem:[#allocation3 + $0x50] sm:$0xff] %v4829
      %4862 = vst [vmem:[#allocation3 + $0x58] sm:$0xff] %v4830
      %4863 = vst [vmem:[#allocation3 + $0x60] sm:$0xff] %v4831
      %4864 = vst [vmem:[#allocation3 + $0x68] sm:$0xff] %v4832
      %4865 = vst [vmem:[#allocation3 + $0x70] sm:$0xff] %v4833
      %4866 = vst [vmem:[#allocation3 + $0x78] sm:$0xff] %v4834
      %4867 = vst [vmem:[#allocation3 + $0x80] sm:$0xff] %v4835
      %4868 = vst [vmem:[#allocation3 + $0x88] sm:$0xff] %v4836
      %4869 = vst [vmem:[#allocation3 + $0x90] sm:$0xff] %v4837
      %4870 = vst [vmem:[#allocation3 + $0x98] sm:$0xff] %v4838
      %4871 = vst [vmem:[#allocation3 + $0xa0] sm:$0xff] %v4839
      %4872 = vst [vmem:[#allocation3 + $0xa8] sm:$0xff] %v4840
      %4873 = vst [vmem:[#allocation3 + $0xb0] sm:$0xff] %v4841
      %4874 = vst [vmem:[#allocation3 + $0xb8] sm:$0xff] %v4842
      %4875 = vst [vmem:[#allocation3 + $0xc0] sm:$0xff] %v4843
      %4876 = vst [vmem:[#allocation3 + $0xc8] sm:$0xff] %v4844
      %4877 = vst [vmem:[#allocation3 + $0xd0] sm:$0xff] %v4845
      %4878 = vst [vmem:[#allocation3 + $0xd8] sm:$0xff] %v4846
      %4879 = vst [vmem:[#allocation3 + $0xe0] sm:$0xff] %v4847
      %4880 = vst [vmem:[#allocation3 + $0xe8] sm:$0xff] %v4848
      %4881 = vst [vmem:[#allocation3 + $0xf0] sm:$0xff] %v4849
      %4882 = vst [vmem:[#allocation3 + $0xf8] sm:$0xff] %v4850
      %4883 = vst [vmem:[#allocation3 + $0x100] sm:$0xff] %v4851
      %4884 = vst [vmem:[#allocation3 + $0x108] sm:$0xff] %v4852
      %4885 = vst [vmem:[#allocation3 + $0x110] sm:$0xff] %v4853
      %v4886 = vld [vmem:[#allocation3 + $0x7] sm:$0xff]
      %v4887 = vld [vmem:[#allocation3 + $0xf] sm:$0xff]
      %v4888 = vld [vmem:[#allocation3 + $0x17] sm:$0xff]
      %v4889 = vld [vmem:[#allocation3 + $0x1f] sm:$0xff]
      %v4890 = vld [vmem:[#allocation3 + $0x27] sm:$0xff]
      %v4891 = vld [vmem:[#allocation3 + $0x2f] sm:$0xff]
      %v4892 = vld [vmem:[#allocation3 + $0x37] sm:$0xff]
      %v4893 = vld [vmem:[#allocation3 + $0x3f] sm:$0xff]
      %v4894 = vld [vmem:[#allocation3 + $0x47] sm:$0xff]
      %v4895 = vld [vmem:[#allocation3 + $0x4f] sm:$0xff]
      %v4896 = vld [vmem:[#allocation3 + $0x57] sm:$0xff]
      %v4897 = vld [vmem:[#allocation3 + $0x5f] sm:$0xff]
      %v4898 = vld [vmem:[#allocation3 + $0x67] sm:$0xff]
      %v4899 = vld [vmem:[#allocation3 + $0x6f] sm:$0xff]
      %v4900 = vld [vmem:[#allocation3 + $0x77] sm:$0xff]
      %v4901 = vld [vmem:[#allocation3 + $0x7f] sm:$0xff]
      %v4902 = vld [vmem:[#allocation3 + $0x87] sm:$0xff]
      %v4903 = vld [vmem:[#allocation3 + $0x8f] sm:$0xff]
      %v4904 = vld [vmem:[#allocation3 + $0x97] sm:$0xff]
      %v4905 = vld [vmem:[#allocation3 + $0x9f] sm:$0xff]
      %v4906 = vld [vmem:[#allocation3 + $0xa7] sm:$0xff]
      %v4907 = vld [vmem:[#allocation3 + $0xaf] sm:$0xff]
      %v4908 = vld [vmem:[#allocation3 + $0xb7] sm:$0xff]
      %v4909 = vld [vmem:[#allocation3 + $0xbf] sm:$0xff]
      %v4910 = vld [vmem:[#allocation3 + $0xc7] sm:$0xff]
      %v4911 = vld [vmem:[#allocation3 + $0xcf] sm:$0xff]
      %v4912 = vld [vmem:[#allocation3 + $0xd7] sm:$0xff]
      %v4913 = vld [vmem:[#allocation3 + $0xdf] sm:$0xff]
      %v4914 = vld [vmem:[#allocation3 + $0xe7] sm:$0xff]
      %v4915 = vld [vmem:[#allocation3 + $0xef] sm:$0xff]
      %v4916 = vld [vmem:[#allocation3 + $0xf7] sm:$0xff]
      %v4917 = vld [vmem:[#allocation3 + $0xff] sm:$0xff]
      %v4918 = vld [vmem:[#allocation2] sm:$0xff]
      %v4919 = vld [vmem:[#allocation2 + $0x8] sm:$0xff]
      %v4920 = vld [vmem:[#allocation2 + $0x10] sm:$0xff]
      %v4921 = vld [vmem:[#allocation2 + $0x18] sm:$0xff]
      %v4922 = vld [vmem:[#allocation2 + $0x20] sm:$0xff]
      %v4923 = vld [vmem:[#allocation2 + $0x28] sm:$0xff]
      %v4924 = vld [vmem:[#allocation2 + $0x30] sm:$0xff]
      %v4925 = vld [vmem:[#allocation2 + $0x38] sm:$0xff]
      %v4926 = vld [vmem:[#allocation2 + $0x40] sm:$0xff]
      %v4927 = vld [vmem:[#allocation2 + $0x48] sm:$0xff]
      %v4928 = vld [vmem:[#allocation2 + $0x50] sm:$0xff]
      %v4929 = vld [vmem:[#allocation2 + $0x58] sm:$0xff]
      %v4930 = vld [vmem:[#allocation2 + $0x60] sm:$0xff]
      %v4931 = vld [vmem:[#allocation2 + $0x68] sm:$0xff]
      %v4932 = vld [vmem:[#allocation2 + $0x70] sm:$0xff]
      %v4933 = vld [vmem:[#allocation2 + $0x78] sm:$0xff]
      %v4934 = vld [vmem:[#allocation2 + $0x80] sm:$0xff]
      %v4935 = vld [vmem:[#allocation2 + $0x88] sm:$0xff]
      %v4936 = vld [vmem:[#allocation2 + $0x90] sm:$0xff]
      %v4937 = vld [vmem:[#allocation2 + $0x98] sm:$0xff]
      %v4938 = vld [vmem:[#allocation2 + $0xa0] sm:$0xff]
      %v4939 = vld [vmem:[#allocation2 + $0xa8] sm:$0xff]
      %v4940 = vld [vmem:[#allocation2 + $0xb0] sm:$0xff]
      %v4941 = vld [vmem:[#allocation2 + $0xb8] sm:$0xff]
      %v4942 = vld [vmem:[#allocation2 + $0xc0] sm:$0xff]
      %v4943 = vld [vmem:[#allocation2 + $0xc8] sm:$0xff]
      %v4944 = vld [vmem:[#allocation2 + $0xd0] sm:$0xff]
      %v4945 = vld [vmem:[#allocation2 + $0xd8] sm:$0xff]
      %v4946 = vld [vmem:[#allocation2 + $0xe0] sm:$0xff]
      %v4947 = vld [vmem:[#allocation2 + $0xe8] sm:$0xff]
      %v4948 = vld [vmem:[#allocation2 + $0xf0] sm:$0xff]
      %v4949 = vld [vmem:[#allocation2 + $0xf8] sm:$0xff]
      %v4950 = vpack.c.bf16 %v4887, %v4886
      %v4951 = vpack.c.bf16 %v4889, %v4888
      %v4952 = vpack.c.bf16 %v4891, %v4890
      %v4953 = vpack.c.bf16 %v4893, %v4892
      %v4954 = vpack.c.bf16 %v4895, %v4894
      %v4955 = vpack.c.bf16 %v4897, %v4896
      %v4956 = vpack.c.bf16 %v4899, %v4898
      %v4957 = vpack.c.bf16 %v4901, %v4900
      %v4958 = vpack.c.bf16 %v4903, %v4902
      %v4959 = vpack.c.bf16 %v4905, %v4904
      %v4960 = vpack.c.bf16 %v4907, %v4906
      %v4961 = vpack.c.bf16 %v4909, %v4908
      %v4962 = vpack.c.bf16 %v4911, %v4910
      %v4963 = vpack.c.bf16 %v4913, %v4912
      %v4964 = vpack.c.bf16 %v4915, %v4914
      %v4965 = vpack.c.bf16 %v4917, %v4916
      %v4966 = vld [vmem:[%s7] sm:$0xf]
      %v4967 = vld [vmem:[%s7 + $0x4] sm:$0xf]
      %v4968 = vld [vmem:[%s7 + $0x8] sm:$0xf]
      %v4969 = vld [vmem:[%s7 + $0xc] sm:$0xf]
      %v4970 = vld [vmem:[%s7 + $0x10] sm:$0xf]
      %v4971 = vld [vmem:[%s7 + $0x14] sm:$0xf]
      %v4972 = vld [vmem:[%s7 + $0x18] sm:$0xf]
      %v4973 = vld [vmem:[%s7 + $0x1c] sm:$0xf]
      %v4974 = vld [vmem:[%s7 + $0x20] sm:$0xf]
      %v4975 = vld [vmem:[%s7 + $0x24] sm:$0xf]
      %v4976 = vld [vmem:[%s7 + $0x28] sm:$0xf]
      %v4977 = vld [vmem:[%s7 + $0x2c] sm:$0xf]
      %v4978 = vld [vmem:[%s7 + $0x30] sm:$0xf]
      %v4979 = vld [vmem:[%s7 + $0x34] sm:$0xf]
      %v4980 = vld [vmem:[%s7 + $0x38] sm:$0xf]
      %v4981 = vld [vmem:[%s7 + $0x3c] sm:$0xf]
      %v4998 = vunpack.c.l.b16 %v4966
      %v4999 = vunpack.c.l.b16 %v4967
      %v5000 = vunpack.c.l.b16 %v4968
      %v5001 = vunpack.c.l.b16 %v4969
      %v5002 = vunpack.c.l.b16 %v4970
      %v5003 = vunpack.c.l.b16 %v4971
      %v5004 = vunpack.c.l.b16 %v4972
      %v5005 = vunpack.c.l.b16 %v4973
      %v5006 = vunpack.c.l.b16 %v4974
      %v5007 = vunpack.c.l.b16 %v4975
      %v5008 = vunpack.c.l.b16 %v4976
      %v5009 = vunpack.c.l.b16 %v4977
      %v5010 = vunpack.c.l.b16 %v4978
      %v5011 = vunpack.c.l.b16 %v4979
      %v5012 = vunpack.c.l.b16 %v4980
      %v5013 = vunpack.c.l.b16 %v4981
      %v5014 = vpack.c.b16 %v4999, %v4998
      %v5015 = vpack.c.b16 %v5001, %v5000
      %v5016 = vpack.c.b16 %v5003, %v5002
      %v5017 = vpack.c.b16 %v5005, %v5004
      %v5018 = vpack.c.b16 %v5007, %v5006
      %v5019 = vpack.c.b16 %v5009, %v5008
      %v5020 = vpack.c.b16 %v5011, %v5010
      %v5021 = vpack.c.b16 %v5013, %v5012
      %5030 = vmatprep.subr.bf16.mxu0 0
      %5031 = vmatpush1.bf16.msra.mxu0 %v5014
      %5032 = vmatprep.subr.bf16.mxu0 0
      %5033 = vmatpush1.bf16.msra.mxu0 %v5015
      %5034 = vmatprep.subr.bf16.mxu0 0
      %5035 = vmatpush1.bf16.msra.mxu0 %v5016
      %5036 = vmatprep.subr.bf16.mxu0 0
      %5037 = vmatpush1.bf16.msra.mxu0 %v5017
      %5038 = vmatprep.subr.bf16.mxu0 0
      %5039 = vmatpush1.bf16.msra.mxu0 %v5018
      %5040 = vmatprep.subr.bf16.mxu0 0
      %5041 = vmatpush1.bf16.msra.mxu0 %v5019
      %5042 = vmatprep.subr.bf16.mxu0 0
      %5043 = vmatpush1.bf16.msra.mxu0 %v5020
      %5044 = vmatprep.subr.bf16.mxu0 0
      %5045 = vmatpush1.bf16.msra.mxu0 %v5021
      %5046 = vmatprep.subr.bf16.mxu0 0
      %5047 = vmatpush1.bf16.msra.mxu0 0
      %5048 = vmatprep.subr.bf16.mxu0 0
      %5049 = vmatpush1.bf16.msra.mxu0 0
      %5050 = vmatprep.subr.bf16.mxu0 0
      %5051 = vmatpush1.bf16.msra.mxu0 0
      %5052 = vmatprep.subr.bf16.mxu0 0
      %5053 = vmatpush1.bf16.msra.mxu0 0
      %5054 = vmatprep.subr.bf16.mxu0 0
      %5055 = vmatpush1.bf16.msra.mxu0 0
      %5056 = vmatprep.subr.bf16.mxu0 0
      %5057 = vmatpush1.bf16.msra.mxu0 0
      %5058 = vmatprep.subr.bf16.mxu0 0
      %5059 = vmatpush1.bf16.msra.mxu0 0
      %5060 = vmatprep.subr.bf16.mxu0 0
      %5061 = vmatpush1.bf16.msra.mxu0 0
      %5062 = vmatprep.mubr.bf16.mxu0 0
      %5063 = vmatmul.mubr.bf16.gmra.mrb[0].mxu0 %v4950
      %v5064 = vpop.f32.mrb[0].mxu0
      %v5065 = vadd.f32 0.0, %v5064
      %v5066 = vpop.f32.mrb[0].mxu0
      %v5067 = vpop.f32.mrb[0].mxu0
      %v5068 = vadd.f32 0.0, %v5067
      %v5069 = vpop.f32.mrb[0].mxu0
      %5070 = vmatprep.mubr.bf16.mxu0 0
      %5071 = vmatmul.mubr.bf16.gmra.mrb[0].mxu0 %v4951
      %v5072 = vpop.f32.mrb[0].mxu0
      %v5073 = vadd.f32 0.0, %v5072
      %v5074 = vpop.f32.mrb[0].mxu0
      %v5075 = vpop.f32.mrb[0].mxu0
      %v5076 = vadd.f32 0.0, %v5075
      %v5077 = vpop.f32.mrb[0].mxu0
      %5078 = vmatprep.mubr.bf16.mxu0 0
      %5079 = vmatmul.mubr.bf16.gmra.mrb[0].mxu0 %v4952
      %v5080 = vpop.f32.mrb[0].mxu0
      %v5081 = vadd.f32 0.0, %v5080
      %v5082 = vpop.f32.mrb[0].mxu0
      %v5083 = vpop.f32.mrb[0].mxu0
      %v5084 = vadd.f32 0.0, %v5083
      %v5085 = vpop.f32.mrb[0].mxu0
      %5086 = vmatprep.mubr.bf16.mxu0 0
      %5087 = vmatmul.mubr.bf16.gmra.mrb[0].mxu0 %v4953
      %v5088 = vpop.f32.mrb[0].mxu0
      %v5089 = vadd.f32 0.0, %v5088
      %v5090 = vpop.f32.mrb[0].mxu0
      %v5091 = vpop.f32.mrb[0].mxu0
      %v5092 = vadd.f32 0.0, %v5091
      %v5093 = vpop.f32.mrb[0].mxu0
      %5094 = vmatprep.mubr.bf16.mxu0 0
      %5095 = vmatmul.mubr.bf16.gmra.mrb[0].mxu0 %v4954
      %v5096 = vpop.f32.mrb[0].mxu0
      %v5097 = vadd.f32 0.0, %v5096
      %v5098 = vpop.f32.mrb[0].mxu0
      %v5099 = vpop.f32.mrb[0].mxu0
      %v5100 = vadd.f32 0.0, %v5099
      %v5101 = vpop.f32.mrb[0].mxu0
      %5102 = vmatprep.mubr.bf16.mxu0 0
      %5103 = vmatmul.mubr.bf16.gmra.mrb[0].mxu0 %v4955
      %v5104 = vpop.f32.mrb[0].mxu0
      %v5105 = vadd.f32 0.0, %v5104
      %v5106 = vpop.f32.mrb[0].mxu0
      %v5107 = vpop.f32.mrb[0].mxu0
      %v5108 = vadd.f32 0.0, %v5107
      %v5109 = vpop.f32.mrb[0].mxu0
      %5110 = vmatprep.mubr.bf16.mxu0 0
      %5111 = vmatmul.mubr.bf16.gmra.mrb[0].mxu0 %v4956
      %v5112 = vpop.f32.mrb[0].mxu0
      %v5113 = vadd.f32 0.0, %v5112
      %v5114 = vpop.f32.mrb[0].mxu0
      %v5115 = vpop.f32.mrb[0].mxu0
      %v5116 = vadd.f32 0.0, %v5115
      %v5117 = vpop.f32.mrb[0].mxu0
      %5118 = vmatprep.mubr.bf16.mxu0 0
      %5119 = vmatmul.mubr.bf16.gmra.mrb[0].mxu0 %v4957
      %v5120 = vpop.f32.mrb[0].mxu0
      %v5121 = vadd.f32 0.0, %v5120
      %v5122 = vpop.f32.mrb[0].mxu0
      %v5123 = vpop.f32.mrb[0].mxu0
      %v5124 = vadd.f32 0.0, %v5123
      %v5125 = vpop.f32.mrb[0].mxu0
      %5126 = vmatprep.mubr.bf16.mxu0 0
      %5127 = vmatmul.mubr.bf16.gmra.mrb[0].mxu0 %v4958
      %v5128 = vpop.f32.mrb[0].mxu0
      %v5129 = vadd.f32 0.0, %v5128
      %v5130 = vpop.f32.mrb[0].mxu0
      %v5131 = vpop.f32.mrb[0].mxu0
      %v5132 = vadd.f32 0.0, %v5131
      %v5133 = vpop.f32.mrb[0].mxu0
      %5134 = vmatprep.mubr.bf16.mxu0 0
      %5135 = vmatmul.mubr.bf16.gmra.mrb[0].mxu0 %v4959
      %v5136 = vpop.f32.mrb[0].mxu0
      %v5137 = vadd.f32 0.0, %v5136
      %v5138 = vpop.f32.mrb[0].mxu0
      %v5139 = vpop.f32.mrb[0].mxu0
      %v5140 = vadd.f32 0.0, %v5139
      %v5141 = vpop.f32.mrb[0].mxu0
      %5142 = vmatprep.mubr.bf16.mxu0 0
      %5143 = vmatmul.mubr.bf16.gmra.mrb[0].mxu0 %v4960
      %v5144 = vpop.f32.mrb[0].mxu0
      %v5145 = vadd.f32 0.0, %v5144
      %v5146 = vpop.f32.mrb[0].mxu0
      %v5147 = vpop.f32.mrb[0].mxu0
      %v5148 = vadd.f32 0.0, %v5147
      %v5149 = vpop.f32.mrb[0].mxu0
      %5150 = vmatprep.mubr.bf16.mxu0 0
      %5151 = vmatmul.mubr.bf16.gmra.mrb[0].mxu0 %v4961
      %v5152 = vpop.f32.mrb[0].mxu0
      %v5153 = vadd.f32 0.0, %v5152
      %v5154 = vpop.f32.mrb[0].mxu0
      %v5155 = vpop.f32.mrb[0].mxu0
      %v5156 = vadd.f32 0.0, %v5155
      %v5157 = vpop.f32.mrb[0].mxu0
      %5158 = vmatprep.mubr.bf16.mxu0 0
      %5159 = vmatmul.mubr.bf16.gmra.mrb[0].mxu0 %v4962
      %v5160 = vpop.f32.mrb[0].mxu0
      %v5161 = vadd.f32 0.0, %v5160
      %v5162 = vpop.f32.mrb[0].mxu0
      %v5163 = vpop.f32.mrb[0].mxu0
      %v5164 = vadd.f32 0.0, %v5163
      %v5165 = vpop.f32.mrb[0].mxu0
      %5166 = vmatprep.mubr.bf16.mxu0 0
      %5167 = vmatmul.mubr.bf16.gmra.mrb[0].mxu0 %v4963
      %v5168 = vpop.f32.mrb[0].mxu0
      %v5169 = vadd.f32 0.0, %v5168
      %v5170 = vpop.f32.mrb[0].mxu0
      %v5171 = vpop.f32.mrb[0].mxu0
      %v5172 = vadd.f32 0.0, %v5171
      %v5173 = vpop.f32.mrb[0].mxu0
      %5174 = vmatprep.mubr.bf16.mxu0 0
      %5175 = vmatmul.mubr.bf16.gmra.mrb[0].mxu0 %v4964
      %v5176 = vpop.f32.mrb[0].mxu0
      %v5177 = vadd.f32 0.0, %v5176
      %v5178 = vpop.f32.mrb[0].mxu0
      %v5179 = vpop.f32.mrb[0].mxu0
      %v5180 = vadd.f32 0.0, %v5179
      %v5181 = vpop.f32.mrb[0].mxu0
      %5182 = vmatprep.mubr.bf16.mxu0 0
      %5183 = vmatmul.mubr.bf16.gmra.mrb[0].mxu0 %v4965
      %v5184 = vpop.f32.mrb[0].mxu0
      %v5185 = vadd.f32 0.0, %v5184
      %v5186 = vpop.f32.mrb[0].mxu0
      %v5187 = vpop.f32.mrb[0].mxu0
      %v5188 = vadd.f32 0.0, %v5187
      %v5189 = vpop.f32.mrb[0].mxu0
      %5190 = vdwg.mxu0
      %v5191 = vadd.f32 %v4918, %v5065
      %v5192 = vadd.f32 %v4919, %v5068
      %v5193 = vadd.f32 %v4920, %v5073
      %v5194 = vadd.f32 %v4921, %v5076
      %v5195 = vadd.f32 %v4922, %v5081
      %v5196 = vadd.f32 %v4923, %v5084
      %v5197 = vadd.f32 %v4924, %v5089
      %v5198 = vadd.f32 %v4925, %v5092
      %v5199 = vadd.f32 %v4926, %v5097
      %v5200 = vadd.f32 %v4927, %v5100
      %v5201 = vadd.f32 %v4928, %v5105
      %v5202 = vadd.f32 %v4929, %v5108
      %v5203 = vadd.f32 %v4930, %v5113
      %v5204 = vadd.f32 %v4931, %v5116
      %v5205 = vadd.f32 %v4932, %v5121
      %v5206 = vadd.f32 %v4933, %v5124
      %v5207 = vadd.f32 %v4934, %v5129
      %v5208 = vadd.f32 %v4935, %v5132
      %v5209 = vadd.f32 %v4936, %v5137
      %v5210 = vadd.f32 %v4937, %v5140
      %v5211 = vadd.f32 %v4938, %v5145
      %v5212 = vadd.f32 %v4939, %v5148
      %v5213 = vadd.f32 %v4940, %v5153
      %v5214 = vadd.f32 %v4941, %v5156
      %v5215 = vadd.f32 %v4942, %v5161
      %v5216 = vadd.f32 %v4943, %v5164
      %v5217 = vadd.f32 %v4944, %v5169
      %v5218 = vadd.f32 %v4945, %v5172
      %v5219 = vadd.f32 %v4946, %v5177
      %v5220 = vadd.f32 %v4947, %v5180
      %v5221 = vadd.f32 %v4948, %v5185
      %v5222 = vadd.f32 %v4949, %v5188
      %5223 = vst [vmem:[#allocation2] sm:$0xff] %v5191
      %5224 = vst [vmem:[#allocation2 + $0x8] sm:$0xff] %v5192
      %5225 = vst [vmem:[#allocation2 + $0x10] sm:$0xff] %v5193
      %5226 = vst [vmem:[#allocation2 + $0x18] sm:$0xff] %v5194
      %5227 = vst [vmem:[#allocation2 + $0x20] sm:$0xff] %v5195
      %5228 = vst [vmem:[#allocation2 + $0x28] sm:$0xff] %v5196
      %5229 = vst [vmem:[#allocation2 + $0x30] sm:$0xff] %v5197
      %5230 = vst [vmem:[#allocation2 + $0x38] sm:$0xff] %v5198
      %5231 = vst [vmem:[#allocation2 + $0x40] sm:$0xff] %v5199
      %5232 = vst [vmem:[#allocation2 + $0x48] sm:$0xff] %v5200
      %5233 = vst [vmem:[#allocation2 + $0x50] sm:$0xff] %v5201
      %5234 = vst [vmem:[#allocation2 + $0x58] sm:$0xff] %v5202
      %5235 = vst [vmem:[#allocation2 + $0x60] sm:$0xff] %v5203
      %5236 = vst [vmem:[#allocation2 + $0x68] sm:$0xff] %v5204
      %5237 = vst [vmem:[#allocation2 + $0x70] sm:$0xff] %v5205
      %5238 = vst [vmem:[#allocation2 + $0x78] sm:$0xff] %v5206
      %5239 = vst [vmem:[#allocation2 + $0x80] sm:$0xff] %v5207
      %5240 = vst [vmem:[#allocation2 + $0x88] sm:$0xff] %v5208
      %5241 = vst [vmem:[#allocation2 + $0x90] sm:$0xff] %v5209
      %5242 = vst [vmem:[#allocation2 + $0x98] sm:$0xff] %v5210
      %5243 = vst [vmem:[#allocation2 + $0xa0] sm:$0xff] %v5211
      %5244 = vst [vmem:[#allocation2 + $0xa8] sm:$0xff] %v5212
      %5245 = vst [vmem:[#allocation2 + $0xb0] sm:$0xff] %v5213
      %5246 = vst [vmem:[#allocation2 + $0xb8] sm:$0xff] %v5214
      %5247 = vst [vmem:[#allocation2 + $0xc0] sm:$0xff] %v5215
      %5248 = vst [vmem:[#allocation2 + $0xc8] sm:$0xff] %v5216
      %5249 = vst [vmem:[#allocation2 + $0xd0] sm:$0xff] %v5217
      %5250 = vst [vmem:[#allocation2 + $0xd8] sm:$0xff] %v5218
      %5251 = vst [vmem:[#allocation2 + $0xe0] sm:$0xff] %v5219
      %5252 = vst [vmem:[#allocation2 + $0xe8] sm:$0xff] %v5220
      %5253 = vst [vmem:[#allocation2 + $0xf0] sm:$0xff] %v5221
      %5254 = vst [vmem:[#allocation2 + $0xf8] sm:$0xff] %v5222
      %v5255 = vld [vmem:[#allocation3 + $0x17] sm:$0xff]
      %v5256 = vld [vmem:[#allocation3 + $0x1f] sm:$0xff]
      %v5257 = vld [vmem:[#allocation3 + $0x27] sm:$0xff]
      %v5258 = vld [vmem:[#allocation3 + $0x2f] sm:$0xff]
      %v5259 = vld [vmem:[#allocation3 + $0x37] sm:$0xff]
      %v5260 = vld [vmem:[#allocation3 + $0x3f] sm:$0xff]
      %v5261 = vld [vmem:[#allocation3 + $0x47] sm:$0xff]
      %v5262 = vld [vmem:[#allocation3 + $0x4f] sm:$0xff]
      %v5263 = vld [vmem:[#allocation3 + $0x57] sm:$0xff]
      %v5264 = vld [vmem:[#allocation3 + $0x5f] sm:$0xff]
      %v5265 = vld [vmem:[#allocation3 + $0x67] sm:$0xff]
      %v5266 = vld [vmem:[#allocation3 + $0x6f] sm:$0xff]
      %v5267 = vld [vmem:[#allocation3 + $0x77] sm:$0xff]
      %v5268 = vld [vmem:[#allocation3 + $0x7f] sm:$0xff]
      %v5269 = vld [vmem:[#allocation3 + $0x87] sm:$0xff]
      %v5270 = vld [vmem:[#allocation3 + $0x8f] sm:$0xff]
      %v5271 = vld [vmem:[#allocation3 + $0x97] sm:$0xff]
      %v5272 = vld [vmem:[#allocation3 + $0x9f] sm:$0xff]
      %v5273 = vld [vmem:[#allocation3 + $0xa7] sm:$0xff]
      %v5274 = vld [vmem:[#allocation3 + $0xaf] sm:$0xff]
      %v5275 = vld [vmem:[#allocation3 + $0xb7] sm:$0xff]
      %v5276 = vld [vmem:[#allocation3 + $0xbf] sm:$0xff]
      %v5277 = vld [vmem:[#allocation3 + $0xc7] sm:$0xff]
      %v5278 = vld [vmem:[#allocation3 + $0xcf] sm:$0xff]
      %v5279 = vld [vmem:[#allocation3 + $0xd7] sm:$0xff]
      %v5280 = vld [vmem:[#allocation3 + $0xdf] sm:$0xff]
      %v5281 = vld [vmem:[#allocation3 + $0xe7] sm:$0xff]
      %v5282 = vld [vmem:[#allocation3 + $0xef] sm:$0xff]
      %v5283 = vld [vmem:[#allocation3 + $0xf7] sm:$0xff]
      %v5284 = vld [vmem:[#allocation3 + $0xff] sm:$0xff]
      %v5285 = vld [vmem:[#allocation3 + $0x107] sm:$0xff]
      %v5286 = vld [vmem:[#allocation3 + $0x10f] sm:$0xff]
      %v5287 = vld [vmem:[#allocation2] sm:$0xff]
      %v5288 = vld [vmem:[#allocation2 + $0x8] sm:$0xff]
      %v5289 = vld [vmem:[#allocation2 + $0x10] sm:$0xff]
      %v5290 = vld [vmem:[#allocation2 + $0x18] sm:$0xff]
      %v5291 = vld [vmem:[#allocation2 + $0x20] sm:$0xff]
      %v5292 = vld [vmem:[#allocation2 + $0x28] sm:$0xff]
      %v5293 = vld [vmem:[#allocation2 + $0x30] sm:$0xff]
      %v5294 = vld [vmem:[#allocation2 + $0x38] sm:$0xff]
      %v5295 = vld [vmem:[#allocation2 + $0x40] sm:$0xff]
      %v5296 = vld [vmem:[#allocation2 + $0x48] sm:$0xff]
      %v5297 = vld [vmem:[#allocation2 + $0x50] sm:$0xff]
      %v5298 = vld [vmem:[#allocation2 + $0x58] sm:$0xff]
      %v5299 = vld [vmem:[#allocation2 + $0x60] sm:$0xff]
      %v5300 = vld [vmem:[#allocation2 + $0x68] sm:$0xff]
      %v5301 = vld [vmem:[#allocation2 + $0x70] sm:$0xff]
      %v5302 = vld [vmem:[#allocation2 + $0x78] sm:$0xff]
      %v5303 = vld [vmem:[#allocation2 + $0x80] sm:$0xff]
      %v5304 = vld [vmem:[#allocation2 + $0x88] sm:$0xff]
      %v5305 = vld [vmem:[#allocation2 + $0x90] sm:$0xff]
      %v5306 = vld [vmem:[#allocation2 + $0x98] sm:$0xff]
      %v5307 = vld [vmem:[#allocation2 + $0xa0] sm:$0xff]
      %v5308 = vld [vmem:[#allocation2 + $0xa8] sm:$0xff]
      %v5309 = vld [vmem:[#allocation2 + $0xb0] sm:$0xff]
      %v5310 = vld [vmem:[#allocation2 + $0xb8] sm:$0xff]
      %v5311 = vld [vmem:[#allocation2 + $0xc0] sm:$0xff]
      %v5312 = vld [vmem:[#allocation2 + $0xc8] sm:$0xff]
      %v5313 = vld [vmem:[#allocation2 + $0xd0] sm:$0xff]
      %v5314 = vld [vmem:[#allocation2 + $0xd8] sm:$0xff]
      %v5315 = vld [vmem:[#allocation2 + $0xe0] sm:$0xff]
      %v5316 = vld [vmem:[#allocation2 + $0xe8] sm:$0xff]
      %v5317 = vld [vmem:[#allocation2 + $0xf0] sm:$0xff]
      %v5318 = vld [vmem:[#allocation2 + $0xf8] sm:$0xff]
      %v5319 = vpack.c.bf16 %v5256, %v5255
      %v5320 = vpack.c.bf16 %v5258, %v5257
      %v5321 = vpack.c.bf16 %v5260, %v5259
      %v5322 = vpack.c.bf16 %v5262, %v5261
      %v5323 = vpack.c.bf16 %v5264, %v5263
      %v5324 = vpack.c.bf16 %v5266, %v5265
      %v5325 = vpack.c.bf16 %v5268, %v5267
      %v5326 = vpack.c.bf16 %v5270, %v5269
      %v5327 = vpack.c.bf16 %v5272, %v5271
      %v5328 = vpack.c.bf16 %v5274, %v5273
      %v5329 = vpack.c.bf16 %v5276, %v5275
      %v5330 = vpack.c.bf16 %v5278, %v5277
      %v5331 = vpack.c.bf16 %v5280, %v5279
      %v5332 = vpack.c.bf16 %v5282, %v5281
      %v5333 = vpack.c.bf16 %v5284, %v5283
      %v5334 = vpack.c.bf16 %v5286, %v5285
      %s5335 = scalar_lea.vmem %s7, 192
      %v5336 = vld [vmem:[%s5335] sm:$0xf]
      %v5337 = vld [vmem:[%s5335 + $0x4] sm:$0xf]
      %v5338 = vld [vmem:[%s5335 + $0x8] sm:$0xf]
      %v5339 = vld [vmem:[%s5335 + $0xc] sm:$0xf]
      %v5340 = vld [vmem:[%s5335 + $0x10] sm:$0xf]
      %v5341 = vld [vmem:[%s5335 + $0x14] sm:$0xf]
      %v5342 = vld [vmem:[%s5335 + $0x18] sm:$0xf]
      %v5343 = vld [vmem:[%s5335 + $0x1c] sm:$0xf]
      %v5344 = vld [vmem:[%s5335 + $0x20] sm:$0xf]
      %v5345 = vld [vmem:[%s5335 + $0x24] sm:$0xf]
      %v5346 = vld [vmem:[%s5335 + $0x28] sm:$0xf]
      %v5347 = vld [vmem:[%s5335 + $0x2c] sm:$0xf]
      %v5348 = vld [vmem:[%s5335 + $0x30] sm:$0xf]
      %v5349 = vld [vmem:[%s5335 + $0x34] sm:$0xf]
      %v5350 = vld [vmem:[%s5335 + $0x38] sm:$0xf]
      %v5351 = vld [vmem:[%s5335 + $0x3c] sm:$0xf]
      %v5368 = vunpack.c.l.b16 %v5336
      %v5369 = vunpack.c.l.b16 %v5337
      %v5370 = vunpack.c.l.b16 %v5338
      %v5371 = vunpack.c.l.b16 %v5339
      %v5372 = vunpack.c.l.b16 %v5340
      %v5373 = vunpack.c.l.b16 %v5341
      %v5374 = vunpack.c.l.b16 %v5342
      %v5375 = vunpack.c.l.b16 %v5343
      %v5376 = vunpack.c.l.b16 %v5344
      %v5377 = vunpack.c.l.b16 %v5345
      %v5378 = vunpack.c.l.b16 %v5346
      %v5379 = vunpack.c.l.b16 %v5347
      %v5380 = vunpack.c.l.b16 %v5348
      %v5381 = vunpack.c.l.b16 %v5349
      %v5382 = vunpack.c.l.b16 %v5350
      %v5383 = vunpack.c.l.b16 %v5351
      %v5384 = vpack.c.b16 %v5369, %v5368
      %v5385 = vpack.c.b16 %v5371, %v5370
      %v5386 = vpack.c.b16 %v5373, %v5372
      %v5387 = vpack.c.b16 %v5375, %v5374
      %v5388 = vpack.c.b16 %v5377, %v5376
      %v5389 = vpack.c.b16 %v5379, %v5378
      %v5390 = vpack.c.b16 %v5381, %v5380
      %v5391 = vpack.c.b16 %v5383, %v5382
      %5400 = vmatprep.subr.bf16.mxu0 0
      %5401 = vmatpush1.bf16.msra.mxu0 %v5384
      %5402 = vmatprep.subr.bf16.mxu0 0
      %5403 = vmatpush1.bf16.msra.mxu0 %v5385
      %5404 = vmatprep.subr.bf16.mxu0 0
      %5405 = vmatpush1.bf16.msra.mxu0 %v5386
      %5406 = vmatprep.subr.bf16.mxu0 0
      %5407 = vmatpush1.bf16.msra.mxu0 %v5387
      %5408 = vmatprep.subr.bf16.mxu0 0
      %5409 = vmatpush1.bf16.msra.mxu0 %v5388
      %5410 = vmatprep.subr.bf16.mxu0 0
      %5411 = vmatpush1.bf16.msra.mxu0 %v5389
      %5412 = vmatprep.subr.bf16.mxu0 0
      %5413 = vmatpush1.bf16.msra.mxu0 %v5390
      %5414 = vmatprep.subr.bf16.mxu0 0
      %5415 = vmatpush1.bf16.msra.mxu0 %v5391
      %5416 = vmatprep.subr.bf16.mxu0 0
      %5417 = vmatpush1.bf16.msra.mxu0 0
      %5418 = vmatprep.subr.bf16.mxu0 0
      %5419 = vmatpush1.bf16.msra.mxu0 0
      %5420 = vmatprep.subr.bf16.mxu0 0
      %5421 = vmatpush1.bf16.msra.mxu0 0
      %5422 = vmatprep.subr.bf16.mxu0 0
      %5423 = vmatpush1.bf16.msra.mxu0 0
      %5424 = vmatprep.subr.bf16.mxu0 0
      %5425 = vmatpush1.bf16.msra.mxu0 0
      %5426 = vmatprep.subr.bf16.mxu0 0
      %5427 = vmatpush1.bf16.msra.mxu0 0
      %5428 = vmatprep.subr.bf16.mxu0 0
      %5429 = vmatpush1.bf16.msra.mxu0 0
      %5430 = vmatprep.subr.bf16.mxu0 0
      %5431 = vmatpush1.bf16.msra.mxu0 0
      %5432 = vmatprep.mubr.bf16.mxu0 0
      %5433 = vmatmul.mubr.bf16.gmra.mrb[0].mxu0 %v5319
      %v5434 = vpop.f32.mrb[0].mxu0
      %v5435 = vadd.f32 0.0, %v5434
      %v5436 = vpop.f32.mrb[0].mxu0
      %v5437 = vpop.f32.mrb[0].mxu0
      %v5438 = vadd.f32 0.0, %v5437
      %v5439 = vpop.f32.mrb[0].mxu0
      %5440 = vmatprep.mubr.bf16.mxu0 0
      %5441 = vmatmul.mubr.bf16.gmra.mrb[0].mxu0 %v5320
      %v5442 = vpop.f32.mrb[0].mxu0
      %v5443 = vadd.f32 0.0, %v5442
      %v5444 = vpop.f32.mrb[0].mxu0
      %v5445 = vpop.f32.mrb[0].mxu0
      %v5446 = vadd.f32 0.0, %v5445
      %v5447 = vpop.f32.mrb[0].mxu0
      %5448 = vmatprep.mubr.bf16.mxu0 0
      %5449 = vmatmul.mubr.bf16.gmra.mrb[0].mxu0 %v5321
      %v5450 = vpop.f32.mrb[0].mxu0
      %v5451 = vadd.f32 0.0, %v5450
      %v5452 = vpop.f32.mrb[0].mxu0
      %v5453 = vpop.f32.mrb[0].mxu0
      %v5454 = vadd.f32 0.0, %v5453
      %v5455 = vpop.f32.mrb[0].mxu0
      %5456 = vmatprep.mubr.bf16.mxu0 0
      %5457 = vmatmul.mubr.bf16.gmra.mrb[0].mxu0 %v5322
      %v5458 = vpop.f32.mrb[0].mxu0
      %v5459 = vadd.f32 0.0, %v5458
      %v5460 = vpop.f32.mrb[0].mxu0
      %v5461 = vpop.f32.mrb[0].mxu0
      %v5462 = vadd.f32 0.0, %v5461
      %v5463 = vpop.f32.mrb[0].mxu0
      %5464 = vmatprep.mubr.bf16.mxu0 0
      %5465 = vmatmul.mubr.bf16.gmra.mrb[0].mxu0 %v5323
      %v5466 = vpop.f32.mrb[0].mxu0
      %v5467 = vadd.f32 0.0, %v5466
      %v5468 = vpop.f32.mrb[0].mxu0
      %v5469 = vpop.f32.mrb[0].mxu0
      %v5470 = vadd.f32 0.0, %v5469
      %v5471 = vpop.f32.mrb[0].mxu0
      %5472 = vmatprep.mubr.bf16.mxu0 0
      %5473 = vmatmul.mubr.bf16.gmra.mrb[0].mxu0 %v5324
      %v5474 = vpop.f32.mrb[0].mxu0
      %v5475 = vadd.f32 0.0, %v5474
      %v5476 = vpop.f32.mrb[0].mxu0
      %v5477 = vpop.f32.mrb[0].mxu0
      %v5478 = vadd.f32 0.0, %v5477
      %v5479 = vpop.f32.mrb[0].mxu0
      %5480 = vmatprep.mubr.bf16.mxu0 0
      %5481 = vmatmul.mubr.bf16.gmra.mrb[0].mxu0 %v5325
      %v5482 = vpop.f32.mrb[0].mxu0
      %v5483 = vadd.f32 0.0, %v5482
      %v5484 = vpop.f32.mrb[0].mxu0
      %v5485 = vpop.f32.mrb[0].mxu0
      %v5486 = vadd.f32 0.0, %v5485
      %v5487 = vpop.f32.mrb[0].mxu0
      %5488 = vmatprep.mubr.bf16.mxu0 0
      %5489 = vmatmul.mubr.bf16.gmra.mrb[0].mxu0 %v5326
      %v5490 = vpop.f32.mrb[0].mxu0
      %v5491 = vadd.f32 0.0, %v5490
      %v5492 = vpop.f32.mrb[0].mxu0
      %v5493 = vpop.f32.mrb[0].mxu0
      %v5494 = vadd.f32 0.0, %v5493
      %v5495 = vpop.f32.mrb[0].mxu0
      %5496 = vmatprep.mubr.bf16.mxu0 0
      %5497 = vmatmul.mubr.bf16.gmra.mrb[0].mxu0 %v5327
      %v5498 = vpop.f32.mrb[0].mxu0
      %v5499 = vadd.f32 0.0, %v5498
      %v5500 = vpop.f32.mrb[0].mxu0
      %v5501 = vpop.f32.mrb[0].mxu0
      %v5502 = vadd.f32 0.0, %v5501
      %v5503 = vpop.f32.mrb[0].mxu0
      %5504 = vmatprep.mubr.bf16.mxu0 0
      %5505 = vmatmul.mubr.bf16.gmra.mrb[0].mxu0 %v5328
      %v5506 = vpop.f32.mrb[0].mxu0
      %v5507 = vadd.f32 0.0, %v5506
      %v5508 = vpop.f32.mrb[0].mxu0
      %v5509 = vpop.f32.mrb[0].mxu0
      %v5510 = vadd.f32 0.0, %v5509
      %v5511 = vpop.f32.mrb[0].mxu0
      %5512 = vmatprep.mubr.bf16.mxu0 0
      %5513 = vmatmul.mubr.bf16.gmra.mrb[0].mxu0 %v5329
      %v5514 = vpop.f32.mrb[0].mxu0
      %v5515 = vadd.f32 0.0, %v5514
      %v5516 = vpop.f32.mrb[0].mxu0
      %v5517 = vpop.f32.mrb[0].mxu0
      %v5518 = vadd.f32 0.0, %v5517
      %v5519 = vpop.f32.mrb[0].mxu0
      %5520 = vmatprep.mubr.bf16.mxu0 0
      %5521 = vmatmul.mubr.bf16.gmra.mrb[0].mxu0 %v5330
      %v5522 = vpop.f32.mrb[0].mxu0
      %v5523 = vadd.f32 0.0, %v5522
      %v5524 = vpop.f32.mrb[0].mxu0
      %v5525 = vpop.f32.mrb[0].mxu0
      %v5526 = vadd.f32 0.0, %v5525
      %v5527 = vpop.f32.mrb[0].mxu0
      %5528 = vmatprep.mubr.bf16.mxu0 0
      %5529 = vmatmul.mubr.bf16.gmra.mrb[0].mxu0 %v5331
      %v5530 = vpop.f32.mrb[0].mxu0
      %v5531 = vadd.f32 0.0, %v5530
      %v5532 = vpop.f32.mrb[0].mxu0
      %v5533 = vpop.f32.mrb[0].mxu0
      %v5534 = vadd.f32 0.0, %v5533
      %v5535 = vpop.f32.mrb[0].mxu0
      %5536 = vmatprep.mubr.bf16.mxu0 0
      %5537 = vmatmul.mubr.bf16.gmra.mrb[0].mxu0 %v5332
      %v5538 = vpop.f32.mrb[0].mxu0
      %v5539 = vadd.f32 0.0, %v5538
      %v5540 = vpop.f32.mrb[0].mxu0
      %v5541 = vpop.f32.mrb[0].mxu0
      %v5542 = vadd.f32 0.0, %v5541
      %v5543 = vpop.f32.mrb[0].mxu0
      %5544 = vmatprep.mubr.bf16.mxu0 0
      %5545 = vmatmul.mubr.bf16.gmra.mrb[0].mxu0 %v5333
      %v5546 = vpop.f32.mrb[0].mxu0
      %v5547 = vadd.f32 0.0, %v5546
      %v5548 = vpop.f32.mrb[0].mxu0
      %v5549 = vpop.f32.mrb[0].mxu0
      %v5550 = vadd.f32 0.0, %v5549
      %v5551 = vpop.f32.mrb[0].mxu0
      %5552 = vmatprep.mubr.bf16.mxu0 0
      %5553 = vmatmul.mubr.bf16.gmra.mrb[0].mxu0 %v5334
      %v5554 = vpop.f32.mrb[0].mxu0
      %v5555 = vadd.f32 0.0, %v5554
      %v5556 = vpop.f32.mrb[0].mxu0
      %v5557 = vpop.f32.mrb[0].mxu0
      %v5558 = vadd.f32 0.0, %v5557
      %v5559 = vpop.f32.mrb[0].mxu0
      %5560 = vdwg.mxu0
      %v5561 = vadd.f32 %v5287, %v5435
      %v5562 = vadd.f32 %v5288, %v5438
      %v5563 = vadd.f32 %v5289, %v5443
      %v5564 = vadd.f32 %v5290, %v5446
      %v5565 = vadd.f32 %v5291, %v5451
      %v5566 = vadd.f32 %v5292, %v5454
      %v5567 = vadd.f32 %v5293, %v5459
      %v5568 = vadd.f32 %v5294, %v5462
      %v5569 = vadd.f32 %v5295, %v5467
      %v5570 = vadd.f32 %v5296, %v5470
      %v5571 = vadd.f32 %v5297, %v5475
      %v5572 = vadd.f32 %v5298, %v5478
      %v5573 = vadd.f32 %v5299, %v5483
      %v5574 = vadd.f32 %v5300, %v5486
      %v5575 = vadd.f32 %v5301, %v5491
      %v5576 = vadd.f32 %v5302, %v5494
      %v5577 = vadd.f32 %v5303, %v5499
      %v5578 = vadd.f32 %v5304, %v5502
      %v5579 = vadd.f32 %v5305, %v5507
      %v5580 = vadd.f32 %v5306, %v5510
      %v5581 = vadd.f32 %v5307, %v5515
      %v5582 = vadd.f32 %v5308, %v5518
      %v5583 = vadd.f32 %v5309, %v5523
      %v5584 = vadd.f32 %v5310, %v5526
      %v5585 = vadd.f32 %v5311, %v5531
      %v5586 = vadd.f32 %v5312, %v5534
      %v5587 = vadd.f32 %v5313, %v5539
      %v5588 = vadd.f32 %v5314, %v5542
      %v5589 = vadd.f32 %v5315, %v5547
      %v5590 = vadd.f32 %v5316, %v5550
      %v5591 = vadd.f32 %v5317, %v5555
      %v5592 = vadd.f32 %v5318, %v5558
      %5593 = vst [vmem:[#allocation2] sm:$0xff] %v5561
      %5594 = vst [vmem:[#allocation2 + $0x8] sm:$0xff] %v5562
      %5595 = vst [vmem:[#allocation2 + $0x10] sm:$0xff] %v5563
      %5596 = vst [vmem:[#allocation2 + $0x18] sm:$0xff] %v5564
      %5597 = vst [vmem:[#allocation2 + $0x20] sm:$0xff] %v5565
      %5598 = vst [vmem:[#allocation2 + $0x28] sm:$0xff] %v5566
      %5599 = vst [vmem:[#allocation2 + $0x30] sm:$0xff] %v5567
      %5600 = vst [vmem:[#allocation2 + $0x38] sm:$0xff] %v5568
      %5601 = vst [vmem:[#allocation2 + $0x40] sm:$0xff] %v5569
      %5602 = vst [vmem:[#allocation2 + $0x48] sm:$0xff] %v5570
      %5603 = vst [vmem:[#allocation2 + $0x50] sm:$0xff] %v5571
      %5604 = vst [vmem:[#allocation2 + $0x58] sm:$0xff] %v5572
      %5605 = vst [vmem:[#allocation2 + $0x60] sm:$0xff] %v5573
      %5606 = vst [vmem:[#allocation2 + $0x68] sm:$0xff] %v5574
      %5607 = vst [vmem:[#allocation2 + $0x70] sm:$0xff] %v5575
      %5608 = vst [vmem:[#allocation2 + $0x78] sm:$0xff] %v5576
      %5609 = vst [vmem:[#allocation2 + $0x80] sm:$0xff] %v5577
      %5610 = vst [vmem:[#allocation2 + $0x88] sm:$0xff] %v5578
      %5611 = vst [vmem:[#allocation2 + $0x90] sm:$0xff] %v5579
      %5612 = vst [vmem:[#allocation2 + $0x98] sm:$0xff] %v5580
      %5613 = vst [vmem:[#allocation2 + $0xa0] sm:$0xff] %v5581
      %5614 = vst [vmem:[#allocation2 + $0xa8] sm:$0xff] %v5582
      %5615 = vst [vmem:[#allocation2 + $0xb0] sm:$0xff] %v5583
      %5616 = vst [vmem:[#allocation2 + $0xb8] sm:$0xff] %v5584
      %5617 = vst [vmem:[#allocation2 + $0xc0] sm:$0xff] %v5585
      %5618 = vst [vmem:[#allocation2 + $0xc8] sm:$0xff] %v5586
      %5619 = vst [vmem:[#allocation2 + $0xd0] sm:$0xff] %v5587
      %5620 = vst [vmem:[#allocation2 + $0xd8] sm:$0xff] %v5588
      %5621 = vst [vmem:[#allocation2 + $0xe0] sm:$0xff] %v5589
      %5622 = vst [vmem:[#allocation2 + $0xe8] sm:$0xff] %v5590
      %5623 = vst [vmem:[#allocation2 + $0xf0] sm:$0xff] %v5591
      %5624 = vst [vmem:[#allocation2 + $0xf8] sm:$0xff] %v5592
      %v5625 = vld [vmem:[#allocation3 + $0x27] sm:$0xff]
      %v5626 = vld [vmem:[#allocation3 + $0x2f] sm:$0xff]
      %v5627 = vld [vmem:[#allocation3 + $0x37] sm:$0xff]
      %v5628 = vld [vmem:[#allocation3 + $0x3f] sm:$0xff]
      %v5629 = vld [vmem:[#allocation3 + $0x47] sm:$0xff]
      %v5630 = vld [vmem:[#allocation3 + $0x4f] sm:$0xff]
      %v5631 = vld [vmem:[#allocation3 + $0x57] sm:$0xff]
      %v5632 = vld [vmem:[#allocation3 + $0x5f] sm:$0xff]
      %v5633 = vld [vmem:[#allocation3 + $0x67] sm:$0xff]
      %v5634 = vld [vmem:[#allocation3 + $0x6f] sm:$0xff]
      %v5635 = vld [vmem:[#allocation3 + $0x77] sm:$0xff]
      %v5636 = vld [vmem:[#allocation3 + $0x7f] sm:$0xff]
      %v5637 = vld [vmem:[#allocation3 + $0x87] sm:$0xff]
      %v5638 = vld [vmem:[#allocation3 + $0x8f] sm:$0xff]
      %v5639 = vld [vmem:[#allocation3 + $0x97] sm:$0xff]
      %v5640 = vld [vmem:[#allocation3 + $0x9f] sm:$0xff]
      %v5641 = vld [vmem:[#allocation3 + $0xa7] sm:$0xff]
      %v5642 = vld [vmem:[#allocation3 + $0xaf] sm:$0xff]
      %v5643 = vld [vmem:[#allocation3 + $0xb7] sm:$0xff]
      %v5644 = vld [vmem:[#allocation3 + $0xbf] sm:$0xff]
      %v5645 = vld [vmem:[#allocation3 + $0xc7] sm:$0xff]
      %v5646 = vld [vmem:[#allocation3 + $0xcf] sm:$0xff]
      %v5647 = vld [vmem:[#allocation3 + $0xd7] sm:$0xff]
      %v5648 = vld [vmem:[#allocation3 + $0xdf] sm:$0xff]
      %v5649 = vld [vmem:[#allocation3 + $0xe7] sm:$0xff]
      %v5650 = vld [vmem:[#allocation3 + $0xef] sm:$0xff]
      %v5651 = vld [vmem:[#allocation3 + $0xf7] sm:$0xff]
      %v5652 = vld [vmem:[#allocation3 + $0xff] sm:$0xff]
      %v5653 = vld [vmem:[#allocation3 + $0x107] sm:$0xff]
      %v5654 = vld [vmem:[#allocation3 + $0x10f] sm:$0xff]
      %v5655 = vld [vmem:[#allocation3 + $0x117] sm:$0xff]
      %v5656 = vld [vmem:[#allocation3 + $0x11f] sm:$0xff]
      %v5657 = vld [vmem:[#allocation2] sm:$0xff]
      %v5658 = vld [vmem:[#allocation2 + $0x8] sm:$0xff]
      %v5659 = vld [vmem:[#allocation2 + $0x10] sm:$0xff]
      %v5660 = vld [vmem:[#allocation2 + $0x18] sm:$0xff]
      %v5661 = vld [vmem:[#allocation2 + $0x20] sm:$0xff]
      %v5662 = vld [vmem:[#allocation2 + $0x28] sm:$0xff]
      %v5663 = vld [vmem:[#allocation2 + $0x30] sm:$0xff]
      %v5664 = vld [vmem:[#allocation2 + $0x38] sm:$0xff]
      %v5665 = vld [vmem:[#allocation2 + $0x40] sm:$0xff]
      %v5666 = vld [vmem:[#allocation2 + $0x48] sm:$0xff]
      %v5667 = vld [vmem:[#allocation2 + $0x50] sm:$0xff]
      %v5668 = vld [vmem:[#allocation2 + $0x58] sm:$0xff]
      %v5669 = vld [vmem:[#allocation2 + $0x60] sm:$0xff]
      %v5670 = vld [vmem:[#allocation2 + $0x68] sm:$0xff]
      %v5671 = vld [vmem:[#allocation2 + $0x70] sm:$0xff]
      %v5672 = vld [vmem:[#allocation2 + $0x78] sm:$0xff]
      %v5673 = vld [vmem:[#allocation2 + $0x80] sm:$0xff]
      %v5674 = vld [vmem:[#allocation2 + $0x88] sm:$0xff]
      %v5675 = vld [vmem:[#allocation2 + $0x90] sm:$0xff]
      %v5676 = vld [vmem:[#allocation2 + $0x98] sm:$0xff]
      %v5677 = vld [vmem:[#allocation2 + $0xa0] sm:$0xff]
      %v5678 = vld [vmem:[#allocation2 + $0xa8] sm:$0xff]
      %v5679 = vld [vmem:[#allocation2 + $0xb0] sm:$0xff]
      %v5680 = vld [vmem:[#allocation2 + $0xb8] sm:$0xff]
      %v5681 = vld [vmem:[#allocation2 + $0xc0] sm:$0xff]
      %v5682 = vld [vmem:[#allocation2 + $0xc8] sm:$0xff]
      %v5683 = vld [vmem:[#allocation2 + $0xd0] sm:$0xff]
      %v5684 = vld [vmem:[#allocation2 + $0xd8] sm:$0xff]
      %v5685 = vld [vmem:[#allocation2 + $0xe0] sm:$0xff]
      %v5686 = vld [vmem:[#allocation2 + $0xe8] sm:$0xff]
      %v5687 = vld [vmem:[#allocation2 + $0xf0] sm:$0xff]
      %v5688 = vld [vmem:[#allocation2 + $0xf8] sm:$0xff]
      %v5689 = vpack.c.bf16 %v5626, %v5625
      %v5690 = vpack.c.bf16 %v5628, %v5627
      %v5691 = vpack.c.bf16 %v5630, %v5629
      %v5692 = vpack.c.bf16 %v5632, %v5631
      %v5693 = vpack.c.bf16 %v5634, %v5633
      %v5694 = vpack.c.bf16 %v5636, %v5635
      %v5695 = vpack.c.bf16 %v5638, %v5637
      %v5696 = vpack.c.bf16 %v5640, %v5639
      %v5697 = vpack.c.bf16 %v5642, %v5641
      %v5698 = vpack.c.bf16 %v5644, %v5643
      %v5699 = vpack.c.bf16 %v5646, %v5645
      %v5700 = vpack.c.bf16 %v5648, %v5647
      %v5701 = vpack.c.bf16 %v5650, %v5649
      %v5702 = vpack.c.bf16 %v5652, %v5651
      %v5703 = vpack.c.bf16 %v5654, %v5653
      %v5704 = vpack.c.bf16 %v5656, %v5655
      %s5705 = scalar_lea.vmem %s7, 384
      %v5706 = vld [vmem:[%s5705] sm:$0xf]
      %v5707 = vld [vmem:[%s5705 + $0x4] sm:$0xf]
      %v5708 = vld [vmem:[%s5705 + $0x8] sm:$0xf]
      %v5709 = vld [vmem:[%s5705 + $0xc] sm:$0xf]
      %v5710 = vld [vmem:[%s5705 + $0x10] sm:$0xf]
      %v5711 = vld [vmem:[%s5705 + $0x14] sm:$0xf]
      %v5712 = vld [vmem:[%s5705 + $0x18] sm:$0xf]
      %v5713 = vld [vmem:[%s5705 + $0x1c] sm:$0xf]
      %v5714 = vld [vmem:[%s5705 + $0x20] sm:$0xf]
      %v5715 = vld [vmem:[%s5705 + $0x24] sm:$0xf]
      %v5716 = vld [vmem:[%s5705 + $0x28] sm:$0xf]
      %v5717 = vld [vmem:[%s5705 + $0x2c] sm:$0xf]
      %v5718 = vld [vmem:[%s5705 + $0x30] sm:$0xf]
      %v5719 = vld [vmem:[%s5705 + $0x34] sm:$0xf]
      %v5720 = vld [vmem:[%s5705 + $0x38] sm:$0xf]
      %v5721 = vld [vmem:[%s5705 + $0x3c] sm:$0xf]
      %v5738 = vunpack.c.l.b16 %v5706
      %v5739 = vunpack.c.l.b16 %v5707
      %v5740 = vunpack.c.l.b16 %v5708
      %v5741 = vunpack.c.l.b16 %v5709
      %v5742 = vunpack.c.l.b16 %v5710
      %v5743 = vunpack.c.l.b16 %v5711
      %v5744 = vunpack.c.l.b16 %v5712
      %v5745 = vunpack.c.l.b16 %v5713
      %v5746 = vunpack.c.l.b16 %v5714
      %v5747 = vunpack.c.l.b16 %v5715
      %v5748 = vunpack.c.l.b16 %v5716
      %v5749 = vunpack.c.l.b16 %v5717
      %v5750 = vunpack.c.l.b16 %v5718
      %v5751 = vunpack.c.l.b16 %v5719
      %v5752 = vunpack.c.l.b16 %v5720
      %v5753 = vunpack.c.l.b16 %v5721
      %v5754 = vpack.c.b16 %v5739, %v5738
      %v5755 = vpack.c.b16 %v5741, %v5740
      %v5756 = vpack.c.b16 %v5743, %v5742
      %v5757 = vpack.c.b16 %v5745, %v5744
      %v5758 = vpack.c.b16 %v5747, %v5746
      %v5759 = vpack.c.b16 %v5749, %v5748
      %v5760 = vpack.c.b16 %v5751, %v5750
      %v5761 = vpack.c.b16 %v5753, %v5752
      %5770 = vmatprep.subr.bf16.mxu0 0
      %5771 = vmatpush1.bf16.msra.mxu0 %v5754
      %5772 = vmatprep.subr.bf16.mxu0 0
      %5773 = vmatpush1.bf16.msra.mxu0 %v5755
      %5774 = vmatprep.subr.bf16.mxu0 0
      %5775 = vmatpush1.bf16.msra.mxu0 %v5756
      %5776 = vmatprep.subr.bf16.mxu0 0
      %5777 = vmatpush1.bf16.msra.mxu0 %v5757
      %5778 = vmatprep.subr.bf16.mxu0 0
      %5779 = vmatpush1.bf16.msra.mxu0 %v5758
      %5780 = vmatprep.subr.bf16.mxu0 0
      %5781 = vmatpush1.bf16.msra.mxu0 %v5759
      %5782 = vmatprep.subr.bf16.mxu0 0
      %5783 = vmatpush1.bf16.msra.mxu0 %v5760
      %5784 = vmatprep.subr.bf16.mxu0 0
      %5785 = vmatpush1.bf16.msra.mxu0 %v5761
      %5786 = vmatprep.subr.bf16.mxu0 0
      %5787 = vmatpush1.bf16.msra.mxu0 0
      %5788 = vmatprep.subr.bf16.mxu0 0
      %5789 = vmatpush1.bf16.msra.mxu0 0
      %5790 = vmatprep.subr.bf16.mxu0 0
      %5791 = vmatpush1.bf16.msra.mxu0 0
      %5792 = vmatprep.subr.bf16.mxu0 0
      %5793 = vmatpush1.bf16.msra.mxu0 0
      %5794 = vmatprep.subr.bf16.mxu0 0
      %5795 = vmatpush1.bf16.msra.mxu0 0
      %5796 = vmatprep.subr.bf16.mxu0 0
      %5797 = vmatpush1.bf16.msra.mxu0 0
      %5798 = vmatprep.subr.bf16.mxu0 0
      %5799 = vmatpush1.bf16.msra.mxu0 0
      %5800 = vmatprep.subr.bf16.mxu0 0
      %5801 = vmatpush1.bf16.msra.mxu0 0
      %5802 = vmatprep.mubr.bf16.mxu0 0
      %5803 = vmatmul.mubr.bf16.gmra.mrb[0].mxu0 %v5689
      %v5804 = vpop.f32.mrb[0].mxu0
      %v5805 = vadd.f32 0.0, %v5804
      %v5806 = vpop.f32.mrb[0].mxu0
      %v5807 = vpop.f32.mrb[0].mxu0
      %v5808 = vadd.f32 0.0, %v5807
      %v5809 = vpop.f32.mrb[0].mxu0
      %5810 = vmatprep.mubr.bf16.mxu0 0
      %5811 = vmatmul.mubr.bf16.gmra.mrb[0].mxu0 %v5690
      %v5812 = vpop.f32.mrb[0].mxu0
      %v5813 = vadd.f32 0.0, %v5812
      %v5814 = vpop.f32.mrb[0].mxu0
      %v5815 = vpop.f32.mrb[0].mxu0
      %v5816 = vadd.f32 0.0, %v5815
      %v5817 = vpop.f32.mrb[0].mxu0
      %5818 = vmatprep.mubr.bf16.mxu0 0
      %5819 = vmatmul.mubr.bf16.gmra.mrb[0].mxu0 %v5691
      %v5820 = vpop.f32.mrb[0].mxu0
      %v5821 = vadd.f32 0.0, %v5820
      %v5822 = vpop.f32.mrb[0].mxu0
      %v5823 = vpop.f32.mrb[0].mxu0
      %v5824 = vadd.f32 0.0, %v5823
      %v5825 = vpop.f32.mrb[0].mxu0
      %5826 = vmatprep.mubr.bf16.mxu0 0
      %5827 = vmatmul.mubr.bf16.gmra.mrb[0].mxu0 %v5692
      %v5828 = vpop.f32.mrb[0].mxu0
      %v5829 = vadd.f32 0.0, %v5828
      %v5830 = vpop.f32.mrb[0].mxu0
      %v5831 = vpop.f32.mrb[0].mxu0
      %v5832 = vadd.f32 0.0, %v5831
      %v5833 = vpop.f32.mrb[0].mxu0
      %5834 = vmatprep.mubr.bf16.mxu0 0
      %5835 = vmatmul.mubr.bf16.gmra.mrb[0].mxu0 %v5693
      %v5836 = vpop.f32.mrb[0].mxu0
      %v5837 = vadd.f32 0.0, %v5836
      %v5838 = vpop.f32.mrb[0].mxu0
      %v5839 = vpop.f32.mrb[0].mxu0
      %v5840 = vadd.f32 0.0, %v5839
      %v5841 = vpop.f32.mrb[0].mxu0
      %5842 = vmatprep.mubr.bf16.mxu0 0
      %5843 = vmatmul.mubr.bf16.gmra.mrb[0].mxu0 %v5694
      %v5844 = vpop.f32.mrb[0].mxu0
      %v5845 = vadd.f32 0.0, %v5844
      %v5846 = vpop.f32.mrb[0].mxu0
      %v5847 = vpop.f32.mrb[0].mxu0
      %v5848 = vadd.f32 0.0, %v5847
      %v5849 = vpop.f32.mrb[0].mxu0
      %5850 = vmatprep.mubr.bf16.mxu0 0
      %5851 = vmatmul.mubr.bf16.gmra.mrb[0].mxu0 %v5695
      %v5852 = vpop.f32.mrb[0].mxu0
      %v5853 = vadd.f32 0.0, %v5852
      %v5854 = vpop.f32.mrb[0].mxu0
      %v5855 = vpop.f32.mrb[0].mxu0
      %v5856 = vadd.f32 0.0, %v5855
      %v5857 = vpop.f32.mrb[0].mxu0
      %5858 = vmatprep.mubr.bf16.mxu0 0
      %5859 = vmatmul.mubr.bf16.gmra.mrb[0].mxu0 %v5696
      %v5860 = vpop.f32.mrb[0].mxu0
      %v5861 = vadd.f32 0.0, %v5860
      %v5862 = vpop.f32.mrb[0].mxu0
      %v5863 = vpop.f32.mrb[0].mxu0
      %v5864 = vadd.f32 0.0, %v5863
      %v5865 = vpop.f32.mrb[0].mxu0
      %5866 = vmatprep.mubr.bf16.mxu0 0
      %5867 = vmatmul.mubr.bf16.gmra.mrb[0].mxu0 %v5697
      %v5868 = vpop.f32.mrb[0].mxu0
      %v5869 = vadd.f32 0.0, %v5868
      %v5870 = vpop.f32.mrb[0].mxu0
      %v5871 = vpop.f32.mrb[0].mxu0
      %v5872 = vadd.f32 0.0, %v5871
      %v5873 = vpop.f32.mrb[0].mxu0
      %5874 = vmatprep.mubr.bf16.mxu0 0
      %5875 = vmatmul.mubr.bf16.gmra.mrb[0].mxu0 %v5698
      %v5876 = vpop.f32.mrb[0].mxu0
      %v5877 = vadd.f32 0.0, %v5876
      %v5878 = vpop.f32.mrb[0].mxu0
      %v5879 = vpop.f32.mrb[0].mxu0
      %v5880 = vadd.f32 0.0, %v5879
      %v5881 = vpop.f32.mrb[0].mxu0
      %5882 = vmatprep.mubr.bf16.mxu0 0
      %5883 = vmatmul.mubr.bf16.gmra.mrb[0].mxu0 %v5699
      %v5884 = vpop.f32.mrb[0].mxu0
      %v5885 = vadd.f32 0.0, %v5884
      %v5886 = vpop.f32.mrb[0].mxu0
      %v5887 = vpop.f32.mrb[0].mxu0
      %v5888 = vadd.f32 0.0, %v5887
      %v5889 = vpop.f32.mrb[0].mxu0
      %5890 = vmatprep.mubr.bf16.mxu0 0
      %5891 = vmatmul.mubr.bf16.gmra.mrb[0].mxu0 %v5700
      %v5892 = vpop.f32.mrb[0].mxu0
      %v5893 = vadd.f32 0.0, %v5892
      %v5894 = vpop.f32.mrb[0].mxu0
      %v5895 = vpop.f32.mrb[0].mxu0
      %v5896 = vadd.f32 0.0, %v5895
      %v5897 = vpop.f32.mrb[0].mxu0
      %5898 = vmatprep.mubr.bf16.mxu0 0
      %5899 = vmatmul.mubr.bf16.gmra.mrb[0].mxu0 %v5701
      %v5900 = vpop.f32.mrb[0].mxu0
      %v5901 = vadd.f32 0.0, %v5900
      %v5902 = vpop.f32.mrb[0].mxu0
      %v5903 = vpop.f32.mrb[0].mxu0
      %v5904 = vadd.f32 0.0, %v5903
      %v5905 = vpop.f32.mrb[0].mxu0
      %5906 = vmatprep.mubr.bf16.mxu0 0
      %5907 = vmatmul.mubr.bf16.gmra.mrb[0].mxu0 %v5702
      %v5908 = vpop.f32.mrb[0].mxu0
      %v5909 = vadd.f32 0.0, %v5908
      %v5910 = vpop.f32.mrb[0].mxu0
      %v5911 = vpop.f32.mrb[0].mxu0
      %v5912 = vadd.f32 0.0, %v5911
      %v5913 = vpop.f32.mrb[0].mxu0
      %5914 = vmatprep.mubr.bf16.mxu0 0
      %5915 = vmatmul.mubr.bf16.gmra.mrb[0].mxu0 %v5703
      %v5916 = vpop.f32.mrb[0].mxu0
      %v5917 = vadd.f32 0.0, %v5916
      %v5918 = vpop.f32.mrb[0].mxu0
      %v5919 = vpop.f32.mrb[0].mxu0
      %v5920 = vadd.f32 0.0, %v5919
      %v5921 = vpop.f32.mrb[0].mxu0
      %5922 = vmatprep.mubr.bf16.mxu0 0
      %5923 = vmatmul.mubr.bf16.gmra.mrb[0].mxu0 %v5704
      %v5924 = vpop.f32.mrb[0].mxu0
      %v5925 = vadd.f32 0.0, %v5924
      %v5926 = vpop.f32.mrb[0].mxu0
      %v5927 = vpop.f32.mrb[0].mxu0
      %v5928 = vadd.f32 0.0, %v5927
      %v5929 = vpop.f32.mrb[0].mxu0
      %5930 = vdwg.mxu0
      %v5931 = vadd.f32 %v5657, %v5805
      %v5932 = vadd.f32 %v5658, %v5808
      %v5933 = vadd.f32 %v5659, %v5813
      %v5934 = vadd.f32 %v5660, %v5816
      %v5935 = vadd.f32 %v5661, %v5821
      %v5936 = vadd.f32 %v5662, %v5824
      %v5937 = vadd.f32 %v5663, %v5829
      %v5938 = vadd.f32 %v5664, %v5832
      %v5939 = vadd.f32 %v5665, %v5837
      %v5940 = vadd.f32 %v5666, %v5840
      %v5941 = vadd.f32 %v5667, %v5845
      %v5942 = vadd.f32 %v5668, %v5848
      %v5943 = vadd.f32 %v5669, %v5853
      %v5944 = vadd.f32 %v5670, %v5856
      %v5945 = vadd.f32 %v5671, %v5861
      %v5946 = vadd.f32 %v5672, %v5864
      %v5947 = vadd.f32 %v5673, %v5869
      %v5948 = vadd.f32 %v5674, %v5872
      %v5949 = vadd.f32 %v5675, %v5877
      %v5950 = vadd.f32 %v5676, %v5880
      %v5951 = vadd.f32 %v5677, %v5885
      %v5952 = vadd.f32 %v5678, %v5888
      %v5953 = vadd.f32 %v5679, %v5893
      %v5954 = vadd.f32 %v5680, %v5896
      %v5955 = vadd.f32 %v5681, %v5901
      %v5956 = vadd.f32 %v5682, %v5904
      %v5957 = vadd.f32 %v5683, %v5909
      %v5958 = vadd.f32 %v5684, %v5912
      %v5959 = vadd.f32 %v5685, %v5917
      %v5960 = vadd.f32 %v5686, %v5920
      %v5961 = vadd.f32 %v5687, %v5925
      %v5962 = vadd.f32 %v5688, %v5928
      %5963 = vst [vmem:[#allocation2] sm:$0xff] %v5931
      %5964 = vst [vmem:[#allocation2 + $0x8] sm:$0xff] %v5932
      %5965 = vst [vmem:[#allocation2 + $0x10] sm:$0xff] %v5933
      %5966 = vst [vmem:[#allocation2 + $0x18] sm:$0xff] %v5934
      %5967 = vst [vmem:[#allocation2 + $0x20] sm:$0xff] %v5935
      %5968 = vst [vmem:[#allocation2 + $0x28] sm:$0xff] %v5936
      %5969 = vst [vmem:[#allocation2 + $0x30] sm:$0xff] %v5937
      %5970 = vst [vmem:[#allocation2 + $0x38] sm:$0xff] %v5938
      %5971 = vst [vmem:[#allocation2 + $0x40] sm:$0xff] %v5939
      %5972 = vst [vmem:[#allocation2 + $0x48] sm:$0xff] %v5940
      %5973 = vst [vmem:[#allocation2 + $0x50] sm:$0xff] %v5941
      %5974 = vst [vmem:[#allocation2 + $0x58] sm:$0xff] %v5942
      %5975 = vst [vmem:[#allocation2 + $0x60] sm:$0xff] %v5943
      %5976 = vst [vmem:[#allocation2 + $0x68] sm:$0xff] %v5944
      %5977 = vst [vmem:[#allocation2 + $0x70] sm:$0xff] %v5945
      %5978 = vst [vmem:[#allocation2 + $0x78] sm:$0xff] %v5946
      %5979 = vst [vmem:[#allocation2 + $0x80] sm:$0xff] %v5947
      %5980 = vst [vmem:[#allocation2 + $0x88] sm:$0xff] %v5948
      %5981 = vst [vmem:[#allocation2 + $0x90] sm:$0xff] %v5949
      %5982 = vst [vmem:[#allocation2 + $0x98] sm:$0xff] %v5950
      %5983 = vst [vmem:[#allocation2 + $0xa0] sm:$0xff] %v5951
      %5984 = vst [vmem:[#allocation2 + $0xa8] sm:$0xff] %v5952
      %5985 = vst [vmem:[#allocation2 + $0xb0] sm:$0xff] %v5953
      %5986 = vst [vmem:[#allocation2 + $0xb8] sm:$0xff] %v5954
      %5987 = vst [vmem:[#allocation2 + $0xc0] sm:$0xff] %v5955
      %5988 = vst [vmem:[#allocation2 + $0xc8] sm:$0xff] %v5956
      %5989 = vst [vmem:[#allocation2 + $0xd0] sm:$0xff] %v5957
      %5990 = vst [vmem:[#allocation2 + $0xd8] sm:$0xff] %v5958
      %5991 = vst [vmem:[#allocation2 + $0xe0] sm:$0xff] %v5959
      %5992 = vst [vmem:[#allocation2 + $0xe8] sm:$0xff] %v5960
      %5993 = vst [vmem:[#allocation2 + $0xf0] sm:$0xff] %v5961
      %5994 = vst [vmem:[#allocation2 + $0xf8] sm:$0xff] %v5962
      %5995 = vst [vmem:[#allocation3 + $0x18] sm:$0xff] %v4758
      %5996 = vst [vmem:[#allocation3 + $0x20] sm:$0xff] %v4759
      %5997 = vst [vmem:[#allocation3 + $0x28] sm:$0xff] %v4760
      %5998 = vst [vmem:[#allocation3 + $0x30] sm:$0xff] %v4761
      %5999 = vst [vmem:[#allocation3 + $0x38] sm:$0xff] %v4762
      %6000 = vst [vmem:[#allocation3 + $0x40] sm:$0xff] %v4763
      %6001 = vst [vmem:[#allocation3 + $0x48] sm:$0xff] %v4764
      %6002 = vst [vmem:[#allocation3 + $0x50] sm:$0xff] %v4765
      %6003 = vst [vmem:[#allocation3 + $0x58] sm:$0xff] %v4766
      %6004 = vst [vmem:[#allocation3 + $0x60] sm:$0xff] %v4767
      %6005 = vst [vmem:[#allocation3 + $0x68] sm:$0xff] %v4768
      %6006 = vst [vmem:[#allocation3 + $0x70] sm:$0xff] %v4769
      %6007 = vst [vmem:[#allocation3 + $0x78] sm:$0xff] %v4770
      %6008 = vst [vmem:[#allocation3 + $0x80] sm:$0xff] %v4771
      %6009 = vst [vmem:[#allocation3 + $0x88] sm:$0xff] %v4772
      %6010 = vst [vmem:[#allocation3 + $0x90] sm:$0xff] %v4773
      %6011 = vst [vmem:[#allocation3 + $0x98] sm:$0xff] %v4774
      %6012 = vst [vmem:[#allocation3 + $0xa0] sm:$0xff] %v4775
      %6013 = vst [vmem:[#allocation3 + $0xa8] sm:$0xff] %v4776
      %6014 = vst [vmem:[#allocation3 + $0xb0] sm:$0xff] %v4777
      %6015 = vst [vmem:[#allocation3 + $0xb8] sm:$0xff] %v4778
      %6016 = vst [vmem:[#allocation3 + $0xc0] sm:$0xff] %v4779
      %6017 = vst [vmem:[#allocation3 + $0xc8] sm:$0xff] %v4780
      %6018 = vst [vmem:[#allocation3 + $0xd0] sm:$0xff] %v4781
      %6019 = vst [vmem:[#allocation3 + $0xd8] sm:$0xff] %v4782
      %6020 = vst [vmem:[#allocation3 + $0xe0] sm:$0xff] %v4783
      %6021 = vst [vmem:[#allocation3 + $0xe8] sm:$0xff] %v4784
      %6022 = vst [vmem:[#allocation3 + $0xf0] sm:$0xff] %v4785
      %6023 = vst [vmem:[#allocation3 + $0xf8] sm:$0xff] %v4786
      %6024 = vst [vmem:[#allocation3 + $0x100] sm:$0xff] %v4787
      %6025 = vst [vmem:[#allocation3 + $0x108] sm:$0xff] %v4788
      %6026 = vst [vmem:[#allocation3 + $0x110] sm:$0xff] %v4789
      %v6027 = vld [vmem:[#allocation3 + $0x8] sm:$0xff]
      %v6028 = vld [vmem:[#allocation3 + $0x10] sm:$0xff]
      %v6029 = vld [vmem:[#allocation3 + $0x18] sm:$0xff]
      %v6030 = vld [vmem:[#allocation3 + $0x20] sm:$0xff]
      %v6031 = vld [vmem:[#allocation3 + $0x28] sm:$0xff]
      %v6032 = vld [vmem:[#allocation3 + $0x30] sm:$0xff]
      %v6033 = vld [vmem:[#allocation3 + $0x38] sm:$0xff]
      %v6034 = vld [vmem:[#allocation3 + $0x40] sm:$0xff]
      %v6035 = vld [vmem:[#allocation3 + $0x48] sm:$0xff]
      %v6036 = vld [vmem:[#allocation3 + $0x50] sm:$0xff]
      %v6037 = vld [vmem:[#allocation3 + $0x58] sm:$0xff]
      %v6038 = vld [vmem:[#allocation3 + $0x60] sm:$0xff]
      %v6039 = vld [vmem:[#allocation3 + $0x68] sm:$0xff]
      %v6040 = vld [vmem:[#allocation3 + $0x70] sm:$0xff]
      %v6041 = vld [vmem:[#allocation3 + $0x78] sm:$0xff]
      %v6042 = vld [vmem:[#allocation3 + $0x80] sm:$0xff]
      %v6043 = vld [vmem:[#allocation3 + $0x88] sm:$0xff]
      %v6044 = vld [vmem:[#allocation3 + $0x90] sm:$0xff]
      %v6045 = vld [vmem:[#allocation3 + $0x98] sm:$0xff]
      %v6046 = vld [vmem:[#allocation3 + $0xa0] sm:$0xff]
      %v6047 = vld [vmem:[#allocation3 + $0xa8] sm:$0xff]
      %v6048 = vld [vmem:[#allocation3 + $0xb0] sm:$0xff]
      %v6049 = vld [vmem:[#allocation3 + $0xb8] sm:$0xff]
      %v6050 = vld [vmem:[#allocation3 + $0xc0] sm:$0xff]
      %v6051 = vld [vmem:[#allocation3 + $0xc8] sm:$0xff]
      %v6052 = vld [vmem:[#allocation3 + $0xd0] sm:$0xff]
      %v6053 = vld [vmem:[#allocation3 + $0xd8] sm:$0xff]
      %v6054 = vld [vmem:[#allocation3 + $0xe0] sm:$0xff]
      %v6055 = vld [vmem:[#allocation3 + $0xe8] sm:$0xff]
      %v6056 = vld [vmem:[#allocation3 + $0xf0] sm:$0xff]
      %v6057 = vld [vmem:[#allocation3 + $0xf8] sm:$0xff]
      %v6058 = vld [vmem:[#allocation3 + $0x100] sm:$0xff]
      %v6059 = vld [vmem:[#allocation2] sm:$0xff]
      %v6060 = vld [vmem:[#allocation2 + $0x8] sm:$0xff]
      %v6061 = vld [vmem:[#allocation2 + $0x10] sm:$0xff]
      %v6062 = vld [vmem:[#allocation2 + $0x18] sm:$0xff]
      %v6063 = vld [vmem:[#allocation2 + $0x20] sm:$0xff]
      %v6064 = vld [vmem:[#allocation2 + $0x28] sm:$0xff]
      %v6065 = vld [vmem:[#allocation2 + $0x30] sm:$0xff]
      %v6066 = vld [vmem:[#allocation2 + $0x38] sm:$0xff]
      %v6067 = vld [vmem:[#allocation2 + $0x40] sm:$0xff]
      %v6068 = vld [vmem:[#allocation2 + $0x48] sm:$0xff]
      %v6069 = vld [vmem:[#allocation2 + $0x50] sm:$0xff]
      %v6070 = vld [vmem:[#allocation2 + $0x58] sm:$0xff]
      %v6071 = vld [vmem:[#allocation2 + $0x60] sm:$0xff]
      %v6072 = vld [vmem:[#allocation2 + $0x68] sm:$0xff]
      %v6073 = vld [vmem:[#allocation2 + $0x70] sm:$0xff]
      %v6074 = vld [vmem:[#allocation2 + $0x78] sm:$0xff]
      %v6075 = vld [vmem:[#allocation2 + $0x80] sm:$0xff]
      %v6076 = vld [vmem:[#allocation2 + $0x88] sm:$0xff]
      %v6077 = vld [vmem:[#allocation2 + $0x90] sm:$0xff]
      %v6078 = vld [vmem:[#allocation2 + $0x98] sm:$0xff]
      %v6079 = vld [vmem:[#allocation2 + $0xa0] sm:$0xff]
      %v6080 = vld [vmem:[#allocation2 + $0xa8] sm:$0xff]
      %v6081 = vld [vmem:[#allocation2 + $0xb0] sm:$0xff]
      %v6082 = vld [vmem:[#allocation2 + $0xb8] sm:$0xff]
      %v6083 = vld [vmem:[#allocation2 + $0xc0] sm:$0xff]
      %v6084 = vld [vmem:[#allocation2 + $0xc8] sm:$0xff]
      %v6085 = vld [vmem:[#allocation2 + $0xd0] sm:$0xff]
      %v6086 = vld [vmem:[#allocation2 + $0xd8] sm:$0xff]
      %v6087 = vld [vmem:[#allocation2 + $0xe0] sm:$0xff]
      %v6088 = vld [vmem:[#allocation2 + $0xe8] sm:$0xff]
      %v6089 = vld [vmem:[#allocation2 + $0xf0] sm:$0xff]
      %v6090 = vld [vmem:[#allocation2 + $0xf8] sm:$0xff]
      %v6091 = vpack.c.bf16 %v6028, %v6027
      %v6092 = vpack.c.bf16 %v6030, %v6029
      %v6093 = vpack.c.bf16 %v6032, %v6031
      %v6094 = vpack.c.bf16 %v6034, %v6033
      %v6095 = vpack.c.bf16 %v6036, %v6035
      %v6096 = vpack.c.bf16 %v6038, %v6037
      %v6097 = vpack.c.bf16 %v6040, %v6039
      %v6098 = vpack.c.bf16 %v6042, %v6041
      %v6099 = vpack.c.bf16 %v6044, %v6043
      %v6100 = vpack.c.bf16 %v6046, %v6045
      %v6101 = vpack.c.bf16 %v6048, %v6047
      %v6102 = vpack.c.bf16 %v6050, %v6049
      %v6103 = vpack.c.bf16 %v6052, %v6051
      %v6104 = vpack.c.bf16 %v6054, %v6053
      %v6105 = vpack.c.bf16 %v6056, %v6055
      %v6106 = vpack.c.bf16 %v6058, %v6057
      %s6107 = scalar_lea.vmem %s7, 64
      %v6108 = vld [vmem:[%s6107] sm:$0xf]
      %v6109 = vld [vmem:[%s6107 + $0x4] sm:$0xf]
      %v6110 = vld [vmem:[%s6107 + $0x8] sm:$0xf]
      %v6111 = vld [vmem:[%s6107 + $0xc] sm:$0xf]
      %v6112 = vld [vmem:[%s6107 + $0x10] sm:$0xf]
      %v6113 = vld [vmem:[%s6107 + $0x14] sm:$0xf]
      %v6114 = vld [vmem:[%s6107 + $0x18] sm:$0xf]
      %v6115 = vld [vmem:[%s6107 + $0x1c] sm:$0xf]
      %v6116 = vld [vmem:[%s6107 + $0x20] sm:$0xf]
      %v6117 = vld [vmem:[%s6107 + $0x24] sm:$0xf]
      %v6118 = vld [vmem:[%s6107 + $0x28] sm:$0xf]
      %v6119 = vld [vmem:[%s6107 + $0x2c] sm:$0xf]
      %v6120 = vld [vmem:[%s6107 + $0x30] sm:$0xf]
      %v6121 = vld [vmem:[%s6107 + $0x34] sm:$0xf]
      %v6122 = vld [vmem:[%s6107 + $0x38] sm:$0xf]
      %v6123 = vld [vmem:[%s6107 + $0x3c] sm:$0xf]
      %v6140 = vunpack.c.l.b16 %v6108
      %v6141 = vunpack.c.l.b16 %v6109
      %v6142 = vunpack.c.l.b16 %v6110
      %v6143 = vunpack.c.l.b16 %v6111
      %v6144 = vunpack.c.l.b16 %v6112
      %v6145 = vunpack.c.l.b16 %v6113
      %v6146 = vunpack.c.l.b16 %v6114
      %v6147 = vunpack.c.l.b16 %v6115
      %v6148 = vunpack.c.l.b16 %v6116
      %v6149 = vunpack.c.l.b16 %v6117
      %v6150 = vunpack.c.l.b16 %v6118
      %v6151 = vunpack.c.l.b16 %v6119
      %v6152 = vunpack.c.l.b16 %v6120
      %v6153 = vunpack.c.l.b16 %v6121
      %v6154 = vunpack.c.l.b16 %v6122
      %v6155 = vunpack.c.l.b16 %v6123
      %v6156 = vpack.c.b16 %v6141, %v6140
      %v6157 = vpack.c.b16 %v6143, %v6142
      %v6158 = vpack.c.b16 %v6145, %v6144
      %v6159 = vpack.c.b16 %v6147, %v6146
      %v6160 = vpack.c.b16 %v6149, %v6148
      %v6161 = vpack.c.b16 %v6151, %v6150
      %v6162 = vpack.c.b16 %v6153, %v6152
      %v6163 = vpack.c.b16 %v6155, %v6154
      %6172 = vmatprep.subr.bf16.mxu0 0
      %6173 = vmatpush1.bf16.msra.mxu0 %v6156
      %6174 = vmatprep.subr.bf16.mxu0 0
      %6175 = vmatpush1.bf16.msra.mxu0 %v6157
      %6176 = vmatprep.subr.bf16.mxu0 0
      %6177 = vmatpush1.bf16.msra.mxu0 %v6158
      %6178 = vmatprep.subr.bf16.mxu0 0
      %6179 = vmatpush1.bf16.msra.mxu0 %v6159
      %6180 = vmatprep.subr.bf16.mxu0 0
      %6181 = vmatpush1.bf16.msra.mxu0 %v6160
      %6182 = vmatprep.subr.bf16.mxu0 0
      %6183 = vmatpush1.bf16.msra.mxu0 %v6161
      %6184 = vmatprep.subr.bf16.mxu0 0
      %6185 = vmatpush1.bf16.msra.mxu0 %v6162
      %6186 = vmatprep.subr.bf16.mxu0 0
      %6187 = vmatpush1.bf16.msra.mxu0 %v6163
      %6188 = vmatprep.subr.bf16.mxu0 0
      %6189 = vmatpush1.bf16.msra.mxu0 0
      %6190 = vmatprep.subr.bf16.mxu0 0
      %6191 = vmatpush1.bf16.msra.mxu0 0
      %6192 = vmatprep.subr.bf16.mxu0 0
      %6193 = vmatpush1.bf16.msra.mxu0 0
      %6194 = vmatprep.subr.bf16.mxu0 0
      %6195 = vmatpush1.bf16.msra.mxu0 0
      %6196 = vmatprep.subr.bf16.mxu0 0
      %6197 = vmatpush1.bf16.msra.mxu0 0
      %6198 = vmatprep.subr.bf16.mxu0 0
      %6199 = vmatpush1.bf16.msra.mxu0 0
      %6200 = vmatprep.subr.bf16.mxu0 0
      %6201 = vmatpush1.bf16.msra.mxu0 0
      %6202 = vmatprep.subr.bf16.mxu0 0
      %6203 = vmatpush1.bf16.msra.mxu0 0
      %6204 = vmatprep.mubr.bf16.mxu0 0
      %6205 = vmatmul.mubr.bf16.gmra.mrb[0].mxu0 %v6091
      %v6206 = vpop.f32.mrb[0].mxu0
      %v6207 = vadd.f32 0.0, %v6206
      %v6208 = vpop.f32.mrb[0].mxu0
      %v6209 = vpop.f32.mrb[0].mxu0
      %v6210 = vadd.f32 0.0, %v6209
      %v6211 = vpop.f32.mrb[0].mxu0
      %6212 = vmatprep.mubr.bf16.mxu0 0
      %6213 = vmatmul.mubr.bf16.gmra.mrb[0].mxu0 %v6092
      %v6214 = vpop.f32.mrb[0].mxu0
      %v6215 = vadd.f32 0.0, %v6214
      %v6216 = vpop.f32.mrb[0].mxu0
      %v6217 = vpop.f32.mrb[0].mxu0
      %v6218 = vadd.f32 0.0, %v6217
      %v6219 = vpop.f32.mrb[0].mxu0
      %6220 = vmatprep.mubr.bf16.mxu0 0
      %6221 = vmatmul.mubr.bf16.gmra.mrb[0].mxu0 %v6093
      %v6222 = vpop.f32.mrb[0].mxu0
      %v6223 = vadd.f32 0.0, %v6222
      %v6224 = vpop.f32.mrb[0].mxu0
      %v6225 = vpop.f32.mrb[0].mxu0
      %v6226 = vadd.f32 0.0, %v6225
      %v6227 = vpop.f32.mrb[0].mxu0
      %6228 = vmatprep.mubr.bf16.mxu0 0
      %6229 = vmatmul.mubr.bf16.gmra.mrb[0].mxu0 %v6094
      %v6230 = vpop.f32.mrb[0].mxu0
      %v6231 = vadd.f32 0.0, %v6230
      %v6232 = vpop.f32.mrb[0].mxu0
      %v6233 = vpop.f32.mrb[0].mxu0
      %v6234 = vadd.f32 0.0, %v6233
      %v6235 = vpop.f32.mrb[0].mxu0
      %6236 = vmatprep.mubr.bf16.mxu0 0
      %6237 = vmatmul.mubr.bf16.gmra.mrb[0].mxu0 %v6095
      %v6238 = vpop.f32.mrb[0].mxu0
      %v6239 = vadd.f32 0.0, %v6238
      %v6240 = vpop.f32.mrb[0].mxu0
      %v6241 = vpop.f32.mrb[0].mxu0
      %v6242 = vadd.f32 0.0, %v6241
      %v6243 = vpop.f32.mrb[0].mxu0
      %6244 = vmatprep.mubr.bf16.mxu0 0
      %6245 = vmatmul.mubr.bf16.gmra.mrb[0].mxu0 %v6096
      %v6246 = vpop.f32.mrb[0].mxu0
      %v6247 = vadd.f32 0.0, %v6246
      %v6248 = vpop.f32.mrb[0].mxu0
      %v6249 = vpop.f32.mrb[0].mxu0
      %v6250 = vadd.f32 0.0, %v6249
      %v6251 = vpop.f32.mrb[0].mxu0
      %6252 = vmatprep.mubr.bf16.mxu0 0
      %6253 = vmatmul.mubr.bf16.gmra.mrb[0].mxu0 %v6097
      %v6254 = vpop.f32.mrb[0].mxu0
      %v6255 = vadd.f32 0.0, %v6254
      %v6256 = vpop.f32.mrb[0].mxu0
      %v6257 = vpop.f32.mrb[0].mxu0
      %v6258 = vadd.f32 0.0, %v6257
      %v6259 = vpop.f32.mrb[0].mxu0
      %6260 = vmatprep.mubr.bf16.mxu0 0
      %6261 = vmatmul.mubr.bf16.gmra.mrb[0].mxu0 %v6098
      %v6262 = vpop.f32.mrb[0].mxu0
      %v6263 = vadd.f32 0.0, %v6262
      %v6264 = vpop.f32.mrb[0].mxu0
      %v6265 = vpop.f32.mrb[0].mxu0
      %v6266 = vadd.f32 0.0, %v6265
      %v6267 = vpop.f32.mrb[0].mxu0
      %6268 = vmatprep.mubr.bf16.mxu0 0
      %6269 = vmatmul.mubr.bf16.gmra.mrb[0].mxu0 %v6099
      %v6270 = vpop.f32.mrb[0].mxu0
      %v6271 = vadd.f32 0.0, %v6270
      %v6272 = vpop.f32.mrb[0].mxu0
      %v6273 = vpop.f32.mrb[0].mxu0
      %v6274 = vadd.f32 0.0, %v6273
      %v6275 = vpop.f32.mrb[0].mxu0
      %6276 = vmatprep.mubr.bf16.mxu0 0
      %6277 = vmatmul.mubr.bf16.gmra.mrb[0].mxu0 %v6100
      %v6278 = vpop.f32.mrb[0].mxu0
      %v6279 = vadd.f32 0.0, %v6278
      %v6280 = vpop.f32.mrb[0].mxu0
      %v6281 = vpop.f32.mrb[0].mxu0
      %v6282 = vadd.f32 0.0, %v6281
      %v6283 = vpop.f32.mrb[0].mxu0
      %6284 = vmatprep.mubr.bf16.mxu0 0
      %6285 = vmatmul.mubr.bf16.gmra.mrb[0].mxu0 %v6101
      %v6286 = vpop.f32.mrb[0].mxu0
      %v6287 = vadd.f32 0.0, %v6286
      %v6288 = vpop.f32.mrb[0].mxu0
      %v6289 = vpop.f32.mrb[0].mxu0
      %v6290 = vadd.f32 0.0, %v6289
      %v6291 = vpop.f32.mrb[0].mxu0
      %6292 = vmatprep.mubr.bf16.mxu0 0
      %6293 = vmatmul.mubr.bf16.gmra.mrb[0].mxu0 %v6102
      %v6294 = vpop.f32.mrb[0].mxu0
      %v6295 = vadd.f32 0.0, %v6294
      %v6296 = vpop.f32.mrb[0].mxu0
      %v6297 = vpop.f32.mrb[0].mxu0
      %v6298 = vadd.f32 0.0, %v6297
      %v6299 = vpop.f32.mrb[0].mxu0
      %6300 = vmatprep.mubr.bf16.mxu0 0
      %6301 = vmatmul.mubr.bf16.gmra.mrb[0].mxu0 %v6103
      %v6302 = vpop.f32.mrb[0].mxu0
      %v6303 = vadd.f32 0.0, %v6302
      %v6304 = vpop.f32.mrb[0].mxu0
      %v6305 = vpop.f32.mrb[0].mxu0
      %v6306 = vadd.f32 0.0, %v6305
      %v6307 = vpop.f32.mrb[0].mxu0
      %6308 = vmatprep.mubr.bf16.mxu0 0
      %6309 = vmatmul.mubr.bf16.gmra.mrb[0].mxu0 %v6104
      %v6310 = vpop.f32.mrb[0].mxu0
      %v6311 = vadd.f32 0.0, %v6310
      %v6312 = vpop.f32.mrb[0].mxu0
      %v6313 = vpop.f32.mrb[0].mxu0
      %v6314 = vadd.f32 0.0, %v6313
      %v6315 = vpop.f32.mrb[0].mxu0
      %6316 = vmatprep.mubr.bf16.mxu0 0
      %6317 = vmatmul.mubr.bf16.gmra.mrb[0].mxu0 %v6105
      %v6318 = vpop.f32.mrb[0].mxu0
      %v6319 = vadd.f32 0.0, %v6318
      %v6320 = vpop.f32.mrb[0].mxu0
      %v6321 = vpop.f32.mrb[0].mxu0
      %v6322 = vadd.f32 0.0, %v6321
      %v6323 = vpop.f32.mrb[0].mxu0
      %6324 = vmatprep.mubr.bf16.mxu0 0
      %6325 = vmatmul.mubr.bf16.gmra.mrb[0].mxu0 %v6106
      %v6326 = vpop.f32.mrb[0].mxu0
      %v6327 = vadd.f32 0.0, %v6326
      %v6328 = vpop.f32.mrb[0].mxu0
      %v6329 = vpop.f32.mrb[0].mxu0
      %v6330 = vadd.f32 0.0, %v6329
      %v6331 = vpop.f32.mrb[0].mxu0
      %6332 = vdwg.mxu0
      %v6333 = vadd.f32 %v6059, %v6207
      %v6334 = vadd.f32 %v6060, %v6210
      %v6335 = vadd.f32 %v6061, %v6215
      %v6336 = vadd.f32 %v6062, %v6218
      %v6337 = vadd.f32 %v6063, %v6223
      %v6338 = vadd.f32 %v6064, %v6226
      %v6339 = vadd.f32 %v6065, %v6231
      %v6340 = vadd.f32 %v6066, %v6234
      %v6341 = vadd.f32 %v6067, %v6239
      %v6342 = vadd.f32 %v6068, %v6242
      %v6343 = vadd.f32 %v6069, %v6247
      %v6344 = vadd.f32 %v6070, %v6250
      %v6345 = vadd.f32 %v6071, %v6255
      %v6346 = vadd.f32 %v6072, %v6258
      %v6347 = vadd.f32 %v6073, %v6263
      %v6348 = vadd.f32 %v6074, %v6266
      %v6349 = vadd.f32 %v6075, %v6271
      %v6350 = vadd.f32 %v6076, %v6274
      %v6351 = vadd.f32 %v6077, %v6279
      %v6352 = vadd.f32 %v6078, %v6282
      %v6353 = vadd.f32 %v6079, %v6287
      %v6354 = vadd.f32 %v6080, %v6290
      %v6355 = vadd.f32 %v6081, %v6295
      %v6356 = vadd.f32 %v6082, %v6298
      %v6357 = vadd.f32 %v6083, %v6303
      %v6358 = vadd.f32 %v6084, %v6306
      %v6359 = vadd.f32 %v6085, %v6311
      %v6360 = vadd.f32 %v6086, %v6314
      %v6361 = vadd.f32 %v6087, %v6319
      %v6362 = vadd.f32 %v6088, %v6322
      %v6363 = vadd.f32 %v6089, %v6327
      %v6364 = vadd.f32 %v6090, %v6330
      %6365 = vst [vmem:[#allocation2] sm:$0xff] %v6333
      %6366 = vst [vmem:[#allocation2 + $0x8] sm:$0xff] %v6334
      %6367 = vst [vmem:[#allocation2 + $0x10] sm:$0xff] %v6335
      %6368 = vst [vmem:[#allocation2 + $0x18] sm:$0xff] %v6336
      %6369 = vst [vmem:[#allocation2 + $0x20] sm:$0xff] %v6337
      %6370 = vst [vmem:[#allocation2 + $0x28] sm:$0xff] %v6338
      %6371 = vst [vmem:[#allocation2 + $0x30] sm:$0xff] %v6339
      %6372 = vst [vmem:[#allocation2 + $0x38] sm:$0xff] %v6340
      %6373 = vst [vmem:[#allocation2 + $0x40] sm:$0xff] %v6341
      %6374 = vst [vmem:[#allocation2 + $0x48] sm:$0xff] %v6342
      %6375 = vst [vmem:[#allocation2 + $0x50] sm:$0xff] %v6343
      %6376 = vst [vmem:[#allocation2 + $0x58] sm:$0xff] %v6344
      %6377 = vst [vmem:[#allocation2 + $0x60] sm:$0xff] %v6345
      %6378 = vst [vmem:[#allocation2 + $0x68] sm:$0xff] %v6346
      %6379 = vst [vmem:[#allocation2 + $0x70] sm:$0xff] %v6347
      %6380 = vst [vmem:[#allocation2 + $0x78] sm:$0xff] %v6348
      %6381 = vst [vmem:[#allocation2 + $0x80] sm:$0xff] %v6349
      %6382 = vst [vmem:[#allocation2 + $0x88] sm:$0xff] %v6350
      %6383 = vst [vmem:[#allocation2 + $0x90] sm:$0xff] %v6351
      %6384 = vst [vmem:[#allocation2 + $0x98] sm:$0xff] %v6352
      %6385 = vst [vmem:[#allocation2 + $0xa0] sm:$0xff] %v6353
      %6386 = vst [vmem:[#allocation2 + $0xa8] sm:$0xff] %v6354
      %6387 = vst [vmem:[#allocation2 + $0xb0] sm:$0xff] %v6355
      %6388 = vst [vmem:[#allocation2 + $0xb8] sm:$0xff] %v6356
      %6389 = vst [vmem:[#allocation2 + $0xc0] sm:$0xff] %v6357
      %6390 = vst [vmem:[#allocation2 + $0xc8] sm:$0xff] %v6358
      %6391 = vst [vmem:[#allocation2 + $0xd0] sm:$0xff] %v6359
      %6392 = vst [vmem:[#allocation2 + $0xd8] sm:$0xff] %v6360
      %6393 = vst [vmem:[#allocation2 + $0xe0] sm:$0xff] %v6361
      %6394 = vst [vmem:[#allocation2 + $0xe8] sm:$0xff] %v6362
      %6395 = vst [vmem:[#allocation2 + $0xf0] sm:$0xff] %v6363
      %6396 = vst [vmem:[#allocation2 + $0xf8] sm:$0xff] %v6364
      %v6397 = vld [vmem:[#allocation3 + $0x18] sm:$0xff]
      %v6398 = vld [vmem:[#allocation3 + $0x20] sm:$0xff]
      %v6399 = vld [vmem:[#allocation3 + $0x28] sm:$0xff]
      %v6400 = vld [vmem:[#allocation3 + $0x30] sm:$0xff]
      %v6401 = vld [vmem:[#allocation3 + $0x38] sm:$0xff]
      %v6402 = vld [vmem:[#allocation3 + $0x40] sm:$0xff]
      %v6403 = vld [vmem:[#allocation3 + $0x48] sm:$0xff]
      %v6404 = vld [vmem:[#allocation3 + $0x50] sm:$0xff]
      %v6405 = vld [vmem:[#allocation3 + $0x58] sm:$0xff]
      %v6406 = vld [vmem:[#allocation3 + $0x60] sm:$0xff]
      %v6407 = vld [vmem:[#allocation3 + $0x68] sm:$0xff]
      %v6408 = vld [vmem:[#allocation3 + $0x70] sm:$0xff]
      %v6409 = vld [vmem:[#allocation3 + $0x78] sm:$0xff]
      %v6410 = vld [vmem:[#allocation3 + $0x80] sm:$0xff]
      %v6411 = vld [vmem:[#allocation3 + $0x88] sm:$0xff]
      %v6412 = vld [vmem:[#allocation3 + $0x90] sm:$0xff]
      %v6413 = vld [vmem:[#allocation3 + $0x98] sm:$0xff]
      %v6414 = vld [vmem:[#allocation3 + $0xa0] sm:$0xff]
      %v6415 = vld [vmem:[#allocation3 + $0xa8] sm:$0xff]
      %v6416 = vld [vmem:[#allocation3 + $0xb0] sm:$0xff]
      %v6417 = vld [vmem:[#allocation3 + $0xb8] sm:$0xff]
      %v6418 = vld [vmem:[#allocation3 + $0xc0] sm:$0xff]
      %v6419 = vld [vmem:[#allocation3 + $0xc8] sm:$0xff]
      %v6420 = vld [vmem:[#allocation3 + $0xd0] sm:$0xff]
      %v6421 = vld [vmem:[#allocation3 + $0xd8] sm:$0xff]
      %v6422 = vld [vmem:[#allocation3 + $0xe0] sm:$0xff]
      %v6423 = vld [vmem:[#allocation3 + $0xe8] sm:$0xff]
      %v6424 = vld [vmem:[#allocation3 + $0xf0] sm:$0xff]
      %v6425 = vld [vmem:[#allocation3 + $0xf8] sm:$0xff]
      %v6426 = vld [vmem:[#allocation3 + $0x100] sm:$0xff]
      %v6427 = vld [vmem:[#allocation3 + $0x108] sm:$0xff]
      %v6428 = vld [vmem:[#allocation3 + $0x110] sm:$0xff]
      %v6429 = vld [vmem:[#allocation2] sm:$0xff]
      %v6430 = vld [vmem:[#allocation2 + $0x8] sm:$0xff]
      %v6431 = vld [vmem:[#allocation2 + $0x10] sm:$0xff]
      %v6432 = vld [vmem:[#allocation2 + $0x18] sm:$0xff]
      %v6433 = vld [vmem:[#allocation2 + $0x20] sm:$0xff]
      %v6434 = vld [vmem:[#allocation2 + $0x28] sm:$0xff]
      %v6435 = vld [vmem:[#allocation2 + $0x30] sm:$0xff]
      %v6436 = vld [vmem:[#allocation2 + $0x38] sm:$0xff]
      %v6437 = vld [vmem:[#allocation2 + $0x40] sm:$0xff]
      %v6438 = vld [vmem:[#allocation2 + $0x48] sm:$0xff]
      %v6439 = vld [vmem:[#allocation2 + $0x50] sm:$0xff]
      %v6440 = vld [vmem:[#allocation2 + $0x58] sm:$0xff]
      %v6441 = vld [vmem:[#allocation2 + $0x60] sm:$0xff]
      %v6442 = vld [vmem:[#allocation2 + $0x68] sm:$0xff]
      %v6443 = vld [vmem:[#allocation2 + $0x70] sm:$0xff]
      %v6444 = vld [vmem:[#allocation2 + $0x78] sm:$0xff]
      %v6445 = vld [vmem:[#allocation2 + $0x80] sm:$0xff]
      %v6446 = vld [vmem:[#allocation2 + $0x88] sm:$0xff]
      %v6447 = vld [vmem:[#allocation2 + $0x90] sm:$0xff]
      %v6448 = vld [vmem:[#allocation2 + $0x98] sm:$0xff]
      %v6449 = vld [vmem:[#allocation2 + $0xa0] sm:$0xff]
      %v6450 = vld [vmem:[#allocation2 + $0xa8] sm:$0xff]
      %v6451 = vld [vmem:[#allocation2 + $0xb0] sm:$0xff]
      %v6452 = vld [vmem:[#allocation2 + $0xb8] sm:$0xff]
      %v6453 = vld [vmem:[#allocation2 + $0xc0] sm:$0xff]
      %v6454 = vld [vmem:[#allocation2 + $0xc8] sm:$0xff]
      %v6455 = vld [vmem:[#allocation2 + $0xd0] sm:$0xff]
      %v6456 = vld [vmem:[#allocation2 + $0xd8] sm:$0xff]
      %v6457 = vld [vmem:[#allocation2 + $0xe0] sm:$0xff]
      %v6458 = vld [vmem:[#allocation2 + $0xe8] sm:$0xff]
      %v6459 = vld [vmem:[#allocation2 + $0xf0] sm:$0xff]
      %v6460 = vld [vmem:[#allocation2 + $0xf8] sm:$0xff]
      %v6461 = vpack.c.bf16 %v6398, %v6397
      %v6462 = vpack.c.bf16 %v6400, %v6399
      %v6463 = vpack.c.bf16 %v6402, %v6401
      %v6464 = vpack.c.bf16 %v6404, %v6403
      %v6465 = vpack.c.bf16 %v6406, %v6405
      %v6466 = vpack.c.bf16 %v6408, %v6407
      %v6467 = vpack.c.bf16 %v6410, %v6409
      %v6468 = vpack.c.bf16 %v6412, %v6411
      %v6469 = vpack.c.bf16 %v6414, %v6413
      %v6470 = vpack.c.bf16 %v6416, %v6415
      %v6471 = vpack.c.bf16 %v6418, %v6417
      %v6472 = vpack.c.bf16 %v6420, %v6419
      %v6473 = vpack.c.bf16 %v6422, %v6421
      %v6474 = vpack.c.bf16 %v6424, %v6423
      %v6475 = vpack.c.bf16 %v6426, %v6425
      %v6476 = vpack.c.bf16 %v6428, %v6427
      %s6477 = scalar_lea.vmem %s7, 256
      %v6478 = vld [vmem:[%s6477] sm:$0xf]
      %v6479 = vld [vmem:[%s6477 + $0x4] sm:$0xf]
      %v6480 = vld [vmem:[%s6477 + $0x8] sm:$0xf]
      %v6481 = vld [vmem:[%s6477 + $0xc] sm:$0xf]
      %v6482 = vld [vmem:[%s6477 + $0x10] sm:$0xf]
      %v6483 = vld [vmem:[%s6477 + $0x14] sm:$0xf]
      %v6484 = vld [vmem:[%s6477 + $0x18] sm:$0xf]
      %v6485 = vld [vmem:[%s6477 + $0x1c] sm:$0xf]
      %v6486 = vld [vmem:[%s6477 + $0x20] sm:$0xf]
      %v6487 = vld [vmem:[%s6477 + $0x24] sm:$0xf]
      %v6488 = vld [vmem:[%s6477 + $0x28] sm:$0xf]
      %v6489 = vld [vmem:[%s6477 + $0x2c] sm:$0xf]
      %v6490 = vld [vmem:[%s6477 + $0x30] sm:$0xf]
      %v6491 = vld [vmem:[%s6477 + $0x34] sm:$0xf]
      %v6492 = vld [vmem:[%s6477 + $0x38] sm:$0xf]
      %v6493 = vld [vmem:[%s6477 + $0x3c] sm:$0xf]
      %v6510 = vunpack.c.l.b16 %v6478
      %v6511 = vunpack.c.l.b16 %v6479
      %v6512 = vunpack.c.l.b16 %v6480
      %v6513 = vunpack.c.l.b16 %v6481
      %v6514 = vunpack.c.l.b16 %v6482
      %v6515 = vunpack.c.l.b16 %v6483
      %v6516 = vunpack.c.l.b16 %v6484
      %v6517 = vunpack.c.l.b16 %v6485
      %v6518 = vunpack.c.l.b16 %v6486
      %v6519 = vunpack.c.l.b16 %v6487
      %v6520 = vunpack.c.l.b16 %v6488
      %v6521 = vunpack.c.l.b16 %v6489
      %v6522 = vunpack.c.l.b16 %v6490
      %v6523 = vunpack.c.l.b16 %v6491
      %v6524 = vunpack.c.l.b16 %v6492
      %v6525 = vunpack.c.l.b16 %v6493
      %v6526 = vpack.c.b16 %v6511, %v6510
      %v6527 = vpack.c.b16 %v6513, %v6512
      %v6528 = vpack.c.b16 %v6515, %v6514
      %v6529 = vpack.c.b16 %v6517, %v6516
      %v6530 = vpack.c.b16 %v6519, %v6518
      %v6531 = vpack.c.b16 %v6521, %v6520
      %v6532 = vpack.c.b16 %v6523, %v6522
      %v6533 = vpack.c.b16 %v6525, %v6524
      %6542 = vmatprep.subr.bf16.mxu0 0
      %6543 = vmatpush1.bf16.msra.mxu0 %v6526
      %6544 = vmatprep.subr.bf16.mxu0 0
      %6545 = vmatpush1.bf16.msra.mxu0 %v6527
      %6546 = vmatprep.subr.bf16.mxu0 0
      %6547 = vmatpush1.bf16.msra.mxu0 %v6528
      %6548 = vmatprep.subr.bf16.mxu0 0
      %6549 = vmatpush1.bf16.msra.mxu0 %v6529
      %6550 = vmatprep.subr.bf16.mxu0 0
      %6551 = vmatpush1.bf16.msra.mxu0 %v6530
      %6552 = vmatprep.subr.bf16.mxu0 0
      %6553 = vmatpush1.bf16.msra.mxu0 %v6531
      %6554 = vmatprep.subr.bf16.mxu0 0
      %6555 = vmatpush1.bf16.msra.mxu0 %v6532
      %6556 = vmatprep.subr.bf16.mxu0 0
      %6557 = vmatpush1.bf16.msra.mxu0 %v6533
      %6558 = vmatprep.subr.bf16.mxu0 0
      %6559 = vmatpush1.bf16.msra.mxu0 0
      %6560 = vmatprep.subr.bf16.mxu0 0
      %6561 = vmatpush1.bf16.msra.mxu0 0
      %6562 = vmatprep.subr.bf16.mxu0 0
      %6563 = vmatpush1.bf16.msra.mxu0 0
      %6564 = vmatprep.subr.bf16.mxu0 0
      %6565 = vmatpush1.bf16.msra.mxu0 0
      %6566 = vmatprep.subr.bf16.mxu0 0
      %6567 = vmatpush1.bf16.msra.mxu0 0
      %6568 = vmatprep.subr.bf16.mxu0 0
      %6569 = vmatpush1.bf16.msra.mxu0 0
      %6570 = vmatprep.subr.bf16.mxu0 0
      %6571 = vmatpush1.bf16.msra.mxu0 0
      %6572 = vmatprep.subr.bf16.mxu0 0
      %6573 = vmatpush1.bf16.msra.mxu0 0
      %6574 = vmatprep.mubr.bf16.mxu0 0
      %6575 = vmatmul.mubr.bf16.gmra.mrb[0].mxu0 %v6461
      %v6576 = vpop.f32.mrb[0].mxu0
      %v6577 = vadd.f32 0.0, %v6576
      %v6578 = vpop.f32.mrb[0].mxu0
      %v6579 = vpop.f32.mrb[0].mxu0
      %v6580 = vadd.f32 0.0, %v6579
      %v6581 = vpop.f32.mrb[0].mxu0
      %6582 = vmatprep.mubr.bf16.mxu0 0
      %6583 = vmatmul.mubr.bf16.gmra.mrb[0].mxu0 %v6462
      %v6584 = vpop.f32.mrb[0].mxu0
      %v6585 = vadd.f32 0.0, %v6584
      %v6586 = vpop.f32.mrb[0].mxu0
      %v6587 = vpop.f32.mrb[0].mxu0
      %v6588 = vadd.f32 0.0, %v6587
      %v6589 = vpop.f32.mrb[0].mxu0
      %6590 = vmatprep.mubr.bf16.mxu0 0
      %6591 = vmatmul.mubr.bf16.gmra.mrb[0].mxu0 %v6463
      %v6592 = vpop.f32.mrb[0].mxu0
      %v6593 = vadd.f32 0.0, %v6592
      %v6594 = vpop.f32.mrb[0].mxu0
      %v6595 = vpop.f32.mrb[0].mxu0
      %v6596 = vadd.f32 0.0, %v6595
      %v6597 = vpop.f32.mrb[0].mxu0
      %6598 = vmatprep.mubr.bf16.mxu0 0
      %6599 = vmatmul.mubr.bf16.gmra.mrb[0].mxu0 %v6464
      %v6600 = vpop.f32.mrb[0].mxu0
      %v6601 = vadd.f32 0.0, %v6600
      %v6602 = vpop.f32.mrb[0].mxu0
      %v6603 = vpop.f32.mrb[0].mxu0
      %v6604 = vadd.f32 0.0, %v6603
      %v6605 = vpop.f32.mrb[0].mxu0
      %6606 = vmatprep.mubr.bf16.mxu0 0
      %6607 = vmatmul.mubr.bf16.gmra.mrb[0].mxu0 %v6465
      %v6608 = vpop.f32.mrb[0].mxu0
      %v6609 = vadd.f32 0.0, %v6608
      %v6610 = vpop.f32.mrb[0].mxu0
      %v6611 = vpop.f32.mrb[0].mxu0
      %v6612 = vadd.f32 0.0, %v6611
      %v6613 = vpop.f32.mrb[0].mxu0
      %6614 = vmatprep.mubr.bf16.mxu0 0
      %6615 = vmatmul.mubr.bf16.gmra.mrb[0].mxu0 %v6466
      %v6616 = vpop.f32.mrb[0].mxu0
      %v6617 = vadd.f32 0.0, %v6616
      %v6618 = vpop.f32.mrb[0].mxu0
      %v6619 = vpop.f32.mrb[0].mxu0
      %v6620 = vadd.f32 0.0, %v6619
      %v6621 = vpop.f32.mrb[0].mxu0
      %6622 = vmatprep.mubr.bf16.mxu0 0
      %6623 = vmatmul.mubr.bf16.gmra.mrb[0].mxu0 %v6467
      %v6624 = vpop.f32.mrb[0].mxu0
      %v6625 = vadd.f32 0.0, %v6624
      %v6626 = vpop.f32.mrb[0].mxu0
      %v6627 = vpop.f32.mrb[0].mxu0
      %v6628 = vadd.f32 0.0, %v6627
      %v6629 = vpop.f32.mrb[0].mxu0
      %6630 = vmatprep.mubr.bf16.mxu0 0
      %6631 = vmatmul.mubr.bf16.gmra.mrb[0].mxu0 %v6468
      %v6632 = vpop.f32.mrb[0].mxu0
      %v6633 = vadd.f32 0.0, %v6632
      %v6634 = vpop.f32.mrb[0].mxu0
      %v6635 = vpop.f32.mrb[0].mxu0
      %v6636 = vadd.f32 0.0, %v6635
      %v6637 = vpop.f32.mrb[0].mxu0
      %6638 = vmatprep.mubr.bf16.mxu0 0
      %6639 = vmatmul.mubr.bf16.gmra.mrb[0].mxu0 %v6469
      %v6640 = vpop.f32.mrb[0].mxu0
      %v6641 = vadd.f32 0.0, %v6640
      %v6642 = vpop.f32.mrb[0].mxu0
      %v6643 = vpop.f32.mrb[0].mxu0
      %v6644 = vadd.f32 0.0, %v6643
      %v6645 = vpop.f32.mrb[0].mxu0
      %6646 = vmatprep.mubr.bf16.mxu0 0
      %6647 = vmatmul.mubr.bf16.gmra.mrb[0].mxu0 %v6470
      %v6648 = vpop.f32.mrb[0].mxu0
      %v6649 = vadd.f32 0.0, %v6648
      %v6650 = vpop.f32.mrb[0].mxu0
      %v6651 = vpop.f32.mrb[0].mxu0
      %v6652 = vadd.f32 0.0, %v6651
      %v6653 = vpop.f32.mrb[0].mxu0
      %6654 = vmatprep.mubr.bf16.mxu0 0
      %6655 = vmatmul.mubr.bf16.gmra.mrb[0].mxu0 %v6471
      %v6656 = vpop.f32.mrb[0].mxu0
      %v6657 = vadd.f32 0.0, %v6656
      %v6658 = vpop.f32.mrb[0].mxu0
      %v6659 = vpop.f32.mrb[0].mxu0
      %v6660 = vadd.f32 0.0, %v6659
      %v6661 = vpop.f32.mrb[0].mxu0
      %6662 = vmatprep.mubr.bf16.mxu0 0
      %6663 = vmatmul.mubr.bf16.gmra.mrb[0].mxu0 %v6472
      %v6664 = vpop.f32.mrb[0].mxu0
      %v6665 = vadd.f32 0.0, %v6664
      %v6666 = vpop.f32.mrb[0].mxu0
      %v6667 = vpop.f32.mrb[0].mxu0
      %v6668 = vadd.f32 0.0, %v6667
      %v6669 = vpop.f32.mrb[0].mxu0
      %6670 = vmatprep.mubr.bf16.mxu0 0
      %6671 = vmatmul.mubr.bf16.gmra.mrb[0].mxu0 %v6473
      %v6672 = vpop.f32.mrb[0].mxu0
      %v6673 = vadd.f32 0.0, %v6672
      %v6674 = vpop.f32.mrb[0].mxu0
      %v6675 = vpop.f32.mrb[0].mxu0
      %v6676 = vadd.f32 0.0, %v6675
      %v6677 = vpop.f32.mrb[0].mxu0
      %6678 = vmatprep.mubr.bf16.mxu0 0
      %6679 = vmatmul.mubr.bf16.gmra.mrb[0].mxu0 %v6474
      %v6680 = vpop.f32.mrb[0].mxu0
      %v6681 = vadd.f32 0.0, %v6680
      %v6682 = vpop.f32.mrb[0].mxu0
      %v6683 = vpop.f32.mrb[0].mxu0
      %v6684 = vadd.f32 0.0, %v6683
      %v6685 = vpop.f32.mrb[0].mxu0
      %6686 = vmatprep.mubr.bf16.mxu0 0
      %6687 = vmatmul.mubr.bf16.gmra.mrb[0].mxu0 %v6475
      %v6688 = vpop.f32.mrb[0].mxu0
      %v6689 = vadd.f32 0.0, %v6688
      %v6690 = vpop.f32.mrb[0].mxu0
      %v6691 = vpop.f32.mrb[0].mxu0
      %v6692 = vadd.f32 0.0, %v6691
      %v6693 = vpop.f32.mrb[0].mxu0
      %6694 = vmatprep.mubr.bf16.mxu0 0
      %6695 = vmatmul.mubr.bf16.gmra.mrb[0].mxu0 %v6476
      %v6696 = vpop.f32.mrb[0].mxu0
      %v6697 = vadd.f32 0.0, %v6696
      %v6698 = vpop.f32.mrb[0].mxu0
      %v6699 = vpop.f32.mrb[0].mxu0
      %v6700 = vadd.f32 0.0, %v6699
      %v6701 = vpop.f32.mrb[0].mxu0
      %6702 = vdwg.mxu0
      %v6703 = vadd.f32 %v6429, %v6577
      %v6704 = vadd.f32 %v6430, %v6580
      %v6705 = vadd.f32 %v6431, %v6585
      %v6706 = vadd.f32 %v6432, %v6588
      %v6707 = vadd.f32 %v6433, %v6593
      %v6708 = vadd.f32 %v6434, %v6596
      %v6709 = vadd.f32 %v6435, %v6601
      %v6710 = vadd.f32 %v6436, %v6604
      %v6711 = vadd.f32 %v6437, %v6609
      %v6712 = vadd.f32 %v6438, %v6612
      %v6713 = vadd.f32 %v6439, %v6617
      %v6714 = vadd.f32 %v6440, %v6620
      %v6715 = vadd.f32 %v6441, %v6625
      %v6716 = vadd.f32 %v6442, %v6628
      %v6717 = vadd.f32 %v6443, %v6633
      %v6718 = vadd.f32 %v6444, %v6636
      %v6719 = vadd.f32 %v6445, %v6641
      %v6720 = vadd.f32 %v6446, %v6644
      %v6721 = vadd.f32 %v6447, %v6649
      %v6722 = vadd.f32 %v6448, %v6652
      %v6723 = vadd.f32 %v6449, %v6657
      %v6724 = vadd.f32 %v6450, %v6660
      %v6725 = vadd.f32 %v6451, %v6665
      %v6726 = vadd.f32 %v6452, %v6668
      %v6727 = vadd.f32 %v6453, %v6673
      %v6728 = vadd.f32 %v6454, %v6676
      %v6729 = vadd.f32 %v6455, %v6681
      %v6730 = vadd.f32 %v6456, %v6684
      %v6731 = vadd.f32 %v6457, %v6689
      %v6732 = vadd.f32 %v6458, %v6692
      %v6733 = vadd.f32 %v6459, %v6697
      %v6734 = vadd.f32 %v6460, %v6700
      %6735 = vst [vmem:[#allocation2] sm:$0xff] %v6703
      %6736 = vst [vmem:[#allocation2 + $0x8] sm:$0xff] %v6704
      %6737 = vst [vmem:[#allocation2 + $0x10] sm:$0xff] %v6705
      %6738 = vst [vmem:[#allocation2 + $0x18] sm:$0xff] %v6706
      %6739 = vst [vmem:[#allocation2 + $0x20] sm:$0xff] %v6707
      %6740 = vst [vmem:[#allocation2 + $0x28] sm:$0xff] %v6708
      %6741 = vst [vmem:[#allocation2 + $0x30] sm:$0xff] %v6709
      %6742 = vst [vmem:[#allocation2 + $0x38] sm:$0xff] %v6710
      %6743 = vst [vmem:[#allocation2 + $0x40] sm:$0xff] %v6711
      %6744 = vst [vmem:[#allocation2 + $0x48] sm:$0xff] %v6712
      %6745 = vst [vmem:[#allocation2 + $0x50] sm:$0xff] %v6713
      %6746 = vst [vmem:[#allocation2 + $0x58] sm:$0xff] %v6714
      %6747 = vst [vmem:[#allocation2 + $0x60] sm:$0xff] %v6715
      %6748 = vst [vmem:[#allocation2 + $0x68] sm:$0xff] %v6716
      %6749 = vst [vmem:[#allocation2 + $0x70] sm:$0xff] %v6717
      %6750 = vst [vmem:[#allocation2 + $0x78] sm:$0xff] %v6718
      %6751 = vst [vmem:[#allocation2 + $0x80] sm:$0xff] %v6719
      %6752 = vst [vmem:[#allocation2 + $0x88] sm:$0xff] %v6720
      %6753 = vst [vmem:[#allocation2 + $0x90] sm:$0xff] %v6721
      %6754 = vst [vmem:[#allocation2 + $0x98] sm:$0xff] %v6722
      %6755 = vst [vmem:[#allocation2 + $0xa0] sm:$0xff] %v6723
      %6756 = vst [vmem:[#allocation2 + $0xa8] sm:$0xff] %v6724
      %6757 = vst [vmem:[#allocation2 + $0xb0] sm:$0xff] %v6725
      %6758 = vst [vmem:[#allocation2 + $0xb8] sm:$0xff] %v6726
      %6759 = vst [vmem:[#allocation2 + $0xc0] sm:$0xff] %v6727
      %6760 = vst [vmem:[#allocation2 + $0xc8] sm:$0xff] %v6728
      %6761 = vst [vmem:[#allocation2 + $0xd0] sm:$0xff] %v6729
      %6762 = vst [vmem:[#allocation2 + $0xd8] sm:$0xff] %v6730
      %6763 = vst [vmem:[#allocation2 + $0xe0] sm:$0xff] %v6731
      %6764 = vst [vmem:[#allocation2 + $0xe8] sm:$0xff] %v6732
      %6765 = vst [vmem:[#allocation2 + $0xf0] sm:$0xff] %v6733
      %6766 = vst [vmem:[#allocation2 + $0xf8] sm:$0xff] %v6734
      %v6767 = vld [vmem:[#allocation3 + $0x28] sm:$0xff]
      %v6768 = vld [vmem:[#allocation3 + $0x30] sm:$0xff]
      %v6769 = vld [vmem:[#allocation3 + $0x38] sm:$0xff]
      %v6770 = vld [vmem:[#allocation3 + $0x40] sm:$0xff]
      %v6771 = vld [vmem:[#allocation3 + $0x48] sm:$0xff]
      %v6772 = vld [vmem:[#allocation3 + $0x50] sm:$0xff]
      %v6773 = vld [vmem:[#allocation3 + $0x58] sm:$0xff]
      %v6774 = vld [vmem:[#allocation3 + $0x60] sm:$0xff]
      %v6775 = vld [vmem:[#allocation3 + $0x68] sm:$0xff]
      %v6776 = vld [vmem:[#allocation3 + $0x70] sm:$0xff]
      %v6777 = vld [vmem:[#allocation3 + $0x78] sm:$0xff]
      %v6778 = vld [vmem:[#allocation3 + $0x80] sm:$0xff]
      %v6779 = vld [vmem:[#allocation3 + $0x88] sm:$0xff]
      %v6780 = vld [vmem:[#allocation3 + $0x90] sm:$0xff]
      %v6781 = vld [vmem:[#allocation3 + $0x98] sm:$0xff]
      %v6782 = vld [vmem:[#allocation3 + $0xa0] sm:$0xff]
      %v6783 = vld [vmem:[#allocation3 + $0xa8] sm:$0xff]
      %v6784 = vld [vmem:[#allocation3 + $0xb0] sm:$0xff]
      %v6785 = vld [vmem:[#allocation3 + $0xb8] sm:$0xff]
      %v6786 = vld [vmem:[#allocation3 + $0xc0] sm:$0xff]
      %v6787 = vld [vmem:[#allocation3 + $0xc8] sm:$0xff]
      %v6788 = vld [vmem:[#allocation3 + $0xd0] sm:$0xff]
      %v6789 = vld [vmem:[#allocation3 + $0xd8] sm:$0xff]
      %v6790 = vld [vmem:[#allocation3 + $0xe0] sm:$0xff]
      %v6791 = vld [vmem:[#allocation3 + $0xe8] sm:$0xff]
      %v6792 = vld [vmem:[#allocation3 + $0xf0] sm:$0xff]
      %v6793 = vld [vmem:[#allocation3 + $0xf8] sm:$0xff]
      %v6794 = vld [vmem:[#allocation3 + $0x100] sm:$0xff]
      %v6795 = vld [vmem:[#allocation3 + $0x108] sm:$0xff]
      %v6796 = vld [vmem:[#allocation3 + $0x110] sm:$0xff]
      %v6797 = vld [vmem:[#allocation3 + $0x118] sm:$0xff]
      %v6798 = vld [vmem:[#allocation3 + $0x120] sm:$0xff]
      %v6799 = vld [vmem:[#allocation2] sm:$0xff]
      %v6800 = vld [vmem:[#allocation2 + $0x8] sm:$0xff]
      %v6801 = vld [vmem:[#allocation2 + $0x10] sm:$0xff]
      %v6802 = vld [vmem:[#allocation2 + $0x18] sm:$0xff]
      %v6803 = vld [vmem:[#allocation2 + $0x20] sm:$0xff]
      %v6804 = vld [vmem:[#allocation2 + $0x28] sm:$0xff]
      %v6805 = vld [vmem:[#allocation2 + $0x30] sm:$0xff]
      %v6806 = vld [vmem:[#allocation2 + $0x38] sm:$0xff]
      %v6807 = vld [vmem:[#allocation2 + $0x40] sm:$0xff]
      %v6808 = vld [vmem:[#allocation2 + $0x48] sm:$0xff]
      %v6809 = vld [vmem:[#allocation2 + $0x50] sm:$0xff]
      %v6810 = vld [vmem:[#allocation2 + $0x58] sm:$0xff]
      %v6811 = vld [vmem:[#allocation2 + $0x60] sm:$0xff]
      %v6812 = vld [vmem:[#allocation2 + $0x68] sm:$0xff]
      %v6813 = vld [vmem:[#allocation2 + $0x70] sm:$0xff]
      %v6814 = vld [vmem:[#allocation2 + $0x78] sm:$0xff]
      %v6815 = vld [vmem:[#allocation2 + $0x80] sm:$0xff]
      %v6816 = vld [vmem:[#allocation2 + $0x88] sm:$0xff]
      %v6817 = vld [vmem:[#allocation2 + $0x90] sm:$0xff]
      %v6818 = vld [vmem:[#allocation2 + $0x98] sm:$0xff]
      %v6819 = vld [vmem:[#allocation2 + $0xa0] sm:$0xff]
      %v6820 = vld [vmem:[#allocation2 + $0xa8] sm:$0xff]
      %v6821 = vld [vmem:[#allocation2 + $0xb0] sm:$0xff]
      %v6822 = vld [vmem:[#allocation2 + $0xb8] sm:$0xff]
      %v6823 = vld [vmem:[#allocation2 + $0xc0] sm:$0xff]
      %v6824 = vld [vmem:[#allocation2 + $0xc8] sm:$0xff]
      %v6825 = vld [vmem:[#allocation2 + $0xd0] sm:$0xff]
      %v6826 = vld [vmem:[#allocation2 + $0xd8] sm:$0xff]
      %v6827 = vld [vmem:[#allocation2 + $0xe0] sm:$0xff]
      %v6828 = vld [vmem:[#allocation2 + $0xe8] sm:$0xff]
      %v6829 = vld [vmem:[#allocation2 + $0xf0] sm:$0xff]
      %v6830 = vld [vmem:[#allocation2 + $0xf8] sm:$0xff]
      %v6831 = vpack.c.bf16 %v6768, %v6767
      %v6832 = vpack.c.bf16 %v6770, %v6769
      %v6833 = vpack.c.bf16 %v6772, %v6771
      %v6834 = vpack.c.bf16 %v6774, %v6773
      %v6835 = vpack.c.bf16 %v6776, %v6775
      %v6836 = vpack.c.bf16 %v6778, %v6777
      %v6837 = vpack.c.bf16 %v6780, %v6779
      %v6838 = vpack.c.bf16 %v6782, %v6781
      %v6839 = vpack.c.bf16 %v6784, %v6783
      %v6840 = vpack.c.bf16 %v6786, %v6785
      %v6841 = vpack.c.bf16 %v6788, %v6787
      %v6842 = vpack.c.bf16 %v6790, %v6789
      %v6843 = vpack.c.bf16 %v6792, %v6791
      %v6844 = vpack.c.bf16 %v6794, %v6793
      %v6845 = vpack.c.bf16 %v6796, %v6795
      %v6846 = vpack.c.bf16 %v6798, %v6797
      %s6847 = scalar_lea.vmem %s7, 448
      %v6848 = vld [vmem:[%s6847] sm:$0xf]
      %v6849 = vld [vmem:[%s6847 + $0x4] sm:$0xf]
      %v6850 = vld [vmem:[%s6847 + $0x8] sm:$0xf]
      %v6851 = vld [vmem:[%s6847 + $0xc] sm:$0xf]
      %v6852 = vld [vmem:[%s6847 + $0x10] sm:$0xf]
      %v6853 = vld [vmem:[%s6847 + $0x14] sm:$0xf]
      %v6854 = vld [vmem:[%s6847 + $0x18] sm:$0xf]
      %v6855 = vld [vmem:[%s6847 + $0x1c] sm:$0xf]
      %v6856 = vld [vmem:[%s6847 + $0x20] sm:$0xf]
      %v6857 = vld [vmem:[%s6847 + $0x24] sm:$0xf]
      %v6858 = vld [vmem:[%s6847 + $0x28] sm:$0xf]
      %v6859 = vld [vmem:[%s6847 + $0x2c] sm:$0xf]
      %v6860 = vld [vmem:[%s6847 + $0x30] sm:$0xf]
      %v6861 = vld [vmem:[%s6847 + $0x34] sm:$0xf]
      %v6862 = vld [vmem:[%s6847 + $0x38] sm:$0xf]
      %v6863 = vld [vmem:[%s6847 + $0x3c] sm:$0xf]
      %v6880 = vunpack.c.l.b16 %v6848
      %v6881 = vunpack.c.l.b16 %v6849
      %v6882 = vunpack.c.l.b16 %v6850
      %v6883 = vunpack.c.l.b16 %v6851
      %v6884 = vunpack.c.l.b16 %v6852
      %v6885 = vunpack.c.l.b16 %v6853
      %v6886 = vunpack.c.l.b16 %v6854
      %v6887 = vunpack.c.l.b16 %v6855
      %v6888 = vunpack.c.l.b16 %v6856
      %v6889 = vunpack.c.l.b16 %v6857
      %v6890 = vunpack.c.l.b16 %v6858
      %v6891 = vunpack.c.l.b16 %v6859
      %v6892 = vunpack.c.l.b16 %v6860
      %v6893 = vunpack.c.l.b16 %v6861
      %v6894 = vunpack.c.l.b16 %v6862
      %v6895 = vunpack.c.l.b16 %v6863
      %v6896 = vpack.c.b16 %v6881, %v6880
      %v6897 = vpack.c.b16 %v6883, %v6882
      %v6898 = vpack.c.b16 %v6885, %v6884
      %v6899 = vpack.c.b16 %v6887, %v6886
      %v6900 = vpack.c.b16 %v6889, %v6888
      %v6901 = vpack.c.b16 %v6891, %v6890
      %v6902 = vpack.c.b16 %v6893, %v6892
      %v6903 = vpack.c.b16 %v6895, %v6894
      %6912 = vmatprep.subr.bf16.mxu0 0
      %6913 = vmatpush1.bf16.msra.mxu0 %v6896
      %6914 = vmatprep.subr.bf16.mxu0 0
      %6915 = vmatpush1.bf16.msra.mxu0 %v6897
      %6916 = vmatprep.subr.bf16.mxu0 0
      %6917 = vmatpush1.bf16.msra.mxu0 %v6898
      %6918 = vmatprep.subr.bf16.mxu0 0
      %6919 = vmatpush1.bf16.msra.mxu0 %v6899
      %6920 = vmatprep.subr.bf16.mxu0 0
      %6921 = vmatpush1.bf16.msra.mxu0 %v6900
      %6922 = vmatprep.subr.bf16.mxu0 0
      %6923 = vmatpush1.bf16.msra.mxu0 %v6901
      %6924 = vmatprep.subr.bf16.mxu0 0
      %6925 = vmatpush1.bf16.msra.mxu0 %v6902
      %6926 = vmatprep.subr.bf16.mxu0 0
      %6927 = vmatpush1.bf16.msra.mxu0 %v6903
      %6928 = vmatprep.subr.bf16.mxu0 0
      %6929 = vmatpush1.bf16.msra.mxu0 0
      %6930 = vmatprep.subr.bf16.mxu0 0
      %6931 = vmatpush1.bf16.msra.mxu0 0
      %6932 = vmatprep.subr.bf16.mxu0 0
      %6933 = vmatpush1.bf16.msra.mxu0 0
      %6934 = vmatprep.subr.bf16.mxu0 0
      %6935 = vmatpush1.bf16.msra.mxu0 0
      %6936 = vmatprep.subr.bf16.mxu0 0
      %6937 = vmatpush1.bf16.msra.mxu0 0
      %6938 = vmatprep.subr.bf16.mxu0 0
      %6939 = vmatpush1.bf16.msra.mxu0 0
      %6940 = vmatprep.subr.bf16.mxu0 0
      %6941 = vmatpush1.bf16.msra.mxu0 0
      %6942 = vmatprep.subr.bf16.mxu0 0
      %6943 = vmatpush1.bf16.msra.mxu0 0
      %6944 = vmatprep.mubr.bf16.mxu0 0
      %6945 = vmatmul.mubr.bf16.gmra.mrb[0].mxu0 %v6831
      %v6946 = vpop.f32.mrb[0].mxu0
      %v6947 = vadd.f32 0.0, %v6946
      %v6948 = vpop.f32.mrb[0].mxu0
      %v6949 = vpop.f32.mrb[0].mxu0
      %v6950 = vadd.f32 0.0, %v6949
      %v6951 = vpop.f32.mrb[0].mxu0
      %6952 = vmatprep.mubr.bf16.mxu0 0
      %6953 = vmatmul.mubr.bf16.gmra.mrb[0].mxu0 %v6832
      %v6954 = vpop.f32.mrb[0].mxu0
      %v6955 = vadd.f32 0.0, %v6954
      %v6956 = vpop.f32.mrb[0].mxu0
      %v6957 = vpop.f32.mrb[0].mxu0
      %v6958 = vadd.f32 0.0, %v6957
      %v6959 = vpop.f32.mrb[0].mxu0
      %6960 = vmatprep.mubr.bf16.mxu0 0
      %6961 = vmatmul.mubr.bf16.gmra.mrb[0].mxu0 %v6833
      %v6962 = vpop.f32.mrb[0].mxu0
      %v6963 = vadd.f32 0.0, %v6962
      %v6964 = vpop.f32.mrb[0].mxu0
      %v6965 = vpop.f32.mrb[0].mxu0
      %v6966 = vadd.f32 0.0, %v6965
      %v6967 = vpop.f32.mrb[0].mxu0
      %6968 = vmatprep.mubr.bf16.mxu0 0
      %6969 = vmatmul.mubr.bf16.gmra.mrb[0].mxu0 %v6834
      %v6970 = vpop.f32.mrb[0].mxu0
      %v6971 = vadd.f32 0.0, %v6970
      %v6972 = vpop.f32.mrb[0].mxu0
      %v6973 = vpop.f32.mrb[0].mxu0
      %v6974 = vadd.f32 0.0, %v6973
      %v6975 = vpop.f32.mrb[0].mxu0
      %6976 = vmatprep.mubr.bf16.mxu0 0
      %6977 = vmatmul.mubr.bf16.gmra.mrb[0].mxu0 %v6835
      %v6978 = vpop.f32.mrb[0].mxu0
      %v6979 = vadd.f32 0.0, %v6978
      %v6980 = vpop.f32.mrb[0].mxu0
      %v6981 = vpop.f32.mrb[0].mxu0
      %v6982 = vadd.f32 0.0, %v6981
      %v6983 = vpop.f32.mrb[0].mxu0
      %6984 = vmatprep.mubr.bf16.mxu0 0
      %6985 = vmatmul.mubr.bf16.gmra.mrb[0].mxu0 %v6836
      %v6986 = vpop.f32.mrb[0].mxu0
      %v6987 = vadd.f32 0.0, %v6986
      %v6988 = vpop.f32.mrb[0].mxu0
      %v6989 = vpop.f32.mrb[0].mxu0
      %v6990 = vadd.f32 0.0, %v6989
      %v6991 = vpop.f32.mrb[0].mxu0
      %6992 = vmatprep.mubr.bf16.mxu0 0
      %6993 = vmatmul.mubr.bf16.gmra.mrb[0].mxu0 %v6837
      %v6994 = vpop.f32.mrb[0].mxu0
      %v6995 = vadd.f32 0.0, %v6994
      %v6996 = vpop.f32.mrb[0].mxu0
      %v6997 = vpop.f32.mrb[0].mxu0
      %v6998 = vadd.f32 0.0, %v6997
      %v6999 = vpop.f32.mrb[0].mxu0
      %7000 = vmatprep.mubr.bf16.mxu0 0
      %7001 = vmatmul.mubr.bf16.gmra.mrb[0].mxu0 %v6838
      %v7002 = vpop.f32.mrb[0].mxu0
      %v7003 = vadd.f32 0.0, %v7002
      %v7004 = vpop.f32.mrb[0].mxu0
      %v7005 = vpop.f32.mrb[0].mxu0
      %v7006 = vadd.f32 0.0, %v7005
      %v7007 = vpop.f32.mrb[0].mxu0
      %7008 = vmatprep.mubr.bf16.mxu0 0
      %7009 = vmatmul.mubr.bf16.gmra.mrb[0].mxu0 %v6839
      %v7010 = vpop.f32.mrb[0].mxu0
      %v7011 = vadd.f32 0.0, %v7010
      %v7012 = vpop.f32.mrb[0].mxu0
      %v7013 = vpop.f32.mrb[0].mxu0
      %v7014 = vadd.f32 0.0, %v7013
      %v7015 = vpop.f32.mrb[0].mxu0
      %7016 = vmatprep.mubr.bf16.mxu0 0
      %7017 = vmatmul.mubr.bf16.gmra.mrb[0].mxu0 %v6840
      %v7018 = vpop.f32.mrb[0].mxu0
      %v7019 = vadd.f32 0.0, %v7018
      %v7020 = vpop.f32.mrb[0].mxu0
      %v7021 = vpop.f32.mrb[0].mxu0
      %v7022 = vadd.f32 0.0, %v7021
      %v7023 = vpop.f32.mrb[0].mxu0
      %7024 = vmatprep.mubr.bf16.mxu0 0
      %7025 = vmatmul.mubr.bf16.gmra.mrb[0].mxu0 %v6841
      %v7026 = vpop.f32.mrb[0].mxu0
      %v7027 = vadd.f32 0.0, %v7026
      %v7028 = vpop.f32.mrb[0].mxu0
      %v7029 = vpop.f32.mrb[0].mxu0
      %v7030 = vadd.f32 0.0, %v7029
      %v7031 = vpop.f32.mrb[0].mxu0
      %7032 = vmatprep.mubr.bf16.mxu0 0
      %7033 = vmatmul.mubr.bf16.gmra.mrb[0].mxu0 %v6842
      %v7034 = vpop.f32.mrb[0].mxu0
      %v7035 = vadd.f32 0.0, %v7034
      %v7036 = vpop.f32.mrb[0].mxu0
      %v7037 = vpop.f32.mrb[0].mxu0
      %v7038 = vadd.f32 0.0, %v7037
      %v7039 = vpop.f32.mrb[0].mxu0
      %7040 = vmatprep.mubr.bf16.mxu0 0
      %7041 = vmatmul.mubr.bf16.gmra.mrb[0].mxu0 %v6843
      %v7042 = vpop.f32.mrb[0].mxu0
      %v7043 = vadd.f32 0.0, %v7042
      %v7044 = vpop.f32.mrb[0].mxu0
      %v7045 = vpop.f32.mrb[0].mxu0
      %v7046 = vadd.f32 0.0, %v7045
      %v7047 = vpop.f32.mrb[0].mxu0
      %7048 = vmatprep.mubr.bf16.mxu0 0
      %7049 = vmatmul.mubr.bf16.gmra.mrb[0].mxu0 %v6844
      %v7050 = vpop.f32.mrb[0].mxu0
      %v7051 = vadd.f32 0.0, %v7050
      %v7052 = vpop.f32.mrb[0].mxu0
      %v7053 = vpop.f32.mrb[0].mxu0
      %v7054 = vadd.f32 0.0, %v7053
      %v7055 = vpop.f32.mrb[0].mxu0
      %7056 = vmatprep.mubr.bf16.mxu0 0
      %7057 = vmatmul.mubr.bf16.gmra.mrb[0].mxu0 %v6845
      %v7058 = vpop.f32.mrb[0].mxu0
      %v7059 = vadd.f32 0.0, %v7058
      %v7060 = vpop.f32.mrb[0].mxu0
      %v7061 = vpop.f32.mrb[0].mxu0
      %v7062 = vadd.f32 0.0, %v7061
      %v7063 = vpop.f32.mrb[0].mxu0
      %7064 = vmatprep.mubr.bf16.mxu0 0
      %7065 = vmatmul.mubr.bf16.gmra.mrb[0].mxu0 %v6846
      %v7066 = vpop.f32.mrb[0].mxu0
      %v7067 = vadd.f32 0.0, %v7066
      %v7068 = vpop.f32.mrb[0].mxu0
      %v7069 = vpop.f32.mrb[0].mxu0
      %v7070 = vadd.f32 0.0, %v7069
      %v7071 = vpop.f32.mrb[0].mxu0
      %7072 = vdwg.mxu0
      %v7073 = vadd.f32 %v6799, %v6947
      %v7074 = vadd.f32 %v6800, %v6950
      %v7075 = vadd.f32 %v6801, %v6955
      %v7076 = vadd.f32 %v6802, %v6958
      %v7077 = vadd.f32 %v6803, %v6963
      %v7078 = vadd.f32 %v6804, %v6966
      %v7079 = vadd.f32 %v6805, %v6971
      %v7080 = vadd.f32 %v6806, %v6974
      %v7081 = vadd.f32 %v6807, %v6979
      %v7082 = vadd.f32 %v6808, %v6982
      %v7083 = vadd.f32 %v6809, %v6987
      %v7084 = vadd.f32 %v6810, %v6990
      %v7085 = vadd.f32 %v6811, %v6995
      %v7086 = vadd.f32 %v6812, %v6998
      %v7087 = vadd.f32 %v6813, %v7003
      %v7088 = vadd.f32 %v6814, %v7006
      %v7089 = vadd.f32 %v6815, %v7011
      %v7090 = vadd.f32 %v6816, %v7014
      %v7091 = vadd.f32 %v6817, %v7019
      %v7092 = vadd.f32 %v6818, %v7022
      %v7093 = vadd.f32 %v6819, %v7027
      %v7094 = vadd.f32 %v6820, %v7030
      %v7095 = vadd.f32 %v6821, %v7035
      %v7096 = vadd.f32 %v6822, %v7038
      %v7097 = vadd.f32 %v6823, %v7043
      %v7098 = vadd.f32 %v6824, %v7046
      %v7099 = vadd.f32 %v6825, %v7051
      %v7100 = vadd.f32 %v6826, %v7054
      %v7101 = vadd.f32 %v6827, %v7059
      %v7102 = vadd.f32 %v6828, %v7062
      %v7103 = vadd.f32 %v6829, %v7067
      %v7104 = vadd.f32 %v6830, %v7070
      %7105 = vst [vmem:[#allocation2] sm:$0xff] %v7073
      %7106 = vst [vmem:[#allocation2 + $0x8] sm:$0xff] %v7074
      %7107 = vst [vmem:[#allocation2 + $0x10] sm:$0xff] %v7075
      %7108 = vst [vmem:[#allocation2 + $0x18] sm:$0xff] %v7076
      %7109 = vst [vmem:[#allocation2 + $0x20] sm:$0xff] %v7077
      %7110 = vst [vmem:[#allocation2 + $0x28] sm:$0xff] %v7078
      %7111 = vst [vmem:[#allocation2 + $0x30] sm:$0xff] %v7079
      %7112 = vst [vmem:[#allocation2 + $0x38] sm:$0xff] %v7080
      %7113 = vst [vmem:[#allocation2 + $0x40] sm:$0xff] %v7081
      %7114 = vst [vmem:[#allocation2 + $0x48] sm:$0xff] %v7082
      %7115 = vst [vmem:[#allocation2 + $0x50] sm:$0xff] %v7083
      %7116 = vst [vmem:[#allocation2 + $0x58] sm:$0xff] %v7084
      %7117 = vst [vmem:[#allocation2 + $0x60] sm:$0xff] %v7085
      %7118 = vst [vmem:[#allocation2 + $0x68] sm:$0xff] %v7086
      %7119 = vst [vmem:[#allocation2 + $0x70] sm:$0xff] %v7087
      %7120 = vst [vmem:[#allocation2 + $0x78] sm:$0xff] %v7088
      %7121 = vst [vmem:[#allocation2 + $0x80] sm:$0xff] %v7089
      %7122 = vst [vmem:[#allocation2 + $0x88] sm:$0xff] %v7090
      %7123 = vst [vmem:[#allocation2 + $0x90] sm:$0xff] %v7091
      %7124 = vst [vmem:[#allocation2 + $0x98] sm:$0xff] %v7092
      %7125 = vst [vmem:[#allocation2 + $0xa0] sm:$0xff] %v7093
      %7126 = vst [vmem:[#allocation2 + $0xa8] sm:$0xff] %v7094
      %7127 = vst [vmem:[#allocation2 + $0xb0] sm:$0xff] %v7095
      %7128 = vst [vmem:[#allocation2 + $0xb8] sm:$0xff] %v7096
      %7129 = vst [vmem:[#allocation2 + $0xc0] sm:$0xff] %v7097
      %7130 = vst [vmem:[#allocation2 + $0xc8] sm:$0xff] %v7098
      %7131 = vst [vmem:[#allocation2 + $0xd0] sm:$0xff] %v7099
      %7132 = vst [vmem:[#allocation2 + $0xd8] sm:$0xff] %v7100
      %7133 = vst [vmem:[#allocation2 + $0xe0] sm:$0xff] %v7101
      %7134 = vst [vmem:[#allocation2 + $0xe8] sm:$0xff] %v7102
      %7135 = vst [vmem:[#allocation2 + $0xf0] sm:$0xff] %v7103
      %7136 = vst [vmem:[#allocation2 + $0xf8] sm:$0xff] %v7104
      %v7137 = vmul.f32 %v4758, %v3000
      %v7138 = vmul.f32 %v4759, %v3005
      %v7139 = vmul.f32 %v4760, %v3010
      %v7140 = vmul.f32 %v4761, %v3015
      %v7141 = vmul.f32 %v4762, %v3020
      %v7142 = vmul.f32 %v4763, %v3025
      %v7143 = vmul.f32 %v4764, %v3030
      %v7144 = vmul.f32 %v4765, %v3035
      %v7145 = vmul.f32 %v4766, %v3040
      %v7146 = vmul.f32 %v4767, %v3045
      %v7147 = vmul.f32 %v4768, %v3050
      %v7148 = vmul.f32 %v4769, %v3055
      %v7149 = vmul.f32 %v4770, %v3060
      %v7150 = vmul.f32 %v4771, %v3065
      %v7151 = vmul.f32 %v4772, %v3070
      %v7152 = vmul.f32 %v4773, %v3075
      %v7153 = vmul.f32 %v4774, %v3080
      %v7154 = vmul.f32 %v4775, %v3085
      %v7155 = vmul.f32 %v4776, %v3090
      %v7156 = vmul.f32 %v4777, %v3095
      %v7157 = vmul.f32 %v4778, %v3100
      %v7158 = vmul.f32 %v4779, %v3105
      %v7159 = vmul.f32 %v4780, %v3110
      %v7160 = vmul.f32 %v4781, %v3115
      %v7161 = vmul.f32 %v4782, %v3120
      %v7162 = vmul.f32 %v4783, %v3125
      %v7163 = vmul.f32 %v4784, %v3130
      %v7164 = vmul.f32 %v4785, %v3135
      %v7165 = vmul.f32 %v4786, %v3140
      %v7166 = vmul.f32 %v4787, %v3145
      %v7167 = vmul.f32 %v4788, %v3150
      %v7168 = vmul.f32 %v4789, %v3155
      %7169 = vst [vmem:[#allocation3 + $0x18] sm:$0xff] %v7137
      %7170 = vst [vmem:[#allocation3 + $0x20] sm:$0xff] %v7138
      %7171 = vst [vmem:[#allocation3 + $0x28] sm:$0xff] %v7139
      %7172 = vst [vmem:[#allocation3 + $0x30] sm:$0xff] %v7140
      %7173 = vst [vmem:[#allocation3 + $0x38] sm:$0xff] %v7141
      %7174 = vst [vmem:[#allocation3 + $0x40] sm:$0xff] %v7142
      %7175 = vst [vmem:[#allocation3 + $0x48] sm:$0xff] %v7143
      %7176 = vst [vmem:[#allocation3 + $0x50] sm:$0xff] %v7144
      %7177 = vst [vmem:[#allocation3 + $0x58] sm:$0xff] %v7145
      %7178 = vst [vmem:[#allocation3 + $0x60] sm:$0xff] %v7146
      %7179 = vst [vmem:[#allocation3 + $0x68] sm:$0xff] %v7147
      %7180 = vst [vmem:[#allocation3 + $0x70] sm:$0xff] %v7148
      %7181 = vst [vmem:[#allocation3 + $0x78] sm:$0xff] %v7149
      %7182 = vst [vmem:[#allocation3 + $0x80] sm:$0xff] %v7150
      %7183 = vst [vmem:[#allocation3 + $0x88] sm:$0xff] %v7151
      %7184 = vst [vmem:[#allocation3 + $0x90] sm:$0xff] %v7152
      %7185 = vst [vmem:[#allocation3 + $0x98] sm:$0xff] %v7153
      %7186 = vst [vmem:[#allocation3 + $0xa0] sm:$0xff] %v7154
      %7187 = vst [vmem:[#allocation3 + $0xa8] sm:$0xff] %v7155
      %7188 = vst [vmem:[#allocation3 + $0xb0] sm:$0xff] %v7156
      %7189 = vst [vmem:[#allocation3 + $0xb8] sm:$0xff] %v7157
      %7190 = vst [vmem:[#allocation3 + $0xc0] sm:$0xff] %v7158
      %7191 = vst [vmem:[#allocation3 + $0xc8] sm:$0xff] %v7159
      %7192 = vst [vmem:[#allocation3 + $0xd0] sm:$0xff] %v7160
      %7193 = vst [vmem:[#allocation3 + $0xd8] sm:$0xff] %v7161
      %7194 = vst [vmem:[#allocation3 + $0xe0] sm:$0xff] %v7162
      %7195 = vst [vmem:[#allocation3 + $0xe8] sm:$0xff] %v7163
      %7196 = vst [vmem:[#allocation3 + $0xf0] sm:$0xff] %v7164
      %7197 = vst [vmem:[#allocation3 + $0xf8] sm:$0xff] %v7165
      %7198 = vst [vmem:[#allocation3 + $0x100] sm:$0xff] %v7166
      %7199 = vst [vmem:[#allocation3 + $0x108] sm:$0xff] %v7167
      %7200 = vst [vmem:[#allocation3 + $0x110] sm:$0xff] %v7168
      %v7201 = vld [vmem:[#allocation3 + $0x9] sm:$0xff]
      %v7202 = vld [vmem:[#allocation3 + $0x11] sm:$0xff]
      %v7203 = vld [vmem:[#allocation3 + $0x19] sm:$0xff]
      %v7204 = vld [vmem:[#allocation3 + $0x21] sm:$0xff]
      %v7205 = vld [vmem:[#allocation3 + $0x29] sm:$0xff]
      %v7206 = vld [vmem:[#allocation3 + $0x31] sm:$0xff]
      %v7207 = vld [vmem:[#allocation3 + $0x39] sm:$0xff]
      %v7208 = vld [vmem:[#allocation3 + $0x41] sm:$0xff]
      %v7209 = vld [vmem:[#allocation3 + $0x49] sm:$0xff]
      %v7210 = vld [vmem:[#allocation3 + $0x51] sm:$0xff]
      %v7211 = vld [vmem:[#allocation3 + $0x59] sm:$0xff]
      %v7212 = vld [vmem:[#allocation3 + $0x61] sm:$0xff]
      %v7213 = vld [vmem:[#allocation3 + $0x69] sm:$0xff]
      %v7214 = vld [vmem:[#allocation3 + $0x71] sm:$0xff]
      %v7215 = vld [vmem:[#allocation3 + $0x79] sm:$0xff]
      %v7216 = vld [vmem:[#allocation3 + $0x81] sm:$0xff]
      %v7217 = vld [vmem:[#allocation3 + $0x89] sm:$0xff]
      %v7218 = vld [vmem:[#allocation3 + $0x91] sm:$0xff]
      %v7219 = vld [vmem:[#allocation3 + $0x99] sm:$0xff]
      %v7220 = vld [vmem:[#allocation3 + $0xa1] sm:$0xff]
      %v7221 = vld [vmem:[#allocation3 + $0xa9] sm:$0xff]
      %v7222 = vld [vmem:[#allocation3 + $0xb1] sm:$0xff]
      %v7223 = vld [vmem:[#allocation3 + $0xb9] sm:$0xff]
      %v7224 = vld [vmem:[#allocation3 + $0xc1] sm:$0xff]
      %v7225 = vld [vmem:[#allocation3 + $0xc9] sm:$0xff]
      %v7226 = vld [vmem:[#allocation3 + $0xd1] sm:$0xff]
      %v7227 = vld [vmem:[#allocation3 + $0xd9] sm:$0xff]
      %v7228 = vld [vmem:[#allocation3 + $0xe1] sm:$0xff]
      %v7229 = vld [vmem:[#allocation3 + $0xe9] sm:$0xff]
      %v7230 = vld [vmem:[#allocation3 + $0xf1] sm:$0xff]
      %v7231 = vld [vmem:[#allocation3 + $0xf9] sm:$0xff]
      %v7232 = vld [vmem:[#allocation3 + $0x101] sm:$0xff]
      %v7233 = vld [vmem:[#allocation2] sm:$0xff]
      %v7234 = vld [vmem:[#allocation2 + $0x8] sm:$0xff]
      %v7235 = vld [vmem:[#allocation2 + $0x10] sm:$0xff]
      %v7236 = vld [vmem:[#allocation2 + $0x18] sm:$0xff]
      %v7237 = vld [vmem:[#allocation2 + $0x20] sm:$0xff]
      %v7238 = vld [vmem:[#allocation2 + $0x28] sm:$0xff]
      %v7239 = vld [vmem:[#allocation2 + $0x30] sm:$0xff]
      %v7240 = vld [vmem:[#allocation2 + $0x38] sm:$0xff]
      %v7241 = vld [vmem:[#allocation2 + $0x40] sm:$0xff]
      %v7242 = vld [vmem:[#allocation2 + $0x48] sm:$0xff]
      %v7243 = vld [vmem:[#allocation2 + $0x50] sm:$0xff]
      %v7244 = vld [vmem:[#allocation2 + $0x58] sm:$0xff]
      %v7245 = vld [vmem:[#allocation2 + $0x60] sm:$0xff]
      %v7246 = vld [vmem:[#allocation2 + $0x68] sm:$0xff]
      %v7247 = vld [vmem:[#allocation2 + $0x70] sm:$0xff]
      %v7248 = vld [vmem:[#allocation2 + $0x78] sm:$0xff]
      %v7249 = vld [vmem:[#allocation2 + $0x80] sm:$0xff]
      %v7250 = vld [vmem:[#allocation2 + $0x88] sm:$0xff]
      %v7251 = vld [vmem:[#allocation2 + $0x90] sm:$0xff]
      %v7252 = vld [vmem:[#allocation2 + $0x98] sm:$0xff]
      %v7253 = vld [vmem:[#allocation2 + $0xa0] sm:$0xff]
      %v7254 = vld [vmem:[#allocation2 + $0xa8] sm:$0xff]
      %v7255 = vld [vmem:[#allocation2 + $0xb0] sm:$0xff]
      %v7256 = vld [vmem:[#allocation2 + $0xb8] sm:$0xff]
      %v7257 = vld [vmem:[#allocation2 + $0xc0] sm:$0xff]
      %v7258 = vld [vmem:[#allocation2 + $0xc8] sm:$0xff]
      %v7259 = vld [vmem:[#allocation2 + $0xd0] sm:$0xff]
      %v7260 = vld [vmem:[#allocation2 + $0xd8] sm:$0xff]
      %v7261 = vld [vmem:[#allocation2 + $0xe0] sm:$0xff]
      %v7262 = vld [vmem:[#allocation2 + $0xe8] sm:$0xff]
      %v7263 = vld [vmem:[#allocation2 + $0xf0] sm:$0xff]
      %v7264 = vld [vmem:[#allocation2 + $0xf8] sm:$0xff]
      %v7265 = vpack.c.bf16 %v7202, %v7201
      %v7266 = vpack.c.bf16 %v7204, %v7203
      %v7267 = vpack.c.bf16 %v7206, %v7205
      %v7268 = vpack.c.bf16 %v7208, %v7207
      %v7269 = vpack.c.bf16 %v7210, %v7209
      %v7270 = vpack.c.bf16 %v7212, %v7211
      %v7271 = vpack.c.bf16 %v7214, %v7213
      %v7272 = vpack.c.bf16 %v7216, %v7215
      %v7273 = vpack.c.bf16 %v7218, %v7217
      %v7274 = vpack.c.bf16 %v7220, %v7219
      %v7275 = vpack.c.bf16 %v7222, %v7221
      %v7276 = vpack.c.bf16 %v7224, %v7223
      %v7277 = vpack.c.bf16 %v7226, %v7225
      %v7278 = vpack.c.bf16 %v7228, %v7227
      %v7279 = vpack.c.bf16 %v7230, %v7229
      %v7280 = vpack.c.bf16 %v7232, %v7231
      %s7281 = scalar_lea.vmem %s7, 128
      %v7282 = vld [vmem:[%s7281] sm:$0xf]
      %v7283 = vld [vmem:[%s7281 + $0x4] sm:$0xf]
      %v7284 = vld [vmem:[%s7281 + $0x8] sm:$0xf]
      %v7285 = vld [vmem:[%s7281 + $0xc] sm:$0xf]
      %v7286 = vld [vmem:[%s7281 + $0x10] sm:$0xf]
      %v7287 = vld [vmem:[%s7281 + $0x14] sm:$0xf]
      %v7288 = vld [vmem:[%s7281 + $0x18] sm:$0xf]
      %v7289 = vld [vmem:[%s7281 + $0x1c] sm:$0xf]
      %v7290 = vld [vmem:[%s7281 + $0x20] sm:$0xf]
      %v7291 = vld [vmem:[%s7281 + $0x24] sm:$0xf]
      %v7292 = vld [vmem:[%s7281 + $0x28] sm:$0xf]
      %v7293 = vld [vmem:[%s7281 + $0x2c] sm:$0xf]
      %v7294 = vld [vmem:[%s7281 + $0x30] sm:$0xf]
      %v7295 = vld [vmem:[%s7281 + $0x34] sm:$0xf]
      %v7296 = vld [vmem:[%s7281 + $0x38] sm:$0xf]
      %v7297 = vld [vmem:[%s7281 + $0x3c] sm:$0xf]
      %v7314 = vunpack.c.l.b16 %v7282
      %v7315 = vunpack.c.l.b16 %v7283
      %v7316 = vunpack.c.l.b16 %v7284
      %v7317 = vunpack.c.l.b16 %v7285
      %v7318 = vunpack.c.l.b16 %v7286
      %v7319 = vunpack.c.l.b16 %v7287
      %v7320 = vunpack.c.l.b16 %v7288
      %v7321 = vunpack.c.l.b16 %v7289
      %v7322 = vunpack.c.l.b16 %v7290
      %v7323 = vunpack.c.l.b16 %v7291
      %v7324 = vunpack.c.l.b16 %v7292
      %v7325 = vunpack.c.l.b16 %v7293
      %v7326 = vunpack.c.l.b16 %v7294
      %v7327 = vunpack.c.l.b16 %v7295
      %v7328 = vunpack.c.l.b16 %v7296
      %v7329 = vunpack.c.l.b16 %v7297
      %v7330 = vpack.c.b16 %v7315, %v7314
      %v7331 = vpack.c.b16 %v7317, %v7316
      %v7332 = vpack.c.b16 %v7319, %v7318
      %v7333 = vpack.c.b16 %v7321, %v7320
      %v7334 = vpack.c.b16 %v7323, %v7322
      %v7335 = vpack.c.b16 %v7325, %v7324
      %v7336 = vpack.c.b16 %v7327, %v7326
      %v7337 = vpack.c.b16 %v7329, %v7328
      %7346 = vmatprep.subr.bf16.mxu0 0
      %7347 = vmatpush1.bf16.msra.mxu0 %v7330
      %7348 = vmatprep.subr.bf16.mxu0 0
      %7349 = vmatpush1.bf16.msra.mxu0 %v7331
      %7350 = vmatprep.subr.bf16.mxu0 0
      %7351 = vmatpush1.bf16.msra.mxu0 %v7332
      %7352 = vmatprep.subr.bf16.mxu0 0
      %7353 = vmatpush1.bf16.msra.mxu0 %v7333
      %7354 = vmatprep.subr.bf16.mxu0 0
      %7355 = vmatpush1.bf16.msra.mxu0 %v7334
      %7356 = vmatprep.subr.bf16.mxu0 0
      %7357 = vmatpush1.bf16.msra.mxu0 %v7335
      %7358 = vmatprep.subr.bf16.mxu0 0
      %7359 = vmatpush1.bf16.msra.mxu0 %v7336
      %7360 = vmatprep.subr.bf16.mxu0 0
      %7361 = vmatpush1.bf16.msra.mxu0 %v7337
      %7362 = vmatprep.subr.bf16.mxu0 0
      %7363 = vmatpush1.bf16.msra.mxu0 0
      %7364 = vmatprep.subr.bf16.mxu0 0
      %7365 = vmatpush1.bf16.msra.mxu0 0
      %7366 = vmatprep.subr.bf16.mxu0 0
      %7367 = vmatpush1.bf16.msra.mxu0 0
      %7368 = vmatprep.subr.bf16.mxu0 0
      %7369 = vmatpush1.bf16.msra.mxu0 0
      %7370 = vmatprep.subr.bf16.mxu0 0
      %7371 = vmatpush1.bf16.msra.mxu0 0
      %7372 = vmatprep.subr.bf16.mxu0 0
      %7373 = vmatpush1.bf16.msra.mxu0 0
      %7374 = vmatprep.subr.bf16.mxu0 0
      %7375 = vmatpush1.bf16.msra.mxu0 0
      %7376 = vmatprep.subr.bf16.mxu0 0
      %7377 = vmatpush1.bf16.msra.mxu0 0
      %7378 = vmatprep.mubr.bf16.mxu0 0
      %7379 = vmatmul.mubr.bf16.gmra.mrb[0].mxu0 %v7265
      %v7380 = vpop.f32.mrb[0].mxu0
      %v7381 = vadd.f32 0.0, %v7380
      %v7382 = vpop.f32.mrb[0].mxu0
      %v7383 = vpop.f32.mrb[0].mxu0
      %v7384 = vadd.f32 0.0, %v7383
      %v7385 = vpop.f32.mrb[0].mxu0
      %7386 = vmatprep.mubr.bf16.mxu0 0
      %7387 = vmatmul.mubr.bf16.gmra.mrb[0].mxu0 %v7266
      %v7388 = vpop.f32.mrb[0].mxu0
      %v7389 = vadd.f32 0.0, %v7388
      %v7390 = vpop.f32.mrb[0].mxu0
      %v7391 = vpop.f32.mrb[0].mxu0
      %v7392 = vadd.f32 0.0, %v7391
      %v7393 = vpop.f32.mrb[0].mxu0
      %7394 = vmatprep.mubr.bf16.mxu0 0
      %7395 = vmatmul.mubr.bf16.gmra.mrb[0].mxu0 %v7267
      %v7396 = vpop.f32.mrb[0].mxu0
      %v7397 = vadd.f32 0.0, %v7396
      %v7398 = vpop.f32.mrb[0].mxu0
      %v7399 = vpop.f32.mrb[0].mxu0
      %v7400 = vadd.f32 0.0, %v7399
      %v7401 = vpop.f32.mrb[0].mxu0
      %7402 = vmatprep.mubr.bf16.mxu0 0
      %7403 = vmatmul.mubr.bf16.gmra.mrb[0].mxu0 %v7268
      %v7404 = vpop.f32.mrb[0].mxu0
      %v7405 = vadd.f32 0.0, %v7404
      %v7406 = vpop.f32.mrb[0].mxu0
      %v7407 = vpop.f32.mrb[0].mxu0
      %v7408 = vadd.f32 0.0, %v7407
      %v7409 = vpop.f32.mrb[0].mxu0
      %7410 = vmatprep.mubr.bf16.mxu0 0
      %7411 = vmatmul.mubr.bf16.gmra.mrb[0].mxu0 %v7269
      %v7412 = vpop.f32.mrb[0].mxu0
      %v7413 = vadd.f32 0.0, %v7412
      %v7414 = vpop.f32.mrb[0].mxu0
      %v7415 = vpop.f32.mrb[0].mxu0
      %v7416 = vadd.f32 0.0, %v7415
      %v7417 = vpop.f32.mrb[0].mxu0
      %7418 = vmatprep.mubr.bf16.mxu0 0
      %7419 = vmatmul.mubr.bf16.gmra.mrb[0].mxu0 %v7270
      %v7420 = vpop.f32.mrb[0].mxu0
      %v7421 = vadd.f32 0.0, %v7420
      %v7422 = vpop.f32.mrb[0].mxu0
      %v7423 = vpop.f32.mrb[0].mxu0
      %v7424 = vadd.f32 0.0, %v7423
      %v7425 = vpop.f32.mrb[0].mxu0
      %7426 = vmatprep.mubr.bf16.mxu0 0
      %7427 = vmatmul.mubr.bf16.gmra.mrb[0].mxu0 %v7271
      %v7428 = vpop.f32.mrb[0].mxu0
      %v7429 = vadd.f32 0.0, %v7428
      %v7430 = vpop.f32.mrb[0].mxu0
      %v7431 = vpop.f32.mrb[0].mxu0
      %v7432 = vadd.f32 0.0, %v7431
      %v7433 = vpop.f32.mrb[0].mxu0
      %7434 = vmatprep.mubr.bf16.mxu0 0
      %7435 = vmatmul.mubr.bf16.gmra.mrb[0].mxu0 %v7272
      %v7436 = vpop.f32.mrb[0].mxu0
      %v7437 = vadd.f32 0.0, %v7436
      %v7438 = vpop.f32.mrb[0].mxu0
      %v7439 = vpop.f32.mrb[0].mxu0
      %v7440 = vadd.f32 0.0, %v7439
      %v7441 = vpop.f32.mrb[0].mxu0
      %7442 = vmatprep.mubr.bf16.mxu0 0
      %7443 = vmatmul.mubr.bf16.gmra.mrb[0].mxu0 %v7273
      %v7444 = vpop.f32.mrb[0].mxu0
      %v7445 = vadd.f32 0.0, %v7444
      %v7446 = vpop.f32.mrb[0].mxu0
      %v7447 = vpop.f32.mrb[0].mxu0
      %v7448 = vadd.f32 0.0, %v7447
      %v7449 = vpop.f32.mrb[0].mxu0
      %7450 = vmatprep.mubr.bf16.mxu0 0
      %7451 = vmatmul.mubr.bf16.gmra.mrb[0].mxu0 %v7274
      %v7452 = vpop.f32.mrb[0].mxu0
      %v7453 = vadd.f32 0.0, %v7452
      %v7454 = vpop.f32.mrb[0].mxu0
      %v7455 = vpop.f32.mrb[0].mxu0
      %v7456 = vadd.f32 0.0, %v7455
      %v7457 = vpop.f32.mrb[0].mxu0
      %7458 = vmatprep.mubr.bf16.mxu0 0
      %7459 = vmatmul.mubr.bf16.gmra.mrb[0].mxu0 %v7275
      %v7460 = vpop.f32.mrb[0].mxu0
      %v7461 = vadd.f32 0.0, %v7460
      %v7462 = vpop.f32.mrb[0].mxu0
      %v7463 = vpop.f32.mrb[0].mxu0
      %v7464 = vadd.f32 0.0, %v7463
      %v7465 = vpop.f32.mrb[0].mxu0
      %7466 = vmatprep.mubr.bf16.mxu0 0
      %7467 = vmatmul.mubr.bf16.gmra.mrb[0].mxu0 %v7276
      %v7468 = vpop.f32.mrb[0].mxu0
      %v7469 = vadd.f32 0.0, %v7468
      %v7470 = vpop.f32.mrb[0].mxu0
      %v7471 = vpop.f32.mrb[0].mxu0
      %v7472 = vadd.f32 0.0, %v7471
      %v7473 = vpop.f32.mrb[0].mxu0
      %7474 = vmatprep.mubr.bf16.mxu0 0
      %7475 = vmatmul.mubr.bf16.gmra.mrb[0].mxu0 %v7277
      %v7476 = vpop.f32.mrb[0].mxu0
      %v7477 = vadd.f32 0.0, %v7476
      %v7478 = vpop.f32.mrb[0].mxu0
      %v7479 = vpop.f32.mrb[0].mxu0
      %v7480 = vadd.f32 0.0, %v7479
      %v7481 = vpop.f32.mrb[0].mxu0
      %7482 = vmatprep.mubr.bf16.mxu0 0
      %7483 = vmatmul.mubr.bf16.gmra.mrb[0].mxu0 %v7278
      %v7484 = vpop.f32.mrb[0].mxu0
      %v7485 = vadd.f32 0.0, %v7484
      %v7486 = vpop.f32.mrb[0].mxu0
      %v7487 = vpop.f32.mrb[0].mxu0
      %v7488 = vadd.f32 0.0, %v7487
      %v7489 = vpop.f32.mrb[0].mxu0
      %7490 = vmatprep.mubr.bf16.mxu0 0
      %7491 = vmatmul.mubr.bf16.gmra.mrb[0].mxu0 %v7279
      %v7492 = vpop.f32.mrb[0].mxu0
      %v7493 = vadd.f32 0.0, %v7492
      %v7494 = vpop.f32.mrb[0].mxu0
      %v7495 = vpop.f32.mrb[0].mxu0
      %v7496 = vadd.f32 0.0, %v7495
      %v7497 = vpop.f32.mrb[0].mxu0
      %7498 = vmatprep.mubr.bf16.mxu0 0
      %7499 = vmatmul.mubr.bf16.gmra.mrb[0].mxu0 %v7280
      %v7500 = vpop.f32.mrb[0].mxu0
      %v7501 = vadd.f32 0.0, %v7500
      %v7502 = vpop.f32.mrb[0].mxu0
      %v7503 = vpop.f32.mrb[0].mxu0
      %v7504 = vadd.f32 0.0, %v7503
      %v7505 = vpop.f32.mrb[0].mxu0
      %7506 = vdwg.mxu0
      %v7507 = vadd.f32 %v7233, %v7381
      %v7508 = vadd.f32 %v7234, %v7384
      %v7509 = vadd.f32 %v7235, %v7389
      %v7510 = vadd.f32 %v7236, %v7392
      %v7511 = vadd.f32 %v7237, %v7397
      %v7512 = vadd.f32 %v7238, %v7400
      %v7513 = vadd.f32 %v7239, %v7405
      %v7514 = vadd.f32 %v7240, %v7408
      %v7515 = vadd.f32 %v7241, %v7413
      %v7516 = vadd.f32 %v7242, %v7416
      %v7517 = vadd.f32 %v7243, %v7421
      %v7518 = vadd.f32 %v7244, %v7424
      %v7519 = vadd.f32 %v7245, %v7429
      %v7520 = vadd.f32 %v7246, %v7432
      %v7521 = vadd.f32 %v7247, %v7437
      %v7522 = vadd.f32 %v7248, %v7440
      %v7523 = vadd.f32 %v7249, %v7445
      %v7524 = vadd.f32 %v7250, %v7448
      %v7525 = vadd.f32 %v7251, %v7453
      %v7526 = vadd.f32 %v7252, %v7456
      %v7527 = vadd.f32 %v7253, %v7461
      %v7528 = vadd.f32 %v7254, %v7464
      %v7529 = vadd.f32 %v7255, %v7469
      %v7530 = vadd.f32 %v7256, %v7472
      %v7531 = vadd.f32 %v7257, %v7477
      %v7532 = vadd.f32 %v7258, %v7480
      %v7533 = vadd.f32 %v7259, %v7485
      %v7534 = vadd.f32 %v7260, %v7488
      %v7535 = vadd.f32 %v7261, %v7493
      %v7536 = vadd.f32 %v7262, %v7496
      %v7537 = vadd.f32 %v7263, %v7501
      %v7538 = vadd.f32 %v7264, %v7504
      %7539 = vst [vmem:[#allocation2] sm:$0xff] %v7507
      %7540 = vst [vmem:[#allocation2 + $0x8] sm:$0xff] %v7508
      %7541 = vst [vmem:[#allocation2 + $0x10] sm:$0xff] %v7509
      %7542 = vst [vmem:[#allocation2 + $0x18] sm:$0xff] %v7510
      %7543 = vst [vmem:[#allocation2 + $0x20] sm:$0xff] %v7511
      %7544 = vst [vmem:[#allocation2 + $0x28] sm:$0xff] %v7512
      %7545 = vst [vmem:[#allocation2 + $0x30] sm:$0xff] %v7513
      %7546 = vst [vmem:[#allocation2 + $0x38] sm:$0xff] %v7514
      %7547 = vst [vmem:[#allocation2 + $0x40] sm:$0xff] %v7515
      %7548 = vst [vmem:[#allocation2 + $0x48] sm:$0xff] %v7516
      %7549 = vst [vmem:[#allocation2 + $0x50] sm:$0xff] %v7517
      %7550 = vst [vmem:[#allocation2 + $0x58] sm:$0xff] %v7518
      %7551 = vst [vmem:[#allocation2 + $0x60] sm:$0xff] %v7519
      %7552 = vst [vmem:[#allocation2 + $0x68] sm:$0xff] %v7520
      %7553 = vst [vmem:[#allocation2 + $0x70] sm:$0xff] %v7521
      %7554 = vst [vmem:[#allocation2 + $0x78] sm:$0xff] %v7522
      %7555 = vst [vmem:[#allocation2 + $0x80] sm:$0xff] %v7523
      %7556 = vst [vmem:[#allocation2 + $0x88] sm:$0xff] %v7524
      %7557 = vst [vmem:[#allocation2 + $0x90] sm:$0xff] %v7525
      %7558 = vst [vmem:[#allocation2 + $0x98] sm:$0xff] %v7526
      %7559 = vst [vmem:[#allocation2 + $0xa0] sm:$0xff] %v7527
      %7560 = vst [vmem:[#allocation2 + $0xa8] sm:$0xff] %v7528
      %7561 = vst [vmem:[#allocation2 + $0xb0] sm:$0xff] %v7529
      %7562 = vst [vmem:[#allocation2 + $0xb8] sm:$0xff] %v7530
      %7563 = vst [vmem:[#allocation2 + $0xc0] sm:$0xff] %v7531
      %7564 = vst [vmem:[#allocation2 + $0xc8] sm:$0xff] %v7532
      %7565 = vst [vmem:[#allocation2 + $0xd0] sm:$0xff] %v7533
      %7566 = vst [vmem:[#allocation2 + $0xd8] sm:$0xff] %v7534
      %7567 = vst [vmem:[#allocation2 + $0xe0] sm:$0xff] %v7535
      %7568 = vst [vmem:[#allocation2 + $0xe8] sm:$0xff] %v7536
      %7569 = vst [vmem:[#allocation2 + $0xf0] sm:$0xff] %v7537
      %7570 = vst [vmem:[#allocation2 + $0xf8] sm:$0xff] %v7538
      %v7571 = vld [vmem:[#allocation3 + $0x19] sm:$0xff]
      %v7572 = vld [vmem:[#allocation3 + $0x21] sm:$0xff]
      %v7573 = vld [vmem:[#allocation3 + $0x29] sm:$0xff]
      %v7574 = vld [vmem:[#allocation3 + $0x31] sm:$0xff]
      %v7575 = vld [vmem:[#allocation3 + $0x39] sm:$0xff]
      %v7576 = vld [vmem:[#allocation3 + $0x41] sm:$0xff]
      %v7577 = vld [vmem:[#allocation3 + $0x49] sm:$0xff]
      %v7578 = vld [vmem:[#allocation3 + $0x51] sm:$0xff]
      %v7579 = vld [vmem:[#allocation3 + $0x59] sm:$0xff]
      %v7580 = vld [vmem:[#allocation3 + $0x61] sm:$0xff]
      %v7581 = vld [vmem:[#allocation3 + $0x69] sm:$0xff]
      %v7582 = vld [vmem:[#allocation3 + $0x71] sm:$0xff]
      %v7583 = vld [vmem:[#allocation3 + $0x79] sm:$0xff]
      %v7584 = vld [vmem:[#allocation3 + $0x81] sm:$0xff]
      %v7585 = vld [vmem:[#allocation3 + $0x89] sm:$0xff]
      %v7586 = vld [vmem:[#allocation3 + $0x91] sm:$0xff]
      %v7587 = vld [vmem:[#allocation3 + $0x99] sm:$0xff]
      %v7588 = vld [vmem:[#allocation3 + $0xa1] sm:$0xff]
      %v7589 = vld [vmem:[#allocation3 + $0xa9] sm:$0xff]
      %v7590 = vld [vmem:[#allocation3 + $0xb1] sm:$0xff]
      %v7591 = vld [vmem:[#allocation3 + $0xb9] sm:$0xff]
      %v7592 = vld [vmem:[#allocation3 + $0xc1] sm:$0xff]
      %v7593 = vld [vmem:[#allocation3 + $0xc9] sm:$0xff]
      %v7594 = vld [vmem:[#allocation3 + $0xd1] sm:$0xff]
      %v7595 = vld [vmem:[#allocation3 + $0xd9] sm:$0xff]
      %v7596 = vld [vmem:[#allocation3 + $0xe1] sm:$0xff]
      %v7597 = vld [vmem:[#allocation3 + $0xe9] sm:$0xff]
      %v7598 = vld [vmem:[#allocation3 + $0xf1] sm:$0xff]
      %v7599 = vld [vmem:[#allocation3 + $0xf9] sm:$0xff]
      %v7600 = vld [vmem:[#allocation3 + $0x101] sm:$0xff]
      %v7601 = vld [vmem:[#allocation3 + $0x109] sm:$0xff]
      %v7602 = vld [vmem:[#allocation3 + $0x111] sm:$0xff]
      %v7603 = vld [vmem:[#allocation2] sm:$0xff]
      %v7604 = vld [vmem:[#allocation2 + $0x8] sm:$0xff]
      %v7605 = vld [vmem:[#allocation2 + $0x10] sm:$0xff]
      %v7606 = vld [vmem:[#allocation2 + $0x18] sm:$0xff]
      %v7607 = vld [vmem:[#allocation2 + $0x20] sm:$0xff]
      %v7608 = vld [vmem:[#allocation2 + $0x28] sm:$0xff]
      %v7609 = vld [vmem:[#allocation2 + $0x30] sm:$0xff]
      %v7610 = vld [vmem:[#allocation2 + $0x38] sm:$0xff]
      %v7611 = vld [vmem:[#allocation2 + $0x40] sm:$0xff]
      %v7612 = vld [vmem:[#allocation2 + $0x48] sm:$0xff]
      %v7613 = vld [vmem:[#allocation2 + $0x50] sm:$0xff]
      %v7614 = vld [vmem:[#allocation2 + $0x58] sm:$0xff]
      %v7615 = vld [vmem:[#allocation2 + $0x60] sm:$0xff]
      %v7616 = vld [vmem:[#allocation2 + $0x68] sm:$0xff]
      %v7617 = vld [vmem:[#allocation2 + $0x70] sm:$0xff]
      %v7618 = vld [vmem:[#allocation2 + $0x78] sm:$0xff]
      %v7619 = vld [vmem:[#allocation2 + $0x80] sm:$0xff]
      %v7620 = vld [vmem:[#allocation2 + $0x88] sm:$0xff]
      %v7621 = vld [vmem:[#allocation2 + $0x90] sm:$0xff]
      %v7622 = vld [vmem:[#allocation2 + $0x98] sm:$0xff]
      %v7623 = vld [vmem:[#allocation2 + $0xa0] sm:$0xff]
      %v7624 = vld [vmem:[#allocation2 + $0xa8] sm:$0xff]
      %v7625 = vld [vmem:[#allocation2 + $0xb0] sm:$0xff]
      %v7626 = vld [vmem:[#allocation2 + $0xb8] sm:$0xff]
      %v7627 = vld [vmem:[#allocation2 + $0xc0] sm:$0xff]
      %v7628 = vld [vmem:[#allocation2 + $0xc8] sm:$0xff]
      %v7629 = vld [vmem:[#allocation2 + $0xd0] sm:$0xff]
      %v7630 = vld [vmem:[#allocation2 + $0xd8] sm:$0xff]
      %v7631 = vld [vmem:[#allocation2 + $0xe0] sm:$0xff]
      %v7632 = vld [vmem:[#allocation2 + $0xe8] sm:$0xff]
      %v7633 = vld [vmem:[#allocation2 + $0xf0] sm:$0xff]
      %v7634 = vld [vmem:[#allocation2 + $0xf8] sm:$0xff]
      %v7635 = vpack.c.bf16 %v7572, %v7571
      %v7636 = vpack.c.bf16 %v7574, %v7573
      %v7637 = vpack.c.bf16 %v7576, %v7575
      %v7638 = vpack.c.bf16 %v7578, %v7577
      %v7639 = vpack.c.bf16 %v7580, %v7579
      %v7640 = vpack.c.bf16 %v7582, %v7581
      %v7641 = vpack.c.bf16 %v7584, %v7583
      %v7642 = vpack.c.bf16 %v7586, %v7585
      %v7643 = vpack.c.bf16 %v7588, %v7587
      %v7644 = vpack.c.bf16 %v7590, %v7589
      %v7645 = vpack.c.bf16 %v7592, %v7591
      %v7646 = vpack.c.bf16 %v7594, %v7593
      %v7647 = vpack.c.bf16 %v7596, %v7595
      %v7648 = vpack.c.bf16 %v7598, %v7597
      %v7649 = vpack.c.bf16 %v7600, %v7599
      %v7650 = vpack.c.bf16 %v7602, %v7601
      %s7651 = scalar_lea.vmem %s7, 320
      %v7652 = vld [vmem:[%s7651] sm:$0xf]
      %v7653 = vld [vmem:[%s7651 + $0x4] sm:$0xf]
      %v7654 = vld [vmem:[%s7651 + $0x8] sm:$0xf]
      %v7655 = vld [vmem:[%s7651 + $0xc] sm:$0xf]
      %v7656 = vld [vmem:[%s7651 + $0x10] sm:$0xf]
      %v7657 = vld [vmem:[%s7651 + $0x14] sm:$0xf]
      %v7658 = vld [vmem:[%s7651 + $0x18] sm:$0xf]
      %v7659 = vld [vmem:[%s7651 + $0x1c] sm:$0xf]
      %v7660 = vld [vmem:[%s7651 + $0x20] sm:$0xf]
      %v7661 = vld [vmem:[%s7651 + $0x24] sm:$0xf]
      %v7662 = vld [vmem:[%s7651 + $0x28] sm:$0xf]
      %v7663 = vld [vmem:[%s7651 + $0x2c] sm:$0xf]
      %v7664 = vld [vmem:[%s7651 + $0x30] sm:$0xf]
      %v7665 = vld [vmem:[%s7651 + $0x34] sm:$0xf]
      %v7666 = vld [vmem:[%s7651 + $0x38] sm:$0xf]
      %v7667 = vld [vmem:[%s7651 + $0x3c] sm:$0xf]
      %v7684 = vunpack.c.l.b16 %v7652
      %v7685 = vunpack.c.l.b16 %v7653
      %v7686 = vunpack.c.l.b16 %v7654
      %v7687 = vunpack.c.l.b16 %v7655
      %v7688 = vunpack.c.l.b16 %v7656
      %v7689 = vunpack.c.l.b16 %v7657
      %v7690 = vunpack.c.l.b16 %v7658
      %v7691 = vunpack.c.l.b16 %v7659
      %v7692 = vunpack.c.l.b16 %v7660
      %v7693 = vunpack.c.l.b16 %v7661
      %v7694 = vunpack.c.l.b16 %v7662
      %v7695 = vunpack.c.l.b16 %v7663
      %v7696 = vunpack.c.l.b16 %v7664
      %v7697 = vunpack.c.l.b16 %v7665
      %v7698 = vunpack.c.l.b16 %v7666
      %v7699 = vunpack.c.l.b16 %v7667
      %v7700 = vpack.c.b16 %v7685, %v7684
      %v7701 = vpack.c.b16 %v7687, %v7686
      %v7702 = vpack.c.b16 %v7689, %v7688
      %v7703 = vpack.c.b16 %v7691, %v7690
      %v7704 = vpack.c.b16 %v7693, %v7692
      %v7705 = vpack.c.b16 %v7695, %v7694
      %v7706 = vpack.c.b16 %v7697, %v7696
      %v7707 = vpack.c.b16 %v7699, %v7698
      %7716 = vmatprep.subr.bf16.mxu0 0
      %7717 = vmatpush1.bf16.msra.mxu0 %v7700
      %7718 = vmatprep.subr.bf16.mxu0 0
      %7719 = vmatpush1.bf16.msra.mxu0 %v7701
      %7720 = vmatprep.subr.bf16.mxu0 0
      %7721 = vmatpush1.bf16.msra.mxu0 %v7702
      %7722 = vmatprep.subr.bf16.mxu0 0
      %7723 = vmatpush1.bf16.msra.mxu0 %v7703
      %7724 = vmatprep.subr.bf16.mxu0 0
      %7725 = vmatpush1.bf16.msra.mxu0 %v7704
      %7726 = vmatprep.subr.bf16.mxu0 0
      %7727 = vmatpush1.bf16.msra.mxu0 %v7705
      %7728 = vmatprep.subr.bf16.mxu0 0
      %7729 = vmatpush1.bf16.msra.mxu0 %v7706
      %7730 = vmatprep.subr.bf16.mxu0 0
      %7731 = vmatpush1.bf16.msra.mxu0 %v7707
      %7732 = vmatprep.subr.bf16.mxu0 0
      %7733 = vmatpush1.bf16.msra.mxu0 0
      %7734 = vmatprep.subr.bf16.mxu0 0
      %7735 = vmatpush1.bf16.msra.mxu0 0
      %7736 = vmatprep.subr.bf16.mxu0 0
      %7737 = vmatpush1.bf16.msra.mxu0 0
      %7738 = vmatprep.subr.bf16.mxu0 0
      %7739 = vmatpush1.bf16.msra.mxu0 0
      %7740 = vmatprep.subr.bf16.mxu0 0
      %7741 = vmatpush1.bf16.msra.mxu0 0
      %7742 = vmatprep.subr.bf16.mxu0 0
      %7743 = vmatpush1.bf16.msra.mxu0 0
      %7744 = vmatprep.subr.bf16.mxu0 0
      %7745 = vmatpush1.bf16.msra.mxu0 0
      %7746 = vmatprep.subr.bf16.mxu0 0
      %7747 = vmatpush1.bf16.msra.mxu0 0
      %7748 = vmatprep.mubr.bf16.mxu0 0
      %7749 = vmatmul.mubr.bf16.gmra.mrb[0].mxu0 %v7635
      %v7750 = vpop.f32.mrb[0].mxu0
      %v7751 = vadd.f32 0.0, %v7750
      %v7752 = vpop.f32.mrb[0].mxu0
      %v7753 = vpop.f32.mrb[0].mxu0
      %v7754 = vadd.f32 0.0, %v7753
      %v7755 = vpop.f32.mrb[0].mxu0
      %7756 = vmatprep.mubr.bf16.mxu0 0
      %7757 = vmatmul.mubr.bf16.gmra.mrb[0].mxu0 %v7636
      %v7758 = vpop.f32.mrb[0].mxu0
      %v7759 = vadd.f32 0.0, %v7758
      %v7760 = vpop.f32.mrb[0].mxu0
      %v7761 = vpop.f32.mrb[0].mxu0
      %v7762 = vadd.f32 0.0, %v7761
      %v7763 = vpop.f32.mrb[0].mxu0
      %7764 = vmatprep.mubr.bf16.mxu0 0
      %7765 = vmatmul.mubr.bf16.gmra.mrb[0].mxu0 %v7637
      %v7766 = vpop.f32.mrb[0].mxu0
      %v7767 = vadd.f32 0.0, %v7766
      %v7768 = vpop.f32.mrb[0].mxu0
      %v7769 = vpop.f32.mrb[0].mxu0
      %v7770 = vadd.f32 0.0, %v7769
      %v7771 = vpop.f32.mrb[0].mxu0
      %7772 = vmatprep.mubr.bf16.mxu0 0
      %7773 = vmatmul.mubr.bf16.gmra.mrb[0].mxu0 %v7638
      %v7774 = vpop.f32.mrb[0].mxu0
      %v7775 = vadd.f32 0.0, %v7774
      %v7776 = vpop.f32.mrb[0].mxu0
      %v7777 = vpop.f32.mrb[0].mxu0
      %v7778 = vadd.f32 0.0, %v7777
      %v7779 = vpop.f32.mrb[0].mxu0
      %7780 = vmatprep.mubr.bf16.mxu0 0
      %7781 = vmatmul.mubr.bf16.gmra.mrb[0].mxu0 %v7639
      %v7782 = vpop.f32.mrb[0].mxu0
      %v7783 = vadd.f32 0.0, %v7782
      %v7784 = vpop.f32.mrb[0].mxu0
      %v7785 = vpop.f32.mrb[0].mxu0
      %v7786 = vadd.f32 0.0, %v7785
      %v7787 = vpop.f32.mrb[0].mxu0
      %7788 = vmatprep.mubr.bf16.mxu0 0
      %7789 = vmatmul.mubr.bf16.gmra.mrb[0].mxu0 %v7640
      %v7790 = vpop.f32.mrb[0].mxu0
      %v7791 = vadd.f32 0.0, %v7790
      %v7792 = vpop.f32.mrb[0].mxu0
      %v7793 = vpop.f32.mrb[0].mxu0
      %v7794 = vadd.f32 0.0, %v7793
      %v7795 = vpop.f32.mrb[0].mxu0
      %7796 = vmatprep.mubr.bf16.mxu0 0
      %7797 = vmatmul.mubr.bf16.gmra.mrb[0].mxu0 %v7641
      %v7798 = vpop.f32.mrb[0].mxu0
      %v7799 = vadd.f32 0.0, %v7798
      %v7800 = vpop.f32.mrb[0].mxu0
      %v7801 = vpop.f32.mrb[0].mxu0
      %v7802 = vadd.f32 0.0, %v7801
      %v7803 = vpop.f32.mrb[0].mxu0
      %7804 = vmatprep.mubr.bf16.mxu0 0
      %7805 = vmatmul.mubr.bf16.gmra.mrb[0].mxu0 %v7642
      %v7806 = vpop.f32.mrb[0].mxu0
      %v7807 = vadd.f32 0.0, %v7806
      %v7808 = vpop.f32.mrb[0].mxu0
      %v7809 = vpop.f32.mrb[0].mxu0
      %v7810 = vadd.f32 0.0, %v7809
      %v7811 = vpop.f32.mrb[0].mxu0
      %7812 = vmatprep.mubr.bf16.mxu0 0
      %7813 = vmatmul.mubr.bf16.gmra.mrb[0].mxu0 %v7643
      %v7814 = vpop.f32.mrb[0].mxu0
      %v7815 = vadd.f32 0.0, %v7814
      %v7816 = vpop.f32.mrb[0].mxu0
      %v7817 = vpop.f32.mrb[0].mxu0
      %v7818 = vadd.f32 0.0, %v7817
      %v7819 = vpop.f32.mrb[0].mxu0
      %7820 = vmatprep.mubr.bf16.mxu0 0
      %7821 = vmatmul.mubr.bf16.gmra.mrb[0].mxu0 %v7644
      %v7822 = vpop.f32.mrb[0].mxu0
      %v7823 = vadd.f32 0.0, %v7822
      %v7824 = vpop.f32.mrb[0].mxu0
      %v7825 = vpop.f32.mrb[0].mxu0
      %v7826 = vadd.f32 0.0, %v7825
      %v7827 = vpop.f32.mrb[0].mxu0
      %7828 = vmatprep.mubr.bf16.mxu0 0
      %7829 = vmatmul.mubr.bf16.gmra.mrb[0].mxu0 %v7645
      %v7830 = vpop.f32.mrb[0].mxu0
      %v7831 = vadd.f32 0.0, %v7830
      %v7832 = vpop.f32.mrb[0].mxu0
      %v7833 = vpop.f32.mrb[0].mxu0
      %v7834 = vadd.f32 0.0, %v7833
      %v7835 = vpop.f32.mrb[0].mxu0
      %7836 = vmatprep.mubr.bf16.mxu0 0
      %7837 = vmatmul.mubr.bf16.gmra.mrb[0].mxu0 %v7646
      %v7838 = vpop.f32.mrb[0].mxu0
      %v7839 = vadd.f32 0.0, %v7838
      %v7840 = vpop.f32.mrb[0].mxu0
      %v7841 = vpop.f32.mrb[0].mxu0
      %v7842 = vadd.f32 0.0, %v7841
      %v7843 = vpop.f32.mrb[0].mxu0
      %7844 = vmatprep.mubr.bf16.mxu0 0
      %7845 = vmatmul.mubr.bf16.gmra.mrb[0].mxu0 %v7647
      %v7846 = vpop.f32.mrb[0].mxu0
      %v7847 = vadd.f32 0.0, %v7846
      %v7848 = vpop.f32.mrb[0].mxu0
      %v7849 = vpop.f32.mrb[0].mxu0
      %v7850 = vadd.f32 0.0, %v7849
      %v7851 = vpop.f32.mrb[0].mxu0
      %7852 = vmatprep.mubr.bf16.mxu0 0
      %7853 = vmatmul.mubr.bf16.gmra.mrb[0].mxu0 %v7648
      %v7854 = vpop.f32.mrb[0].mxu0
      %v7855 = vadd.f32 0.0, %v7854
      %v7856 = vpop.f32.mrb[0].mxu0
      %v7857 = vpop.f32.mrb[0].mxu0
      %v7858 = vadd.f32 0.0, %v7857
      %v7859 = vpop.f32.mrb[0].mxu0
      %7860 = vmatprep.mubr.bf16.mxu0 0
      %7861 = vmatmul.mubr.bf16.gmra.mrb[0].mxu0 %v7649
      %v7862 = vpop.f32.mrb[0].mxu0
      %v7863 = vadd.f32 0.0, %v7862
      %v7864 = vpop.f32.mrb[0].mxu0
      %v7865 = vpop.f32.mrb[0].mxu0
      %v7866 = vadd.f32 0.0, %v7865
      %v7867 = vpop.f32.mrb[0].mxu0
      %7868 = vmatprep.mubr.bf16.mxu0 0
      %7869 = vmatmul.mubr.bf16.gmra.mrb[0].mxu0 %v7650
      %v7870 = vpop.f32.mrb[0].mxu0
      %v7871 = vadd.f32 0.0, %v7870
      %v7872 = vpop.f32.mrb[0].mxu0
      %v7873 = vpop.f32.mrb[0].mxu0
      %v7874 = vadd.f32 0.0, %v7873
      %v7875 = vpop.f32.mrb[0].mxu0
      %7876 = vdwg.mxu0
      %v7877 = vadd.f32 %v7603, %v7751
      %v7878 = vadd.f32 %v7604, %v7754
      %v7879 = vadd.f32 %v7605, %v7759
      %v7880 = vadd.f32 %v7606, %v7762
      %v7881 = vadd.f32 %v7607, %v7767
      %v7882 = vadd.f32 %v7608, %v7770
      %v7883 = vadd.f32 %v7609, %v7775
      %v7884 = vadd.f32 %v7610, %v7778
      %v7885 = vadd.f32 %v7611, %v7783
      %v7886 = vadd.f32 %v7612, %v7786
      %v7887 = vadd.f32 %v7613, %v7791
      %v7888 = vadd.f32 %v7614, %v7794
      %v7889 = vadd.f32 %v7615, %v7799
      %v7890 = vadd.f32 %v7616, %v7802
      %v7891 = vadd.f32 %v7617, %v7807
      %v7892 = vadd.f32 %v7618, %v7810
      %v7893 = vadd.f32 %v7619, %v7815
      %v7894 = vadd.f32 %v7620, %v7818
      %v7895 = vadd.f32 %v7621, %v7823
      %v7896 = vadd.f32 %v7622, %v7826
      %v7897 = vadd.f32 %v7623, %v7831
      %v7898 = vadd.f32 %v7624, %v7834
      %v7899 = vadd.f32 %v7625, %v7839
      %v7900 = vadd.f32 %v7626, %v7842
      %v7901 = vadd.f32 %v7627, %v7847
      %v7902 = vadd.f32 %v7628, %v7850
      %v7903 = vadd.f32 %v7629, %v7855
      %v7904 = vadd.f32 %v7630, %v7858
      %v7905 = vadd.f32 %v7631, %v7863
      %v7906 = vadd.f32 %v7632, %v7866
      %v7907 = vadd.f32 %v7633, %v7871
      %v7908 = vadd.f32 %v7634, %v7874
      %7909 = vst [vmem:[#allocation2] sm:$0xff] %v7877
      %7910 = vst [vmem:[#allocation2 + $0x8] sm:$0xff] %v7878
      %7911 = vst [vmem:[#allocation2 + $0x10] sm:$0xff] %v7879
      %7912 = vst [vmem:[#allocation2 + $0x18] sm:$0xff] %v7880
      %7913 = vst [vmem:[#allocation2 + $0x20] sm:$0xff] %v7881
      %7914 = vst [vmem:[#allocation2 + $0x28] sm:$0xff] %v7882
      %7915 = vst [vmem:[#allocation2 + $0x30] sm:$0xff] %v7883
      %7916 = vst [vmem:[#allocation2 + $0x38] sm:$0xff] %v7884
      %7917 = vst [vmem:[#allocation2 + $0x40] sm:$0xff] %v7885
      %7918 = vst [vmem:[#allocation2 + $0x48] sm:$0xff] %v7886
      %7919 = vst [vmem:[#allocation2 + $0x50] sm:$0xff] %v7887
      %7920 = vst [vmem:[#allocation2 + $0x58] sm:$0xff] %v7888
      %7921 = vst [vmem:[#allocation2 + $0x60] sm:$0xff] %v7889
      %7922 = vst [vmem:[#allocation2 + $0x68] sm:$0xff] %v7890
      %7923 = vst [vmem:[#allocation2 + $0x70] sm:$0xff] %v7891
      %7924 = vst [vmem:[#allocation2 + $0x78] sm:$0xff] %v7892
      %7925 = vst [vmem:[#allocation2 + $0x80] sm:$0xff] %v7893
      %7926 = vst [vmem:[#allocation2 + $0x88] sm:$0xff] %v7894
      %7927 = vst [vmem:[#allocation2 + $0x90] sm:$0xff] %v7895
      %7928 = vst [vmem:[#allocation2 + $0x98] sm:$0xff] %v7896
      %7929 = vst [vmem:[#allocation2 + $0xa0] sm:$0xff] %v7897
      %7930 = vst [vmem:[#allocation2 + $0xa8] sm:$0xff] %v7898
      %7931 = vst [vmem:[#allocation2 + $0xb0] sm:$0xff] %v7899
      %7932 = vst [vmem:[#allocation2 + $0xb8] sm:$0xff] %v7900
      %7933 = vst [vmem:[#allocation2 + $0xc0] sm:$0xff] %v7901
      %7934 = vst [vmem:[#allocation2 + $0xc8] sm:$0xff] %v7902
      %7935 = vst [vmem:[#allocation2 + $0xd0] sm:$0xff] %v7903
      %7936 = vst [vmem:[#allocation2 + $0xd8] sm:$0xff] %v7904
      %7937 = vst [vmem:[#allocation2 + $0xe0] sm:$0xff] %v7905
      %7938 = vst [vmem:[#allocation2 + $0xe8] sm:$0xff] %v7906
      %7939 = vst [vmem:[#allocation2 + $0xf0] sm:$0xff] %v7907
      %7940 = vst [vmem:[#allocation2 + $0xf8] sm:$0xff] %v7908
      %v7941 = vld [vmem:[#allocation3 + $0x29] sm:$0xff]
      %v7942 = vld [vmem:[#allocation3 + $0x31] sm:$0xff]
      %v7943 = vld [vmem:[#allocation3 + $0x39] sm:$0xff]
      %v7944 = vld [vmem:[#allocation3 + $0x41] sm:$0xff]
      %v7945 = vld [vmem:[#allocation3 + $0x49] sm:$0xff]
      %v7946 = vld [vmem:[#allocation3 + $0x51] sm:$0xff]
      %v7947 = vld [vmem:[#allocation3 + $0x59] sm:$0xff]
      %v7948 = vld [vmem:[#allocation3 + $0x61] sm:$0xff]
      %v7949 = vld [vmem:[#allocation3 + $0x69] sm:$0xff]
      %v7950 = vld [vmem:[#allocation3 + $0x71] sm:$0xff]
      %v7951 = vld [vmem:[#allocation3 + $0x79] sm:$0xff]
      %v7952 = vld [vmem:[#allocation3 + $0x81] sm:$0xff]
      %v7953 = vld [vmem:[#allocation3 + $0x89] sm:$0xff]
      %v7954 = vld [vmem:[#allocation3 + $0x91] sm:$0xff]
      %v7955 = vld [vmem:[#allocation3 + $0x99] sm:$0xff]
      %v7956 = vld [vmem:[#allocation3 + $0xa1] sm:$0xff]
      %v7957 = vld [vmem:[#allocation3 + $0xa9] sm:$0xff]
      %v7958 = vld [vmem:[#allocation3 + $0xb1] sm:$0xff]
      %v7959 = vld [vmem:[#allocation3 + $0xb9] sm:$0xff]
      %v7960 = vld [vmem:[#allocation3 + $0xc1] sm:$0xff]
      %v7961 = vld [vmem:[#allocation3 + $0xc9] sm:$0xff]
      %v7962 = vld [vmem:[#allocation3 + $0xd1] sm:$0xff]
      %v7963 = vld [vmem:[#allocation3 + $0xd9] sm:$0xff]
      %v7964 = vld [vmem:[#allocation3 + $0xe1] sm:$0xff]
      %v7965 = vld [vmem:[#allocation3 + $0xe9] sm:$0xff]
      %v7966 = vld [vmem:[#allocation3 + $0xf1] sm:$0xff]
      %v7967 = vld [vmem:[#allocation3 + $0xf9] sm:$0xff]
      %v7968 = vld [vmem:[#allocation3 + $0x101] sm:$0xff]
      %v7969 = vld [vmem:[#allocation3 + $0x109] sm:$0xff]
      %v7970 = vld [vmem:[#allocation3 + $0x111] sm:$0xff]
      %v7971 = vld [vmem:[#allocation3 + $0x119] sm:$0xff]
      %v7972 = vld [vmem:[#allocation3 + $0x121] sm:$0xff]
      %v7973 = vld [vmem:[#allocation2] sm:$0xff]
      %v7974 = vld [vmem:[#allocation2 + $0x8] sm:$0xff]
      %v7975 = vld [vmem:[#allocation2 + $0x10] sm:$0xff]
      %v7976 = vld [vmem:[#allocation2 + $0x18] sm:$0xff]
      %v7977 = vld [vmem:[#allocation2 + $0x20] sm:$0xff]
      %v7978 = vld [vmem:[#allocation2 + $0x28] sm:$0xff]
      %v7979 = vld [vmem:[#allocation2 + $0x30] sm:$0xff]
      %v7980 = vld [vmem:[#allocation2 + $0x38] sm:$0xff]
      %v7981 = vld [vmem:[#allocation2 + $0x40] sm:$0xff]
      %v7982 = vld [vmem:[#allocation2 + $0x48] sm:$0xff]
      %v7983 = vld [vmem:[#allocation2 + $0x50] sm:$0xff]
      %v7984 = vld [vmem:[#allocation2 + $0x58] sm:$0xff]
      %v7985 = vld [vmem:[#allocation2 + $0x60] sm:$0xff]
      %v7986 = vld [vmem:[#allocation2 + $0x68] sm:$0xff]
      %v7987 = vld [vmem:[#allocation2 + $0x70] sm:$0xff]
      %v7988 = vld [vmem:[#allocation2 + $0x78] sm:$0xff]
      %v7989 = vld [vmem:[#allocation2 + $0x80] sm:$0xff]
      %v7990 = vld [vmem:[#allocation2 + $0x88] sm:$0xff]
      %v7991 = vld [vmem:[#allocation2 + $0x90] sm:$0xff]
      %v7992 = vld [vmem:[#allocation2 + $0x98] sm:$0xff]
      %v7993 = vld [vmem:[#allocation2 + $0xa0] sm:$0xff]
      %v7994 = vld [vmem:[#allocation2 + $0xa8] sm:$0xff]
      %v7995 = vld [vmem:[#allocation2 + $0xb0] sm:$0xff]
      %v7996 = vld [vmem:[#allocation2 + $0xb8] sm:$0xff]
      %v7997 = vld [vmem:[#allocation2 + $0xc0] sm:$0xff]
      %v7998 = vld [vmem:[#allocation2 + $0xc8] sm:$0xff]
      %v7999 = vld [vmem:[#allocation2 + $0xd0] sm:$0xff]
      %v8000 = vld [vmem:[#allocation2 + $0xd8] sm:$0xff]
      %v8001 = vld [vmem:[#allocation2 + $0xe0] sm:$0xff]
      %v8002 = vld [vmem:[#allocation2 + $0xe8] sm:$0xff]
      %v8003 = vld [vmem:[#allocation2 + $0xf0] sm:$0xff]
      %v8004 = vld [vmem:[#allocation2 + $0xf8] sm:$0xff]
      %v8005 = vpack.c.bf16 %v7942, %v7941
      %v8006 = vpack.c.bf16 %v7944, %v7943
      %v8007 = vpack.c.bf16 %v7946, %v7945
      %v8008 = vpack.c.bf16 %v7948, %v7947
      %v8009 = vpack.c.bf16 %v7950, %v7949
      %v8010 = vpack.c.bf16 %v7952, %v7951
      %v8011 = vpack.c.bf16 %v7954, %v7953
      %v8012 = vpack.c.bf16 %v7956, %v7955
      %v8013 = vpack.c.bf16 %v7958, %v7957
      %v8014 = vpack.c.bf16 %v7960, %v7959
      %v8015 = vpack.c.bf16 %v7962, %v7961
      %v8016 = vpack.c.bf16 %v7964, %v7963
      %v8017 = vpack.c.bf16 %v7966, %v7965
      %v8018 = vpack.c.bf16 %v7968, %v7967
      %v8019 = vpack.c.bf16 %v7970, %v7969
      %v8020 = vpack.c.bf16 %v7972, %v7971
      %s8021 = scalar_lea.vmem %s7, 512
      %v8022 = vld [vmem:[%s8021] sm:$0xf]
      %v8023 = vld [vmem:[%s8021 + $0x4] sm:$0xf]
      %v8024 = vld [vmem:[%s8021 + $0x8] sm:$0xf]
      %v8025 = vld [vmem:[%s8021 + $0xc] sm:$0xf]
      %v8026 = vld [vmem:[%s8021 + $0x10] sm:$0xf]
      %v8027 = vld [vmem:[%s8021 + $0x14] sm:$0xf]
      %v8028 = vld [vmem:[%s8021 + $0x18] sm:$0xf]
      %v8029 = vld [vmem:[%s8021 + $0x1c] sm:$0xf]
      %v8030 = vld [vmem:[%s8021 + $0x20] sm:$0xf]
      %v8031 = vld [vmem:[%s8021 + $0x24] sm:$0xf]
      %v8032 = vld [vmem:[%s8021 + $0x28] sm:$0xf]
      %v8033 = vld [vmem:[%s8021 + $0x2c] sm:$0xf]
      %v8034 = vld [vmem:[%s8021 + $0x30] sm:$0xf]
      %v8035 = vld [vmem:[%s8021 + $0x34] sm:$0xf]
      %v8036 = vld [vmem:[%s8021 + $0x38] sm:$0xf]
      %v8037 = vld [vmem:[%s8021 + $0x3c] sm:$0xf]
      %v8054 = vunpack.c.l.b16 %v8022
      %v8055 = vunpack.c.l.b16 %v8023
      %v8056 = vunpack.c.l.b16 %v8024
      %v8057 = vunpack.c.l.b16 %v8025
      %v8058 = vunpack.c.l.b16 %v8026
      %v8059 = vunpack.c.l.b16 %v8027
      %v8060 = vunpack.c.l.b16 %v8028
      %v8061 = vunpack.c.l.b16 %v8029
      %v8062 = vunpack.c.l.b16 %v8030
      %v8063 = vunpack.c.l.b16 %v8031
      %v8064 = vunpack.c.l.b16 %v8032
      %v8065 = vunpack.c.l.b16 %v8033
      %v8066 = vunpack.c.l.b16 %v8034
      %v8067 = vunpack.c.l.b16 %v8035
      %v8068 = vunpack.c.l.b16 %v8036
      %v8069 = vunpack.c.l.b16 %v8037
      %v8070 = vpack.c.b16 %v8055, %v8054
      %v8071 = vpack.c.b16 %v8057, %v8056
      %v8072 = vpack.c.b16 %v8059, %v8058
      %v8073 = vpack.c.b16 %v8061, %v8060
      %v8074 = vpack.c.b16 %v8063, %v8062
      %v8075 = vpack.c.b16 %v8065, %v8064
      %v8076 = vpack.c.b16 %v8067, %v8066
      %v8077 = vpack.c.b16 %v8069, %v8068
      %8086 = vmatprep.subr.bf16.mxu0 0
      %8087 = vmatpush1.bf16.msra.mxu0 %v8070
      %8088 = vmatprep.subr.bf16.mxu0 0
      %8089 = vmatpush1.bf16.msra.mxu0 %v8071
      %8090 = vmatprep.subr.bf16.mxu0 0
      %8091 = vmatpush1.bf16.msra.mxu0 %v8072
      %8092 = vmatprep.subr.bf16.mxu0 0
      %8093 = vmatpush1.bf16.msra.mxu0 %v8073
      %8094 = vmatprep.subr.bf16.mxu0 0
      %8095 = vmatpush1.bf16.msra.mxu0 %v8074
      %8096 = vmatprep.subr.bf16.mxu0 0
      %8097 = vmatpush1.bf16.msra.mxu0 %v8075
      %8098 = vmatprep.subr.bf16.mxu0 0
      %8099 = vmatpush1.bf16.msra.mxu0 %v8076
      %8100 = vmatprep.subr.bf16.mxu0 0
      %8101 = vmatpush1.bf16.msra.mxu0 %v8077
      %8102 = vmatprep.subr.bf16.mxu0 0
      %8103 = vmatpush1.bf16.msra.mxu0 0
      %8104 = vmatprep.subr.bf16.mxu0 0
      %8105 = vmatpush1.bf16.msra.mxu0 0
      %8106 = vmatprep.subr.bf16.mxu0 0
      %8107 = vmatpush1.bf16.msra.mxu0 0
      %8108 = vmatprep.subr.bf16.mxu0 0
      %8109 = vmatpush1.bf16.msra.mxu0 0
      %8110 = vmatprep.subr.bf16.mxu0 0
      %8111 = vmatpush1.bf16.msra.mxu0 0
      %8112 = vmatprep.subr.bf16.mxu0 0
      %8113 = vmatpush1.bf16.msra.mxu0 0
      %8114 = vmatprep.subr.bf16.mxu0 0
      %8115 = vmatpush1.bf16.msra.mxu0 0
      %8116 = vmatprep.subr.bf16.mxu0 0
      %8117 = vmatpush1.bf16.msra.mxu0 0
      %8118 = vmatprep.mubr.bf16.mxu0 0
      %8119 = vmatmul.mubr.bf16.gmra.mrb[0].mxu0 %v8005
      %v8120 = vpop.f32.mrb[0].mxu0
      %v8121 = vadd.f32 0.0, %v8120
      %v8122 = vpop.f32.mrb[0].mxu0
      %v8123 = vpop.f32.mrb[0].mxu0
      %v8124 = vadd.f32 0.0, %v8123
      %v8125 = vpop.f32.mrb[0].mxu0
      %8126 = vmatprep.mubr.bf16.mxu0 0
      %8127 = vmatmul.mubr.bf16.gmra.mrb[0].mxu0 %v8006
      %v8128 = vpop.f32.mrb[0].mxu0
      %v8129 = vadd.f32 0.0, %v8128
      %v8130 = vpop.f32.mrb[0].mxu0
      %v8131 = vpop.f32.mrb[0].mxu0
      %v8132 = vadd.f32 0.0, %v8131
      %v8133 = vpop.f32.mrb[0].mxu0
      %8134 = vmatprep.mubr.bf16.mxu0 0
      %8135 = vmatmul.mubr.bf16.gmra.mrb[0].mxu0 %v8007
      %v8136 = vpop.f32.mrb[0].mxu0
      %v8137 = vadd.f32 0.0, %v8136
      %v8138 = vpop.f32.mrb[0].mxu0
      %v8139 = vpop.f32.mrb[0].mxu0
      %v8140 = vadd.f32 0.0, %v8139
      %v8141 = vpop.f32.mrb[0].mxu0
      %8142 = vmatprep.mubr.bf16.mxu0 0
      %8143 = vmatmul.mubr.bf16.gmra.mrb[0].mxu0 %v8008
      %v8144 = vpop.f32.mrb[0].mxu0
      %v8145 = vadd.f32 0.0, %v8144
      %v8146 = vpop.f32.mrb[0].mxu0
      %v8147 = vpop.f32.mrb[0].mxu0
      %v8148 = vadd.f32 0.0, %v8147
      %v8149 = vpop.f32.mrb[0].mxu0
      %8150 = vmatprep.mubr.bf16.mxu0 0
      %8151 = vmatmul.mubr.bf16.gmra.mrb[0].mxu0 %v8009
      %v8152 = vpop.f32.mrb[0].mxu0
      %v8153 = vadd.f32 0.0, %v8152
      %v8154 = vpop.f32.mrb[0].mxu0
      %v8155 = vpop.f32.mrb[0].mxu0
      %v8156 = vadd.f32 0.0, %v8155
      %v8157 = vpop.f32.mrb[0].mxu0
      %8158 = vmatprep.mubr.bf16.mxu0 0
      %8159 = vmatmul.mubr.bf16.gmra.mrb[0].mxu0 %v8010
      %v8160 = vpop.f32.mrb[0].mxu0
      %v8161 = vadd.f32 0.0, %v8160
      %v8162 = vpop.f32.mrb[0].mxu0
      %v8163 = vpop.f32.mrb[0].mxu0
      %v8164 = vadd.f32 0.0, %v8163
      %v8165 = vpop.f32.mrb[0].mxu0
      %8166 = vmatprep.mubr.bf16.mxu0 0
      %8167 = vmatmul.mubr.bf16.gmra.mrb[0].mxu0 %v8011
      %v8168 = vpop.f32.mrb[0].mxu0
      %v8169 = vadd.f32 0.0, %v8168
      %v8170 = vpop.f32.mrb[0].mxu0
      %v8171 = vpop.f32.mrb[0].mxu0
      %v8172 = vadd.f32 0.0, %v8171
      %v8173 = vpop.f32.mrb[0].mxu0
      %8174 = vmatprep.mubr.bf16.mxu0 0
      %8175 = vmatmul.mubr.bf16.gmra.mrb[0].mxu0 %v8012
      %v8176 = vpop.f32.mrb[0].mxu0
      %v8177 = vadd.f32 0.0, %v8176
      %v8178 = vpop.f32.mrb[0].mxu0
      %v8179 = vpop.f32.mrb[0].mxu0
      %v8180 = vadd.f32 0.0, %v8179
      %v8181 = vpop.f32.mrb[0].mxu0
      %8182 = vmatprep.mubr.bf16.mxu0 0
      %8183 = vmatmul.mubr.bf16.gmra.mrb[0].mxu0 %v8013
      %v8184 = vpop.f32.mrb[0].mxu0
      %v8185 = vadd.f32 0.0, %v8184
      %v8186 = vpop.f32.mrb[0].mxu0
      %v8187 = vpop.f32.mrb[0].mxu0
      %v8188 = vadd.f32 0.0, %v8187
      %v8189 = vpop.f32.mrb[0].mxu0
      %8190 = vmatprep.mubr.bf16.mxu0 0
      %8191 = vmatmul.mubr.bf16.gmra.mrb[0].mxu0 %v8014
      %v8192 = vpop.f32.mrb[0].mxu0
      %v8193 = vadd.f32 0.0, %v8192
      %v8194 = vpop.f32.mrb[0].mxu0
      %v8195 = vpop.f32.mrb[0].mxu0
      %v8196 = vadd.f32 0.0, %v8195
      %v8197 = vpop.f32.mrb[0].mxu0
      %8198 = vmatprep.mubr.bf16.mxu0 0
      %8199 = vmatmul.mubr.bf16.gmra.mrb[0].mxu0 %v8015
      %v8200 = vpop.f32.mrb[0].mxu0
      %v8201 = vadd.f32 0.0, %v8200
      %v8202 = vpop.f32.mrb[0].mxu0
      %v8203 = vpop.f32.mrb[0].mxu0
      %v8204 = vadd.f32 0.0, %v8203
      %v8205 = vpop.f32.mrb[0].mxu0
      %8206 = vmatprep.mubr.bf16.mxu0 0
      %8207 = vmatmul.mubr.bf16.gmra.mrb[0].mxu0 %v8016
      %v8208 = vpop.f32.mrb[0].mxu0
      %v8209 = vadd.f32 0.0, %v8208
      %v8210 = vpop.f32.mrb[0].mxu0
      %v8211 = vpop.f32.mrb[0].mxu0
      %v8212 = vadd.f32 0.0, %v8211
      %v8213 = vpop.f32.mrb[0].mxu0
      %8214 = vmatprep.mubr.bf16.mxu0 0
      %8215 = vmatmul.mubr.bf16.gmra.mrb[0].mxu0 %v8017
      %v8216 = vpop.f32.mrb[0].mxu0
      %v8217 = vadd.f32 0.0, %v8216
      %v8218 = vpop.f32.mrb[0].mxu0
      %v8219 = vpop.f32.mrb[0].mxu0
      %v8220 = vadd.f32 0.0, %v8219
      %v8221 = vpop.f32.mrb[0].mxu0
      %8222 = vmatprep.mubr.bf16.mxu0 0
      %8223 = vmatmul.mubr.bf16.gmra.mrb[0].mxu0 %v8018
      %v8224 = vpop.f32.mrb[0].mxu0
      %v8225 = vadd.f32 0.0, %v8224
      %v8226 = vpop.f32.mrb[0].mxu0
      %v8227 = vpop.f32.mrb[0].mxu0
      %v8228 = vadd.f32 0.0, %v8227
      %v8229 = vpop.f32.mrb[0].mxu0
      %8230 = vmatprep.mubr.bf16.mxu0 0
      %8231 = vmatmul.mubr.bf16.gmra.mrb[0].mxu0 %v8019
      %v8232 = vpop.f32.mrb[0].mxu0
      %v8233 = vadd.f32 0.0, %v8232
      %v8234 = vpop.f32.mrb[0].mxu0
      %v8235 = vpop.f32.mrb[0].mxu0
      %v8236 = vadd.f32 0.0, %v8235
      %v8237 = vpop.f32.mrb[0].mxu0
      %8238 = vmatprep.mubr.bf16.mxu0 0
      %8239 = vmatmul.mubr.bf16.gmra.mrb[0].mxu0 %v8020
      %v8240 = vpop.f32.mrb[0].mxu0
      %v8241 = vadd.f32 0.0, %v8240
      %v8242 = vpop.f32.mrb[0].mxu0
      %v8243 = vpop.f32.mrb[0].mxu0
      %v8244 = vadd.f32 0.0, %v8243
      %v8245 = vpop.f32.mrb[0].mxu0
      %8246 = vdwg.mxu0
      %v8247 = vadd.f32 %v7973, %v8121
      %v8248 = vadd.f32 %v7974, %v8124
      %v8249 = vadd.f32 %v7975, %v8129
      %v8250 = vadd.f32 %v7976, %v8132
      %v8251 = vadd.f32 %v7977, %v8137
      %v8252 = vadd.f32 %v7978, %v8140
      %v8253 = vadd.f32 %v7979, %v8145
      %v8254 = vadd.f32 %v7980, %v8148
      %v8255 = vadd.f32 %v7981, %v8153
      %v8256 = vadd.f32 %v7982, %v8156
      %v8257 = vadd.f32 %v7983, %v8161
      %v8258 = vadd.f32 %v7984, %v8164
      %v8259 = vadd.f32 %v7985, %v8169
      %v8260 = vadd.f32 %v7986, %v8172
      %v8261 = vadd.f32 %v7987, %v8177
      %v8262 = vadd.f32 %v7988, %v8180
      %v8263 = vadd.f32 %v7989, %v8185
      %v8264 = vadd.f32 %v7990, %v8188
      %v8265 = vadd.f32 %v7991, %v8193
      %v8266 = vadd.f32 %v7992, %v8196
      %v8267 = vadd.f32 %v7993, %v8201
      %v8268 = vadd.f32 %v7994, %v8204
      %v8269 = vadd.f32 %v7995, %v8209
      %v8270 = vadd.f32 %v7996, %v8212
      %v8271 = vadd.f32 %v7997, %v8217
      %v8272 = vadd.f32 %v7998, %v8220
      %v8273 = vadd.f32 %v7999, %v8225
      %v8274 = vadd.f32 %v8000, %v8228
      %v8275 = vadd.f32 %v8001, %v8233
      %v8276 = vadd.f32 %v8002, %v8236
      %v8277 = vadd.f32 %v8003, %v8241
      %v8278 = vadd.f32 %v8004, %v8244
      %8279 = vst [vmem:[#allocation2] sm:$0xff] %v8247
      %8280 = vst [vmem:[#allocation2 + $0x8] sm:$0xff] %v8248
      %8281 = vst [vmem:[#allocation2 + $0x10] sm:$0xff] %v8249
      %8282 = vst [vmem:[#allocation2 + $0x18] sm:$0xff] %v8250
      %8283 = vst [vmem:[#allocation2 + $0x20] sm:$0xff] %v8251
      %8284 = vst [vmem:[#allocation2 + $0x28] sm:$0xff] %v8252
      %8285 = vst [vmem:[#allocation2 + $0x30] sm:$0xff] %v8253
      %8286 = vst [vmem:[#allocation2 + $0x38] sm:$0xff] %v8254
      %8287 = vst [vmem:[#allocation2 + $0x40] sm:$0xff] %v8255
      %8288 = vst [vmem:[#allocation2 + $0x48] sm:$0xff] %v8256
      %8289 = vst [vmem:[#allocation2 + $0x50] sm:$0xff] %v8257
      %8290 = vst [vmem:[#allocation2 + $0x58] sm:$0xff] %v8258
      %8291 = vst [vmem:[#allocation2 + $0x60] sm:$0xff] %v8259
      %8292 = vst [vmem:[#allocation2 + $0x68] sm:$0xff] %v8260
      %8293 = vst [vmem:[#allocation2 + $0x70] sm:$0xff] %v8261
      %8294 = vst [vmem:[#allocation2 + $0x78] sm:$0xff] %v8262
      %8295 = vst [vmem:[#allocation2 + $0x80] sm:$0xff] %v8263
      %8296 = vst [vmem:[#allocation2 + $0x88] sm:$0xff] %v8264
      %8297 = vst [vmem:[#allocation2 + $0x90] sm:$0xff] %v8265
      %8298 = vst [vmem:[#allocation2 + $0x98] sm:$0xff] %v8266
      %8299 = vst [vmem:[#allocation2 + $0xa0] sm:$0xff] %v8267
      %8300 = vst [vmem:[#allocation2 + $0xa8] sm:$0xff] %v8268
      %8301 = vst [vmem:[#allocation2 + $0xb0] sm:$0xff] %v8269
      %8302 = vst [vmem:[#allocation2 + $0xb8] sm:$0xff] %v8270
      %8303 = vst [vmem:[#allocation2 + $0xc0] sm:$0xff] %v8271
      %8304 = vst [vmem:[#allocation2 + $0xc8] sm:$0xff] %v8272
      %8305 = vst [vmem:[#allocation2 + $0xd0] sm:$0xff] %v8273
      %8306 = vst [vmem:[#allocation2 + $0xd8] sm:$0xff] %v8274
      %8307 = vst [vmem:[#allocation2 + $0xe0] sm:$0xff] %v8275
      %8308 = vst [vmem:[#allocation2 + $0xe8] sm:$0xff] %v8276
      %8309 = vst [vmem:[#allocation2 + $0xf0] sm:$0xff] %v8277
      %8310 = vst [vmem:[#allocation2 + $0xf8] sm:$0xff] %v8278
      %v8311 = vld [vmem:[#allocation2] sm:$0xff]
      %v8312 = vld [vmem:[#allocation2 + $0x8] sm:$0xff]
      %v8313 = vld [vmem:[#allocation2 + $0x10] sm:$0xff]
      %v8314 = vld [vmem:[#allocation2 + $0x18] sm:$0xff]
      %v8315 = vld [vmem:[#allocation2 + $0x20] sm:$0xff]
      %v8316 = vld [vmem:[#allocation2 + $0x28] sm:$0xff]
      %v8317 = vld [vmem:[#allocation2 + $0x30] sm:$0xff]
      %v8318 = vld [vmem:[#allocation2 + $0x38] sm:$0xff]
      %v8319 = vld [vmem:[#allocation2 + $0x40] sm:$0xff]
      %v8320 = vld [vmem:[#allocation2 + $0x48] sm:$0xff]
      %v8321 = vld [vmem:[#allocation2 + $0x50] sm:$0xff]
      %v8322 = vld [vmem:[#allocation2 + $0x58] sm:$0xff]
      %v8323 = vld [vmem:[#allocation2 + $0x60] sm:$0xff]
      %v8324 = vld [vmem:[#allocation2 + $0x68] sm:$0xff]
      %v8325 = vld [vmem:[#allocation2 + $0x70] sm:$0xff]
      %v8326 = vld [vmem:[#allocation2 + $0x78] sm:$0xff]
      %v8327 = vld [vmem:[#allocation2 + $0x80] sm:$0xff]
      %v8328 = vld [vmem:[#allocation2 + $0x88] sm:$0xff]
      %v8329 = vld [vmem:[#allocation2 + $0x90] sm:$0xff]
      %v8330 = vld [vmem:[#allocation2 + $0x98] sm:$0xff]
      %v8331 = vld [vmem:[#allocation2 + $0xa0] sm:$0xff]
      %v8332 = vld [vmem:[#allocation2 + $0xa8] sm:$0xff]
      %v8333 = vld [vmem:[#allocation2 + $0xb0] sm:$0xff]
      %v8334 = vld [vmem:[#allocation2 + $0xb8] sm:$0xff]
      %v8335 = vld [vmem:[#allocation2 + $0xc0] sm:$0xff]
      %v8336 = vld [vmem:[#allocation2 + $0xc8] sm:$0xff]
      %v8337 = vld [vmem:[#allocation2 + $0xd0] sm:$0xff]
      %v8338 = vld [vmem:[#allocation2 + $0xd8] sm:$0xff]
      %v8339 = vld [vmem:[#allocation2 + $0xe0] sm:$0xff]
      %v8340 = vld [vmem:[#allocation2 + $0xe8] sm:$0xff]
      %v8341 = vld [vmem:[#allocation2 + $0xf0] sm:$0xff]
      %v8342 = vld [vmem:[#allocation2 + $0xf8] sm:$0xff]
      %v8343 = vld [vmem:[%s8] sm:$0x1]
      %v8345 = vlaneseq
      %v8346 = vshrl.u32 %v8345, 7
      %v8347 = vsub.s32 0, %v8346
      %v8348 = vrot.slane %v8343, %v8347
      %v8350 = vadd.f32 %v8311, %v8348
      %v8351 = vadd.f32 %v8312, %v8348
      %v8352 = vadd.f32 %v8313, %v8348
      %v8353 = vadd.f32 %v8314, %v8348
      %v8354 = vadd.f32 %v8315, %v8348
      %v8355 = vadd.f32 %v8316, %v8348
      %v8356 = vadd.f32 %v8317, %v8348
      %v8357 = vadd.f32 %v8318, %v8348
      %v8358 = vadd.f32 %v8319, %v8348
      %v8359 = vadd.f32 %v8320, %v8348
      %v8360 = vadd.f32 %v8321, %v8348
      %v8361 = vadd.f32 %v8322, %v8348
      %v8362 = vadd.f32 %v8323, %v8348
      %v8363 = vadd.f32 %v8324, %v8348
      %v8364 = vadd.f32 %v8325, %v8348
      %v8365 = vadd.f32 %v8326, %v8348
      %v8366 = vadd.f32 %v8327, %v8348
      %v8367 = vadd.f32 %v8328, %v8348
      %v8368 = vadd.f32 %v8329, %v8348
      %v8369 = vadd.f32 %v8330, %v8348
      %v8370 = vadd.f32 %v8331, %v8348
      %v8371 = vadd.f32 %v8332, %v8348
      %v8372 = vadd.f32 %v8333, %v8348
      %v8373 = vadd.f32 %v8334, %v8348
      %v8374 = vadd.f32 %v8335, %v8348
      %v8375 = vadd.f32 %v8336, %v8348
      %v8376 = vadd.f32 %v8337, %v8348
      %v8377 = vadd.f32 %v8338, %v8348
      %v8378 = vadd.f32 %v8339, %v8348
      %v8379 = vadd.f32 %v8340, %v8348
      %v8380 = vadd.f32 %v8341, %v8348
      %v8381 = vadd.f32 %v8342, %v8348
      %vm8382 = vcmp.gt.f32.partialorder %v8350, 0.0
      %vm8383 = vcmp.gt.f32.partialorder %v8351, 0.0
      %vm8384 = vcmp.gt.f32.partialorder %v8352, 0.0
      %vm8385 = vcmp.gt.f32.partialorder %v8353, 0.0
      %vm8386 = vcmp.gt.f32.partialorder %v8354, 0.0
      %vm8387 = vcmp.gt.f32.partialorder %v8355, 0.0
      %vm8388 = vcmp.gt.f32.partialorder %v8356, 0.0
      %vm8389 = vcmp.gt.f32.partialorder %v8357, 0.0
      %vm8390 = vcmp.gt.f32.partialorder %v8358, 0.0
      %vm8391 = vcmp.gt.f32.partialorder %v8359, 0.0
      %vm8392 = vcmp.gt.f32.partialorder %v8360, 0.0
      %vm8393 = vcmp.gt.f32.partialorder %v8361, 0.0
      %vm8394 = vcmp.gt.f32.partialorder %v8362, 0.0
      %vm8395 = vcmp.gt.f32.partialorder %v8363, 0.0
      %vm8396 = vcmp.gt.f32.partialorder %v8364, 0.0
      %vm8397 = vcmp.gt.f32.partialorder %v8365, 0.0
      %vm8398 = vcmp.gt.f32.partialorder %v8366, 0.0
      %vm8399 = vcmp.gt.f32.partialorder %v8367, 0.0
      %vm8400 = vcmp.gt.f32.partialorder %v8368, 0.0
      %vm8401 = vcmp.gt.f32.partialorder %v8369, 0.0
      %vm8402 = vcmp.gt.f32.partialorder %v8370, 0.0
      %vm8403 = vcmp.gt.f32.partialorder %v8371, 0.0
      %vm8404 = vcmp.gt.f32.partialorder %v8372, 0.0
      %vm8405 = vcmp.gt.f32.partialorder %v8373, 0.0
      %vm8406 = vcmp.gt.f32.partialorder %v8374, 0.0
      %vm8407 = vcmp.gt.f32.partialorder %v8375, 0.0
      %vm8408 = vcmp.gt.f32.partialorder %v8376, 0.0
      %vm8409 = vcmp.gt.f32.partialorder %v8377, 0.0
      %vm8410 = vcmp.gt.f32.partialorder %v8378, 0.0
      %vm8411 = vcmp.gt.f32.partialorder %v8379, 0.0
      %vm8412 = vcmp.gt.f32.partialorder %v8380, 0.0
      %vm8413 = vcmp.gt.f32.partialorder %v8381, 0.0
      %v8414 = vmul.f32 %v8350, 0.2
      %v8415 = vmul.f32 %v8351, 0.2
      %v8416 = vmul.f32 %v8352, 0.2
      %v8417 = vmul.f32 %v8353, 0.2
      %v8418 = vmul.f32 %v8354, 0.2
      %v8419 = vmul.f32 %v8355, 0.2
      %v8420 = vmul.f32 %v8356, 0.2
      %v8421 = vmul.f32 %v8357, 0.2
      %v8422 = vmul.f32 %v8358, 0.2
      %v8423 = vmul.f32 %v8359, 0.2
      %v8424 = vmul.f32 %v8360, 0.2
      %v8425 = vmul.f32 %v8361, 0.2
      %v8426 = vmul.f32 %v8362, 0.2
      %v8427 = vmul.f32 %v8363, 0.2
      %v8428 = vmul.f32 %v8364, 0.2
      %v8429 = vmul.f32 %v8365, 0.2
      %v8430 = vmul.f32 %v8366, 0.2
      %v8431 = vmul.f32 %v8367, 0.2
      %v8432 = vmul.f32 %v8368, 0.2
      %v8433 = vmul.f32 %v8369, 0.2
      %v8434 = vmul.f32 %v8370, 0.2
      %v8435 = vmul.f32 %v8371, 0.2
      %v8436 = vmul.f32 %v8372, 0.2
      %v8437 = vmul.f32 %v8373, 0.2
      %v8438 = vmul.f32 %v8374, 0.2
      %v8439 = vmul.f32 %v8375, 0.2
      %v8440 = vmul.f32 %v8376, 0.2
      %v8441 = vmul.f32 %v8377, 0.2
      %v8442 = vmul.f32 %v8378, 0.2
      %v8443 = vmul.f32 %v8379, 0.2
      %v8444 = vmul.f32 %v8380, 0.2
      %v8445 = vmul.f32 %v8381, 0.2
      %v8446 = vsel %vm8382, %v8350, %v8414
      %v8447 = vsel %vm8383, %v8351, %v8415
      %v8448 = vsel %vm8384, %v8352, %v8416
      %v8449 = vsel %vm8385, %v8353, %v8417
      %v8450 = vsel %vm8386, %v8354, %v8418
      %v8451 = vsel %vm8387, %v8355, %v8419
      %v8452 = vsel %vm8388, %v8356, %v8420
      %v8453 = vsel %vm8389, %v8357, %v8421
      %v8454 = vsel %vm8390, %v8358, %v8422
      %v8455 = vsel %vm8391, %v8359, %v8423
      %v8456 = vsel %vm8392, %v8360, %v8424
      %v8457 = vsel %vm8393, %v8361, %v8425
      %v8458 = vsel %vm8394, %v8362, %v8426
      %v8459 = vsel %vm8395, %v8363, %v8427
      %v8460 = vsel %vm8396, %v8364, %v8428
      %v8461 = vsel %vm8397, %v8365, %v8429
      %v8462 = vsel %vm8398, %v8366, %v8430
      %v8463 = vsel %vm8399, %v8367, %v8431
      %v8464 = vsel %vm8400, %v8368, %v8432
      %v8465 = vsel %vm8401, %v8369, %v8433
      %v8466 = vsel %vm8402, %v8370, %v8434
      %v8467 = vsel %vm8403, %v8371, %v8435
      %v8468 = vsel %vm8404, %v8372, %v8436
      %v8469 = vsel %vm8405, %v8373, %v8437
      %v8470 = vsel %vm8406, %v8374, %v8438
      %v8471 = vsel %vm8407, %v8375, %v8439
      %v8472 = vsel %vm8408, %v8376, %v8440
      %v8473 = vsel %vm8409, %v8377, %v8441
      %v8474 = vsel %vm8410, %v8378, %v8442
      %v8475 = vsel %vm8411, %v8379, %v8443
      %v8476 = vsel %vm8412, %v8380, %v8444
      %v8477 = vsel %vm8413, %v8381, %v8445
      %v8478 = vpack.c.bf16 %v459, %v458
      %v8479 = vpack.c.bf16 %v461, %v460
      %v8480 = vpack.c.bf16 %v463, %v462
      %v8481 = vpack.c.bf16 %v465, %v464
      %v8482 = vpack.c.bf16 %v467, %v466
      %v8483 = vpack.c.bf16 %v469, %v468
      %v8484 = vpack.c.bf16 %v471, %v470
      %v8485 = vpack.c.bf16 %v473, %v472
      %v8486 = vpack.c.bf16 %v475, %v474
      %v8487 = vpack.c.bf16 %v477, %v476
      %v8488 = vpack.c.bf16 %v479, %v478
      %v8489 = vpack.c.bf16 %v481, %v480
      %v8490 = vpack.c.bf16 %v483, %v482
      %v8491 = vpack.c.bf16 %v485, %v484
      %v8492 = vpack.c.bf16 %v487, %v486
      %v8493 = vpack.c.bf16 %v489, %v488
      %v8494 = vld [vmem:[%s9] sm:$0xf]
      %v8495 = vld [vmem:[%s9 + $0x4] sm:$0xf]
      %v8496 = vld [vmem:[%s9 + $0x8] sm:$0xf]
      %v8497 = vld [vmem:[%s9 + $0xc] sm:$0xf]
      %v8498 = vld [vmem:[%s9 + $0x10] sm:$0xf]
      %v8499 = vld [vmem:[%s9 + $0x14] sm:$0xf]
      %v8500 = vld [vmem:[%s9 + $0x18] sm:$0xf]
      %v8501 = vld [vmem:[%s9 + $0x1c] sm:$0xf]
      %v8502 = vld [vmem:[%s9 + $0x20] sm:$0xf]
      %v8503 = vld [vmem:[%s9 + $0x24] sm:$0xf]
      %v8504 = vld [vmem:[%s9 + $0x28] sm:$0xf]
      %v8505 = vld [vmem:[%s9 + $0x2c] sm:$0xf]
      %v8506 = vld [vmem:[%s9 + $0x30] sm:$0xf]
      %v8507 = vld [vmem:[%s9 + $0x34] sm:$0xf]
      %v8508 = vld [vmem:[%s9 + $0x38] sm:$0xf]
      %v8509 = vld [vmem:[%s9 + $0x3c] sm:$0xf]
      %v8510 = vld [vmem:[%s10] sm:$0x1]
      %v8512 = vlaneseq
      %v8513 = vshrl.u32 %v8512, 7
      %v8514 = vsub.s32 0, %v8513
      %v8515 = vrot.slane %v8510, %v8514
      %v8533 = vunpack.c.l.b16 %v8494
      %v8534 = vunpack.c.l.b16 %v8495
      %v8535 = vunpack.c.l.b16 %v8496
      %v8536 = vunpack.c.l.b16 %v8497
      %v8537 = vunpack.c.l.b16 %v8498
      %v8538 = vunpack.c.l.b16 %v8499
      %v8539 = vunpack.c.l.b16 %v8500
      %v8540 = vunpack.c.l.b16 %v8501
      %v8541 = vunpack.c.l.b16 %v8502
      %v8542 = vunpack.c.l.b16 %v8503
      %v8543 = vunpack.c.l.b16 %v8504
      %v8544 = vunpack.c.l.b16 %v8505
      %v8545 = vunpack.c.l.b16 %v8506
      %v8546 = vunpack.c.l.b16 %v8507
      %v8547 = vunpack.c.l.b16 %v8508
      %v8548 = vunpack.c.l.b16 %v8509
      %v8549 = vpack.c.b16 %v8534, %v8533
      %v8550 = vpack.c.b16 %v8536, %v8535
      %v8551 = vpack.c.b16 %v8538, %v8537
      %v8552 = vpack.c.b16 %v8540, %v8539
      %v8553 = vpack.c.b16 %v8542, %v8541
      %v8554 = vpack.c.b16 %v8544, %v8543
      %v8555 = vpack.c.b16 %v8546, %v8545
      %v8556 = vpack.c.b16 %v8548, %v8547
      %8565 = vmatprep.subr.bf16.mxu0 0
      %8566 = vmatpush1.bf16.msra.mxu0 %v8549
      %8567 = vmatprep.subr.bf16.mxu0 0
      %8568 = vmatpush1.bf16.msra.mxu0 %v8550
      %8569 = vmatprep.subr.bf16.mxu0 0
      %8570 = vmatpush1.bf16.msra.mxu0 %v8551
      %8571 = vmatprep.subr.bf16.mxu0 0
      %8572 = vmatpush1.bf16.msra.mxu0 %v8552
      %8573 = vmatprep.subr.bf16.mxu0 0
      %8574 = vmatpush1.bf16.msra.mxu0 %v8553
      %8575 = vmatprep.subr.bf16.mxu0 0
      %8576 = vmatpush1.bf16.msra.mxu0 %v8554
      %8577 = vmatprep.subr.bf16.mxu0 0
      %8578 = vmatpush1.bf16.msra.mxu0 %v8555
      %8579 = vmatprep.subr.bf16.mxu0 0
      %8580 = vmatpush1.bf16.msra.mxu0 %v8556
      %8581 = vmatprep.subr.bf16.mxu0 0
      %8582 = vmatpush1.bf16.msra.mxu0 0
      %8583 = vmatprep.subr.bf16.mxu0 0
      %8584 = vmatpush1.bf16.msra.mxu0 0
      %8585 = vmatprep.subr.bf16.mxu0 0
      %8586 = vmatpush1.bf16.msra.mxu0 0
      %8587 = vmatprep.subr.bf16.mxu0 0
      %8588 = vmatpush1.bf16.msra.mxu0 0
      %8589 = vmatprep.subr.bf16.mxu0 0
      %8590 = vmatpush1.bf16.msra.mxu0 0
      %8591 = vmatprep.subr.bf16.mxu0 0
      %8592 = vmatpush1.bf16.msra.mxu0 0
      %8593 = vmatprep.subr.bf16.mxu0 0
      %8594 = vmatpush1.bf16.msra.mxu0 0
      %8595 = vmatprep.subr.bf16.mxu0 0
      %8596 = vmatpush1.bf16.msra.mxu0 0
      %8597 = vmatprep.mubr.bf16.mxu0 0
      %8598 = vmatmul.mubr.bf16.gmra.mrb[0].mxu0 %v8478
      %v8599 = vpop.f32.mrb[0].mxu0
      %v8600 = vadd.f32 %v8515, %v8599
      %v8601 = vpop.f32.mrb[0].mxu0
      %v8602 = vpop.f32.mrb[0].mxu0
      %v8603 = vadd.f32 %v8515, %v8602
      %v8604 = vpop.f32.mrb[0].mxu0
      %8605 = vmatprep.mubr.bf16.mxu0 0
      %8606 = vmatmul.mubr.bf16.gmra.mrb[0].mxu0 %v8479
      %v8607 = vpop.f32.mrb[0].mxu0
      %v8608 = vadd.f32 %v8515, %v8607
      %v8609 = vpop.f32.mrb[0].mxu0
      %v8610 = vpop.f32.mrb[0].mxu0
      %v8611 = vadd.f32 %v8515, %v8610
      %v8612 = vpop.f32.mrb[0].mxu0
      %8613 = vmatprep.mubr.bf16.mxu0 0
      %8614 = vmatmul.mubr.bf16.gmra.mrb[0].mxu0 %v8480
      %v8615 = vpop.f32.mrb[0].mxu0
      %v8616 = vadd.f32 %v8515, %v8615
      %v8617 = vpop.f32.mrb[0].mxu0
      %v8618 = vpop.f32.mrb[0].mxu0
      %v8619 = vadd.f32 %v8515, %v8618
      %v8620 = vpop.f32.mrb[0].mxu0
      %8621 = vmatprep.mubr.bf16.mxu0 0
      %8622 = vmatmul.mubr.bf16.gmra.mrb[0].mxu0 %v8481
      %v8623 = vpop.f32.mrb[0].mxu0
      %v8624 = vadd.f32 %v8515, %v8623
      %v8625 = vpop.f32.mrb[0].mxu0
      %v8626 = vpop.f32.mrb[0].mxu0
      %v8627 = vadd.f32 %v8515, %v8626
      %v8628 = vpop.f32.mrb[0].mxu0
      %8629 = vmatprep.mubr.bf16.mxu0 0
      %8630 = vmatmul.mubr.bf16.gmra.mrb[0].mxu0 %v8482
      %v8631 = vpop.f32.mrb[0].mxu0
      %v8632 = vadd.f32 %v8515, %v8631
      %v8633 = vpop.f32.mrb[0].mxu0
      %v8634 = vpop.f32.mrb[0].mxu0
      %v8635 = vadd.f32 %v8515, %v8634
      %v8636 = vpop.f32.mrb[0].mxu0
      %8637 = vmatprep.mubr.bf16.mxu0 0
      %8638 = vmatmul.mubr.bf16.gmra.mrb[0].mxu0 %v8483
      %v8639 = vpop.f32.mrb[0].mxu0
      %v8640 = vadd.f32 %v8515, %v8639
      %v8641 = vpop.f32.mrb[0].mxu0
      %v8642 = vpop.f32.mrb[0].mxu0
      %v8643 = vadd.f32 %v8515, %v8642
      %v8644 = vpop.f32.mrb[0].mxu0
      %8645 = vmatprep.mubr.bf16.mxu0 0
      %8646 = vmatmul.mubr.bf16.gmra.mrb[0].mxu0 %v8484
      %v8647 = vpop.f32.mrb[0].mxu0
      %v8648 = vadd.f32 %v8515, %v8647
      %v8649 = vpop.f32.mrb[0].mxu0
      %v8650 = vpop.f32.mrb[0].mxu0
      %v8651 = vadd.f32 %v8515, %v8650
      %v8652 = vpop.f32.mrb[0].mxu0
      %8653 = vmatprep.mubr.bf16.mxu0 0
      %8654 = vmatmul.mubr.bf16.gmra.mrb[0].mxu0 %v8485
      %v8655 = vpop.f32.mrb[0].mxu0
      %v8656 = vadd.f32 %v8515, %v8655
      %v8657 = vpop.f32.mrb[0].mxu0
      %v8658 = vpop.f32.mrb[0].mxu0
      %v8659 = vadd.f32 %v8515, %v8658
      %v8660 = vpop.f32.mrb[0].mxu0
      %8661 = vmatprep.mubr.bf16.mxu0 0
      %8662 = vmatmul.mubr.bf16.gmra.mrb[0].mxu0 %v8486
      %v8663 = vpop.f32.mrb[0].mxu0
      %v8664 = vadd.f32 %v8515, %v8663
      %v8665 = vpop.f32.mrb[0].mxu0
      %v8666 = vpop.f32.mrb[0].mxu0
      %v8667 = vadd.f32 %v8515, %v8666
      %v8668 = vpop.f32.mrb[0].mxu0
      %8669 = vmatprep.mubr.bf16.mxu0 0
      %8670 = vmatmul.mubr.bf16.gmra.mrb[0].mxu0 %v8487
      %v8671 = vpop.f32.mrb[0].mxu0
      %v8672 = vadd.f32 %v8515, %v8671
      %v8673 = vpop.f32.mrb[0].mxu0
      %v8674 = vpop.f32.mrb[0].mxu0
      %v8675 = vadd.f32 %v8515, %v8674
      %v8676 = vpop.f32.mrb[0].mxu0
      %8677 = vmatprep.mubr.bf16.mxu0 0
      %8678 = vmatmul.mubr.bf16.gmra.mrb[0].mxu0 %v8488
      %v8679 = vpop.f32.mrb[0].mxu0
      %v8680 = vadd.f32 %v8515, %v8679
      %v8681 = vpop.f32.mrb[0].mxu0
      %v8682 = vpop.f32.mrb[0].mxu0
      %v8683 = vadd.f32 %v8515, %v8682
      %v8684 = vpop.f32.mrb[0].mxu0
      %8685 = vmatprep.mubr.bf16.mxu0 0
      %8686 = vmatmul.mubr.bf16.gmra.mrb[0].mxu0 %v8489
      %v8687 = vpop.f32.mrb[0].mxu0
      %v8688 = vadd.f32 %v8515, %v8687
      %v8689 = vpop.f32.mrb[0].mxu0
      %v8690 = vpop.f32.mrb[0].mxu0
      %v8691 = vadd.f32 %v8515, %v8690
      %v8692 = vpop.f32.mrb[0].mxu0
      %8693 = vmatprep.mubr.bf16.mxu0 0
      %8694 = vmatmul.mubr.bf16.gmra.mrb[0].mxu0 %v8490
      %v8695 = vpop.f32.mrb[0].mxu0
      %v8696 = vadd.f32 %v8515, %v8695
      %v8697 = vpop.f32.mrb[0].mxu0
      %v8698 = vpop.f32.mrb[0].mxu0
      %v8699 = vadd.f32 %v8515, %v8698
      %v8700 = vpop.f32.mrb[0].mxu0
      %8701 = vmatprep.mubr.bf16.mxu0 0
      %8702 = vmatmul.mubr.bf16.gmra.mrb[0].mxu0 %v8491
      %v8703 = vpop.f32.mrb[0].mxu0
      %v8704 = vadd.f32 %v8515, %v8703
      %v8705 = vpop.f32.mrb[0].mxu0
      %v8706 = vpop.f32.mrb[0].mxu0
      %v8707 = vadd.f32 %v8515, %v8706
      %v8708 = vpop.f32.mrb[0].mxu0
      %8709 = vmatprep.mubr.bf16.mxu0 0
      %8710 = vmatmul.mubr.bf16.gmra.mrb[0].mxu0 %v8492
      %v8711 = vpop.f32.mrb[0].mxu0
      %v8712 = vadd.f32 %v8515, %v8711
      %v8713 = vpop.f32.mrb[0].mxu0
      %v8714 = vpop.f32.mrb[0].mxu0
      %v8715 = vadd.f32 %v8515, %v8714
      %v8716 = vpop.f32.mrb[0].mxu0
      %8717 = vmatprep.mubr.bf16.mxu0 0
      %8718 = vmatmul.mubr.bf16.gmra.mrb[0].mxu0 %v8493
      %v8719 = vpop.f32.mrb[0].mxu0
      %v8720 = vadd.f32 %v8515, %v8719
      %v8721 = vpop.f32.mrb[0].mxu0
      %v8722 = vpop.f32.mrb[0].mxu0
      %v8723 = vadd.f32 %v8515, %v8722
      %v8724 = vpop.f32.mrb[0].mxu0
      %8725 = vdwg.mxu0
      %v8726 = vadd.f32 %v8600, %v8446
      %v8727 = vadd.f32 %v8603, %v8447
      %v8728 = vadd.f32 %v8608, %v8448
      %v8729 = vadd.f32 %v8611, %v8449
      %v8730 = vadd.f32 %v8616, %v8450
      %v8731 = vadd.f32 %v8619, %v8451
      %v8732 = vadd.f32 %v8624, %v8452
      %v8733 = vadd.f32 %v8627, %v8453
      %v8734 = vadd.f32 %v8632, %v8454
      %v8735 = vadd.f32 %v8635, %v8455
      %v8736 = vadd.f32 %v8640, %v8456
      %v8737 = vadd.f32 %v8643, %v8457
      %v8738 = vadd.f32 %v8648, %v8458
      %v8739 = vadd.f32 %v8651, %v8459
      %v8740 = vadd.f32 %v8656, %v8460
      %v8741 = vadd.f32 %v8659, %v8461
      %v8742 = vadd.f32 %v8664, %v8462
      %v8743 = vadd.f32 %v8667, %v8463
      %v8744 = vadd.f32 %v8672, %v8464
      %v8745 = vadd.f32 %v8675, %v8465
      %v8746 = vadd.f32 %v8680, %v8466
      %v8747 = vadd.f32 %v8683, %v8467
      %v8748 = vadd.f32 %v8688, %v8468
      %v8749 = vadd.f32 %v8691, %v8469
      %v8750 = vadd.f32 %v8696, %v8470
      %v8751 = vadd.f32 %v8699, %v8471
      %v8752 = vadd.f32 %v8704, %v8472
      %v8753 = vadd.f32 %v8707, %v8473
      %v8754 = vadd.f32 %v8712, %v8474
      %v8755 = vadd.f32 %v8715, %v8475
      %v8756 = vadd.f32 %v8720, %v8476
      %v8757 = vadd.f32 %v8723, %v8477
      %8758 = vst [vmem:[%s386] sm:$0xff] %v8726
      %8759 = vst [vmem:[%s386 + $0x8] sm:$0xff] %v8727
      %8760 = vst [vmem:[%s386 + $0x10] sm:$0xff] %v8728
      %8761 = vst [vmem:[%s386 + $0x18] sm:$0xff] %v8729
      %8762 = vst [vmem:[%s386 + $0x20] sm:$0xff] %v8730
      %8763 = vst [vmem:[%s386 + $0x28] sm:$0xff] %v8731
      %8764 = vst [vmem:[%s386 + $0x30] sm:$0xff] %v8732
      %8765 = vst [vmem:[%s386 + $0x38] sm:$0xff] %v8733
      %8766 = vst [vmem:[%s386 + $0x40] sm:$0xff] %v8734
      %8767 = vst [vmem:[%s386 + $0x48] sm:$0xff] %v8735
      %8768 = vst [vmem:[%s386 + $0x50] sm:$0xff] %v8736
      %8769 = vst [vmem:[%s386 + $0x58] sm:$0xff] %v8737
      %8770 = vst [vmem:[%s386 + $0x60] sm:$0xff] %v8738
      %8771 = vst [vmem:[%s386 + $0x68] sm:$0xff] %v8739
      %8772 = vst [vmem:[%s386 + $0x70] sm:$0xff] %v8740
      %8773 = vst [vmem:[%s386 + $0x78] sm:$0xff] %v8741
      %8774 = vst [vmem:[%s386 + $0x80] sm:$0xff] %v8742
      %8775 = vst [vmem:[%s386 + $0x88] sm:$0xff] %v8743
      %8776 = vst [vmem:[%s386 + $0x90] sm:$0xff] %v8744
      %8777 = vst [vmem:[%s386 + $0x98] sm:$0xff] %v8745
      %8778 = vst [vmem:[%s386 + $0xa0] sm:$0xff] %v8746
      %8779 = vst [vmem:[%s386 + $0xa8] sm:$0xff] %v8747
      %8780 = vst [vmem:[%s386 + $0xb0] sm:$0xff] %v8748
      %8781 = vst [vmem:[%s386 + $0xb8] sm:$0xff] %v8749
      %8782 = vst [vmem:[%s386 + $0xc0] sm:$0xff] %v8750
      %8783 = vst [vmem:[%s386 + $0xc8] sm:$0xff] %v8751
      %8784 = vst [vmem:[%s386 + $0xd0] sm:$0xff] %v8752
      %8785 = vst [vmem:[%s386 + $0xd8] sm:$0xff] %v8753
      %8786 = vst [vmem:[%s386 + $0xe0] sm:$0xff] %v8754
      %8787 = vst [vmem:[%s386 + $0xe8] sm:$0xff] %v8755
      %8788 = vst [vmem:[%s386 + $0xf0] sm:$0xff] %v8756
      %8789 = vst [vmem:[%s386 + $0xf8] sm:$0xff] %v8757
      %p8790 = scmp.lt.s32.totalorder %s22, 1
      %s8791 = scalar_select %p8790, %s22, 1
      %s8792 = smul.addr %s8791, 32
      %s8793 = smul.addr %s8792, 8
      %s8794 = scalar_lea.vmem %s11, %s8793
      // Predicated region
      $region65: #{hin_res_block.1} parent=63 // pred_check
        %p8795 = pneg %p276
      $region66: #{hin_res_block.1} parent=63 // pred_check_branch
        %8797 = sbr.rel (%p8795) target = $region68
      $region67: #{hin_res_block.1} parent=63 // pred_region
        _
      $region68: #{hin_res_block.1} parent=63 // pred_fallthru
        _
    $region64: #{hin_res_block.1} parent=5 // pred_fallthru
      _
    %p8798 = scmp.le.s32.totalorder 2, %s17
    // Predicated region
    $region69: #{hin_res_block.1} parent=5 // pred_check
      %p8799 = pneg %p8798
    $region70: #{hin_res_block.1} parent=5 // pred_check_branch
      %8801 = sbr.rel (%p8799) target = $region72
    $region71: #{hin_res_block.1} parent=5 // pred_region
      %s8802 = ssub.s32 %s17, 2
      // Predicated region
      $region73: #{hin_res_block.1} parent=71 // pred_check
        %p8803 = pneg %p282
      $region74: #{hin_res_block.1} parent=71 // pred_check_branch
        %8805 = sbr.rel (%p8803) target = $region76
      $region75: #{hin_res_block.1} parent=71 // pred_region
        %p8806 = scmp.lt.s32.totalorder %s23, 1
        %s8807 = scalar_select %p8806, %s23, 1
        %s8808 = smul.addr %s8807, 32
        %s8809 = smul.addr %s8808, 8
        %s8810 = scalar_lea.vmem %s11, %s8809
      $region76: #{hin_res_block.1} parent=71 // pred_fallthru
        _
    $region72: #{hin_res_block.1} parent=5 // pred_fallthru
      _
  $region6: #{hin_res_block.1} parent=0 // loop_footer
    %s21 = sadd.s32 1, %s17
  $region7: #{hin_res_block.1} parent=0 // loop_footer_branch
    %16 = sbr.rel target = $region3
  $region8: #{hin_res_block.1} parent=0 // loop_exit
    _

</llo_original>
